<compile_context>
chip_gen: v5e
topology: v5e:2x2
jax: 0.10.0
libtpu: 0.0.40
codegen_flags: <defaults>
</compile_context>

<pallas_src>
import functools

import jax
import jax.numpy as jnp
from jax.experimental import pallas as pl
from jax.experimental.pallas import tpu as pltpu

HIDDEN = 256
N_HIDDEN_STACK = 7      # fc2 .. fc8
HEAD_PAD = 128          # fused head matmul width: cols [0:3]=fc9, [3:7]=fc10, rest 0
OUT_W = 8               # stored output width (covers the 7 real columns)
TB_MAX = 1024           # max batch-tile rows per grid step


def _make_kernel(bf16_epilogue: bool):
    def fcn_kernel(x_ref, w1x_ref, b1_ref, wh_ref, bh_ref,
                   whead_ref, bhead_ref, out_ref):
        # fc1: x @ W1_xyz + (b1 + t*W1_t)   (t already folded into b1 upstream)
        acc = jnp.dot(x_ref[...].astype(jnp.bfloat16), w1x_ref[...],
                      preferred_element_type=jnp.float32)
        if bf16_epilogue:
            h = jnp.maximum(acc.astype(jnp.bfloat16)
                            + b1_ref[...].astype(jnp.bfloat16), 0.0)
        else:
            h = jnp.maximum(acc + b1_ref[...], 0.0).astype(jnp.bfloat16)

        # fc2..fc8: bf16 MXU matmul, f32 accumulate; bias+ReLU epilogue in bf16
        # on v6e/v7x (bf16 VALUs) and f32 on v5e-and-older.
        for i in range(N_HIDDEN_STACK):
            acc = jnp.dot(h, wh_ref[i], preferred_element_type=jnp.float32)
            if bf16_epilogue:
                h = jnp.maximum(acc.astype(jnp.bfloat16) + bh_ref[i], 0.0)
            else:
                h = jnp.maximum(acc + bh_ref[i].astype(jnp.float32),
                                0.0).astype(jnp.bfloat16)

        # fused heads: one (TB,256)@(256,128) bf16 matmul; only the 8 real
        # columns are stored (narrow out block -> ~16x less HBM writeback).
        out = jnp.dot(h, whead_ref[...],
                      preferred_element_type=jnp.float32) + bhead_ref[...]
        out_ref[...] = out[:, :OUT_W].astype(out_ref.dtype)

    return fcn_kernel


def _choose_tb(batch: int, tb_max: int = TB_MAX) -> int:
    """Batch tile: large enough to amortize per-grid-step pipeline overhead,
    but aims for >= 2 grid steps (both v7x TensorCores) and limits padded-row
    waste on small/ragged batches.  Always a multiple of 256."""
    b_pad = ((batch + 255) // 256) * 256
    tb = min(tb_max, b_pad)
    if b_pad > 256 and b_pad // tb < 2:
        tb = ((b_pad // 2 + 255) // 256) * 256
    return max(256, min(tb, tb_max))


def _use_bf16_epilogue() -> bool:
    """bf16 bias+ReLU epilogue on v6e/v7x (bf16 VALUs); f32 on v5e and older."""
    try:
        kind = jax.devices()[0].device_kind.lower()
    except Exception:
        return True
    return not any(old in kind for old in ("v2", "v3", "v4", "v5"))


@functools.partial(jax.jit, static_argnames=("bf16_epilogue",))
def fcn_forward(x, t, params, *, bf16_epilogue=True):
    """x: (B, 3) f32, t: scalar.  Returns (delta_x (B,3), delta_q (B,4))."""
    (w1x, w1t, b1, wh, bh, whead, bhead) = params
    B = x.shape[0]
    TB = _choose_tb(B)
    n_tiles = pl.cdiv(B, TB)
    B_pad = n_tiles * TB
    if B_pad != B:
        x = jnp.pad(x, ((0, B_pad - B), (0, 0)))

    # fold t into the fc1 bias: x_aug @ W1 + b1 == x @ W1[:3] + (b1 + t*W1[3])
    b1_eff = b1 + jnp.asarray(t, jnp.float32) * w1t

    out = pl.pallas_call(
        _make_kernel(bf16_epilogue),
        out_shape=jax.ShapeDtypeStruct((B_pad, OUT_W), jnp.float32),
        grid=(n_tiles,),
        in_specs=[
            # batch-tiled input points (double-buffered by the pipeline)
            pl.BlockSpec((TB, 3), lambda i: (i, 0)),
            # weights / biases: full-array blocks, same block index every step
            # -> loaded once and kept VMEM-resident across the batch grid.
            pl.BlockSpec((3, HIDDEN), lambda i: (0, 0)),
            pl.BlockSpec((1, HIDDEN), lambda i: (0, 0)),
            pl.BlockSpec((N_HIDDEN_STACK, HIDDEN, HIDDEN), lambda i: (0, 0, 0)),
            pl.BlockSpec((N_HIDDEN_STACK, 1, HIDDEN), lambda i: (0, 0, 0)),
            pl.BlockSpec((HIDDEN, HEAD_PAD), lambda i: (0, 0)),
            pl.BlockSpec((1, HEAD_PAD), lambda i: (0, 0)),
        ],
        out_specs=pl.BlockSpec((TB, OUT_W), lambda i: (i, 0)),
        compiler_params=pltpu.CompilerParams(
            dimension_semantics=("parallel",),
            vmem_limit_bytes=32 * 1024 * 1024),
        # TODO(synk): pin grid-invariant weight specs to a single buffer
        # (pipeline_mode=pl.Buffered(1)) for extra v7x VMEM headroom; total
        # footprint here is only ~2-4 MB so it is not load-bearing.
    )(x, w1x, b1_eff, wh, bh, whead, bhead)

    return out[:B, 0:3], out[:B, 3:7]


def init_params(key):
    """PyTorch nn.Linear-style init: U(-1/sqrt(fan_in), +1/sqrt(fan_in)).
    Weights stored as (in_features, out_features); MXU operands kept in bf16."""
    keys = jax.random.split(key, 20)

    def linear(kw, kb, fan_in, fan_out):
        bound = 1.0 / jnp.sqrt(jnp.float32(fan_in))
        w = jax.random.uniform(kw, (fan_in, fan_out), jnp.float32, -bound, bound)
        b = jax.random.uniform(kb, (1, fan_out), jnp.float32, -bound, bound)
        return w, b

    w1, b1 = linear(keys[0], keys[1], 4, HIDDEN)
    w1x = w1[:3, :].astype(jnp.bfloat16)   # (3, 256)  multiplies x  (bf16 MXU operand)
    w1t = w1[3:4, :]                        # (1, 256)  folded into bias with t (f32)

    wh_list, bh_list = [], []
    for i in range(N_HIDDEN_STACK):
        w, b = linear(keys[2 + 2 * i], keys[3 + 2 * i], HIDDEN, HIDDEN)
        wh_list.append(w)
        bh_list.append(b)
    wh = jnp.stack(wh_list, 0).astype(jnp.bfloat16)   # (7, 256, 256) bf16
    bh = jnp.stack(bh_list, 0).astype(jnp.bfloat16)   # (7, 1, 256)   bf16

    w9, b9 = linear(keys[16], keys[17], HIDDEN, 3)
    w10, b10 = linear(keys[18], keys[19], HIDDEN, 4)

    # fused, zero-padded head: cols [0:3] = fc9, [3:7] = fc10, rest zero.
    whead = jnp.zeros((HIDDEN, HEAD_PAD), jnp.float32)
    whead = whead.at[:, 0:3].set(w9).at[:, 3:7].set(w10).astype(jnp.bfloat16)
    bhead = jnp.zeros((1, HEAD_PAD), jnp.float32)
    bhead = bhead.at[:, 0:3].set(b9).at[:, 3:7].set(b10)

    return (w1x, w1t, b1, wh, bh, whead, bhead)


def fcn_ref(x, t, params, *, bf16_epilogue=True):
    """Pure-JAX reference mirroring the kernel numerics (bf16 MXU operands,
    f32 accumulation, generation-gated epilogue dtype)."""
    (w1x, w1t, b1, wh, bh, whead, bhead) = params
    b1_eff = b1 + jnp.asarray(t, jnp.float32) * w1t
    acc = jnp.dot(x.astype(jnp.bfloat16), w1x, preferred_element_type=jnp.float32)
    if bf16_epilogue:
        h = jnp.maximum(acc.astype(jnp.bfloat16) + b1_eff.astype(jnp.bfloat16), 0.0)
    else:
        h = jnp.maximum(acc + b1_eff, 0.0).astype(jnp.bfloat16)
    for i in range(N_HIDDEN_STACK):
        acc = jnp.dot(h, wh[i], preferred_element_type=jnp.float32)
        if bf16_epilogue:
            h = jnp.maximum(acc.astype(jnp.bfloat16) + bh[i], 0.0)
        else:
            h = jnp.maximum(acc + bh[i].astype(jnp.float32), 0.0).astype(jnp.bfloat16)
    out = jnp.dot(h, whead, preferred_element_type=jnp.float32) + bhead
    return out[:, 0:3], out[:, 3:7]


if __name__ == "__main__":
    key = jax.random.PRNGKey(0)
    k_params, k_x = jax.random.split(key)

    params = init_params(k_params)

    B = 300           # not a multiple of 256 -> exercises the padded grid path
    x = jax.random.normal(k_x, (B, 3), dtype=jnp.float32)
    t = jnp.float32(0.5)

    bf16_ep = _use_bf16_epilogue()
    dx, dq = fcn_forward(x, t, params, bf16_epilogue=bf16_ep)
    jax.block_until_ready((dx, dq))

    # correctness check against a pure-JAX reference with the same numerics
    dx_ref, dq_ref = fcn_ref(x, t, params, bf16_epilogue=bf16_ep)
    assert dx.shape == (B, 3) and dq.shape == (B, 4)
    assert jnp.allclose(dx, dx_ref, atol=2e-3, rtol=2e-3), \
        float(jnp.max(jnp.abs(dx - dx_ref)))
    assert jnp.allclose(dq, dq_ref, atol=2e-3, rtol=2e-3), \
        float(jnp.max(jnp.abs(dq - dq_ref)))

    print("KERNEL_OK")
</pallas_src>

<mosaic_0001>
module attributes {stable_mosaic.version = 11 : i64} {
  func.func @fcn_kernel(%arg0: i32, %arg1: memref<256x3xf32, #tpu.memory_space<vmem>>, %arg2: memref<3x256xbf16, #tpu.memory_space<vmem>>, %arg3: memref<1x256xf32, #tpu.memory_space<vmem>>, %arg4: memref<7x256x256xbf16, #tpu.memory_space<vmem>>, %arg5: memref<7x1x256xbf16, #tpu.memory_space<vmem>>, %arg6: memref<256x128xbf16, #tpu.memory_space<vmem>>, %arg7: memref<1x128xf32, #tpu.memory_space<vmem>>, %arg8: memref<256x8xf32, #tpu.memory_space<vmem>>) attributes {dimension_semantics = [#tpu.dimension_semantics<parallel>], iteration_bounds = array<i64: 2>, scalar_prefetch = 0 : i64, scratch_operands = 0 : i64, tpu.core_type = #tpu.core_type<tc>, window_params = [{transform_indices = @transform_0, window_bounds = array<i64: 256, 3>}, {pipeline_mode = #tpu.pipeline_mode<synchronous>, transform_indices = @transform_1, window_bounds = array<i64: 3, 256>}, {pipeline_mode = #tpu.pipeline_mode<synchronous>, transform_indices = @transform_2, window_bounds = array<i64: 1, 256>}, {pipeline_mode = #tpu.pipeline_mode<synchronous>, transform_indices = @transform_3, window_bounds = array<i64: 7, 256, 256>}, {pipeline_mode = #tpu.pipeline_mode<synchronous>, transform_indices = @transform_4, window_bounds = array<i64: 7, 1, 256>}, {pipeline_mode = #tpu.pipeline_mode<synchronous>, transform_indices = @transform_5, window_bounds = array<i64: 256, 128>}, {pipeline_mode = #tpu.pipeline_mode<synchronous>, transform_indices = @transform_6, window_bounds = array<i64: 1, 128>}, {transform_indices = @transform_7, window_bounds = array<i64: 256, 8>}]} {
    %c0 = arith.constant 0 : index
    %c0_0 = arith.constant 0 : index
    %0 = vector.load %arg1[%c0, %c0_0] : memref<256x3xf32, #tpu.memory_space<vmem>>, vector<256x3xf32>
    %1 = arith.truncf %0 : vector<256x3xf32> to vector<256x3xbf16>
    %c0_1 = arith.constant 0 : index
    %c0_2 = arith.constant 0 : index
    %2 = vector.load %arg2[%c0_1, %c0_2] : memref<3x256xbf16, #tpu.memory_space<vmem>>, vector<3x256xbf16>
    %cst = arith.constant dense<0.000000e+00> : vector<256x256xf32>
    %3 = tpu.matmul %1, %2, %cst {dimension_numbers = #tpu.dot_dimension_numbers<[1], [0], [0], [1], [0, 0, 1, 1], [], []>} : vector<256x3xbf16>, vector<3x256xbf16>, vector<256x256xf32> -> vector<256x256xf32>
    %4 = arith.truncf %3 : vector<256x256xf32> to vector<256x256xbf16>
    %c0_3 = arith.constant 0 : index
    %c0_4 = arith.constant 0 : index
    %5 = vector.load %arg3[%c0_3, %c0_4] : memref<1x256xf32, #tpu.memory_space<vmem>>, vector<1x256xf32>
    %6 = arith.truncf %5 : vector<1x256xf32> to vector<1x256xbf16>
    %7 = vector.broadcast %6 : vector<1x256xbf16> to vector<256x256xbf16>
    %8 = arith.addf %4, %7 : vector<256x256xbf16>
    %cst_5 = arith.constant 0.000000e+00 : bf16
    %9 = vector.broadcast %cst_5 : bf16 to vector<256x256xbf16>
    %10 = arith.maximumf %8, %9 : vector<256x256xbf16>
    %c0_6 = arith.constant 0 : index
    %c0_7 = arith.constant 0 : index
    %c0_8 = arith.constant 0 : index
    %11 = vector.load %arg4[%c0_6, %c0_7, %c0_8] : memref<7x256x256xbf16, #tpu.memory_space<vmem>>, vector<1x256x256xbf16>
    %12 = vector.shape_cast %11 : vector<1x256x256xbf16> to vector<256x256xbf16>
    %cst_9 = arith.constant dense<0.000000e+00> : vector<256x256xf32>
    %13 = tpu.matmul %10, %12, %cst_9 {dimension_numbers = #tpu.dot_dimension_numbers<[1], [0], [0], [1], [0, 0, 1, 1], [], []>} : vector<256x256xbf16>, vector<256x256xbf16>, vector<256x256xf32> -> vector<256x256xf32>
    %14 = arith.truncf %13 : vector<256x256xf32> to vector<256x256xbf16>
    %c0_10 = arith.constant 0 : index
    %c0_11 = arith.constant 0 : index
    %c0_12 = arith.constant 0 : index
    %15 = vector.load %arg5[%c0_10, %c0_11, %c0_12] : memref<7x1x256xbf16, #tpu.memory_space<vmem>>, vector<1x1x256xbf16>
    %16 = vector.shape_cast %15 : vector<1x1x256xbf16> to vector<1x256xbf16>
    %17 = vector.broadcast %16 : vector<1x256xbf16> to vector<256x256xbf16>
    %18 = arith.addf %14, %17 : vector<256x256xbf16>
    %cst_13 = arith.constant 0.000000e+00 : bf16
    %19 = vector.broadcast %cst_13 : bf16 to vector<256x256xbf16>
    %20 = arith.maximumf %18, %19 : vector<256x256xbf16>
    %c1 = arith.constant 1 : index
    %c0_14 = arith.constant 0 : index
    %c0_15 = arith.constant 0 : index
    %21 = vector.load %arg4[%c1, %c0_14, %c0_15] : memref<7x256x256xbf16, #tpu.memory_space<vmem>>, vector<1x256x256xbf16>
    %22 = vector.shape_cast %21 : vector<1x256x256xbf16> to vector<256x256xbf16>
    %cst_16 = arith.constant dense<0.000000e+00> : vector<256x256xf32>
    %23 = tpu.matmul %20, %22, %cst_16 {dimension_numbers = #tpu.dot_dimension_numbers<[1], [0], [0], [1], [0, 0, 1, 1], [], []>} : vector<256x256xbf16>, vector<256x256xbf16>, vector<256x256xf32> -> vector<256x256xf32>
    %24 = arith.truncf %23 : vector<256x256xf32> to vector<256x256xbf16>
    %c1_17 = arith.constant 1 : index
    %c0_18 = arith.constant 0 : index
    %c0_19 = arith.constant 0 : index
    %25 = vector.load %arg5[%c1_17, %c0_18, %c0_19] : memref<7x1x256xbf16, #tpu.memory_space<vmem>>, vector<1x1x256xbf16>
    %26 = vector.shape_cast %25 : vector<1x1x256xbf16> to vector<1x256xbf16>
    %27 = vector.broadcast %26 : vector<1x256xbf16> to vector<256x256xbf16>
    %28 = arith.addf %24, %27 : vector<256x256xbf16>
    %cst_20 = arith.constant 0.000000e+00 : bf16
    %29 = vector.broadcast %cst_20 : bf16 to vector<256x256xbf16>
    %30 = arith.maximumf %28, %29 : vector<256x256xbf16>
    %c2 = arith.constant 2 : index
    %c0_21 = arith.constant 0 : index
    %c0_22 = arith.constant 0 : index
    %31 = vector.load %arg4[%c2, %c0_21, %c0_22] : memref<7x256x256xbf16, #tpu.memory_space<vmem>>, vector<1x256x256xbf16>
    %32 = vector.shape_cast %31 : vector<1x256x256xbf16> to vector<256x256xbf16>
    %cst_23 = arith.constant dense<0.000000e+00> : vector<256x256xf32>
    %33 = tpu.matmul %30, %32, %cst_23 {dimension_numbers = #tpu.dot_dimension_numbers<[1], [0], [0], [1], [0, 0, 1, 1], [], []>} : vector<256x256xbf16>, vector<256x256xbf16>, vector<256x256xf32> -> vector<256x256xf32>
    %34 = arith.truncf %33 : vector<256x256xf32> to vector<256x256xbf16>
    %c2_24 = arith.constant 2 : index
    %c0_25 = arith.constant 0 : index
    %c0_26 = arith.constant 0 : index
    %35 = vector.load %arg5[%c2_24, %c0_25, %c0_26] : memref<7x1x256xbf16, #tpu.memory_space<vmem>>, vector<1x1x256xbf16>
    %36 = vector.shape_cast %35 : vector<1x1x256xbf16> to vector<1x256xbf16>
    %37 = vector.broadcast %36 : vector<1x256xbf16> to vector<256x256xbf16>
    %38 = arith.addf %34, %37 : vector<256x256xbf16>
    %cst_27 = arith.constant 0.000000e+00 : bf16
    %39 = vector.broadcast %cst_27 : bf16 to vector<256x256xbf16>
    %40 = arith.maximumf %38, %39 : vector<256x256xbf16>
    %c3 = arith.constant 3 : index
    %c0_28 = arith.constant 0 : index
    %c0_29 = arith.constant 0 : index
    %41 = vector.load %arg4[%c3, %c0_28, %c0_29] : memref<7x256x256xbf16, #tpu.memory_space<vmem>>, vector<1x256x256xbf16>
    %42 = vector.shape_cast %41 : vector<1x256x256xbf16> to vector<256x256xbf16>
    %cst_30 = arith.constant dense<0.000000e+00> : vector<256x256xf32>
    %43 = tpu.matmul %40, %42, %cst_30 {dimension_numbers = #tpu.dot_dimension_numbers<[1], [0], [0], [1], [0, 0, 1, 1], [], []>} : vector<256x256xbf16>, vector<256x256xbf16>, vector<256x256xf32> -> vector<256x256xf32>
    %44 = arith.truncf %43 : vector<256x256xf32> to vector<256x256xbf16>
    %c3_31 = arith.constant 3 : index
    %c0_32 = arith.constant 0 : index
    %c0_33 = arith.constant 0 : index
    %45 = vector.load %arg5[%c3_31, %c0_32, %c0_33] : memref<7x1x256xbf16, #tpu.memory_space<vmem>>, vector<1x1x256xbf16>
    %46 = vector.shape_cast %45 : vector<1x1x256xbf16> to vector<1x256xbf16>
    %47 = vector.broadcast %46 : vector<1x256xbf16> to vector<256x256xbf16>
    %48 = arith.addf %44, %47 : vector<256x256xbf16>
    %cst_34 = arith.constant 0.000000e+00 : bf16
    %49 = vector.broadcast %cst_34 : bf16 to vector<256x256xbf16>
    %50 = arith.maximumf %48, %49 : vector<256x256xbf16>
    %c4 = arith.constant 4 : index
    %c0_35 = arith.constant 0 : index
    %c0_36 = arith.constant 0 : index
    %51 = vector.load %arg4[%c4, %c0_35, %c0_36] : memref<7x256x256xbf16, #tpu.memory_space<vmem>>, vector<1x256x256xbf16>
    %52 = vector.shape_cast %51 : vector<1x256x256xbf16> to vector<256x256xbf16>
    %cst_37 = arith.constant dense<0.000000e+00> : vector<256x256xf32>
    %53 = tpu.matmul %50, %52, %cst_37 {dimension_numbers = #tpu.dot_dimension_numbers<[1], [0], [0], [1], [0, 0, 1, 1], [], []>} : vector<256x256xbf16>, vector<256x256xbf16>, vector<256x256xf32> -> vector<256x256xf32>
    %54 = arith.truncf %53 : vector<256x256xf32> to vector<256x256xbf16>
    %c4_38 = arith.constant 4 : index
    %c0_39 = arith.constant 0 : index
    %c0_40 = arith.constant 0 : index
    %55 = vector.load %arg5[%c4_38, %c0_39, %c0_40] : memref<7x1x256xbf16, #tpu.memory_space<vmem>>, vector<1x1x256xbf16>
    %56 = vector.shape_cast %55 : vector<1x1x256xbf16> to vector<1x256xbf16>
    %57 = vector.broadcast %56 : vector<1x256xbf16> to vector<256x256xbf16>
    %58 = arith.addf %54, %57 : vector<256x256xbf16>
    %cst_41 = arith.constant 0.000000e+00 : bf16
    %59 = vector.broadcast %cst_41 : bf16 to vector<256x256xbf16>
    %60 = arith.maximumf %58, %59 : vector<256x256xbf16>
    %c5 = arith.constant 5 : index
    %c0_42 = arith.constant 0 : index
    %c0_43 = arith.constant 0 : index
    %61 = vector.load %arg4[%c5, %c0_42, %c0_43] : memref<7x256x256xbf16, #tpu.memory_space<vmem>>, vector<1x256x256xbf16>
    %62 = vector.shape_cast %61 : vector<1x256x256xbf16> to vector<256x256xbf16>
    %cst_44 = arith.constant dense<0.000000e+00> : vector<256x256xf32>
    %63 = tpu.matmul %60, %62, %cst_44 {dimension_numbers = #tpu.dot_dimension_numbers<[1], [0], [0], [1], [0, 0, 1, 1], [], []>} : vector<256x256xbf16>, vector<256x256xbf16>, vector<256x256xf32> -> vector<256x256xf32>
    %64 = arith.truncf %63 : vector<256x256xf32> to vector<256x256xbf16>
    %c5_45 = arith.constant 5 : index
    %c0_46 = arith.constant 0 : index
    %c0_47 = arith.constant 0 : index
    %65 = vector.load %arg5[%c5_45, %c0_46, %c0_47] : memref<7x1x256xbf16, #tpu.memory_space<vmem>>, vector<1x1x256xbf16>
    %66 = vector.shape_cast %65 : vector<1x1x256xbf16> to vector<1x256xbf16>
    %67 = vector.broadcast %66 : vector<1x256xbf16> to vector<256x256xbf16>
    %68 = arith.addf %64, %67 : vector<256x256xbf16>
    %cst_48 = arith.constant 0.000000e+00 : bf16
    %69 = vector.broadcast %cst_48 : bf16 to vector<256x256xbf16>
    %70 = arith.maximumf %68, %69 : vector<256x256xbf16>
    %c6 = arith.constant 6 : index
    %c0_49 = arith.constant 0 : index
    %c0_50 = arith.constant 0 : index
    %71 = vector.load %arg4[%c6, %c0_49, %c0_50] : memref<7x256x256xbf16, #tpu.memory_space<vmem>>, vector<1x256x256xbf16>
    %72 = vector.shape_cast %71 : vector<1x256x256xbf16> to vector<256x256xbf16>
    %cst_51 = arith.constant dense<0.000000e+00> : vector<256x256xf32>
    %73 = tpu.matmul %70, %72, %cst_51 {dimension_numbers = #tpu.dot_dimension_numbers<[1], [0], [0], [1], [0, 0, 1, 1], [], []>} : vector<256x256xbf16>, vector<256x256xbf16>, vector<256x256xf32> -> vector<256x256xf32>
    %74 = arith.truncf %73 : vector<256x256xf32> to vector<256x256xbf16>
    %c6_52 = arith.constant 6 : index
    %c0_53 = arith.constant 0 : index
    %c0_54 = arith.constant 0 : index
    %75 = vector.load %arg5[%c6_52, %c0_53, %c0_54] : memref<7x1x256xbf16, #tpu.memory_space<vmem>>, vector<1x1x256xbf16>
    %76 = vector.shape_cast %75 : vector<1x1x256xbf16> to vector<1x256xbf16>
    %77 = vector.broadcast %76 : vector<1x256xbf16> to vector<256x256xbf16>
    %78 = arith.addf %74, %77 : vector<256x256xbf16>
    %cst_55 = arith.constant 0.000000e+00 : bf16
    %79 = vector.broadcast %cst_55 : bf16 to vector<256x256xbf16>
    %80 = arith.maximumf %78, %79 : vector<256x256xbf16>
    %c0_56 = arith.constant 0 : index
    %c0_57 = arith.constant 0 : index
    %81 = vector.load %arg6[%c0_56, %c0_57] : memref<256x128xbf16, #tpu.memory_space<vmem>>, vector<256x128xbf16>
    %cst_58 = arith.constant dense<0.000000e+00> : vector<256x128xf32>
    %82 = tpu.matmul %80, %81, %cst_58 {dimension_numbers = #tpu.dot_dimension_numbers<[1], [0], [0], [1], [0, 0, 1, 1], [], []>} : vector<256x256xbf16>, vector<256x128xbf16>, vector<256x128xf32> -> vector<256x128xf32>
    %c0_59 = arith.constant 0 : index
    %c0_60 = arith.constant 0 : index
    %83 = vector.load %arg7[%c0_59, %c0_60] : memref<1x128xf32, #tpu.memory_space<vmem>>, vector<1x128xf32>
    %84 = vector.broadcast %83 : vector<1x128xf32> to vector<256x128xf32>
    %85 = arith.addf %82, %84 : vector<256x128xf32>
    %86 = vector.extract_strided_slice %85 {offsets = [0, 0], sizes = [256, 8], strides = [1, 1]} : vector<256x128xf32> to vector<256x8xf32>
    %c0_61 = arith.constant 0 : index
    %c0_62 = arith.constant 0 : index
    %87 = vector.load %arg8[%c0_61, %c0_62] : memref<256x8xf32, #tpu.memory_space<vmem>>, vector<256x8xf32>
    tpu.vector_store %arg8[%c0_61, %c0_62], %86 {strides = array<i32>} : memref<256x8xf32, #tpu.memory_space<vmem>>, vector<256x8xf32>,
    return
  }
  func.func @transform_0(%arg0: i32) -> (i32, i32) {
    %c0_i32 = arith.constant 0 : i32
    %c0_i32_0 = arith.constant 0 : i32
    return %arg0, %c0_i32 : i32, i32
  }
  func.func @transform_1(%arg0: i32) -> (i32, i32) {
    %c0_i32 = arith.constant 0 : i32
    %c0_i32_0 = arith.constant 0 : i32
    %c0_i32_1 = arith.constant 0 : i32
    return %c0_i32, %c0_i32_0 : i32, i32
  }
  func.func @transform_2(%arg0: i32) -> (i32, i32) {
    %c0_i32 = arith.constant 0 : i32
    %c0_i32_0 = arith.constant 0 : i32
    %c0_i32_1 = arith.constant 0 : i32
    return %c0_i32, %c0_i32_0 : i32, i32
  }
  func.func @transform_3(%arg0: i32) -> (i32, i32, i32) {
    %c0_i32 = arith.constant 0 : i32
    %c0_i32_0 = arith.constant 0 : i32
    %c0_i32_1 = arith.constant 0 : i32
    %c0_i32_2 = arith.constant 0 : i32
    return %c0_i32, %c0_i32_0, %c0_i32_1 : i32, i32, i32
  }
  func.func @transform_4(%arg0: i32) -> (i32, i32, i32) {
    %c0_i32 = arith.constant 0 : i32
    %c0_i32_0 = arith.constant 0 : i32
    %c0_i32_1 = arith.constant 0 : i32
    %c0_i32_2 = arith.constant 0 : i32
    return %c0_i32, %c0_i32_0, %c0_i32_1 : i32, i32, i32
  }
  func.func @transform_5(%arg0: i32) -> (i32, i32) {
    %c0_i32 = arith.constant 0 : i32
    %c0_i32_0 = arith.constant 0 : i32
    %c0_i32_1 = arith.constant 0 : i32
    return %c0_i32, %c0_i32_0 : i32, i32
  }
  func.func @transform_6(%arg0: i32) -> (i32, i32) {
    %c0_i32 = arith.constant 0 : i32
    %c0_i32_0 = arith.constant 0 : i32
    %c0_i32_1 = arith.constant 0 : i32
    return %c0_i32, %c0_i32_0 : i32, i32
  }
  func.func @transform_7(%arg0: i32) -> (i32, i32) {
    %c0_i32 = arith.constant 0 : i32
    %c0_i32_0 = arith.constant 0 : i32
    return %arg0, %c0_i32 : i32, i32
  }
}

</mosaic_0001>

<llo_original>
// kernel: fcn_forward.1
$region0: #{fcn_forward.1}
  #allocation0 [shape = 'u32[]', space=smem, size = 0x4, offset = 0x4, fixed_abs, tag = 'smem constant byte address 0x4 - core index']
  #allocation1 [shape = 'u32[72,128]{1,0:T(1,128)}', space=vmem, size = 0x9000, scoped, tag = 'internal scratch']
  %s0 = inlined_call_operand.vmem [shape: f32[512,3], index: 0, kind: input, shape index: {}]
  %s1 = inlined_call_operand.vmem [shape: bf16[3,256], index: 1, kind: input, shape index: {}]
  %s2 = inlined_call_operand.vmem [shape: f32[1,256], index: 2, kind: input, shape index: {}]
  %s3 = inlined_call_operand.hbm [shape: bf16[7,256,256], index: 3, kind: input, shape index: {}]
  %s4 = inlined_call_operand.vmem [shape: bf16[7,1,256], index: 4, kind: input, shape index: {}]
  %s5 = inlined_call_operand.vmem [shape: bf16[256,128], index: 5, kind: input, shape index: {}]
  %s6 = inlined_call_operand.vmem [shape: f32[1,128], index: 6, kind: input, shape index: {}]
  %s7 = inlined_call_operand.vmem [shape: f32[512,8], index: 7, kind: output, shape index: {}]
  %s8 = sld [smem:[#allocation0]]
  $region65: #{fcn_forward.1} parent=0
    _
  %s10 = ssub.s32 1, %s8
  %s11 = scalar_select 0, %s10, %s8
  $region1: #{fcn_forward.1} parent=0
    #allocation2 [shape = 'u8[917504]{0}', space=vmem, size = 0xe0000, scoped, tag = 'input window, operand 3, single buffered']
    #allocation3 [shape = 's32[2]{0}', space=sflag, size = 0x8, scoped, tag = 'scoped memory for fcn_forward.1']
    %12 = vsyncpa [#allocation3], 0
    loop: start=0, step=1, limit=4
    $region2: #{fcn_forward.1} parent=1 // loop_pre_header
      _
    $region3: #{fcn_forward.1} parent=1 // loop_header
      %s14 = sphi 0, %s18
      %p15 = scmp.ge.s32.totalorder %s14, 4
      %s24 = sphi 0, %s26
      %s27 = sphi 0, %s24
      %s28 = sphi 0, %s27
      %s44 = sphi 0, %s28
      %s48 = sphi 0, %s48
      %s50 = sphi 0, %s48
      %s51 = sphi 0, %s50
      %s65 = sphi 0, %s51
      %s69 = sphi 0, %s69
      %s71 = sphi 0, %s69
      %s72 = sphi 0, %s71
      %s86 = sphi 0, %s72
      %s90 = sphi 0, %s90
      %s92 = sphi 0, %s90
      %s93 = sphi 0, %s92
      %s107 = sphi 0, %s93
      %s111 = sphi 0, %s111
      %s113 = sphi 0, %s111
      %s114 = sphi 0, %s113
      %s128 = sphi 0, %s114
      %s132 = sphi 0, %s132
      %s134 = sphi 0, %s132
      %s135 = sphi 0, %s134
      %s149 = sphi 0, %s135
      %s153 = sphi 0, %s153
      %s155 = sphi 0, %s153
      %s156 = sphi 0, %s155
      %s170 = sphi 0, %s156
      %s176 = sphi 0, %s178
      %s179 = sphi 0, %s176
      %s180 = sphi 0, %s179
      %s196 = sphi 0, %s180
    $region4: #{fcn_forward.1} parent=1 // loop_header_branch
      %17 = sbr.rel (%p15) target = $region8
    $region5: #{fcn_forward.1} parent=1 // loop_body
      %s19 = ssub.s32 %s14, 1
      %s20 = ssub.s32 %s14, 2
      %s21 = sadd.s32 %s14, 1
      %s22 = ssub.s32 %s14, %s21
      %p23 = scmp.eq.s32.totalorder %s22, 0
      %s25 = sadd.s32 %s24, 1
      %s26 = scalar_select %p23, %s24, %s25
      %p29 = pneg %p23
      %p30 = scmp.eq.s32.totalorder %s14, 1
      %p31 = por %p29, %p30
      %p32 = scmp.ne.s32.totalorder %s24, %s27
      %p33 = scmp.eq.s32.totalorder %s14, 0
      %p34 = por %p32, %p33
      %p35 = scmp.ne.s32.totalorder %s24, %s27
      %p36 = scmp.eq.s32.totalorder %s19, 1
      %p37 = por %p35, %p36
      %p38 = scmp.ne.s32.totalorder %s27, %s28
      %p39 = scmp.eq.s32.totalorder %s19, 0
      %p40 = por %p38, %p39
      %p41 = scmp.ne.s32.totalorder %s27, %s28
      %p42 = scmp.eq.s32.totalorder %s20, 1
      %p43 = por %p41, %p42
      %p45 = scmp.ne.s32.totalorder %s28, %s44
      %p46 = scmp.eq.s32.totalorder %s20, 0
      %p47 = por %p45, %p46
      %s49 = sadd.s32 %s48, 1
      %p52 = scmp.eq.s32.totalorder %s14, 1
      %p53 = scmp.ne.s32.totalorder %s48, %s50
      %p54 = scmp.eq.s32.totalorder %s14, 0
      %p55 = por %p53, %p54
      %p56 = scmp.ne.s32.totalorder %s48, %s50
      %p57 = scmp.eq.s32.totalorder %s19, 1
      %p58 = por %p56, %p57
      %p59 = scmp.ne.s32.totalorder %s50, %s51
      %p60 = scmp.eq.s32.totalorder %s19, 0
      %p61 = por %p59, %p60
      %p62 = scmp.ne.s32.totalorder %s50, %s51
      %p63 = scmp.eq.s32.totalorder %s20, 1
      %p64 = por %p62, %p63
      %p66 = scmp.ne.s32.totalorder %s51, %s65
      %p67 = scmp.eq.s32.totalorder %s20, 0
      %p68 = por %p66, %p67
      %s70 = sadd.s32 %s69, 1
      %p73 = scmp.eq.s32.totalorder %s14, 1
      %p74 = scmp.ne.s32.totalorder %s69, %s71
      %p75 = scmp.eq.s32.totalorder %s14, 0
      %p76 = por %p74, %p75
      %p77 = scmp.ne.s32.totalorder %s69, %s71
      %p78 = scmp.eq.s32.totalorder %s19, 1
      %p79 = por %p77, %p78
      %p80 = scmp.ne.s32.totalorder %s71, %s72
      %p81 = scmp.eq.s32.totalorder %s19, 0
      %p82 = por %p80, %p81
      %p83 = scmp.ne.s32.totalorder %s71, %s72
      %p84 = scmp.eq.s32.totalorder %s20, 1
      %p85 = por %p83, %p84
      %p87 = scmp.ne.s32.totalorder %s72, %s86
      %p88 = scmp.eq.s32.totalorder %s20, 0
      %p89 = por %p87, %p88
      %s91 = sadd.s32 %s90, 1
      %p94 = scmp.eq.s32.totalorder %s14, 1
      %p95 = scmp.ne.s32.totalorder %s90, %s92
      %p96 = scmp.eq.s32.totalorder %s14, 0
      %p97 = por %p95, %p96
      %p98 = scmp.ne.s32.totalorder %s90, %s92
      %p99 = scmp.eq.s32.totalorder %s19, 1
      %p100 = por %p98, %p99
      %p101 = scmp.ne.s32.totalorder %s92, %s93
      %p102 = scmp.eq.s32.totalorder %s19, 0
      %p103 = por %p101, %p102
      %p104 = scmp.ne.s32.totalorder %s92, %s93
      %p105 = scmp.eq.s32.totalorder %s20, 1
      %p106 = por %p104, %p105
      %p108 = scmp.ne.s32.totalorder %s93, %s107
      %p109 = scmp.eq.s32.totalorder %s20, 0
      %p110 = por %p108, %p109
      %s112 = sadd.s32 %s111, 1
      %p115 = scmp.eq.s32.totalorder %s14, 1
      %p116 = scmp.ne.s32.totalorder %s111, %s113
      %p117 = scmp.eq.s32.totalorder %s14, 0
      %p118 = por %p116, %p117
      %p119 = scmp.ne.s32.totalorder %s111, %s113
      %p120 = scmp.eq.s32.totalorder %s19, 1
      %p121 = por %p119, %p120
      %p122 = scmp.ne.s32.totalorder %s113, %s114
      %p123 = scmp.eq.s32.totalorder %s19, 0
      %p124 = por %p122, %p123
      %p125 = scmp.ne.s32.totalorder %s113, %s114
      %p126 = scmp.eq.s32.totalorder %s20, 1
      %p127 = por %p125, %p126
      %p129 = scmp.ne.s32.totalorder %s114, %s128
      %p130 = scmp.eq.s32.totalorder %s20, 0
      %p131 = por %p129, %p130
      %s133 = sadd.s32 %s132, 1
      %p136 = scmp.eq.s32.totalorder %s14, 1
      %p137 = scmp.ne.s32.totalorder %s132, %s134
      %p138 = scmp.eq.s32.totalorder %s14, 0
      %p139 = por %p137, %p138
      %p140 = scmp.ne.s32.totalorder %s132, %s134
      %p141 = scmp.eq.s32.totalorder %s19, 1
      %p142 = por %p140, %p141
      %p143 = scmp.ne.s32.totalorder %s134, %s135
      %p144 = scmp.eq.s32.totalorder %s19, 0
      %p145 = por %p143, %p144
      %p146 = scmp.ne.s32.totalorder %s134, %s135
      %p147 = scmp.eq.s32.totalorder %s20, 1
      %p148 = por %p146, %p147
      %p150 = scmp.ne.s32.totalorder %s135, %s149
      %p151 = scmp.eq.s32.totalorder %s20, 0
      %p152 = por %p150, %p151
      %s154 = sadd.s32 %s153, 1
      %p157 = scmp.eq.s32.totalorder %s14, 1
      %p158 = scmp.ne.s32.totalorder %s153, %s155
      %p159 = scmp.eq.s32.totalorder %s14, 0
      %p160 = por %p158, %p159
      %p161 = scmp.ne.s32.totalorder %s153, %s155
      %p162 = scmp.eq.s32.totalorder %s19, 1
      %p163 = por %p161, %p162
      %p164 = scmp.ne.s32.totalorder %s155, %s156
      %p165 = scmp.eq.s32.totalorder %s19, 0
      %p166 = por %p164, %p165
      %p167 = scmp.ne.s32.totalorder %s155, %s156
      %p168 = scmp.eq.s32.totalorder %s20, 1
      %p169 = por %p167, %p168
      %p171 = scmp.ne.s32.totalorder %s156, %s170
      %p172 = scmp.eq.s32.totalorder %s20, 0
      %p173 = por %p171, %p172
      %s174 = ssub.s32 %s14, %s21
      %p175 = scmp.eq.s32.totalorder %s174, 0
      %s177 = sadd.s32 %s176, 1
      %s178 = scalar_select %p175, %s176, %s177
      %p181 = pneg %p175
      %p182 = scmp.eq.s32.totalorder %s14, 1
      %p183 = por %p181, %p182
      %p184 = scmp.ne.s32.totalorder %s176, %s179
      %p185 = scmp.eq.s32.totalorder %s14, 0
      %p186 = por %p184, %p185
      %p187 = scmp.ne.s32.totalorder %s176, %s179
      %p188 = scmp.eq.s32.totalorder %s19, 1
      %p189 = por %p187, %p188
      %p190 = scmp.ne.s32.totalorder %s179, %s180
      %p191 = scmp.eq.s32.totalorder %s19, 0
      %p192 = por %p190, %p191
      %p193 = scmp.ne.s32.totalorder %s179, %s180
      %p194 = scmp.eq.s32.totalorder %s20, 1
      %p195 = por %p193, %p194
      %p197 = scmp.ne.s32.totalorder %s180, %s196
      %p198 = scmp.eq.s32.totalorder %s20, 0
      %p199 = por %p197, %p198
      %p200 = scmp.le.s32.totalorder 1, %s14
      %p201 = scmp.lt.s32.totalorder %s14, 3
      %p202 = pnand %p200, %p201
      %p203 = pneg %p202
      // Predicated region
      $region9: #{fcn_forward.1} parent=5 // pred_check
        _
      $region10: #{fcn_forward.1} parent=5 // pred_check_branch
        %205 = sbr.rel (%p202) target = $region12
      $region11: #{fcn_forward.1} parent=5 // pred_region
        %s206 = ssub.s32 %s14, 1
        // Predicated region
        $region13: #{fcn_forward.1} parent=11 // pred_check
          %p207 = pneg %p61
        $region14: #{fcn_forward.1} parent=11 // pred_check_branch
          %209 = sbr.rel (%p207) target = $region16
        $region15: #{fcn_forward.1} parent=11 // pred_region
          _
        $region16: #{fcn_forward.1} parent=11 // pred_fallthru
          _
        // Predicated region
        $region17: #{fcn_forward.1} parent=11 // pred_check
          %p210 = pneg %p82
        $region18: #{fcn_forward.1} parent=11 // pred_check_branch
          %212 = sbr.rel (%p210) target = $region20
        $region19: #{fcn_forward.1} parent=11 // pred_region
          _
        $region20: #{fcn_forward.1} parent=11 // pred_fallthru
          _
        // Predicated region
        $region21: #{fcn_forward.1} parent=11 // pred_check
          %p213 = pneg %p103
        $region22: #{fcn_forward.1} parent=11 // pred_check_branch
          %215 = sbr.rel (%p213) target = $region24
        $region23: #{fcn_forward.1} parent=11 // pred_region
          %217 = vsyncadd [#allocation3], 0
          %s218 = sshll.u32 %s3, 4
          %s219 = int_to_ptr.hbm [resolvable:$true] %s218
          %s220 = sshll.u32 [#allocation2], 4
          %s221 = int_to_ptr.vmem [resolvable:$true] %s220
          %226 = dma.hbm_to_vmem [thread:$0]  %s219, 28672, %s221, [#allocation3], 128, 128, 8
        $region24: #{fcn_forward.1} parent=11 // pred_fallthru
          _
        // Predicated region
        $region25: #{fcn_forward.1} parent=11 // pred_check
          %p227 = pneg %p124
        $region26: #{fcn_forward.1} parent=11 // pred_check_branch
          %229 = sbr.rel (%p227) target = $region28
        $region27: #{fcn_forward.1} parent=11 // pred_region
          _
        $region28: #{fcn_forward.1} parent=11 // pred_fallthru
          _
        // Predicated region
        $region29: #{fcn_forward.1} parent=11 // pred_check
          %p230 = pneg %p145
        $region30: #{fcn_forward.1} parent=11 // pred_check_branch
          %232 = sbr.rel (%p230) target = $region32
        $region31: #{fcn_forward.1} parent=11 // pred_region
          _
        $region32: #{fcn_forward.1} parent=11 // pred_fallthru
          _
        // Predicated region
        $region33: #{fcn_forward.1} parent=11 // pred_check
          %p233 = pneg %p166
        $region34: #{fcn_forward.1} parent=11 // pred_check_branch
          %235 = sbr.rel (%p233) target = $region36
        $region35: #{fcn_forward.1} parent=11 // pred_region
          _
        $region36: #{fcn_forward.1} parent=11 // pred_fallthru
          _
      $region12: #{fcn_forward.1} parent=5 // pred_fallthru
        _
      %p236 = scmp.lt.s32.totalorder %s14, 2
      // Predicated region
      $region37: #{fcn_forward.1} parent=5 // pred_check
        %p237 = pneg %p236
      $region38: #{fcn_forward.1} parent=5 // pred_check_branch
        %239 = sbr.rel (%p237) target = $region40
      $region39: #{fcn_forward.1} parent=5 // pred_region
        // Predicated region
        $region41: #{fcn_forward.1} parent=39 // pred_check
          %p240 = pneg %p34
        $region42: #{fcn_forward.1} parent=39 // pred_check_branch
          %242 = sbr.rel (%p240) target = $region44
        $region43: #{fcn_forward.1} parent=39 // pred_region
          %s243 = smul.u32 32, %s14
          %p244 = scmp.lt.s32.totalorder %s243, 63
          %s245 = scalar_select %p244, %s243, 63
          %s246 = smul.addr %s245, 8
          %s247 = scalar_lea.vmem %s0, %s246
          %s248 = smul.u32 32, %s14
        $region44: #{fcn_forward.1} parent=39 // pred_fallthru
          _
      $region40: #{fcn_forward.1} parent=5 // pred_fallthru
        _
      %p249 = scmp.le.s32.totalorder 1, %s14
      %p250 = scmp.lt.s32.totalorder %s14, 3
      %p251 = pnand %p249, %p250
      %p252 = pneg %p251
      // Predicated region
      $region45: #{fcn_forward.1} parent=5 // pred_check
        _
      $region46: #{fcn_forward.1} parent=5 // pred_check_branch
        %254 = sbr.rel (%p251) target = $region48
      $region47: #{fcn_forward.1} parent=5 // pred_region
        %s255 = ssub.s32 %s14, 1
        // Predicated region
        $region49: #{fcn_forward.1} parent=47 // pred_check
          %p256 = pneg %p103
        $region50: #{fcn_forward.1} parent=47 // pred_check_branch
          %258 = sbr.rel (%p256) target = $region52
        $region51: #{fcn_forward.1} parent=47 // pred_region
          %260 = dma.done [#allocation3], 28672
        $region52: #{fcn_forward.1} parent=47 // pred_fallthru
          _
        %s261 = smul.u32 32, %s19
        %p262 = scmp.lt.s32.totalorder %s261, 63
        %s263 = scalar_select %p262, %s261, 63
        %s264 = smul.addr %s263, 8
        %s265 = scalar_lea.vmem %s0, %s264
        %p266 = pneg %p40
        %p267 = pneg %p37
        %p268 = pneg %p61
        %p269 = pneg %p58
        %p270 = pneg %p82
        %p271 = pneg %p79
        %p272 = pneg %p103
        %p273 = pneg %p100
        %p274 = pneg %p124
        %p275 = pneg %p121
        %p276 = pneg %p145
        %p277 = pneg %p142
        %p278 = pneg %p166
        %p279 = pneg %p163
        %p280 = pneg %p192
        %p281 = pneg %p189
        %s282 = smul.u32 32, %s19
        %p283 = scmp.lt.s32.totalorder %s282, 63
        %s284 = scalar_select %p283, %s282, 63
        %s285 = smul.addr %s284, 8
        %s286 = scalar_lea.vmem %s7, %s285
        %s287 = smul.u32 32, %s19
        %p288 = scmp.lt.s32.totalorder %s287, 63
        %s289 = scalar_select %p288, %s287, 63
        %s290 = smul.addr %s289, 8
        %s291 = scalar_lea.vmem %s0, %s290
        %s292 = smul.u32 32, %s19
        %s293 = smul.u32 32, %s19
        %p294 = scmp.lt.s32.totalorder %s293, 63
        %s295 = scalar_select %p294, %s293, 63
        %s296 = smul.addr %s295, 8
        %s297 = scalar_lea.vmem %s7, %s296
        %s298 = smul.u32 32, %s19
        %v300 = vld [vmem:[%s291] sm:$0xff]
        %v301 = vld [vmem:[%s291 + $0x8] sm:$0xff]
        %v302 = vld [vmem:[%s291 + $0x10] sm:$0xff]
        %v303 = vld [vmem:[%s291 + $0x18] sm:$0xff]
        %v304 = vld [vmem:[%s291 + $0x20] sm:$0xff]
        %v305 = vld [vmem:[%s291 + $0x28] sm:$0xff]
        %v306 = vld [vmem:[%s291 + $0x30] sm:$0xff]
        %v307 = vld [vmem:[%s291 + $0x38] sm:$0xff]
        %v308 = vld [vmem:[%s291 + $0x40] sm:$0xff]
        %v309 = vld [vmem:[%s291 + $0x48] sm:$0xff]
        %v310 = vld [vmem:[%s291 + $0x50] sm:$0xff]
        %v311 = vld [vmem:[%s291 + $0x58] sm:$0xff]
        %v312 = vld [vmem:[%s291 + $0x60] sm:$0xff]
        %v313 = vld [vmem:[%s291 + $0x68] sm:$0xff]
        %v314 = vld [vmem:[%s291 + $0x70] sm:$0xff]
        %v315 = vld [vmem:[%s291 + $0x78] sm:$0xff]
        %v316 = vld [vmem:[%s291 + $0x80] sm:$0xff]
        %v317 = vld [vmem:[%s291 + $0x88] sm:$0xff]
        %v318 = vld [vmem:[%s291 + $0x90] sm:$0xff]
        %v319 = vld [vmem:[%s291 + $0x98] sm:$0xff]
        %v320 = vld [vmem:[%s291 + $0xa0] sm:$0xff]
        %v321 = vld [vmem:[%s291 + $0xa8] sm:$0xff]
        %v322 = vld [vmem:[%s291 + $0xb0] sm:$0xff]
        %v323 = vld [vmem:[%s291 + $0xb8] sm:$0xff]
        %v324 = vld [vmem:[%s291 + $0xc0] sm:$0xff]
        %v325 = vld [vmem:[%s291 + $0xc8] sm:$0xff]
        %v326 = vld [vmem:[%s291 + $0xd0] sm:$0xff]
        %v327 = vld [vmem:[%s291 + $0xd8] sm:$0xff]
        %v328 = vld [vmem:[%s291 + $0xe0] sm:$0xff]
        %v329 = vld [vmem:[%s291 + $0xe8] sm:$0xff]
        %v330 = vld [vmem:[%s291 + $0xf0] sm:$0xff]
        %v331 = vld [vmem:[%s291 + $0xf8] sm:$0xff]
        %v332 = vpack.c.bf16 %v301, %v300
        %v333 = vpack.c.bf16 %v303, %v302
        %v334 = vpack.c.bf16 %v305, %v304
        %v335 = vpack.c.bf16 %v307, %v306
        %v336 = vpack.c.bf16 %v309, %v308
        %v337 = vpack.c.bf16 %v311, %v310
        %v338 = vpack.c.bf16 %v313, %v312
        %v339 = vpack.c.bf16 %v315, %v314
        %v340 = vpack.c.bf16 %v317, %v316
        %v341 = vpack.c.bf16 %v319, %v318
        %v342 = vpack.c.bf16 %v321, %v320
        %v343 = vpack.c.bf16 %v323, %v322
        %v344 = vpack.c.bf16 %v325, %v324
        %v345 = vpack.c.bf16 %v327, %v326
        %v346 = vpack.c.bf16 %v329, %v328
        %v347 = vpack.c.bf16 %v331, %v330
        %v348 = vld [vmem:[%s1] sm:$0xf]
        %350 = vst [vmem:[#allocation1] ss:$4 sm:$0xff] %v348
        %v351 = vld.sshfl [vmem:[#allocation1] sm:$0xff pattern:$0x73625140]
        %v352 = vld.sshfl [vmem:[#allocation1 + $0x8] sm:$0xff pattern:$0x73625140]
        %vm353 = vcmask 23552
        %v355 = vsel %vm353, %v332, 0
        %v358 = vsel %vm353, %v333, 0
        %v361 = vsel %vm353, %v334, 0
        %v364 = vsel %vm353, %v335, 0
        %v367 = vsel %vm353, %v336, 0
        %v370 = vsel %vm353, %v337, 0
        %v373 = vsel %vm353, %v338, 0
        %v376 = vsel %vm353, %v339, 0
        %v379 = vsel %vm353, %v340, 0
        %v382 = vsel %vm353, %v341, 0
        %v385 = vsel %vm353, %v342, 0
        %v388 = vsel %vm353, %v343, 0
        %v391 = vsel %vm353, %v344, 0
        %v394 = vsel %vm353, %v345, 0
        %v397 = vsel %vm353, %v346, 0
        %v400 = vsel %vm353, %v347, 0
        %vm402 = vcmask 1040384
        %vm403 = vcmask 1041408
        %v404 = vsel %vm402, 4294967295, 65535
        %v405 = vsel %vm403, %v404, 0
        %v406 = vand.u32 %v351, %v405
        %v408 = vand.u32 %v352, %v405
        %410 = vmatpush.bf16.msra.mxu0 0
        %411 = vmatpush.bf16.msra.mxu0 0
        %412 = vmatpush.bf16.msra.mxu0 0
        %413 = vmatpush.bf16.msra.mxu0 0
        %414 = vmatpush.bf16.msra.mxu0 0
        %415 = vmatpush.bf16.msra.mxu0 0
        %416 = vmatpush.bf16.msra.mxu0 0
        %417 = vmatpush.bf16.msra.mxu0 %v406
        %418 = vmatmul.bf16.gmra.mxu0 %v355
        %v419 = vpop.f32.mrf.mxu0
        %v420 = vadd.f32 0.0, %v419
        %v421 = vpop.f32.mrf.mxu0
        %v422 = vadd.f32 0.0, %v421
        %423 = vmatmul.bf16.gmra.mxu0 %v358
        %v424 = vpop.f32.mrf.mxu0
        %v425 = vadd.f32 0.0, %v424
        %v426 = vpop.f32.mrf.mxu0
        %v427 = vadd.f32 0.0, %v426
        %428 = vmatmul.bf16.gmra.mxu0 %v361
        %v429 = vpop.f32.mrf.mxu0
        %v430 = vadd.f32 0.0, %v429
        %v431 = vpop.f32.mrf.mxu0
        %v432 = vadd.f32 0.0, %v431
        %433 = vmatmul.bf16.gmra.mxu0 %v364
        %v434 = vpop.f32.mrf.mxu0
        %v435 = vadd.f32 0.0, %v434
        %v436 = vpop.f32.mrf.mxu0
        %v437 = vadd.f32 0.0, %v436
        %438 = vmatmul.bf16.gmra.mxu0 %v367
        %v439 = vpop.f32.mrf.mxu0
        %v440 = vadd.f32 0.0, %v439
        %v441 = vpop.f32.mrf.mxu0
        %v442 = vadd.f32 0.0, %v441
        %443 = vmatmul.bf16.gmra.mxu0 %v370
        %v444 = vpop.f32.mrf.mxu0
        %v445 = vadd.f32 0.0, %v444
        %v446 = vpop.f32.mrf.mxu0
        %v447 = vadd.f32 0.0, %v446
        %448 = vmatmul.bf16.gmra.mxu0 %v373
        %v449 = vpop.f32.mrf.mxu0
        %v450 = vadd.f32 0.0, %v449
        %v451 = vpop.f32.mrf.mxu0
        %v452 = vadd.f32 0.0, %v451
        %453 = vmatmul.bf16.gmra.mxu0 %v376
        %v454 = vpop.f32.mrf.mxu0
        %v455 = vadd.f32 0.0, %v454
        %v456 = vpop.f32.mrf.mxu0
        %v457 = vadd.f32 0.0, %v456
        %458 = vmatmul.bf16.gmra.mxu0 %v379
        %v459 = vpop.f32.mrf.mxu0
        %v460 = vadd.f32 0.0, %v459
        %v461 = vpop.f32.mrf.mxu0
        %v462 = vadd.f32 0.0, %v461
        %463 = vmatmul.bf16.gmra.mxu0 %v382
        %v464 = vpop.f32.mrf.mxu0
        %v465 = vadd.f32 0.0, %v464
        %v466 = vpop.f32.mrf.mxu0
        %v467 = vadd.f32 0.0, %v466
        %468 = vmatmul.bf16.gmra.mxu0 %v385
        %v469 = vpop.f32.mrf.mxu0
        %v470 = vadd.f32 0.0, %v469
        %v471 = vpop.f32.mrf.mxu0
        %v472 = vadd.f32 0.0, %v471
        %473 = vmatmul.bf16.gmra.mxu0 %v388
        %v474 = vpop.f32.mrf.mxu0
        %v475 = vadd.f32 0.0, %v474
        %v476 = vpop.f32.mrf.mxu0
        %v477 = vadd.f32 0.0, %v476
        %478 = vmatmul.bf16.gmra.mxu0 %v391
        %v479 = vpop.f32.mrf.mxu0
        %v480 = vadd.f32 0.0, %v479
        %v481 = vpop.f32.mrf.mxu0
        %v482 = vadd.f32 0.0, %v481
        %483 = vmatmul.bf16.gmra.mxu0 %v394
        %v484 = vpop.f32.mrf.mxu0
        %v485 = vadd.f32 0.0, %v484
        %v486 = vpop.f32.mrf.mxu0
        %v487 = vadd.f32 0.0, %v486
        %488 = vmatmul.bf16.gmra.mxu0 %v397
        %v489 = vpop.f32.mrf.mxu0
        %v490 = vadd.f32 0.0, %v489
        %v491 = vpop.f32.mrf.mxu0
        %v492 = vadd.f32 0.0, %v491
        %493 = vmatmul.bf16.gmra.mxu0 %v400
        %v494 = vpop.f32.mrf.mxu0
        %v495 = vadd.f32 0.0, %v494
        %v496 = vpop.f32.mrf.mxu0
        %v497 = vadd.f32 0.0, %v496
        %498 = vdwg.mxu0
        %499 = vmatpush.bf16.msra.mxu0 0
        %500 = vmatpush.bf16.msra.mxu0 0
        %501 = vmatpush.bf16.msra.mxu0 0
        %502 = vmatpush.bf16.msra.mxu0 0
        %503 = vmatpush.bf16.msra.mxu0 0
        %504 = vmatpush.bf16.msra.mxu0 0
        %505 = vmatpush.bf16.msra.mxu0 0
        %506 = vmatpush.bf16.msra.mxu0 %v408
        %507 = vmatmul.bf16.gmra.mxu0 %v355
        %v508 = vpop.f32.mrf.mxu0
        %v509 = vadd.f32 0.0, %v508
        %v510 = vpop.f32.mrf.mxu0
        %v511 = vadd.f32 0.0, %v510
        %512 = vmatmul.bf16.gmra.mxu0 %v358
        %v513 = vpop.f32.mrf.mxu0
        %v514 = vadd.f32 0.0, %v513
        %v515 = vpop.f32.mrf.mxu0
        %v516 = vadd.f32 0.0, %v515
        %517 = vmatmul.bf16.gmra.mxu0 %v361
        %v518 = vpop.f32.mrf.mxu0
        %v519 = vadd.f32 0.0, %v518
        %v520 = vpop.f32.mrf.mxu0
        %v521 = vadd.f32 0.0, %v520
        %522 = vmatmul.bf16.gmra.mxu0 %v364
        %v523 = vpop.f32.mrf.mxu0
        %v524 = vadd.f32 0.0, %v523
        %v525 = vpop.f32.mrf.mxu0
        %v526 = vadd.f32 0.0, %v525
        %527 = vmatmul.bf16.gmra.mxu0 %v367
        %v528 = vpop.f32.mrf.mxu0
        %v529 = vadd.f32 0.0, %v528
        %v530 = vpop.f32.mrf.mxu0
        %v531 = vadd.f32 0.0, %v530
        %532 = vmatmul.bf16.gmra.mxu0 %v370
        %v533 = vpop.f32.mrf.mxu0
        %v534 = vadd.f32 0.0, %v533
        %v535 = vpop.f32.mrf.mxu0
        %v536 = vadd.f32 0.0, %v535
        %537 = vmatmul.bf16.gmra.mxu0 %v373
        %v538 = vpop.f32.mrf.mxu0
        %v539 = vadd.f32 0.0, %v538
        %v540 = vpop.f32.mrf.mxu0
        %v541 = vadd.f32 0.0, %v540
        %542 = vmatmul.bf16.gmra.mxu0 %v376
        %v543 = vpop.f32.mrf.mxu0
        %v544 = vadd.f32 0.0, %v543
        %v545 = vpop.f32.mrf.mxu0
        %v546 = vadd.f32 0.0, %v545
        %547 = vmatmul.bf16.gmra.mxu0 %v379
        %v548 = vpop.f32.mrf.mxu0
        %v549 = vadd.f32 0.0, %v548
        %v550 = vpop.f32.mrf.mxu0
        %v551 = vadd.f32 0.0, %v550
        %552 = vmatmul.bf16.gmra.mxu0 %v382
        %v553 = vpop.f32.mrf.mxu0
        %v554 = vadd.f32 0.0, %v553
        %v555 = vpop.f32.mrf.mxu0
        %v556 = vadd.f32 0.0, %v555
        %557 = vmatmul.bf16.gmra.mxu0 %v385
        %v558 = vpop.f32.mrf.mxu0
        %v559 = vadd.f32 0.0, %v558
        %v560 = vpop.f32.mrf.mxu0
        %v561 = vadd.f32 0.0, %v560
        %562 = vmatmul.bf16.gmra.mxu0 %v388
        %v563 = vpop.f32.mrf.mxu0
        %v564 = vadd.f32 0.0, %v563
        %v565 = vpop.f32.mrf.mxu0
        %v566 = vadd.f32 0.0, %v565
        %567 = vmatmul.bf16.gmra.mxu0 %v391
        %v568 = vpop.f32.mrf.mxu0
        %v569 = vadd.f32 0.0, %v568
        %v570 = vpop.f32.mrf.mxu0
        %v571 = vadd.f32 0.0, %v570
        %572 = vmatmul.bf16.gmra.mxu0 %v394
        %v573 = vpop.f32.mrf.mxu0
        %v574 = vadd.f32 0.0, %v573
        %v575 = vpop.f32.mrf.mxu0
        %v576 = vadd.f32 0.0, %v575
        %577 = vmatmul.bf16.gmra.mxu0 %v397
        %v578 = vpop.f32.mrf.mxu0
        %v579 = vadd.f32 0.0, %v578
        %v580 = vpop.f32.mrf.mxu0
        %v581 = vadd.f32 0.0, %v580
        %582 = vmatmul.bf16.gmra.mxu0 %v400
        %v583 = vpop.f32.mrf.mxu0
        %v584 = vadd.f32 0.0, %v583
        %v585 = vpop.f32.mrf.mxu0
        %v586 = vadd.f32 0.0, %v585
        %587 = vdwg.mxu0
        %v588 = vpack.c.bf16 %v509, %v420
        %v589 = vpack.c.bf16 %v511, %v422
        %v590 = vpack.c.bf16 %v514, %v425
        %v591 = vpack.c.bf16 %v516, %v427
        %v592 = vpack.c.bf16 %v519, %v430
        %v593 = vpack.c.bf16 %v521, %v432
        %v594 = vpack.c.bf16 %v524, %v435
        %v595 = vpack.c.bf16 %v526, %v437
        %v596 = vpack.c.bf16 %v529, %v440
        %v597 = vpack.c.bf16 %v531, %v442
        %v598 = vpack.c.bf16 %v534, %v445
        %v599 = vpack.c.bf16 %v536, %v447
        %v600 = vpack.c.bf16 %v539, %v450
        %v601 = vpack.c.bf16 %v541, %v452
        %v602 = vpack.c.bf16 %v544, %v455
        %v603 = vpack.c.bf16 %v546, %v457
        %v604 = vpack.c.bf16 %v549, %v460
        %v605 = vpack.c.bf16 %v551, %v462
        %v606 = vpack.c.bf16 %v554, %v465
        %v607 = vpack.c.bf16 %v556, %v467
        %v608 = vpack.c.bf16 %v559, %v470
        %v609 = vpack.c.bf16 %v561, %v472
        %v610 = vpack.c.bf16 %v564, %v475
        %v611 = vpack.c.bf16 %v566, %v477
        %v612 = vpack.c.bf16 %v569, %v480
        %v613 = vpack.c.bf16 %v571, %v482
        %v614 = vpack.c.bf16 %v574, %v485
        %v615 = vpack.c.bf16 %v576, %v487
        %v616 = vpack.c.bf16 %v579, %v490
        %v617 = vpack.c.bf16 %v581, %v492
        %v618 = vpack.c.bf16 %v584, %v495
        %v619 = vpack.c.bf16 %v586, %v497
        %v620 = vld [vmem:[%s2] sm:$0x3]
        %v622 = vperm.slane %v620, 0
        %v623 = vperm.slane %v620, 1
        %v626 = vpack.c.bf16 %v623, %v622
        %v628 = vunpack.c.l.b16 %v626
        %v629 = vunpack.c.h.b16 %v626
        %v630 = vpack.c.b16 %v628, %v628
        %v631 = vpack.c.b16 %v629, %v629
        %v633 = vpack.i.b16 %v630, %v630
        %v635 = vperm.slane %v633, 0
        %v637 = vpack.i.b16 %v631, %v631
        %v639 = vperm.slane %v637, 0
        %v640 = vunpack.c.l.bf16 %v588
        %v641 = vunpack.c.h.bf16 %v588
        %v642 = vunpack.c.l.bf16 %v589
        %v643 = vunpack.c.h.bf16 %v589
        %v644 = vunpack.c.l.bf16 %v590
        %v645 = vunpack.c.h.bf16 %v590
        %v646 = vunpack.c.l.bf16 %v591
        %v647 = vunpack.c.h.bf16 %v591
        %v648 = vunpack.c.l.bf16 %v592
        %v649 = vunpack.c.h.bf16 %v592
        %v650 = vunpack.c.l.bf16 %v593
        %v651 = vunpack.c.h.bf16 %v593
        %v652 = vunpack.c.l.bf16 %v594
        %v653 = vunpack.c.h.bf16 %v594
        %v654 = vunpack.c.l.bf16 %v595
        %v655 = vunpack.c.h.bf16 %v595
        %v656 = vunpack.c.l.bf16 %v596
        %v657 = vunpack.c.h.bf16 %v596
        %v658 = vunpack.c.l.bf16 %v597
        %v659 = vunpack.c.h.bf16 %v597
        %v660 = vunpack.c.l.bf16 %v598
        %v661 = vunpack.c.h.bf16 %v598
        %v662 = vunpack.c.l.bf16 %v599
        %v663 = vunpack.c.h.bf16 %v599
        %v664 = vunpack.c.l.bf16 %v600
        %v665 = vunpack.c.h.bf16 %v600
        %v666 = vunpack.c.l.bf16 %v601
        %v667 = vunpack.c.h.bf16 %v601
        %v668 = vunpack.c.l.bf16 %v602
        %v669 = vunpack.c.h.bf16 %v602
        %v670 = vunpack.c.l.bf16 %v603
        %v671 = vunpack.c.h.bf16 %v603
        %v672 = vunpack.c.l.bf16 %v604
        %v673 = vunpack.c.h.bf16 %v604
        %v674 = vunpack.c.l.bf16 %v605
        %v675 = vunpack.c.h.bf16 %v605
        %v676 = vunpack.c.l.bf16 %v606
        %v677 = vunpack.c.h.bf16 %v606
        %v678 = vunpack.c.l.bf16 %v607
        %v679 = vunpack.c.h.bf16 %v607
        %v680 = vunpack.c.l.bf16 %v608
        %v681 = vunpack.c.h.bf16 %v608
        %v682 = vunpack.c.l.bf16 %v609
        %v683 = vunpack.c.h.bf16 %v609
        %v684 = vunpack.c.l.bf16 %v610
        %v685 = vunpack.c.h.bf16 %v610
        %v686 = vunpack.c.l.bf16 %v611
        %v687 = vunpack.c.h.bf16 %v611
        %v688 = vunpack.c.l.bf16 %v612
        %v689 = vunpack.c.h.bf16 %v612
        %v690 = vunpack.c.l.bf16 %v613
        %v691 = vunpack.c.h.bf16 %v613
        %v692 = vunpack.c.l.bf16 %v614
        %v693 = vunpack.c.h.bf16 %v614
        %v694 = vunpack.c.l.bf16 %v615
        %v695 = vunpack.c.h.bf16 %v615
        %v696 = vunpack.c.l.bf16 %v616
        %v697 = vunpack.c.h.bf16 %v616
        %v698 = vunpack.c.l.bf16 %v617
        %v699 = vunpack.c.h.bf16 %v617
        %v700 = vunpack.c.l.bf16 %v618
        %v701 = vunpack.c.h.bf16 %v618
        %v702 = vunpack.c.l.bf16 %v619
        %v703 = vunpack.c.h.bf16 %v619
        %v704 = vunpack.c.l.bf16 %v635
        %v705 = vunpack.c.l.bf16 %v639
        %v706 = vadd.f32 %v640, %v704
        %v707 = vadd.f32 %v641, %v705
        %v708 = vadd.f32 %v642, %v704
        %v709 = vadd.f32 %v643, %v705
        %v710 = vadd.f32 %v644, %v704
        %v711 = vadd.f32 %v645, %v705
        %v712 = vadd.f32 %v646, %v704
        %v713 = vadd.f32 %v647, %v705
        %v714 = vadd.f32 %v648, %v704
        %v715 = vadd.f32 %v649, %v705
        %v716 = vadd.f32 %v650, %v704
        %v717 = vadd.f32 %v651, %v705
        %v718 = vadd.f32 %v652, %v704
        %v719 = vadd.f32 %v653, %v705
        %v720 = vadd.f32 %v654, %v704
        %v721 = vadd.f32 %v655, %v705
        %v722 = vadd.f32 %v656, %v704
        %v723 = vadd.f32 %v657, %v705
        %v724 = vadd.f32 %v658, %v704
        %v725 = vadd.f32 %v659, %v705
        %v726 = vadd.f32 %v660, %v704
        %v727 = vadd.f32 %v661, %v705
        %v728 = vadd.f32 %v662, %v704
        %v729 = vadd.f32 %v663, %v705
        %v730 = vadd.f32 %v664, %v704
        %v731 = vadd.f32 %v665, %v705
        %v732 = vadd.f32 %v666, %v704
        %v733 = vadd.f32 %v667, %v705
        %v734 = vadd.f32 %v668, %v704
        %v735 = vadd.f32 %v669, %v705
        %v736 = vadd.f32 %v670, %v704
        %v737 = vadd.f32 %v671, %v705
        %v738 = vadd.f32 %v672, %v704
        %v739 = vadd.f32 %v673, %v705
        %v740 = vadd.f32 %v674, %v704
        %v741 = vadd.f32 %v675, %v705
        %v742 = vadd.f32 %v676, %v704
        %v743 = vadd.f32 %v677, %v705
        %v744 = vadd.f32 %v678, %v704
        %v745 = vadd.f32 %v679, %v705
        %v746 = vadd.f32 %v680, %v704
        %v747 = vadd.f32 %v681, %v705
        %v748 = vadd.f32 %v682, %v704
        %v749 = vadd.f32 %v683, %v705
        %v750 = vadd.f32 %v684, %v704
        %v751 = vadd.f32 %v685, %v705
        %v752 = vadd.f32 %v686, %v704
        %v753 = vadd.f32 %v687, %v705
        %v754 = vadd.f32 %v688, %v704
        %v755 = vadd.f32 %v689, %v705
        %v756 = vadd.f32 %v690, %v704
        %v757 = vadd.f32 %v691, %v705
        %v758 = vadd.f32 %v692, %v704
        %v759 = vadd.f32 %v693, %v705
        %v760 = vadd.f32 %v694, %v704
        %v761 = vadd.f32 %v695, %v705
        %v762 = vadd.f32 %v696, %v704
        %v763 = vadd.f32 %v697, %v705
        %v764 = vadd.f32 %v698, %v704
        %v765 = vadd.f32 %v699, %v705
        %v766 = vadd.f32 %v700, %v704
        %v767 = vadd.f32 %v701, %v705
        %v768 = vadd.f32 %v702, %v704
        %v769 = vadd.f32 %v703, %v705
        %v770 = vpack.c.bf16 %v707, %v706
        %v771 = vpack.c.bf16 %v709, %v708
        %v772 = vpack.c.bf16 %v711, %v710
        %v773 = vpack.c.bf16 %v713, %v712
        %v774 = vpack.c.bf16 %v715, %v714
        %v775 = vpack.c.bf16 %v717, %v716
        %v776 = vpack.c.bf16 %v719, %v718
        %v777 = vpack.c.bf16 %v721, %v720
        %v778 = vpack.c.bf16 %v723, %v722
        %v779 = vpack.c.bf16 %v725, %v724
        %v780 = vpack.c.bf16 %v727, %v726
        %v781 = vpack.c.bf16 %v729, %v728
        %v782 = vpack.c.bf16 %v731, %v730
        %v783 = vpack.c.bf16 %v733, %v732
        %v784 = vpack.c.bf16 %v735, %v734
        %v785 = vpack.c.bf16 %v737, %v736
        %v786 = vpack.c.bf16 %v739, %v738
        %v787 = vpack.c.bf16 %v741, %v740
        %v788 = vpack.c.bf16 %v743, %v742
        %v789 = vpack.c.bf16 %v745, %v744
        %v790 = vpack.c.bf16 %v747, %v746
        %v791 = vpack.c.bf16 %v749, %v748
        %v792 = vpack.c.bf16 %v751, %v750
        %v793 = vpack.c.bf16 %v753, %v752
        %v794 = vpack.c.bf16 %v755, %v754
        %v795 = vpack.c.bf16 %v757, %v756
        %v796 = vpack.c.bf16 %v759, %v758
        %v797 = vpack.c.bf16 %v761, %v760
        %v798 = vpack.c.bf16 %v763, %v762
        %v799 = vpack.c.bf16 %v765, %v764
        %v800 = vpack.c.bf16 %v767, %v766
        %v801 = vpack.c.bf16 %v769, %v768
        %v802 = vunpack.c.l.bf16 %v770
        %v803 = vunpack.c.h.bf16 %v770
        %v804 = vunpack.c.l.bf16 %v771
        %v805 = vunpack.c.h.bf16 %v771
        %v806 = vunpack.c.l.bf16 %v772
        %v807 = vunpack.c.h.bf16 %v772
        %v808 = vunpack.c.l.bf16 %v773
        %v809 = vunpack.c.h.bf16 %v773
        %v810 = vunpack.c.l.bf16 %v774
        %v811 = vunpack.c.h.bf16 %v774
        %v812 = vunpack.c.l.bf16 %v775
        %v813 = vunpack.c.h.bf16 %v775
        %v814 = vunpack.c.l.bf16 %v776
        %v815 = vunpack.c.h.bf16 %v776
        %v816 = vunpack.c.l.bf16 %v777
        %v817 = vunpack.c.h.bf16 %v777
        %v818 = vunpack.c.l.bf16 %v778
        %v819 = vunpack.c.h.bf16 %v778
        %v820 = vunpack.c.l.bf16 %v779
        %v821 = vunpack.c.h.bf16 %v779
        %v822 = vunpack.c.l.bf16 %v780
        %v823 = vunpack.c.h.bf16 %v780
        %v824 = vunpack.c.l.bf16 %v781
        %v825 = vunpack.c.h.bf16 %v781
        %v826 = vunpack.c.l.bf16 %v782
        %v827 = vunpack.c.h.bf16 %v782
        %v828 = vunpack.c.l.bf16 %v783
        %v829 = vunpack.c.h.bf16 %v783
        %v830 = vunpack.c.l.bf16 %v784
        %v831 = vunpack.c.h.bf16 %v784
        %v832 = vunpack.c.l.bf16 %v785
        %v833 = vunpack.c.h.bf16 %v785
        %v834 = vunpack.c.l.bf16 %v786
        %v835 = vunpack.c.h.bf16 %v786
        %v836 = vunpack.c.l.bf16 %v787
        %v837 = vunpack.c.h.bf16 %v787
        %v838 = vunpack.c.l.bf16 %v788
        %v839 = vunpack.c.h.bf16 %v788
        %v840 = vunpack.c.l.bf16 %v789
        %v841 = vunpack.c.h.bf16 %v789
        %v842 = vunpack.c.l.bf16 %v790
        %v843 = vunpack.c.h.bf16 %v790
        %v844 = vunpack.c.l.bf16 %v791
        %v845 = vunpack.c.h.bf16 %v791
        %v846 = vunpack.c.l.bf16 %v792
        %v847 = vunpack.c.h.bf16 %v792
        %v848 = vunpack.c.l.bf16 %v793
        %v849 = vunpack.c.h.bf16 %v793
        %v850 = vunpack.c.l.bf16 %v794
        %v851 = vunpack.c.h.bf16 %v794
        %v852 = vunpack.c.l.bf16 %v795
        %v853 = vunpack.c.h.bf16 %v795
        %v854 = vunpack.c.l.bf16 %v796
        %v855 = vunpack.c.h.bf16 %v796
        %v856 = vunpack.c.l.bf16 %v797
        %v857 = vunpack.c.h.bf16 %v797
        %v858 = vunpack.c.l.bf16 %v798
        %v859 = vunpack.c.h.bf16 %v798
        %v860 = vunpack.c.l.bf16 %v799
        %v861 = vunpack.c.h.bf16 %v799
        %v862 = vunpack.c.l.bf16 %v800
        %v863 = vunpack.c.h.bf16 %v800
        %v864 = vunpack.c.l.bf16 %v801
        %v865 = vunpack.c.h.bf16 %v801
        %v866 = vmax.f32 %v802, 0.0
        %v867 = vmax.f32 %v803, 0.0
        %v868 = vmax.f32 %v804, 0.0
        %v869 = vmax.f32 %v805, 0.0
        %v870 = vmax.f32 %v806, 0.0
        %v871 = vmax.f32 %v807, 0.0
        %v872 = vmax.f32 %v808, 0.0
        %v873 = vmax.f32 %v809, 0.0
        %v874 = vmax.f32 %v810, 0.0
        %v875 = vmax.f32 %v811, 0.0
        %v876 = vmax.f32 %v812, 0.0
        %v877 = vmax.f32 %v813, 0.0
        %v878 = vmax.f32 %v814, 0.0
        %v879 = vmax.f32 %v815, 0.0
        %v880 = vmax.f32 %v816, 0.0
        %v881 = vmax.f32 %v817, 0.0
        %v882 = vmax.f32 %v818, 0.0
        %v883 = vmax.f32 %v819, 0.0
        %v884 = vmax.f32 %v820, 0.0
        %v885 = vmax.f32 %v821, 0.0
        %v886 = vmax.f32 %v822, 0.0
        %v887 = vmax.f32 %v823, 0.0
        %v888 = vmax.f32 %v824, 0.0
        %v889 = vmax.f32 %v825, 0.0
        %v890 = vmax.f32 %v826, 0.0
        %v891 = vmax.f32 %v827, 0.0
        %v892 = vmax.f32 %v828, 0.0
        %v893 = vmax.f32 %v829, 0.0
        %v894 = vmax.f32 %v830, 0.0
        %v895 = vmax.f32 %v831, 0.0
        %v896 = vmax.f32 %v832, 0.0
        %v897 = vmax.f32 %v833, 0.0
        %v898 = vmax.f32 %v834, 0.0
        %v899 = vmax.f32 %v835, 0.0
        %v900 = vmax.f32 %v836, 0.0
        %v901 = vmax.f32 %v837, 0.0
        %v902 = vmax.f32 %v838, 0.0
        %v903 = vmax.f32 %v839, 0.0
        %v904 = vmax.f32 %v840, 0.0
        %v905 = vmax.f32 %v841, 0.0
        %v906 = vmax.f32 %v842, 0.0
        %v907 = vmax.f32 %v843, 0.0
        %v908 = vmax.f32 %v844, 0.0
        %v909 = vmax.f32 %v845, 0.0
        %v910 = vmax.f32 %v846, 0.0
        %v911 = vmax.f32 %v847, 0.0
        %v912 = vmax.f32 %v848, 0.0
        %v913 = vmax.f32 %v849, 0.0
        %v914 = vmax.f32 %v850, 0.0
        %v915 = vmax.f32 %v851, 0.0
        %v916 = vmax.f32 %v852, 0.0
        %v917 = vmax.f32 %v853, 0.0
        %v918 = vmax.f32 %v854, 0.0
        %v919 = vmax.f32 %v855, 0.0
        %v920 = vmax.f32 %v856, 0.0
        %v921 = vmax.f32 %v857, 0.0
        %v922 = vmax.f32 %v858, 0.0
        %v923 = vmax.f32 %v859, 0.0
        %v924 = vmax.f32 %v860, 0.0
        %v925 = vmax.f32 %v861, 0.0
        %v926 = vmax.f32 %v862, 0.0
        %v927 = vmax.f32 %v863, 0.0
        %v928 = vmax.f32 %v864, 0.0
        %v929 = vmax.f32 %v865, 0.0
        %v930 = vpack.c.bf16 %v868, %v866
        %v931 = vpack.c.bf16 %v869, %v867
        %v932 = vpack.c.bf16 %v872, %v870
        %v933 = vpack.c.bf16 %v873, %v871
        %v934 = vpack.c.bf16 %v876, %v874
        %v935 = vpack.c.bf16 %v877, %v875
        %v936 = vpack.c.bf16 %v880, %v878
        %v937 = vpack.c.bf16 %v881, %v879
        %v938 = vpack.c.bf16 %v884, %v882
        %v939 = vpack.c.bf16 %v885, %v883
        %v940 = vpack.c.bf16 %v888, %v886
        %v941 = vpack.c.bf16 %v889, %v887
        %v942 = vpack.c.bf16 %v892, %v890
        %v943 = vpack.c.bf16 %v893, %v891
        %v944 = vpack.c.bf16 %v896, %v894
        %v945 = vpack.c.bf16 %v897, %v895
        %v946 = vpack.c.bf16 %v900, %v898
        %v947 = vpack.c.bf16 %v901, %v899
        %v948 = vpack.c.bf16 %v904, %v902
        %v949 = vpack.c.bf16 %v905, %v903
        %v950 = vpack.c.bf16 %v908, %v906
        %v951 = vpack.c.bf16 %v909, %v907
        %v952 = vpack.c.bf16 %v912, %v910
        %v953 = vpack.c.bf16 %v913, %v911
        %v954 = vpack.c.bf16 %v916, %v914
        %v955 = vpack.c.bf16 %v917, %v915
        %v956 = vpack.c.bf16 %v920, %v918
        %v957 = vpack.c.bf16 %v921, %v919
        %v958 = vpack.c.bf16 %v924, %v922
        %v959 = vpack.c.bf16 %v925, %v923
        %v960 = vpack.c.bf16 %v928, %v926
        %v961 = vpack.c.bf16 %v929, %v927
        %v962 = vld [vmem:[#allocation2] sm:$0xff]
        %v963 = vld [vmem:[#allocation2 + $0x8] sm:$0xff]
        %v964 = vld [vmem:[#allocation2 + $0x10] sm:$0xff]
        %v965 = vld [vmem:[#allocation2 + $0x18] sm:$0xff]
        %v966 = vld [vmem:[#allocation2 + $0x20] sm:$0xff]
        %v967 = vld [vmem:[#allocation2 + $0x28] sm:$0xff]
        %v968 = vld [vmem:[#allocation2 + $0x30] sm:$0xff]
        %v969 = vld [vmem:[#allocation2 + $0x38] sm:$0xff]
        %v970 = vld [vmem:[#allocation2 + $0x40] sm:$0xff]
        %v971 = vld [vmem:[#allocation2 + $0x48] sm:$0xff]
        %v972 = vld [vmem:[#allocation2 + $0x50] sm:$0xff]
        %v973 = vld [vmem:[#allocation2 + $0x58] sm:$0xff]
        %v974 = vld [vmem:[#allocation2 + $0x60] sm:$0xff]
        %v975 = vld [vmem:[#allocation2 + $0x68] sm:$0xff]
        %v976 = vld [vmem:[#allocation2 + $0x70] sm:$0xff]
        %v977 = vld [vmem:[#allocation2 + $0x78] sm:$0xff]
        %v978 = vld [vmem:[#allocation2 + $0x80] sm:$0xff]
        %v979 = vld [vmem:[#allocation2 + $0x88] sm:$0xff]
        %v980 = vld [vmem:[#allocation2 + $0x90] sm:$0xff]
        %v981 = vld [vmem:[#allocation2 + $0x98] sm:$0xff]
        %v982 = vld [vmem:[#allocation2 + $0xa0] sm:$0xff]
        %v983 = vld [vmem:[#allocation2 + $0xa8] sm:$0xff]
        %v984 = vld [vmem:[#allocation2 + $0xb0] sm:$0xff]
        %v985 = vld [vmem:[#allocation2 + $0xb8] sm:$0xff]
        %v986 = vld [vmem:[#allocation2 + $0xc0] sm:$0xff]
        %v987 = vld [vmem:[#allocation2 + $0xc8] sm:$0xff]
        %v988 = vld [vmem:[#allocation2 + $0xd0] sm:$0xff]
        %v989 = vld [vmem:[#allocation2 + $0xd8] sm:$0xff]
        %v990 = vld [vmem:[#allocation2 + $0xe0] sm:$0xff]
        %v991 = vld [vmem:[#allocation2 + $0xe8] sm:$0xff]
        %v992 = vld [vmem:[#allocation2 + $0xf0] sm:$0xff]
        %v993 = vld [vmem:[#allocation2 + $0xf8] sm:$0xff]
        %v1026 = vunpack.c.l.b16 %v962
        %v1027 = vunpack.c.h.b16 %v962
        %v1028 = vunpack.c.l.b16 %v963
        %v1029 = vunpack.c.h.b16 %v963
        %v1030 = vunpack.c.l.b16 %v964
        %v1031 = vunpack.c.h.b16 %v964
        %v1032 = vunpack.c.l.b16 %v965
        %v1033 = vunpack.c.h.b16 %v965
        %v1034 = vunpack.c.l.b16 %v966
        %v1035 = vunpack.c.h.b16 %v966
        %v1036 = vunpack.c.l.b16 %v967
        %v1037 = vunpack.c.h.b16 %v967
        %v1038 = vunpack.c.l.b16 %v968
        %v1039 = vunpack.c.h.b16 %v968
        %v1040 = vunpack.c.l.b16 %v969
        %v1041 = vunpack.c.h.b16 %v969
        %v1042 = vunpack.c.l.b16 %v970
        %v1043 = vunpack.c.h.b16 %v970
        %v1044 = vunpack.c.l.b16 %v971
        %v1045 = vunpack.c.h.b16 %v971
        %v1046 = vunpack.c.l.b16 %v972
        %v1047 = vunpack.c.h.b16 %v972
        %v1048 = vunpack.c.l.b16 %v973
        %v1049 = vunpack.c.h.b16 %v973
        %v1050 = vunpack.c.l.b16 %v974
        %v1051 = vunpack.c.h.b16 %v974
        %v1052 = vunpack.c.l.b16 %v975
        %v1053 = vunpack.c.h.b16 %v975
        %v1054 = vunpack.c.l.b16 %v976
        %v1055 = vunpack.c.h.b16 %v976
        %v1056 = vunpack.c.l.b16 %v977
        %v1057 = vunpack.c.h.b16 %v977
        %v1058 = vunpack.c.l.b16 %v978
        %v1059 = vunpack.c.h.b16 %v978
        %v1060 = vunpack.c.l.b16 %v979
        %v1061 = vunpack.c.h.b16 %v979
        %v1062 = vunpack.c.l.b16 %v980
        %v1063 = vunpack.c.h.b16 %v980
        %v1064 = vunpack.c.l.b16 %v981
        %v1065 = vunpack.c.h.b16 %v981
        %v1066 = vunpack.c.l.b16 %v982
        %v1067 = vunpack.c.h.b16 %v982
        %v1068 = vunpack.c.l.b16 %v983
        %v1069 = vunpack.c.h.b16 %v983
        %v1070 = vunpack.c.l.b16 %v984
        %v1071 = vunpack.c.h.b16 %v984
        %v1072 = vunpack.c.l.b16 %v985
        %v1073 = vunpack.c.h.b16 %v985
        %v1074 = vunpack.c.l.b16 %v986
        %v1075 = vunpack.c.h.b16 %v986
        %v1076 = vunpack.c.l.b16 %v987
        %v1077 = vunpack.c.h.b16 %v987
        %v1078 = vunpack.c.l.b16 %v988
        %v1079 = vunpack.c.h.b16 %v988
        %v1080 = vunpack.c.l.b16 %v989
        %v1081 = vunpack.c.h.b16 %v989
        %v1082 = vunpack.c.l.b16 %v990
        %v1083 = vunpack.c.h.b16 %v990
        %v1084 = vunpack.c.l.b16 %v991
        %v1085 = vunpack.c.h.b16 %v991
        %v1086 = vunpack.c.l.b16 %v992
        %v1087 = vunpack.c.h.b16 %v992
        %v1088 = vunpack.c.l.b16 %v993
        %v1089 = vunpack.c.h.b16 %v993
        %v1090 = vpack.c.b16 %v1028, %v1026
        %v1091 = vpack.c.b16 %v1029, %v1027
        %v1092 = vpack.c.b16 %v1032, %v1030
        %v1093 = vpack.c.b16 %v1033, %v1031
        %v1094 = vpack.c.b16 %v1036, %v1034
        %v1095 = vpack.c.b16 %v1037, %v1035
        %v1096 = vpack.c.b16 %v1040, %v1038
        %v1097 = vpack.c.b16 %v1041, %v1039
        %v1098 = vpack.c.b16 %v1044, %v1042
        %v1099 = vpack.c.b16 %v1045, %v1043
        %v1100 = vpack.c.b16 %v1048, %v1046
        %v1101 = vpack.c.b16 %v1049, %v1047
        %v1102 = vpack.c.b16 %v1052, %v1050
        %v1103 = vpack.c.b16 %v1053, %v1051
        %v1104 = vpack.c.b16 %v1056, %v1054
        %v1105 = vpack.c.b16 %v1057, %v1055
        %v1106 = vpack.c.b16 %v1060, %v1058
        %v1107 = vpack.c.b16 %v1061, %v1059
        %v1108 = vpack.c.b16 %v1064, %v1062
        %v1109 = vpack.c.b16 %v1065, %v1063
        %v1110 = vpack.c.b16 %v1068, %v1066
        %v1111 = vpack.c.b16 %v1069, %v1067
        %v1112 = vpack.c.b16 %v1072, %v1070
        %v1113 = vpack.c.b16 %v1073, %v1071
        %v1114 = vpack.c.b16 %v1076, %v1074
        %v1115 = vpack.c.b16 %v1077, %v1075
        %v1116 = vpack.c.b16 %v1080, %v1078
        %v1117 = vpack.c.b16 %v1081, %v1079
        %v1118 = vpack.c.b16 %v1084, %v1082
        %v1119 = vpack.c.b16 %v1085, %v1083
        %v1120 = vpack.c.b16 %v1088, %v1086
        %v1121 = vpack.c.b16 %v1089, %v1087
        %1154 = vmatpush.bf16.msra.mxu0 %v1104
        %1155 = vmatpush.bf16.msra.mxu0 %v1102
        %1156 = vmatpush.bf16.msra.mxu0 %v1100
        %1157 = vmatpush.bf16.msra.mxu0 %v1098
        %1158 = vmatpush.bf16.msra.mxu0 %v1096
        %1159 = vmatpush.bf16.msra.mxu0 %v1094
        %1160 = vmatpush.bf16.msra.mxu0 %v1092
        %1161 = vmatpush.bf16.msra.mxu0 %v1090
        %1162 = vmatmul.bf16.gmra.mxu0 %v930
        %v1163 = vpop.f32.mrf.mxu0
        %v1164 = vadd.f32 0.0, %v1163
        %v1165 = vpop.f32.mrf.mxu0
        %v1166 = vadd.f32 0.0, %v1165
        %1167 = vmatmul.bf16.gmra.mxu0 %v932
        %v1168 = vpop.f32.mrf.mxu0
        %v1169 = vadd.f32 0.0, %v1168
        %v1170 = vpop.f32.mrf.mxu0
        %v1171 = vadd.f32 0.0, %v1170
        %1172 = vmatmul.bf16.gmra.mxu0 %v934
        %v1173 = vpop.f32.mrf.mxu0
        %v1174 = vadd.f32 0.0, %v1173
        %v1175 = vpop.f32.mrf.mxu0
        %v1176 = vadd.f32 0.0, %v1175
        %1177 = vmatmul.bf16.gmra.mxu0 %v936
        %v1178 = vpop.f32.mrf.mxu0
        %v1179 = vadd.f32 0.0, %v1178
        %v1180 = vpop.f32.mrf.mxu0
        %v1181 = vadd.f32 0.0, %v1180
        %1182 = vmatmul.bf16.gmra.mxu0 %v938
        %v1183 = vpop.f32.mrf.mxu0
        %v1184 = vadd.f32 0.0, %v1183
        %v1185 = vpop.f32.mrf.mxu0
        %v1186 = vadd.f32 0.0, %v1185
        %1187 = vmatmul.bf16.gmra.mxu0 %v940
        %v1188 = vpop.f32.mrf.mxu0
        %v1189 = vadd.f32 0.0, %v1188
        %v1190 = vpop.f32.mrf.mxu0
        %v1191 = vadd.f32 0.0, %v1190
        %1192 = vmatmul.bf16.gmra.mxu0 %v942
        %v1193 = vpop.f32.mrf.mxu0
        %v1194 = vadd.f32 0.0, %v1193
        %v1195 = vpop.f32.mrf.mxu0
        %v1196 = vadd.f32 0.0, %v1195
        %1197 = vmatmul.bf16.gmra.mxu0 %v944
        %v1198 = vpop.f32.mrf.mxu0
        %v1199 = vadd.f32 0.0, %v1198
        %v1200 = vpop.f32.mrf.mxu0
        %v1201 = vadd.f32 0.0, %v1200
        %1202 = vmatmul.bf16.gmra.mxu0 %v946
        %v1203 = vpop.f32.mrf.mxu0
        %v1204 = vadd.f32 0.0, %v1203
        %v1205 = vpop.f32.mrf.mxu0
        %v1206 = vadd.f32 0.0, %v1205
        %1207 = vmatmul.bf16.gmra.mxu0 %v948
        %v1208 = vpop.f32.mrf.mxu0
        %v1209 = vadd.f32 0.0, %v1208
        %v1210 = vpop.f32.mrf.mxu0
        %v1211 = vadd.f32 0.0, %v1210
        %1212 = vmatmul.bf16.gmra.mxu0 %v950
        %v1213 = vpop.f32.mrf.mxu0
        %v1214 = vadd.f32 0.0, %v1213
        %v1215 = vpop.f32.mrf.mxu0
        %v1216 = vadd.f32 0.0, %v1215
        %1217 = vmatmul.bf16.gmra.mxu0 %v952
        %v1218 = vpop.f32.mrf.mxu0
        %v1219 = vadd.f32 0.0, %v1218
        %v1220 = vpop.f32.mrf.mxu0
        %v1221 = vadd.f32 0.0, %v1220
        %1222 = vmatmul.bf16.gmra.mxu0 %v954
        %v1223 = vpop.f32.mrf.mxu0
        %v1224 = vadd.f32 0.0, %v1223
        %v1225 = vpop.f32.mrf.mxu0
        %v1226 = vadd.f32 0.0, %v1225
        %1227 = vmatmul.bf16.gmra.mxu0 %v956
        %v1228 = vpop.f32.mrf.mxu0
        %v1229 = vadd.f32 0.0, %v1228
        %v1230 = vpop.f32.mrf.mxu0
        %v1231 = vadd.f32 0.0, %v1230
        %1232 = vmatmul.bf16.gmra.mxu0 %v958
        %v1233 = vpop.f32.mrf.mxu0
        %v1234 = vadd.f32 0.0, %v1233
        %v1235 = vpop.f32.mrf.mxu0
        %v1236 = vadd.f32 0.0, %v1235
        %1237 = vmatmul.bf16.gmra.mxu0 %v960
        %v1238 = vpop.f32.mrf.mxu0
        %v1239 = vadd.f32 0.0, %v1238
        %v1240 = vpop.f32.mrf.mxu0
        %v1241 = vadd.f32 0.0, %v1240
        %1242 = vdwg.mxu0
        %1243 = vmatpush.bf16.msra.mxu0 %v1120
        %1244 = vmatpush.bf16.msra.mxu0 %v1118
        %1245 = vmatpush.bf16.msra.mxu0 %v1116
        %1246 = vmatpush.bf16.msra.mxu0 %v1114
        %1247 = vmatpush.bf16.msra.mxu0 %v1112
        %1248 = vmatpush.bf16.msra.mxu0 %v1110
        %1249 = vmatpush.bf16.msra.mxu0 %v1108
        %1250 = vmatpush.bf16.msra.mxu0 %v1106
        %1251 = vmatmul.bf16.gmra.mxu0 %v931
        %v1252 = vpop.f32.mrf.mxu0
        %v1253 = vadd.f32 %v1164, %v1252
        %v1254 = vpop.f32.mrf.mxu0
        %v1255 = vadd.f32 %v1166, %v1254
        %1256 = vmatmul.bf16.gmra.mxu0 %v933
        %v1257 = vpop.f32.mrf.mxu0
        %v1258 = vadd.f32 %v1169, %v1257
        %v1259 = vpop.f32.mrf.mxu0
        %v1260 = vadd.f32 %v1171, %v1259
        %1261 = vmatmul.bf16.gmra.mxu0 %v935
        %v1262 = vpop.f32.mrf.mxu0
        %v1263 = vadd.f32 %v1174, %v1262
        %v1264 = vpop.f32.mrf.mxu0
        %v1265 = vadd.f32 %v1176, %v1264
        %1266 = vmatmul.bf16.gmra.mxu0 %v937
        %v1267 = vpop.f32.mrf.mxu0
        %v1268 = vadd.f32 %v1179, %v1267
        %v1269 = vpop.f32.mrf.mxu0
        %v1270 = vadd.f32 %v1181, %v1269
        %1271 = vmatmul.bf16.gmra.mxu0 %v939
        %v1272 = vpop.f32.mrf.mxu0
        %v1273 = vadd.f32 %v1184, %v1272
        %v1274 = vpop.f32.mrf.mxu0
        %v1275 = vadd.f32 %v1186, %v1274
        %1276 = vmatmul.bf16.gmra.mxu0 %v941
        %v1277 = vpop.f32.mrf.mxu0
        %v1278 = vadd.f32 %v1189, %v1277
        %v1279 = vpop.f32.mrf.mxu0
        %v1280 = vadd.f32 %v1191, %v1279
        %1281 = vmatmul.bf16.gmra.mxu0 %v943
        %v1282 = vpop.f32.mrf.mxu0
        %v1283 = vadd.f32 %v1194, %v1282
        %v1284 = vpop.f32.mrf.mxu0
        %v1285 = vadd.f32 %v1196, %v1284
        %1286 = vmatmul.bf16.gmra.mxu0 %v945
        %v1287 = vpop.f32.mrf.mxu0
        %v1288 = vadd.f32 %v1199, %v1287
        %v1289 = vpop.f32.mrf.mxu0
        %v1290 = vadd.f32 %v1201, %v1289
        %1291 = vmatmul.bf16.gmra.mxu0 %v947
        %v1292 = vpop.f32.mrf.mxu0
        %v1293 = vadd.f32 %v1204, %v1292
        %v1294 = vpop.f32.mrf.mxu0
        %v1295 = vadd.f32 %v1206, %v1294
        %1296 = vmatmul.bf16.gmra.mxu0 %v949
        %v1297 = vpop.f32.mrf.mxu0
        %v1298 = vadd.f32 %v1209, %v1297
        %v1299 = vpop.f32.mrf.mxu0
        %v1300 = vadd.f32 %v1211, %v1299
        %1301 = vmatmul.bf16.gmra.mxu0 %v951
        %v1302 = vpop.f32.mrf.mxu0
        %v1303 = vadd.f32 %v1214, %v1302
        %v1304 = vpop.f32.mrf.mxu0
        %v1305 = vadd.f32 %v1216, %v1304
        %1306 = vmatmul.bf16.gmra.mxu0 %v953
        %v1307 = vpop.f32.mrf.mxu0
        %v1308 = vadd.f32 %v1219, %v1307
        %v1309 = vpop.f32.mrf.mxu0
        %v1310 = vadd.f32 %v1221, %v1309
        %1311 = vmatmul.bf16.gmra.mxu0 %v955
        %v1312 = vpop.f32.mrf.mxu0
        %v1313 = vadd.f32 %v1224, %v1312
        %v1314 = vpop.f32.mrf.mxu0
        %v1315 = vadd.f32 %v1226, %v1314
        %1316 = vmatmul.bf16.gmra.mxu0 %v957
        %v1317 = vpop.f32.mrf.mxu0
        %v1318 = vadd.f32 %v1229, %v1317
        %v1319 = vpop.f32.mrf.mxu0
        %v1320 = vadd.f32 %v1231, %v1319
        %1321 = vmatmul.bf16.gmra.mxu0 %v959
        %v1322 = vpop.f32.mrf.mxu0
        %v1323 = vadd.f32 %v1234, %v1322
        %v1324 = vpop.f32.mrf.mxu0
        %v1325 = vadd.f32 %v1236, %v1324
        %1326 = vmatmul.bf16.gmra.mxu0 %v961
        %v1327 = vpop.f32.mrf.mxu0
        %v1328 = vadd.f32 %v1239, %v1327
        %v1329 = vpop.f32.mrf.mxu0
        %v1330 = vadd.f32 %v1241, %v1329
        %1331 = vdwg.mxu0
        %1332 = vmatpush.bf16.msra.mxu0 %v1105
        %1333 = vmatpush.bf16.msra.mxu0 %v1103
        %1334 = vmatpush.bf16.msra.mxu0 %v1101
        %1335 = vmatpush.bf16.msra.mxu0 %v1099
        %1336 = vmatpush.bf16.msra.mxu0 %v1097
        %1337 = vmatpush.bf16.msra.mxu0 %v1095
        %1338 = vmatpush.bf16.msra.mxu0 %v1093
        %1339 = vmatpush.bf16.msra.mxu0 %v1091
        %1340 = vmatmul.bf16.gmra.mxu0 %v930
        %v1341 = vpop.f32.mrf.mxu0
        %v1342 = vadd.f32 0.0, %v1341
        %v1343 = vpop.f32.mrf.mxu0
        %v1344 = vadd.f32 0.0, %v1343
        %1345 = vmatmul.bf16.gmra.mxu0 %v932
        %v1346 = vpop.f32.mrf.mxu0
        %v1347 = vadd.f32 0.0, %v1346
        %v1348 = vpop.f32.mrf.mxu0
        %v1349 = vadd.f32 0.0, %v1348
        %1350 = vmatmul.bf16.gmra.mxu0 %v934
        %v1351 = vpop.f32.mrf.mxu0
        %v1352 = vadd.f32 0.0, %v1351
        %v1353 = vpop.f32.mrf.mxu0
        %v1354 = vadd.f32 0.0, %v1353
        %1355 = vmatmul.bf16.gmra.mxu0 %v936
        %v1356 = vpop.f32.mrf.mxu0
        %v1357 = vadd.f32 0.0, %v1356
        %v1358 = vpop.f32.mrf.mxu0
        %v1359 = vadd.f32 0.0, %v1358
        %1360 = vmatmul.bf16.gmra.mxu0 %v938
        %v1361 = vpop.f32.mrf.mxu0
        %v1362 = vadd.f32 0.0, %v1361
        %v1363 = vpop.f32.mrf.mxu0
        %v1364 = vadd.f32 0.0, %v1363
        %1365 = vmatmul.bf16.gmra.mxu0 %v940
        %v1366 = vpop.f32.mrf.mxu0
        %v1367 = vadd.f32 0.0, %v1366
        %v1368 = vpop.f32.mrf.mxu0
        %v1369 = vadd.f32 0.0, %v1368
        %1370 = vmatmul.bf16.gmra.mxu0 %v942
        %v1371 = vpop.f32.mrf.mxu0
        %v1372 = vadd.f32 0.0, %v1371
        %v1373 = vpop.f32.mrf.mxu0
        %v1374 = vadd.f32 0.0, %v1373
        %1375 = vmatmul.bf16.gmra.mxu0 %v944
        %v1376 = vpop.f32.mrf.mxu0
        %v1377 = vadd.f32 0.0, %v1376
        %v1378 = vpop.f32.mrf.mxu0
        %v1379 = vadd.f32 0.0, %v1378
        %1380 = vmatmul.bf16.gmra.mxu0 %v946
        %v1381 = vpop.f32.mrf.mxu0
        %v1382 = vadd.f32 0.0, %v1381
        %v1383 = vpop.f32.mrf.mxu0
        %v1384 = vadd.f32 0.0, %v1383
        %1385 = vmatmul.bf16.gmra.mxu0 %v948
        %v1386 = vpop.f32.mrf.mxu0
        %v1387 = vadd.f32 0.0, %v1386
        %v1388 = vpop.f32.mrf.mxu0
        %v1389 = vadd.f32 0.0, %v1388
        %1390 = vmatmul.bf16.gmra.mxu0 %v950
        %v1391 = vpop.f32.mrf.mxu0
        %v1392 = vadd.f32 0.0, %v1391
        %v1393 = vpop.f32.mrf.mxu0
        %v1394 = vadd.f32 0.0, %v1393
        %1395 = vmatmul.bf16.gmra.mxu0 %v952
        %v1396 = vpop.f32.mrf.mxu0
        %v1397 = vadd.f32 0.0, %v1396
        %v1398 = vpop.f32.mrf.mxu0
        %v1399 = vadd.f32 0.0, %v1398
        %1400 = vmatmul.bf16.gmra.mxu0 %v954
        %v1401 = vpop.f32.mrf.mxu0
        %v1402 = vadd.f32 0.0, %v1401
        %v1403 = vpop.f32.mrf.mxu0
        %v1404 = vadd.f32 0.0, %v1403
        %1405 = vmatmul.bf16.gmra.mxu0 %v956
        %v1406 = vpop.f32.mrf.mxu0
        %v1407 = vadd.f32 0.0, %v1406
        %v1408 = vpop.f32.mrf.mxu0
        %v1409 = vadd.f32 0.0, %v1408
        %1410 = vmatmul.bf16.gmra.mxu0 %v958
        %v1411 = vpop.f32.mrf.mxu0
        %v1412 = vadd.f32 0.0, %v1411
        %v1413 = vpop.f32.mrf.mxu0
        %v1414 = vadd.f32 0.0, %v1413
        %1415 = vmatmul.bf16.gmra.mxu0 %v960
        %v1416 = vpop.f32.mrf.mxu0
        %v1417 = vadd.f32 0.0, %v1416
        %v1418 = vpop.f32.mrf.mxu0
        %v1419 = vadd.f32 0.0, %v1418
        %1420 = vdwg.mxu0
        %1421 = vmatpush.bf16.msra.mxu0 %v1121
        %1422 = vmatpush.bf16.msra.mxu0 %v1119
        %1423 = vmatpush.bf16.msra.mxu0 %v1117
        %1424 = vmatpush.bf16.msra.mxu0 %v1115
        %1425 = vmatpush.bf16.msra.mxu0 %v1113
        %1426 = vmatpush.bf16.msra.mxu0 %v1111
        %1427 = vmatpush.bf16.msra.mxu0 %v1109
        %1428 = vmatpush.bf16.msra.mxu0 %v1107
        %1429 = vmatmul.bf16.gmra.mxu0 %v931
        %v1430 = vpop.f32.mrf.mxu0
        %v1431 = vadd.f32 %v1342, %v1430
        %v1432 = vpop.f32.mrf.mxu0
        %v1433 = vadd.f32 %v1344, %v1432
        %1434 = vmatmul.bf16.gmra.mxu0 %v933
        %v1435 = vpop.f32.mrf.mxu0
        %v1436 = vadd.f32 %v1347, %v1435
        %v1437 = vpop.f32.mrf.mxu0
        %v1438 = vadd.f32 %v1349, %v1437
        %1439 = vmatmul.bf16.gmra.mxu0 %v935
        %v1440 = vpop.f32.mrf.mxu0
        %v1441 = vadd.f32 %v1352, %v1440
        %v1442 = vpop.f32.mrf.mxu0
        %v1443 = vadd.f32 %v1354, %v1442
        %1444 = vmatmul.bf16.gmra.mxu0 %v937
        %v1445 = vpop.f32.mrf.mxu0
        %v1446 = vadd.f32 %v1357, %v1445
        %v1447 = vpop.f32.mrf.mxu0
        %v1448 = vadd.f32 %v1359, %v1447
        %1449 = vmatmul.bf16.gmra.mxu0 %v939
        %v1450 = vpop.f32.mrf.mxu0
        %v1451 = vadd.f32 %v1362, %v1450
        %v1452 = vpop.f32.mrf.mxu0
        %v1453 = vadd.f32 %v1364, %v1452
        %1454 = vmatmul.bf16.gmra.mxu0 %v941
        %v1455 = vpop.f32.mrf.mxu0
        %v1456 = vadd.f32 %v1367, %v1455
        %v1457 = vpop.f32.mrf.mxu0
        %v1458 = vadd.f32 %v1369, %v1457
        %1459 = vmatmul.bf16.gmra.mxu0 %v943
        %v1460 = vpop.f32.mrf.mxu0
        %v1461 = vadd.f32 %v1372, %v1460
        %v1462 = vpop.f32.mrf.mxu0
        %v1463 = vadd.f32 %v1374, %v1462
        %1464 = vmatmul.bf16.gmra.mxu0 %v945
        %v1465 = vpop.f32.mrf.mxu0
        %v1466 = vadd.f32 %v1377, %v1465
        %v1467 = vpop.f32.mrf.mxu0
        %v1468 = vadd.f32 %v1379, %v1467
        %1469 = vmatmul.bf16.gmra.mxu0 %v947
        %v1470 = vpop.f32.mrf.mxu0
        %v1471 = vadd.f32 %v1382, %v1470
        %v1472 = vpop.f32.mrf.mxu0
        %v1473 = vadd.f32 %v1384, %v1472
        %1474 = vmatmul.bf16.gmra.mxu0 %v949
        %v1475 = vpop.f32.mrf.mxu0
        %v1476 = vadd.f32 %v1387, %v1475
        %v1477 = vpop.f32.mrf.mxu0
        %v1478 = vadd.f32 %v1389, %v1477
        %1479 = vmatmul.bf16.gmra.mxu0 %v951
        %v1480 = vpop.f32.mrf.mxu0
        %v1481 = vadd.f32 %v1392, %v1480
        %v1482 = vpop.f32.mrf.mxu0
        %v1483 = vadd.f32 %v1394, %v1482
        %1484 = vmatmul.bf16.gmra.mxu0 %v953
        %v1485 = vpop.f32.mrf.mxu0
        %v1486 = vadd.f32 %v1397, %v1485
        %v1487 = vpop.f32.mrf.mxu0
        %v1488 = vadd.f32 %v1399, %v1487
        %1489 = vmatmul.bf16.gmra.mxu0 %v955
        %v1490 = vpop.f32.mrf.mxu0
        %v1491 = vadd.f32 %v1402, %v1490
        %v1492 = vpop.f32.mrf.mxu0
        %v1493 = vadd.f32 %v1404, %v1492
        %1494 = vmatmul.bf16.gmra.mxu0 %v957
        %v1495 = vpop.f32.mrf.mxu0
        %v1496 = vadd.f32 %v1407, %v1495
        %v1497 = vpop.f32.mrf.mxu0
        %v1498 = vadd.f32 %v1409, %v1497
        %1499 = vmatmul.bf16.gmra.mxu0 %v959
        %v1500 = vpop.f32.mrf.mxu0
        %v1501 = vadd.f32 %v1412, %v1500
        %v1502 = vpop.f32.mrf.mxu0
        %v1503 = vadd.f32 %v1414, %v1502
        %1504 = vmatmul.bf16.gmra.mxu0 %v961
        %v1505 = vpop.f32.mrf.mxu0
        %v1506 = vadd.f32 %v1417, %v1505
        %v1507 = vpop.f32.mrf.mxu0
        %v1508 = vadd.f32 %v1419, %v1507
        %1509 = vdwg.mxu0
        %v1510 = vpack.c.bf16 %v1431, %v1253
        %v1511 = vpack.c.bf16 %v1433, %v1255
        %v1512 = vpack.c.bf16 %v1436, %v1258
        %v1513 = vpack.c.bf16 %v1438, %v1260
        %v1514 = vpack.c.bf16 %v1441, %v1263
        %v1515 = vpack.c.bf16 %v1443, %v1265
        %v1516 = vpack.c.bf16 %v1446, %v1268
        %v1517 = vpack.c.bf16 %v1448, %v1270
        %v1518 = vpack.c.bf16 %v1451, %v1273
        %v1519 = vpack.c.bf16 %v1453, %v1275
        %v1520 = vpack.c.bf16 %v1456, %v1278
        %v1521 = vpack.c.bf16 %v1458, %v1280
        %v1522 = vpack.c.bf16 %v1461, %v1283
        %v1523 = vpack.c.bf16 %v1463, %v1285
        %v1524 = vpack.c.bf16 %v1466, %v1288
        %v1525 = vpack.c.bf16 %v1468, %v1290
        %v1526 = vpack.c.bf16 %v1471, %v1293
        %v1527 = vpack.c.bf16 %v1473, %v1295
        %v1528 = vpack.c.bf16 %v1476, %v1298
        %v1529 = vpack.c.bf16 %v1478, %v1300
        %v1530 = vpack.c.bf16 %v1481, %v1303
        %v1531 = vpack.c.bf16 %v1483, %v1305
        %v1532 = vpack.c.bf16 %v1486, %v1308
        %v1533 = vpack.c.bf16 %v1488, %v1310
        %v1534 = vpack.c.bf16 %v1491, %v1313
        %v1535 = vpack.c.bf16 %v1493, %v1315
        %v1536 = vpack.c.bf16 %v1496, %v1318
        %v1537 = vpack.c.bf16 %v1498, %v1320
        %v1538 = vpack.c.bf16 %v1501, %v1323
        %v1539 = vpack.c.bf16 %v1503, %v1325
        %v1540 = vpack.c.bf16 %v1506, %v1328
        %v1541 = vpack.c.bf16 %v1508, %v1330
        %v1542 = vld [vmem:[%s4] sm:$0x3]
        %1544 = vst [vmem:[#allocation1] ss:$9 sm:$0xff] %v1542
        %v1545 = vld [vmem:[#allocation1] sm:$0xff]
        %v1546 = vld [vmem:[#allocation1 + $0x9] sm:$0xff]
        %v1547 = vpack.i.b16 %v1545, %v1545
        %v1549 = vperm.slane %v1547, 0
        %v1550 = vpack.i.b16 %v1546, %v1546
        %v1552 = vperm.slane %v1550, 0
        %v1553 = vunpack.c.l.bf16 %v1510
        %v1554 = vunpack.c.h.bf16 %v1510
        %v1555 = vunpack.c.l.bf16 %v1511
        %v1556 = vunpack.c.h.bf16 %v1511
        %v1557 = vunpack.c.l.bf16 %v1512
        %v1558 = vunpack.c.h.bf16 %v1512
        %v1559 = vunpack.c.l.bf16 %v1513
        %v1560 = vunpack.c.h.bf16 %v1513
        %v1561 = vunpack.c.l.bf16 %v1514
        %v1562 = vunpack.c.h.bf16 %v1514
        %v1563 = vunpack.c.l.bf16 %v1515
        %v1564 = vunpack.c.h.bf16 %v1515
        %v1565 = vunpack.c.l.bf16 %v1516
        %v1566 = vunpack.c.h.bf16 %v1516
        %v1567 = vunpack.c.l.bf16 %v1517
        %v1568 = vunpack.c.h.bf16 %v1517
        %v1569 = vunpack.c.l.bf16 %v1518
        %v1570 = vunpack.c.h.bf16 %v1518
        %v1571 = vunpack.c.l.bf16 %v1519
        %v1572 = vunpack.c.h.bf16 %v1519
        %v1573 = vunpack.c.l.bf16 %v1520
        %v1574 = vunpack.c.h.bf16 %v1520
        %v1575 = vunpack.c.l.bf16 %v1521
        %v1576 = vunpack.c.h.bf16 %v1521
        %v1577 = vunpack.c.l.bf16 %v1522
        %v1578 = vunpack.c.h.bf16 %v1522
        %v1579 = vunpack.c.l.bf16 %v1523
        %v1580 = vunpack.c.h.bf16 %v1523
        %v1581 = vunpack.c.l.bf16 %v1524
        %v1582 = vunpack.c.h.bf16 %v1524
        %v1583 = vunpack.c.l.bf16 %v1525
        %v1584 = vunpack.c.h.bf16 %v1525
        %v1585 = vunpack.c.l.bf16 %v1526
        %v1586 = vunpack.c.h.bf16 %v1526
        %v1587 = vunpack.c.l.bf16 %v1527
        %v1588 = vunpack.c.h.bf16 %v1527
        %v1589 = vunpack.c.l.bf16 %v1528
        %v1590 = vunpack.c.h.bf16 %v1528
        %v1591 = vunpack.c.l.bf16 %v1529
        %v1592 = vunpack.c.h.bf16 %v1529
        %v1593 = vunpack.c.l.bf16 %v1530
        %v1594 = vunpack.c.h.bf16 %v1530
        %v1595 = vunpack.c.l.bf16 %v1531
        %v1596 = vunpack.c.h.bf16 %v1531
        %v1597 = vunpack.c.l.bf16 %v1532
        %v1598 = vunpack.c.h.bf16 %v1532
        %v1599 = vunpack.c.l.bf16 %v1533
        %v1600 = vunpack.c.h.bf16 %v1533
        %v1601 = vunpack.c.l.bf16 %v1534
        %v1602 = vunpack.c.h.bf16 %v1534
        %v1603 = vunpack.c.l.bf16 %v1535
        %v1604 = vunpack.c.h.bf16 %v1535
        %v1605 = vunpack.c.l.bf16 %v1536
        %v1606 = vunpack.c.h.bf16 %v1536
        %v1607 = vunpack.c.l.bf16 %v1537
        %v1608 = vunpack.c.h.bf16 %v1537
        %v1609 = vunpack.c.l.bf16 %v1538
        %v1610 = vunpack.c.h.bf16 %v1538
        %v1611 = vunpack.c.l.bf16 %v1539
        %v1612 = vunpack.c.h.bf16 %v1539
        %v1613 = vunpack.c.l.bf16 %v1540
        %v1614 = vunpack.c.h.bf16 %v1540
        %v1615 = vunpack.c.l.bf16 %v1541
        %v1616 = vunpack.c.h.bf16 %v1541
        %v1617 = vunpack.c.l.bf16 %v1549
        %v1618 = vunpack.c.l.bf16 %v1552
        %v1619 = vadd.f32 %v1553, %v1617
        %v1620 = vadd.f32 %v1554, %v1618
        %v1621 = vadd.f32 %v1555, %v1617
        %v1622 = vadd.f32 %v1556, %v1618
        %v1623 = vadd.f32 %v1557, %v1617
        %v1624 = vadd.f32 %v1558, %v1618
        %v1625 = vadd.f32 %v1559, %v1617
        %v1626 = vadd.f32 %v1560, %v1618
        %v1627 = vadd.f32 %v1561, %v1617
        %v1628 = vadd.f32 %v1562, %v1618
        %v1629 = vadd.f32 %v1563, %v1617
        %v1630 = vadd.f32 %v1564, %v1618
        %v1631 = vadd.f32 %v1565, %v1617
        %v1632 = vadd.f32 %v1566, %v1618
        %v1633 = vadd.f32 %v1567, %v1617
        %v1634 = vadd.f32 %v1568, %v1618
        %v1635 = vadd.f32 %v1569, %v1617
        %v1636 = vadd.f32 %v1570, %v1618
        %v1637 = vadd.f32 %v1571, %v1617
        %v1638 = vadd.f32 %v1572, %v1618
        %v1639 = vadd.f32 %v1573, %v1617
        %v1640 = vadd.f32 %v1574, %v1618
        %v1641 = vadd.f32 %v1575, %v1617
        %v1642 = vadd.f32 %v1576, %v1618
        %v1643 = vadd.f32 %v1577, %v1617
        %v1644 = vadd.f32 %v1578, %v1618
        %v1645 = vadd.f32 %v1579, %v1617
        %v1646 = vadd.f32 %v1580, %v1618
        %v1647 = vadd.f32 %v1581, %v1617
        %v1648 = vadd.f32 %v1582, %v1618
        %v1649 = vadd.f32 %v1583, %v1617
        %v1650 = vadd.f32 %v1584, %v1618
        %v1651 = vadd.f32 %v1585, %v1617
        %v1652 = vadd.f32 %v1586, %v1618
        %v1653 = vadd.f32 %v1587, %v1617
        %v1654 = vadd.f32 %v1588, %v1618
        %v1655 = vadd.f32 %v1589, %v1617
        %v1656 = vadd.f32 %v1590, %v1618
        %v1657 = vadd.f32 %v1591, %v1617
        %v1658 = vadd.f32 %v1592, %v1618
        %v1659 = vadd.f32 %v1593, %v1617
        %v1660 = vadd.f32 %v1594, %v1618
        %v1661 = vadd.f32 %v1595, %v1617
        %v1662 = vadd.f32 %v1596, %v1618
        %v1663 = vadd.f32 %v1597, %v1617
        %v1664 = vadd.f32 %v1598, %v1618
        %v1665 = vadd.f32 %v1599, %v1617
        %v1666 = vadd.f32 %v1600, %v1618
        %v1667 = vadd.f32 %v1601, %v1617
        %v1668 = vadd.f32 %v1602, %v1618
        %v1669 = vadd.f32 %v1603, %v1617
        %v1670 = vadd.f32 %v1604, %v1618
        %v1671 = vadd.f32 %v1605, %v1617
        %v1672 = vadd.f32 %v1606, %v1618
        %v1673 = vadd.f32 %v1607, %v1617
        %v1674 = vadd.f32 %v1608, %v1618
        %v1675 = vadd.f32 %v1609, %v1617
        %v1676 = vadd.f32 %v1610, %v1618
        %v1677 = vadd.f32 %v1611, %v1617
        %v1678 = vadd.f32 %v1612, %v1618
        %v1679 = vadd.f32 %v1613, %v1617
        %v1680 = vadd.f32 %v1614, %v1618
        %v1681 = vadd.f32 %v1615, %v1617
        %v1682 = vadd.f32 %v1616, %v1618
        %v1683 = vpack.c.bf16 %v1620, %v1619
        %v1684 = vpack.c.bf16 %v1622, %v1621
        %v1685 = vpack.c.bf16 %v1624, %v1623
        %v1686 = vpack.c.bf16 %v1626, %v1625
        %v1687 = vpack.c.bf16 %v1628, %v1627
        %v1688 = vpack.c.bf16 %v1630, %v1629
        %v1689 = vpack.c.bf16 %v1632, %v1631
        %v1690 = vpack.c.bf16 %v1634, %v1633
        %v1691 = vpack.c.bf16 %v1636, %v1635
        %v1692 = vpack.c.bf16 %v1638, %v1637
        %v1693 = vpack.c.bf16 %v1640, %v1639
        %v1694 = vpack.c.bf16 %v1642, %v1641
        %v1695 = vpack.c.bf16 %v1644, %v1643
        %v1696 = vpack.c.bf16 %v1646, %v1645
        %v1697 = vpack.c.bf16 %v1648, %v1647
        %v1698 = vpack.c.bf16 %v1650, %v1649
        %v1699 = vpack.c.bf16 %v1652, %v1651
        %v1700 = vpack.c.bf16 %v1654, %v1653
        %v1701 = vpack.c.bf16 %v1656, %v1655
        %v1702 = vpack.c.bf16 %v1658, %v1657
        %v1703 = vpack.c.bf16 %v1660, %v1659
        %v1704 = vpack.c.bf16 %v1662, %v1661
        %v1705 = vpack.c.bf16 %v1664, %v1663
        %v1706 = vpack.c.bf16 %v1666, %v1665
        %v1707 = vpack.c.bf16 %v1668, %v1667
        %v1708 = vpack.c.bf16 %v1670, %v1669
        %v1709 = vpack.c.bf16 %v1672, %v1671
        %v1710 = vpack.c.bf16 %v1674, %v1673
        %v1711 = vpack.c.bf16 %v1676, %v1675
        %v1712 = vpack.c.bf16 %v1678, %v1677
        %v1713 = vpack.c.bf16 %v1680, %v1679
        %v1714 = vpack.c.bf16 %v1682, %v1681
        %v1715 = vunpack.c.l.bf16 %v1683
        %v1716 = vunpack.c.h.bf16 %v1683
        %v1717 = vunpack.c.l.bf16 %v1684
        %v1718 = vunpack.c.h.bf16 %v1684
        %v1719 = vunpack.c.l.bf16 %v1685
        %v1720 = vunpack.c.h.bf16 %v1685
        %v1721 = vunpack.c.l.bf16 %v1686
        %v1722 = vunpack.c.h.bf16 %v1686
        %v1723 = vunpack.c.l.bf16 %v1687
        %v1724 = vunpack.c.h.bf16 %v1687
        %v1725 = vunpack.c.l.bf16 %v1688
        %v1726 = vunpack.c.h.bf16 %v1688
        %v1727 = vunpack.c.l.bf16 %v1689
        %v1728 = vunpack.c.h.bf16 %v1689
        %v1729 = vunpack.c.l.bf16 %v1690
        %v1730 = vunpack.c.h.bf16 %v1690
        %v1731 = vunpack.c.l.bf16 %v1691
        %v1732 = vunpack.c.h.bf16 %v1691
        %v1733 = vunpack.c.l.bf16 %v1692
        %v1734 = vunpack.c.h.bf16 %v1692
        %v1735 = vunpack.c.l.bf16 %v1693
        %v1736 = vunpack.c.h.bf16 %v1693
        %v1737 = vunpack.c.l.bf16 %v1694
        %v1738 = vunpack.c.h.bf16 %v1694
        %v1739 = vunpack.c.l.bf16 %v1695
        %v1740 = vunpack.c.h.bf16 %v1695
        %v1741 = vunpack.c.l.bf16 %v1696
        %v1742 = vunpack.c.h.bf16 %v1696
        %v1743 = vunpack.c.l.bf16 %v1697
        %v1744 = vunpack.c.h.bf16 %v1697
        %v1745 = vunpack.c.l.bf16 %v1698
        %v1746 = vunpack.c.h.bf16 %v1698
        %v1747 = vunpack.c.l.bf16 %v1699
        %v1748 = vunpack.c.h.bf16 %v1699
        %v1749 = vunpack.c.l.bf16 %v1700
        %v1750 = vunpack.c.h.bf16 %v1700
        %v1751 = vunpack.c.l.bf16 %v1701
        %v1752 = vunpack.c.h.bf16 %v1701
        %v1753 = vunpack.c.l.bf16 %v1702
        %v1754 = vunpack.c.h.bf16 %v1702
        %v1755 = vunpack.c.l.bf16 %v1703
        %v1756 = vunpack.c.h.bf16 %v1703
        %v1757 = vunpack.c.l.bf16 %v1704
        %v1758 = vunpack.c.h.bf16 %v1704
        %v1759 = vunpack.c.l.bf16 %v1705
        %v1760 = vunpack.c.h.bf16 %v1705
        %v1761 = vunpack.c.l.bf16 %v1706
        %v1762 = vunpack.c.h.bf16 %v1706
        %v1763 = vunpack.c.l.bf16 %v1707
        %v1764 = vunpack.c.h.bf16 %v1707
        %v1765 = vunpack.c.l.bf16 %v1708
        %v1766 = vunpack.c.h.bf16 %v1708
        %v1767 = vunpack.c.l.bf16 %v1709
        %v1768 = vunpack.c.h.bf16 %v1709
        %v1769 = vunpack.c.l.bf16 %v1710
        %v1770 = vunpack.c.h.bf16 %v1710
        %v1771 = vunpack.c.l.bf16 %v1711
        %v1772 = vunpack.c.h.bf16 %v1711
        %v1773 = vunpack.c.l.bf16 %v1712
        %v1774 = vunpack.c.h.bf16 %v1712
        %v1775 = vunpack.c.l.bf16 %v1713
        %v1776 = vunpack.c.h.bf16 %v1713
        %v1777 = vunpack.c.l.bf16 %v1714
        %v1778 = vunpack.c.h.bf16 %v1714
        %v1779 = vmax.f32 %v1715, 0.0
        %v1780 = vmax.f32 %v1716, 0.0
        %v1781 = vmax.f32 %v1717, 0.0
        %v1782 = vmax.f32 %v1718, 0.0
        %v1783 = vmax.f32 %v1719, 0.0
        %v1784 = vmax.f32 %v1720, 0.0
        %v1785 = vmax.f32 %v1721, 0.0
        %v1786 = vmax.f32 %v1722, 0.0
        %v1787 = vmax.f32 %v1723, 0.0
        %v1788 = vmax.f32 %v1724, 0.0
        %v1789 = vmax.f32 %v1725, 0.0
        %v1790 = vmax.f32 %v1726, 0.0
        %v1791 = vmax.f32 %v1727, 0.0
        %v1792 = vmax.f32 %v1728, 0.0
        %v1793 = vmax.f32 %v1729, 0.0
        %v1794 = vmax.f32 %v1730, 0.0
        %v1795 = vmax.f32 %v1731, 0.0
        %v1796 = vmax.f32 %v1732, 0.0
        %v1797 = vmax.f32 %v1733, 0.0
        %v1798 = vmax.f32 %v1734, 0.0
        %v1799 = vmax.f32 %v1735, 0.0
        %v1800 = vmax.f32 %v1736, 0.0
        %v1801 = vmax.f32 %v1737, 0.0
        %v1802 = vmax.f32 %v1738, 0.0
        %v1803 = vmax.f32 %v1739, 0.0
        %v1804 = vmax.f32 %v1740, 0.0
        %v1805 = vmax.f32 %v1741, 0.0
        %v1806 = vmax.f32 %v1742, 0.0
        %v1807 = vmax.f32 %v1743, 0.0
        %v1808 = vmax.f32 %v1744, 0.0
        %v1809 = vmax.f32 %v1745, 0.0
        %v1810 = vmax.f32 %v1746, 0.0
        %v1811 = vmax.f32 %v1747, 0.0
        %v1812 = vmax.f32 %v1748, 0.0
        %v1813 = vmax.f32 %v1749, 0.0
        %v1814 = vmax.f32 %v1750, 0.0
        %v1815 = vmax.f32 %v1751, 0.0
        %v1816 = vmax.f32 %v1752, 0.0
        %v1817 = vmax.f32 %v1753, 0.0
        %v1818 = vmax.f32 %v1754, 0.0
        %v1819 = vmax.f32 %v1755, 0.0
        %v1820 = vmax.f32 %v1756, 0.0
        %v1821 = vmax.f32 %v1757, 0.0
        %v1822 = vmax.f32 %v1758, 0.0
        %v1823 = vmax.f32 %v1759, 0.0
        %v1824 = vmax.f32 %v1760, 0.0
        %v1825 = vmax.f32 %v1761, 0.0
        %v1826 = vmax.f32 %v1762, 0.0
        %v1827 = vmax.f32 %v1763, 0.0
        %v1828 = vmax.f32 %v1764, 0.0
        %v1829 = vmax.f32 %v1765, 0.0
        %v1830 = vmax.f32 %v1766, 0.0
        %v1831 = vmax.f32 %v1767, 0.0
        %v1832 = vmax.f32 %v1768, 0.0
        %v1833 = vmax.f32 %v1769, 0.0
        %v1834 = vmax.f32 %v1770, 0.0
        %v1835 = vmax.f32 %v1771, 0.0
        %v1836 = vmax.f32 %v1772, 0.0
        %v1837 = vmax.f32 %v1773, 0.0
        %v1838 = vmax.f32 %v1774, 0.0
        %v1839 = vmax.f32 %v1775, 0.0
        %v1840 = vmax.f32 %v1776, 0.0
        %v1841 = vmax.f32 %v1777, 0.0
        %v1842 = vmax.f32 %v1778, 0.0
        %v1843 = vpack.c.bf16 %v1781, %v1779
        %v1844 = vpack.c.bf16 %v1782, %v1780
        %v1845 = vpack.c.bf16 %v1785, %v1783
        %v1846 = vpack.c.bf16 %v1786, %v1784
        %v1847 = vpack.c.bf16 %v1789, %v1787
        %v1848 = vpack.c.bf16 %v1790, %v1788
        %v1849 = vpack.c.bf16 %v1793, %v1791
        %v1850 = vpack.c.bf16 %v1794, %v1792
        %v1851 = vpack.c.bf16 %v1797, %v1795
        %v1852 = vpack.c.bf16 %v1798, %v1796
        %v1853 = vpack.c.bf16 %v1801, %v1799
        %v1854 = vpack.c.bf16 %v1802, %v1800
        %v1855 = vpack.c.bf16 %v1805, %v1803
        %v1856 = vpack.c.bf16 %v1806, %v1804
        %v1857 = vpack.c.bf16 %v1809, %v1807
        %v1858 = vpack.c.bf16 %v1810, %v1808
        %v1859 = vpack.c.bf16 %v1813, %v1811
        %v1860 = vpack.c.bf16 %v1814, %v1812
        %v1861 = vpack.c.bf16 %v1817, %v1815
        %v1862 = vpack.c.bf16 %v1818, %v1816
        %v1863 = vpack.c.bf16 %v1821, %v1819
        %v1864 = vpack.c.bf16 %v1822, %v1820
        %v1865 = vpack.c.bf16 %v1825, %v1823
        %v1866 = vpack.c.bf16 %v1826, %v1824
        %v1867 = vpack.c.bf16 %v1829, %v1827
        %v1868 = vpack.c.bf16 %v1830, %v1828
        %v1869 = vpack.c.bf16 %v1833, %v1831
        %v1870 = vpack.c.bf16 %v1834, %v1832
        %v1871 = vpack.c.bf16 %v1837, %v1835
        %v1872 = vpack.c.bf16 %v1838, %v1836
        %v1873 = vpack.c.bf16 %v1841, %v1839
        %v1874 = vpack.c.bf16 %v1842, %v1840
        %s1875 = scalar_lea.vmem [#allocation2], 256
        %v1876 = vld [vmem:[%s1875] sm:$0xff]
        %v1877 = vld [vmem:[%s1875 + $0x8] sm:$0xff]
        %v1878 = vld [vmem:[%s1875 + $0x10] sm:$0xff]
        %v1879 = vld [vmem:[%s1875 + $0x18] sm:$0xff]
        %v1880 = vld [vmem:[%s1875 + $0x20] sm:$0xff]
        %v1881 = vld [vmem:[%s1875 + $0x28] sm:$0xff]
        %v1882 = vld [vmem:[%s1875 + $0x30] sm:$0xff]
        %v1883 = vld [vmem:[%s1875 + $0x38] sm:$0xff]
        %v1884 = vld [vmem:[%s1875 + $0x40] sm:$0xff]
        %v1885 = vld [vmem:[%s1875 + $0x48] sm:$0xff]
        %v1886 = vld [vmem:[%s1875 + $0x50] sm:$0xff]
        %v1887 = vld [vmem:[%s1875 + $0x58] sm:$0xff]
        %v1888 = vld [vmem:[%s1875 + $0x60] sm:$0xff]
        %v1889 = vld [vmem:[%s1875 + $0x68] sm:$0xff]
        %v1890 = vld [vmem:[%s1875 + $0x70] sm:$0xff]
        %v1891 = vld [vmem:[%s1875 + $0x78] sm:$0xff]
        %v1892 = vld [vmem:[%s1875 + $0x80] sm:$0xff]
        %v1893 = vld [vmem:[%s1875 + $0x88] sm:$0xff]
        %v1894 = vld [vmem:[%s1875 + $0x90] sm:$0xff]
        %v1895 = vld [vmem:[%s1875 + $0x98] sm:$0xff]
        %v1896 = vld [vmem:[%s1875 + $0xa0] sm:$0xff]
        %v1897 = vld [vmem:[%s1875 + $0xa8] sm:$0xff]
        %v1898 = vld [vmem:[%s1875 + $0xb0] sm:$0xff]
        %v1899 = vld [vmem:[%s1875 + $0xb8] sm:$0xff]
        %v1900 = vld [vmem:[%s1875 + $0xc0] sm:$0xff]
        %v1901 = vld [vmem:[%s1875 + $0xc8] sm:$0xff]
        %v1902 = vld [vmem:[%s1875 + $0xd0] sm:$0xff]
        %v1903 = vld [vmem:[%s1875 + $0xd8] sm:$0xff]
        %v1904 = vld [vmem:[%s1875 + $0xe0] sm:$0xff]
        %v1905 = vld [vmem:[%s1875 + $0xe8] sm:$0xff]
        %v1906 = vld [vmem:[%s1875 + $0xf0] sm:$0xff]
        %v1907 = vld [vmem:[%s1875 + $0xf8] sm:$0xff]
        %v1940 = vunpack.c.l.b16 %v1876
        %v1941 = vunpack.c.h.b16 %v1876
        %v1942 = vunpack.c.l.b16 %v1877
        %v1943 = vunpack.c.h.b16 %v1877
        %v1944 = vunpack.c.l.b16 %v1878
        %v1945 = vunpack.c.h.b16 %v1878
        %v1946 = vunpack.c.l.b16 %v1879
        %v1947 = vunpack.c.h.b16 %v1879
        %v1948 = vunpack.c.l.b16 %v1880
        %v1949 = vunpack.c.h.b16 %v1880
        %v1950 = vunpack.c.l.b16 %v1881
        %v1951 = vunpack.c.h.b16 %v1881
        %v1952 = vunpack.c.l.b16 %v1882
        %v1953 = vunpack.c.h.b16 %v1882
        %v1954 = vunpack.c.l.b16 %v1883
        %v1955 = vunpack.c.h.b16 %v1883
        %v1956 = vunpack.c.l.b16 %v1884
        %v1957 = vunpack.c.h.b16 %v1884
        %v1958 = vunpack.c.l.b16 %v1885
        %v1959 = vunpack.c.h.b16 %v1885
        %v1960 = vunpack.c.l.b16 %v1886
        %v1961 = vunpack.c.h.b16 %v1886
        %v1962 = vunpack.c.l.b16 %v1887
        %v1963 = vunpack.c.h.b16 %v1887
        %v1964 = vunpack.c.l.b16 %v1888
        %v1965 = vunpack.c.h.b16 %v1888
        %v1966 = vunpack.c.l.b16 %v1889
        %v1967 = vunpack.c.h.b16 %v1889
        %v1968 = vunpack.c.l.b16 %v1890
        %v1969 = vunpack.c.h.b16 %v1890
        %v1970 = vunpack.c.l.b16 %v1891
        %v1971 = vunpack.c.h.b16 %v1891
        %v1972 = vunpack.c.l.b16 %v1892
        %v1973 = vunpack.c.h.b16 %v1892
        %v1974 = vunpack.c.l.b16 %v1893
        %v1975 = vunpack.c.h.b16 %v1893
        %v1976 = vunpack.c.l.b16 %v1894
        %v1977 = vunpack.c.h.b16 %v1894
        %v1978 = vunpack.c.l.b16 %v1895
        %v1979 = vunpack.c.h.b16 %v1895
        %v1980 = vunpack.c.l.b16 %v1896
        %v1981 = vunpack.c.h.b16 %v1896
        %v1982 = vunpack.c.l.b16 %v1897
        %v1983 = vunpack.c.h.b16 %v1897
        %v1984 = vunpack.c.l.b16 %v1898
        %v1985 = vunpack.c.h.b16 %v1898
        %v1986 = vunpack.c.l.b16 %v1899
        %v1987 = vunpack.c.h.b16 %v1899
        %v1988 = vunpack.c.l.b16 %v1900
        %v1989 = vunpack.c.h.b16 %v1900
        %v1990 = vunpack.c.l.b16 %v1901
        %v1991 = vunpack.c.h.b16 %v1901
        %v1992 = vunpack.c.l.b16 %v1902
        %v1993 = vunpack.c.h.b16 %v1902
        %v1994 = vunpack.c.l.b16 %v1903
        %v1995 = vunpack.c.h.b16 %v1903
        %v1996 = vunpack.c.l.b16 %v1904
        %v1997 = vunpack.c.h.b16 %v1904
        %v1998 = vunpack.c.l.b16 %v1905
        %v1999 = vunpack.c.h.b16 %v1905
        %v2000 = vunpack.c.l.b16 %v1906
        %v2001 = vunpack.c.h.b16 %v1906
        %v2002 = vunpack.c.l.b16 %v1907
        %v2003 = vunpack.c.h.b16 %v1907
        %v2004 = vpack.c.b16 %v1942, %v1940
        %v2005 = vpack.c.b16 %v1943, %v1941
        %v2006 = vpack.c.b16 %v1946, %v1944
        %v2007 = vpack.c.b16 %v1947, %v1945
        %v2008 = vpack.c.b16 %v1950, %v1948
        %v2009 = vpack.c.b16 %v1951, %v1949
        %v2010 = vpack.c.b16 %v1954, %v1952
        %v2011 = vpack.c.b16 %v1955, %v1953
        %v2012 = vpack.c.b16 %v1958, %v1956
        %v2013 = vpack.c.b16 %v1959, %v1957
        %v2014 = vpack.c.b16 %v1962, %v1960
        %v2015 = vpack.c.b16 %v1963, %v1961
        %v2016 = vpack.c.b16 %v1966, %v1964
        %v2017 = vpack.c.b16 %v1967, %v1965
        %v2018 = vpack.c.b16 %v1970, %v1968
        %v2019 = vpack.c.b16 %v1971, %v1969
        %v2020 = vpack.c.b16 %v1974, %v1972
        %v2021 = vpack.c.b16 %v1975, %v1973
        %v2022 = vpack.c.b16 %v1978, %v1976
        %v2023 = vpack.c.b16 %v1979, %v1977
        %v2024 = vpack.c.b16 %v1982, %v1980
        %v2025 = vpack.c.b16 %v1983, %v1981
        %v2026 = vpack.c.b16 %v1986, %v1984
        %v2027 = vpack.c.b16 %v1987, %v1985
        %v2028 = vpack.c.b16 %v1990, %v1988
        %v2029 = vpack.c.b16 %v1991, %v1989
        %v2030 = vpack.c.b16 %v1994, %v1992
        %v2031 = vpack.c.b16 %v1995, %v1993
        %v2032 = vpack.c.b16 %v1998, %v1996
        %v2033 = vpack.c.b16 %v1999, %v1997
        %v2034 = vpack.c.b16 %v2002, %v2000
        %v2035 = vpack.c.b16 %v2003, %v2001
        %2068 = vmatpush.bf16.msra.mxu0 %v2018
        %2069 = vmatpush.bf16.msra.mxu0 %v2016
        %2070 = vmatpush.bf16.msra.mxu0 %v2014
        %2071 = vmatpush.bf16.msra.mxu0 %v2012
        %2072 = vmatpush.bf16.msra.mxu0 %v2010
        %2073 = vmatpush.bf16.msra.mxu0 %v2008
        %2074 = vmatpush.bf16.msra.mxu0 %v2006
        %2075 = vmatpush.bf16.msra.mxu0 %v2004
        %2076 = vmatmul.bf16.gmra.mxu0 %v1843
        %v2077 = vpop.f32.mrf.mxu0
        %v2078 = vadd.f32 0.0, %v2077
        %v2079 = vpop.f32.mrf.mxu0
        %v2080 = vadd.f32 0.0, %v2079
        %2081 = vmatmul.bf16.gmra.mxu0 %v1845
        %v2082 = vpop.f32.mrf.mxu0
        %v2083 = vadd.f32 0.0, %v2082
        %v2084 = vpop.f32.mrf.mxu0
        %v2085 = vadd.f32 0.0, %v2084
        %2086 = vmatmul.bf16.gmra.mxu0 %v1847
        %v2087 = vpop.f32.mrf.mxu0
        %v2088 = vadd.f32 0.0, %v2087
        %v2089 = vpop.f32.mrf.mxu0
        %v2090 = vadd.f32 0.0, %v2089
        %2091 = vmatmul.bf16.gmra.mxu0 %v1849
        %v2092 = vpop.f32.mrf.mxu0
        %v2093 = vadd.f32 0.0, %v2092
        %v2094 = vpop.f32.mrf.mxu0
        %v2095 = vadd.f32 0.0, %v2094
        %2096 = vmatmul.bf16.gmra.mxu0 %v1851
        %v2097 = vpop.f32.mrf.mxu0
        %v2098 = vadd.f32 0.0, %v2097
        %v2099 = vpop.f32.mrf.mxu0
        %v2100 = vadd.f32 0.0, %v2099
        %2101 = vmatmul.bf16.gmra.mxu0 %v1853
        %v2102 = vpop.f32.mrf.mxu0
        %v2103 = vadd.f32 0.0, %v2102
        %v2104 = vpop.f32.mrf.mxu0
        %v2105 = vadd.f32 0.0, %v2104
        %2106 = vmatmul.bf16.gmra.mxu0 %v1855
        %v2107 = vpop.f32.mrf.mxu0
        %v2108 = vadd.f32 0.0, %v2107
        %v2109 = vpop.f32.mrf.mxu0
        %v2110 = vadd.f32 0.0, %v2109
        %2111 = vmatmul.bf16.gmra.mxu0 %v1857
        %v2112 = vpop.f32.mrf.mxu0
        %v2113 = vadd.f32 0.0, %v2112
        %v2114 = vpop.f32.mrf.mxu0
        %v2115 = vadd.f32 0.0, %v2114
        %2116 = vmatmul.bf16.gmra.mxu0 %v1859
        %v2117 = vpop.f32.mrf.mxu0
        %v2118 = vadd.f32 0.0, %v2117
        %v2119 = vpop.f32.mrf.mxu0
        %v2120 = vadd.f32 0.0, %v2119
        %2121 = vmatmul.bf16.gmra.mxu0 %v1861
        %v2122 = vpop.f32.mrf.mxu0
        %v2123 = vadd.f32 0.0, %v2122
        %v2124 = vpop.f32.mrf.mxu0
        %v2125 = vadd.f32 0.0, %v2124
        %2126 = vmatmul.bf16.gmra.mxu0 %v1863
        %v2127 = vpop.f32.mrf.mxu0
        %v2128 = vadd.f32 0.0, %v2127
        %v2129 = vpop.f32.mrf.mxu0
        %v2130 = vadd.f32 0.0, %v2129
        %2131 = vmatmul.bf16.gmra.mxu0 %v1865
        %v2132 = vpop.f32.mrf.mxu0
        %v2133 = vadd.f32 0.0, %v2132
        %v2134 = vpop.f32.mrf.mxu0
        %v2135 = vadd.f32 0.0, %v2134
        %2136 = vmatmul.bf16.gmra.mxu0 %v1867
        %v2137 = vpop.f32.mrf.mxu0
        %v2138 = vadd.f32 0.0, %v2137
        %v2139 = vpop.f32.mrf.mxu0
        %v2140 = vadd.f32 0.0, %v2139
        %2141 = vmatmul.bf16.gmra.mxu0 %v1869
        %v2142 = vpop.f32.mrf.mxu0
        %v2143 = vadd.f32 0.0, %v2142
        %v2144 = vpop.f32.mrf.mxu0
        %v2145 = vadd.f32 0.0, %v2144
        %2146 = vmatmul.bf16.gmra.mxu0 %v1871
        %v2147 = vpop.f32.mrf.mxu0
        %v2148 = vadd.f32 0.0, %v2147
        %v2149 = vpop.f32.mrf.mxu0
        %v2150 = vadd.f32 0.0, %v2149
        %2151 = vmatmul.bf16.gmra.mxu0 %v1873
        %v2152 = vpop.f32.mrf.mxu0
        %v2153 = vadd.f32 0.0, %v2152
        %v2154 = vpop.f32.mrf.mxu0
        %v2155 = vadd.f32 0.0, %v2154
        %2156 = vdwg.mxu0
        %2157 = vmatpush.bf16.msra.mxu0 %v2034
        %2158 = vmatpush.bf16.msra.mxu0 %v2032
        %2159 = vmatpush.bf16.msra.mxu0 %v2030
        %2160 = vmatpush.bf16.msra.mxu0 %v2028
        %2161 = vmatpush.bf16.msra.mxu0 %v2026
        %2162 = vmatpush.bf16.msra.mxu0 %v2024
        %2163 = vmatpush.bf16.msra.mxu0 %v2022
        %2164 = vmatpush.bf16.msra.mxu0 %v2020
        %2165 = vmatmul.bf16.gmra.mxu0 %v1844
        %v2166 = vpop.f32.mrf.mxu0
        %v2167 = vadd.f32 %v2078, %v2166
        %v2168 = vpop.f32.mrf.mxu0
        %v2169 = vadd.f32 %v2080, %v2168
        %2170 = vmatmul.bf16.gmra.mxu0 %v1846
        %v2171 = vpop.f32.mrf.mxu0
        %v2172 = vadd.f32 %v2083, %v2171
        %v2173 = vpop.f32.mrf.mxu0
        %v2174 = vadd.f32 %v2085, %v2173
        %2175 = vmatmul.bf16.gmra.mxu0 %v1848
        %v2176 = vpop.f32.mrf.mxu0
        %v2177 = vadd.f32 %v2088, %v2176
        %v2178 = vpop.f32.mrf.mxu0
        %v2179 = vadd.f32 %v2090, %v2178
        %2180 = vmatmul.bf16.gmra.mxu0 %v1850
        %v2181 = vpop.f32.mrf.mxu0
        %v2182 = vadd.f32 %v2093, %v2181
        %v2183 = vpop.f32.mrf.mxu0
        %v2184 = vadd.f32 %v2095, %v2183
        %2185 = vmatmul.bf16.gmra.mxu0 %v1852
        %v2186 = vpop.f32.mrf.mxu0
        %v2187 = vadd.f32 %v2098, %v2186
        %v2188 = vpop.f32.mrf.mxu0
        %v2189 = vadd.f32 %v2100, %v2188
        %2190 = vmatmul.bf16.gmra.mxu0 %v1854
        %v2191 = vpop.f32.mrf.mxu0
        %v2192 = vadd.f32 %v2103, %v2191
        %v2193 = vpop.f32.mrf.mxu0
        %v2194 = vadd.f32 %v2105, %v2193
        %2195 = vmatmul.bf16.gmra.mxu0 %v1856
        %v2196 = vpop.f32.mrf.mxu0
        %v2197 = vadd.f32 %v2108, %v2196
        %v2198 = vpop.f32.mrf.mxu0
        %v2199 = vadd.f32 %v2110, %v2198
        %2200 = vmatmul.bf16.gmra.mxu0 %v1858
        %v2201 = vpop.f32.mrf.mxu0
        %v2202 = vadd.f32 %v2113, %v2201
        %v2203 = vpop.f32.mrf.mxu0
        %v2204 = vadd.f32 %v2115, %v2203
        %2205 = vmatmul.bf16.gmra.mxu0 %v1860
        %v2206 = vpop.f32.mrf.mxu0
        %v2207 = vadd.f32 %v2118, %v2206
        %v2208 = vpop.f32.mrf.mxu0
        %v2209 = vadd.f32 %v2120, %v2208
        %2210 = vmatmul.bf16.gmra.mxu0 %v1862
        %v2211 = vpop.f32.mrf.mxu0
        %v2212 = vadd.f32 %v2123, %v2211
        %v2213 = vpop.f32.mrf.mxu0
        %v2214 = vadd.f32 %v2125, %v2213
        %2215 = vmatmul.bf16.gmra.mxu0 %v1864
        %v2216 = vpop.f32.mrf.mxu0
        %v2217 = vadd.f32 %v2128, %v2216
        %v2218 = vpop.f32.mrf.mxu0
        %v2219 = vadd.f32 %v2130, %v2218
        %2220 = vmatmul.bf16.gmra.mxu0 %v1866
        %v2221 = vpop.f32.mrf.mxu0
        %v2222 = vadd.f32 %v2133, %v2221
        %v2223 = vpop.f32.mrf.mxu0
        %v2224 = vadd.f32 %v2135, %v2223
        %2225 = vmatmul.bf16.gmra.mxu0 %v1868
        %v2226 = vpop.f32.mrf.mxu0
        %v2227 = vadd.f32 %v2138, %v2226
        %v2228 = vpop.f32.mrf.mxu0
        %v2229 = vadd.f32 %v2140, %v2228
        %2230 = vmatmul.bf16.gmra.mxu0 %v1870
        %v2231 = vpop.f32.mrf.mxu0
        %v2232 = vadd.f32 %v2143, %v2231
        %v2233 = vpop.f32.mrf.mxu0
        %v2234 = vadd.f32 %v2145, %v2233
        %2235 = vmatmul.bf16.gmra.mxu0 %v1872
        %v2236 = vpop.f32.mrf.mxu0
        %v2237 = vadd.f32 %v2148, %v2236
        %v2238 = vpop.f32.mrf.mxu0
        %v2239 = vadd.f32 %v2150, %v2238
        %2240 = vmatmul.bf16.gmra.mxu0 %v1874
        %v2241 = vpop.f32.mrf.mxu0
        %v2242 = vadd.f32 %v2153, %v2241
        %v2243 = vpop.f32.mrf.mxu0
        %v2244 = vadd.f32 %v2155, %v2243
        %2245 = vdwg.mxu0
        %2246 = vmatpush.bf16.msra.mxu0 %v2019
        %2247 = vmatpush.bf16.msra.mxu0 %v2017
        %2248 = vmatpush.bf16.msra.mxu0 %v2015
        %2249 = vmatpush.bf16.msra.mxu0 %v2013
        %2250 = vmatpush.bf16.msra.mxu0 %v2011
        %2251 = vmatpush.bf16.msra.mxu0 %v2009
        %2252 = vmatpush.bf16.msra.mxu0 %v2007
        %2253 = vmatpush.bf16.msra.mxu0 %v2005
        %2254 = vmatmul.bf16.gmra.mxu0 %v1843
        %v2255 = vpop.f32.mrf.mxu0
        %v2256 = vadd.f32 0.0, %v2255
        %v2257 = vpop.f32.mrf.mxu0
        %v2258 = vadd.f32 0.0, %v2257
        %2259 = vmatmul.bf16.gmra.mxu0 %v1845
        %v2260 = vpop.f32.mrf.mxu0
        %v2261 = vadd.f32 0.0, %v2260
        %v2262 = vpop.f32.mrf.mxu0
        %v2263 = vadd.f32 0.0, %v2262
        %2264 = vmatmul.bf16.gmra.mxu0 %v1847
        %v2265 = vpop.f32.mrf.mxu0
        %v2266 = vadd.f32 0.0, %v2265
        %v2267 = vpop.f32.mrf.mxu0
        %v2268 = vadd.f32 0.0, %v2267
        %2269 = vmatmul.bf16.gmra.mxu0 %v1849
        %v2270 = vpop.f32.mrf.mxu0
        %v2271 = vadd.f32 0.0, %v2270
        %v2272 = vpop.f32.mrf.mxu0
        %v2273 = vadd.f32 0.0, %v2272
        %2274 = vmatmul.bf16.gmra.mxu0 %v1851
        %v2275 = vpop.f32.mrf.mxu0
        %v2276 = vadd.f32 0.0, %v2275
        %v2277 = vpop.f32.mrf.mxu0
        %v2278 = vadd.f32 0.0, %v2277
        %2279 = vmatmul.bf16.gmra.mxu0 %v1853
        %v2280 = vpop.f32.mrf.mxu0
        %v2281 = vadd.f32 0.0, %v2280
        %v2282 = vpop.f32.mrf.mxu0
        %v2283 = vadd.f32 0.0, %v2282
        %2284 = vmatmul.bf16.gmra.mxu0 %v1855
        %v2285 = vpop.f32.mrf.mxu0
        %v2286 = vadd.f32 0.0, %v2285
        %v2287 = vpop.f32.mrf.mxu0
        %v2288 = vadd.f32 0.0, %v2287
        %2289 = vmatmul.bf16.gmra.mxu0 %v1857
        %v2290 = vpop.f32.mrf.mxu0
        %v2291 = vadd.f32 0.0, %v2290
        %v2292 = vpop.f32.mrf.mxu0
        %v2293 = vadd.f32 0.0, %v2292
        %2294 = vmatmul.bf16.gmra.mxu0 %v1859
        %v2295 = vpop.f32.mrf.mxu0
        %v2296 = vadd.f32 0.0, %v2295
        %v2297 = vpop.f32.mrf.mxu0
        %v2298 = vadd.f32 0.0, %v2297
        %2299 = vmatmul.bf16.gmra.mxu0 %v1861
        %v2300 = vpop.f32.mrf.mxu0
        %v2301 = vadd.f32 0.0, %v2300
        %v2302 = vpop.f32.mrf.mxu0
        %v2303 = vadd.f32 0.0, %v2302
        %2304 = vmatmul.bf16.gmra.mxu0 %v1863
        %v2305 = vpop.f32.mrf.mxu0
        %v2306 = vadd.f32 0.0, %v2305
        %v2307 = vpop.f32.mrf.mxu0
        %v2308 = vadd.f32 0.0, %v2307
        %2309 = vmatmul.bf16.gmra.mxu0 %v1865
        %v2310 = vpop.f32.mrf.mxu0
        %v2311 = vadd.f32 0.0, %v2310
        %v2312 = vpop.f32.mrf.mxu0
        %v2313 = vadd.f32 0.0, %v2312
        %2314 = vmatmul.bf16.gmra.mxu0 %v1867
        %v2315 = vpop.f32.mrf.mxu0
        %v2316 = vadd.f32 0.0, %v2315
        %v2317 = vpop.f32.mrf.mxu0
        %v2318 = vadd.f32 0.0, %v2317
        %2319 = vmatmul.bf16.gmra.mxu0 %v1869
        %v2320 = vpop.f32.mrf.mxu0
        %v2321 = vadd.f32 0.0, %v2320
        %v2322 = vpop.f32.mrf.mxu0
        %v2323 = vadd.f32 0.0, %v2322
        %2324 = vmatmul.bf16.gmra.mxu0 %v1871
        %v2325 = vpop.f32.mrf.mxu0
        %v2326 = vadd.f32 0.0, %v2325
        %v2327 = vpop.f32.mrf.mxu0
        %v2328 = vadd.f32 0.0, %v2327
        %2329 = vmatmul.bf16.gmra.mxu0 %v1873
        %v2330 = vpop.f32.mrf.mxu0
        %v2331 = vadd.f32 0.0, %v2330
        %v2332 = vpop.f32.mrf.mxu0
        %v2333 = vadd.f32 0.0, %v2332
        %2334 = vdwg.mxu0
        %2335 = vmatpush.bf16.msra.mxu0 %v2035
        %2336 = vmatpush.bf16.msra.mxu0 %v2033
        %2337 = vmatpush.bf16.msra.mxu0 %v2031
        %2338 = vmatpush.bf16.msra.mxu0 %v2029
        %2339 = vmatpush.bf16.msra.mxu0 %v2027
        %2340 = vmatpush.bf16.msra.mxu0 %v2025
        %2341 = vmatpush.bf16.msra.mxu0 %v2023
        %2342 = vmatpush.bf16.msra.mxu0 %v2021
        %2343 = vmatmul.bf16.gmra.mxu0 %v1844
        %v2344 = vpop.f32.mrf.mxu0
        %v2345 = vadd.f32 %v2256, %v2344
        %v2346 = vpop.f32.mrf.mxu0
        %v2347 = vadd.f32 %v2258, %v2346
        %2348 = vmatmul.bf16.gmra.mxu0 %v1846
        %v2349 = vpop.f32.mrf.mxu0
        %v2350 = vadd.f32 %v2261, %v2349
        %v2351 = vpop.f32.mrf.mxu0
        %v2352 = vadd.f32 %v2263, %v2351
        %2353 = vmatmul.bf16.gmra.mxu0 %v1848
        %v2354 = vpop.f32.mrf.mxu0
        %v2355 = vadd.f32 %v2266, %v2354
        %v2356 = vpop.f32.mrf.mxu0
        %v2357 = vadd.f32 %v2268, %v2356
        %2358 = vmatmul.bf16.gmra.mxu0 %v1850
        %v2359 = vpop.f32.mrf.mxu0
        %v2360 = vadd.f32 %v2271, %v2359
        %v2361 = vpop.f32.mrf.mxu0
        %v2362 = vadd.f32 %v2273, %v2361
        %2363 = vmatmul.bf16.gmra.mxu0 %v1852
        %v2364 = vpop.f32.mrf.mxu0
        %v2365 = vadd.f32 %v2276, %v2364
        %v2366 = vpop.f32.mrf.mxu0
        %v2367 = vadd.f32 %v2278, %v2366
        %2368 = vmatmul.bf16.gmra.mxu0 %v1854
        %v2369 = vpop.f32.mrf.mxu0
        %v2370 = vadd.f32 %v2281, %v2369
        %v2371 = vpop.f32.mrf.mxu0
        %v2372 = vadd.f32 %v2283, %v2371
        %2373 = vmatmul.bf16.gmra.mxu0 %v1856
        %v2374 = vpop.f32.mrf.mxu0
        %v2375 = vadd.f32 %v2286, %v2374
        %v2376 = vpop.f32.mrf.mxu0
        %v2377 = vadd.f32 %v2288, %v2376
        %2378 = vmatmul.bf16.gmra.mxu0 %v1858
        %v2379 = vpop.f32.mrf.mxu0
        %v2380 = vadd.f32 %v2291, %v2379
        %v2381 = vpop.f32.mrf.mxu0
        %v2382 = vadd.f32 %v2293, %v2381
        %2383 = vmatmul.bf16.gmra.mxu0 %v1860
        %v2384 = vpop.f32.mrf.mxu0
        %v2385 = vadd.f32 %v2296, %v2384
        %v2386 = vpop.f32.mrf.mxu0
        %v2387 = vadd.f32 %v2298, %v2386
        %2388 = vmatmul.bf16.gmra.mxu0 %v1862
        %v2389 = vpop.f32.mrf.mxu0
        %v2390 = vadd.f32 %v2301, %v2389
        %v2391 = vpop.f32.mrf.mxu0
        %v2392 = vadd.f32 %v2303, %v2391
        %2393 = vmatmul.bf16.gmra.mxu0 %v1864
        %v2394 = vpop.f32.mrf.mxu0
        %v2395 = vadd.f32 %v2306, %v2394
        %v2396 = vpop.f32.mrf.mxu0
        %v2397 = vadd.f32 %v2308, %v2396
        %2398 = vmatmul.bf16.gmra.mxu0 %v1866
        %v2399 = vpop.f32.mrf.mxu0
        %v2400 = vadd.f32 %v2311, %v2399
        %v2401 = vpop.f32.mrf.mxu0
        %v2402 = vadd.f32 %v2313, %v2401
        %2403 = vmatmul.bf16.gmra.mxu0 %v1868
        %v2404 = vpop.f32.mrf.mxu0
        %v2405 = vadd.f32 %v2316, %v2404
        %v2406 = vpop.f32.mrf.mxu0
        %v2407 = vadd.f32 %v2318, %v2406
        %2408 = vmatmul.bf16.gmra.mxu0 %v1870
        %v2409 = vpop.f32.mrf.mxu0
        %v2410 = vadd.f32 %v2321, %v2409
        %v2411 = vpop.f32.mrf.mxu0
        %v2412 = vadd.f32 %v2323, %v2411
        %2413 = vmatmul.bf16.gmra.mxu0 %v1872
        %v2414 = vpop.f32.mrf.mxu0
        %v2415 = vadd.f32 %v2326, %v2414
        %v2416 = vpop.f32.mrf.mxu0
        %v2417 = vadd.f32 %v2328, %v2416
        %2418 = vmatmul.bf16.gmra.mxu0 %v1874
        %v2419 = vpop.f32.mrf.mxu0
        %v2420 = vadd.f32 %v2331, %v2419
        %v2421 = vpop.f32.mrf.mxu0
        %v2422 = vadd.f32 %v2333, %v2421
        %2423 = vdwg.mxu0
        %v2424 = vpack.c.bf16 %v2345, %v2167
        %v2425 = vpack.c.bf16 %v2347, %v2169
        %v2426 = vpack.c.bf16 %v2350, %v2172
        %v2427 = vpack.c.bf16 %v2352, %v2174
        %v2428 = vpack.c.bf16 %v2355, %v2177
        %v2429 = vpack.c.bf16 %v2357, %v2179
        %v2430 = vpack.c.bf16 %v2360, %v2182
        %v2431 = vpack.c.bf16 %v2362, %v2184
        %v2432 = vpack.c.bf16 %v2365, %v2187
        %v2433 = vpack.c.bf16 %v2367, %v2189
        %v2434 = vpack.c.bf16 %v2370, %v2192
        %v2435 = vpack.c.bf16 %v2372, %v2194
        %v2436 = vpack.c.bf16 %v2375, %v2197
        %v2437 = vpack.c.bf16 %v2377, %v2199
        %v2438 = vpack.c.bf16 %v2380, %v2202
        %v2439 = vpack.c.bf16 %v2382, %v2204
        %v2440 = vpack.c.bf16 %v2385, %v2207
        %v2441 = vpack.c.bf16 %v2387, %v2209
        %v2442 = vpack.c.bf16 %v2390, %v2212
        %v2443 = vpack.c.bf16 %v2392, %v2214
        %v2444 = vpack.c.bf16 %v2395, %v2217
        %v2445 = vpack.c.bf16 %v2397, %v2219
        %v2446 = vpack.c.bf16 %v2400, %v2222
        %v2447 = vpack.c.bf16 %v2402, %v2224
        %v2448 = vpack.c.bf16 %v2405, %v2227
        %v2449 = vpack.c.bf16 %v2407, %v2229
        %v2450 = vpack.c.bf16 %v2410, %v2232
        %v2451 = vpack.c.bf16 %v2412, %v2234
        %v2452 = vpack.c.bf16 %v2415, %v2237
        %v2453 = vpack.c.bf16 %v2417, %v2239
        %v2454 = vpack.c.bf16 %v2420, %v2242
        %v2455 = vpack.c.bf16 %v2422, %v2244
        %s2456 = scalar_lea.vmem %s4, 2
        %v2457 = vld [vmem:[%s2456] sm:$0x3]
        %2459 = vst [vmem:[#allocation1] ss:$9 sm:$0xff] %v2457
        %v2460 = vld [vmem:[#allocation1] sm:$0xff]
        %v2461 = vld [vmem:[#allocation1 + $0x9] sm:$0xff]
        %v2462 = vpack.i.b16 %v2460, %v2460
        %v2464 = vperm.slane %v2462, 0
        %v2465 = vpack.i.b16 %v2461, %v2461
        %v2467 = vperm.slane %v2465, 0
        %v2468 = vunpack.c.l.bf16 %v2424
        %v2469 = vunpack.c.h.bf16 %v2424
        %v2470 = vunpack.c.l.bf16 %v2425
        %v2471 = vunpack.c.h.bf16 %v2425
        %v2472 = vunpack.c.l.bf16 %v2426
        %v2473 = vunpack.c.h.bf16 %v2426
        %v2474 = vunpack.c.l.bf16 %v2427
        %v2475 = vunpack.c.h.bf16 %v2427
        %v2476 = vunpack.c.l.bf16 %v2428
        %v2477 = vunpack.c.h.bf16 %v2428
        %v2478 = vunpack.c.l.bf16 %v2429
        %v2479 = vunpack.c.h.bf16 %v2429
        %v2480 = vunpack.c.l.bf16 %v2430
        %v2481 = vunpack.c.h.bf16 %v2430
        %v2482 = vunpack.c.l.bf16 %v2431
        %v2483 = vunpack.c.h.bf16 %v2431
        %v2484 = vunpack.c.l.bf16 %v2432
        %v2485 = vunpack.c.h.bf16 %v2432
        %v2486 = vunpack.c.l.bf16 %v2433
        %v2487 = vunpack.c.h.bf16 %v2433
        %v2488 = vunpack.c.l.bf16 %v2434
        %v2489 = vunpack.c.h.bf16 %v2434
        %v2490 = vunpack.c.l.bf16 %v2435
        %v2491 = vunpack.c.h.bf16 %v2435
        %v2492 = vunpack.c.l.bf16 %v2436
        %v2493 = vunpack.c.h.bf16 %v2436
        %v2494 = vunpack.c.l.bf16 %v2437
        %v2495 = vunpack.c.h.bf16 %v2437
        %v2496 = vunpack.c.l.bf16 %v2438
        %v2497 = vunpack.c.h.bf16 %v2438
        %v2498 = vunpack.c.l.bf16 %v2439
        %v2499 = vunpack.c.h.bf16 %v2439
        %v2500 = vunpack.c.l.bf16 %v2440
        %v2501 = vunpack.c.h.bf16 %v2440
        %v2502 = vunpack.c.l.bf16 %v2441
        %v2503 = vunpack.c.h.bf16 %v2441
        %v2504 = vunpack.c.l.bf16 %v2442
        %v2505 = vunpack.c.h.bf16 %v2442
        %v2506 = vunpack.c.l.bf16 %v2443
        %v2507 = vunpack.c.h.bf16 %v2443
        %v2508 = vunpack.c.l.bf16 %v2444
        %v2509 = vunpack.c.h.bf16 %v2444
        %v2510 = vunpack.c.l.bf16 %v2445
        %v2511 = vunpack.c.h.bf16 %v2445
        %v2512 = vunpack.c.l.bf16 %v2446
        %v2513 = vunpack.c.h.bf16 %v2446
        %v2514 = vunpack.c.l.bf16 %v2447
        %v2515 = vunpack.c.h.bf16 %v2447
        %v2516 = vunpack.c.l.bf16 %v2448
        %v2517 = vunpack.c.h.bf16 %v2448
        %v2518 = vunpack.c.l.bf16 %v2449
        %v2519 = vunpack.c.h.bf16 %v2449
        %v2520 = vunpack.c.l.bf16 %v2450
        %v2521 = vunpack.c.h.bf16 %v2450
        %v2522 = vunpack.c.l.bf16 %v2451
        %v2523 = vunpack.c.h.bf16 %v2451
        %v2524 = vunpack.c.l.bf16 %v2452
        %v2525 = vunpack.c.h.bf16 %v2452
        %v2526 = vunpack.c.l.bf16 %v2453
        %v2527 = vunpack.c.h.bf16 %v2453
        %v2528 = vunpack.c.l.bf16 %v2454
        %v2529 = vunpack.c.h.bf16 %v2454
        %v2530 = vunpack.c.l.bf16 %v2455
        %v2531 = vunpack.c.h.bf16 %v2455
        %v2532 = vunpack.c.l.bf16 %v2464
        %v2533 = vunpack.c.l.bf16 %v2467
        %v2534 = vadd.f32 %v2468, %v2532
        %v2535 = vadd.f32 %v2469, %v2533
        %v2536 = vadd.f32 %v2470, %v2532
        %v2537 = vadd.f32 %v2471, %v2533
        %v2538 = vadd.f32 %v2472, %v2532
        %v2539 = vadd.f32 %v2473, %v2533
        %v2540 = vadd.f32 %v2474, %v2532
        %v2541 = vadd.f32 %v2475, %v2533
        %v2542 = vadd.f32 %v2476, %v2532
        %v2543 = vadd.f32 %v2477, %v2533
        %v2544 = vadd.f32 %v2478, %v2532
        %v2545 = vadd.f32 %v2479, %v2533
        %v2546 = vadd.f32 %v2480, %v2532
        %v2547 = vadd.f32 %v2481, %v2533
        %v2548 = vadd.f32 %v2482, %v2532
        %v2549 = vadd.f32 %v2483, %v2533
        %v2550 = vadd.f32 %v2484, %v2532
        %v2551 = vadd.f32 %v2485, %v2533
        %v2552 = vadd.f32 %v2486, %v2532
        %v2553 = vadd.f32 %v2487, %v2533
        %v2554 = vadd.f32 %v2488, %v2532
        %v2555 = vadd.f32 %v2489, %v2533
        %v2556 = vadd.f32 %v2490, %v2532
        %v2557 = vadd.f32 %v2491, %v2533
        %v2558 = vadd.f32 %v2492, %v2532
        %v2559 = vadd.f32 %v2493, %v2533
        %v2560 = vadd.f32 %v2494, %v2532
        %v2561 = vadd.f32 %v2495, %v2533
        %v2562 = vadd.f32 %v2496, %v2532
        %v2563 = vadd.f32 %v2497, %v2533
        %v2564 = vadd.f32 %v2498, %v2532
        %v2565 = vadd.f32 %v2499, %v2533
        %v2566 = vadd.f32 %v2500, %v2532
        %v2567 = vadd.f32 %v2501, %v2533
        %v2568 = vadd.f32 %v2502, %v2532
        %v2569 = vadd.f32 %v2503, %v2533
        %v2570 = vadd.f32 %v2504, %v2532
        %v2571 = vadd.f32 %v2505, %v2533
        %v2572 = vadd.f32 %v2506, %v2532
        %v2573 = vadd.f32 %v2507, %v2533
        %v2574 = vadd.f32 %v2508, %v2532
        %v2575 = vadd.f32 %v2509, %v2533
        %v2576 = vadd.f32 %v2510, %v2532
        %v2577 = vadd.f32 %v2511, %v2533
        %v2578 = vadd.f32 %v2512, %v2532
        %v2579 = vadd.f32 %v2513, %v2533
        %v2580 = vadd.f32 %v2514, %v2532
        %v2581 = vadd.f32 %v2515, %v2533
        %v2582 = vadd.f32 %v2516, %v2532
        %v2583 = vadd.f32 %v2517, %v2533
        %v2584 = vadd.f32 %v2518, %v2532
        %v2585 = vadd.f32 %v2519, %v2533
        %v2586 = vadd.f32 %v2520, %v2532
        %v2587 = vadd.f32 %v2521, %v2533
        %v2588 = vadd.f32 %v2522, %v2532
        %v2589 = vadd.f32 %v2523, %v2533
        %v2590 = vadd.f32 %v2524, %v2532
        %v2591 = vadd.f32 %v2525, %v2533
        %v2592 = vadd.f32 %v2526, %v2532
        %v2593 = vadd.f32 %v2527, %v2533
        %v2594 = vadd.f32 %v2528, %v2532
        %v2595 = vadd.f32 %v2529, %v2533
        %v2596 = vadd.f32 %v2530, %v2532
        %v2597 = vadd.f32 %v2531, %v2533
        %v2598 = vpack.c.bf16 %v2535, %v2534
        %v2599 = vpack.c.bf16 %v2537, %v2536
        %v2600 = vpack.c.bf16 %v2539, %v2538
        %v2601 = vpack.c.bf16 %v2541, %v2540
        %v2602 = vpack.c.bf16 %v2543, %v2542
        %v2603 = vpack.c.bf16 %v2545, %v2544
        %v2604 = vpack.c.bf16 %v2547, %v2546
        %v2605 = vpack.c.bf16 %v2549, %v2548
        %v2606 = vpack.c.bf16 %v2551, %v2550
        %v2607 = vpack.c.bf16 %v2553, %v2552
        %v2608 = vpack.c.bf16 %v2555, %v2554
        %v2609 = vpack.c.bf16 %v2557, %v2556
        %v2610 = vpack.c.bf16 %v2559, %v2558
        %v2611 = vpack.c.bf16 %v2561, %v2560
        %v2612 = vpack.c.bf16 %v2563, %v2562
        %v2613 = vpack.c.bf16 %v2565, %v2564
        %v2614 = vpack.c.bf16 %v2567, %v2566
        %v2615 = vpack.c.bf16 %v2569, %v2568
        %v2616 = vpack.c.bf16 %v2571, %v2570
        %v2617 = vpack.c.bf16 %v2573, %v2572
        %v2618 = vpack.c.bf16 %v2575, %v2574
        %v2619 = vpack.c.bf16 %v2577, %v2576
        %v2620 = vpack.c.bf16 %v2579, %v2578
        %v2621 = vpack.c.bf16 %v2581, %v2580
        %v2622 = vpack.c.bf16 %v2583, %v2582
        %v2623 = vpack.c.bf16 %v2585, %v2584
        %v2624 = vpack.c.bf16 %v2587, %v2586
        %v2625 = vpack.c.bf16 %v2589, %v2588
        %v2626 = vpack.c.bf16 %v2591, %v2590
        %v2627 = vpack.c.bf16 %v2593, %v2592
        %v2628 = vpack.c.bf16 %v2595, %v2594
        %v2629 = vpack.c.bf16 %v2597, %v2596
        %v2630 = vunpack.c.l.bf16 %v2598
        %v2631 = vunpack.c.h.bf16 %v2598
        %v2632 = vunpack.c.l.bf16 %v2599
        %v2633 = vunpack.c.h.bf16 %v2599
        %v2634 = vunpack.c.l.bf16 %v2600
        %v2635 = vunpack.c.h.bf16 %v2600
        %v2636 = vunpack.c.l.bf16 %v2601
        %v2637 = vunpack.c.h.bf16 %v2601
        %v2638 = vunpack.c.l.bf16 %v2602
        %v2639 = vunpack.c.h.bf16 %v2602
        %v2640 = vunpack.c.l.bf16 %v2603
        %v2641 = vunpack.c.h.bf16 %v2603
        %v2642 = vunpack.c.l.bf16 %v2604
        %v2643 = vunpack.c.h.bf16 %v2604
        %v2644 = vunpack.c.l.bf16 %v2605
        %v2645 = vunpack.c.h.bf16 %v2605
        %v2646 = vunpack.c.l.bf16 %v2606
        %v2647 = vunpack.c.h.bf16 %v2606
        %v2648 = vunpack.c.l.bf16 %v2607
        %v2649 = vunpack.c.h.bf16 %v2607
        %v2650 = vunpack.c.l.bf16 %v2608
        %v2651 = vunpack.c.h.bf16 %v2608
        %v2652 = vunpack.c.l.bf16 %v2609
        %v2653 = vunpack.c.h.bf16 %v2609
        %v2654 = vunpack.c.l.bf16 %v2610
        %v2655 = vunpack.c.h.bf16 %v2610
        %v2656 = vunpack.c.l.bf16 %v2611
        %v2657 = vunpack.c.h.bf16 %v2611
        %v2658 = vunpack.c.l.bf16 %v2612
        %v2659 = vunpack.c.h.bf16 %v2612
        %v2660 = vunpack.c.l.bf16 %v2613
        %v2661 = vunpack.c.h.bf16 %v2613
        %v2662 = vunpack.c.l.bf16 %v2614
        %v2663 = vunpack.c.h.bf16 %v2614
        %v2664 = vunpack.c.l.bf16 %v2615
        %v2665 = vunpack.c.h.bf16 %v2615
        %v2666 = vunpack.c.l.bf16 %v2616
        %v2667 = vunpack.c.h.bf16 %v2616
        %v2668 = vunpack.c.l.bf16 %v2617
        %v2669 = vunpack.c.h.bf16 %v2617
        %v2670 = vunpack.c.l.bf16 %v2618
        %v2671 = vunpack.c.h.bf16 %v2618
        %v2672 = vunpack.c.l.bf16 %v2619
        %v2673 = vunpack.c.h.bf16 %v2619
        %v2674 = vunpack.c.l.bf16 %v2620
        %v2675 = vunpack.c.h.bf16 %v2620
        %v2676 = vunpack.c.l.bf16 %v2621
        %v2677 = vunpack.c.h.bf16 %v2621
        %v2678 = vunpack.c.l.bf16 %v2622
        %v2679 = vunpack.c.h.bf16 %v2622
        %v2680 = vunpack.c.l.bf16 %v2623
        %v2681 = vunpack.c.h.bf16 %v2623
        %v2682 = vunpack.c.l.bf16 %v2624
        %v2683 = vunpack.c.h.bf16 %v2624
        %v2684 = vunpack.c.l.bf16 %v2625
        %v2685 = vunpack.c.h.bf16 %v2625
        %v2686 = vunpack.c.l.bf16 %v2626
        %v2687 = vunpack.c.h.bf16 %v2626
        %v2688 = vunpack.c.l.bf16 %v2627
        %v2689 = vunpack.c.h.bf16 %v2627
        %v2690 = vunpack.c.l.bf16 %v2628
        %v2691 = vunpack.c.h.bf16 %v2628
        %v2692 = vunpack.c.l.bf16 %v2629
        %v2693 = vunpack.c.h.bf16 %v2629
        %v2694 = vmax.f32 %v2630, 0.0
        %v2695 = vmax.f32 %v2631, 0.0
        %v2696 = vmax.f32 %v2632, 0.0
        %v2697 = vmax.f32 %v2633, 0.0
        %v2698 = vmax.f32 %v2634, 0.0
        %v2699 = vmax.f32 %v2635, 0.0
        %v2700 = vmax.f32 %v2636, 0.0
        %v2701 = vmax.f32 %v2637, 0.0
        %v2702 = vmax.f32 %v2638, 0.0
        %v2703 = vmax.f32 %v2639, 0.0
        %v2704 = vmax.f32 %v2640, 0.0
        %v2705 = vmax.f32 %v2641, 0.0
        %v2706 = vmax.f32 %v2642, 0.0
        %v2707 = vmax.f32 %v2643, 0.0
        %v2708 = vmax.f32 %v2644, 0.0
        %v2709 = vmax.f32 %v2645, 0.0
        %v2710 = vmax.f32 %v2646, 0.0
        %v2711 = vmax.f32 %v2647, 0.0
        %v2712 = vmax.f32 %v2648, 0.0
        %v2713 = vmax.f32 %v2649, 0.0
        %v2714 = vmax.f32 %v2650, 0.0
        %v2715 = vmax.f32 %v2651, 0.0
        %v2716 = vmax.f32 %v2652, 0.0
        %v2717 = vmax.f32 %v2653, 0.0
        %v2718 = vmax.f32 %v2654, 0.0
        %v2719 = vmax.f32 %v2655, 0.0
        %v2720 = vmax.f32 %v2656, 0.0
        %v2721 = vmax.f32 %v2657, 0.0
        %v2722 = vmax.f32 %v2658, 0.0
        %v2723 = vmax.f32 %v2659, 0.0
        %v2724 = vmax.f32 %v2660, 0.0
        %v2725 = vmax.f32 %v2661, 0.0
        %v2726 = vmax.f32 %v2662, 0.0
        %v2727 = vmax.f32 %v2663, 0.0
        %v2728 = vmax.f32 %v2664, 0.0
        %v2729 = vmax.f32 %v2665, 0.0
        %v2730 = vmax.f32 %v2666, 0.0
        %v2731 = vmax.f32 %v2667, 0.0
        %v2732 = vmax.f32 %v2668, 0.0
        %v2733 = vmax.f32 %v2669, 0.0
        %v2734 = vmax.f32 %v2670, 0.0
        %v2735 = vmax.f32 %v2671, 0.0
        %v2736 = vmax.f32 %v2672, 0.0
        %v2737 = vmax.f32 %v2673, 0.0
        %v2738 = vmax.f32 %v2674, 0.0
        %v2739 = vmax.f32 %v2675, 0.0
        %v2740 = vmax.f32 %v2676, 0.0
        %v2741 = vmax.f32 %v2677, 0.0
        %v2742 = vmax.f32 %v2678, 0.0
        %v2743 = vmax.f32 %v2679, 0.0
        %v2744 = vmax.f32 %v2680, 0.0
        %v2745 = vmax.f32 %v2681, 0.0
        %v2746 = vmax.f32 %v2682, 0.0
        %v2747 = vmax.f32 %v2683, 0.0
        %v2748 = vmax.f32 %v2684, 0.0
        %v2749 = vmax.f32 %v2685, 0.0
        %v2750 = vmax.f32 %v2686, 0.0
        %v2751 = vmax.f32 %v2687, 0.0
        %v2752 = vmax.f32 %v2688, 0.0
        %v2753 = vmax.f32 %v2689, 0.0
        %v2754 = vmax.f32 %v2690, 0.0
        %v2755 = vmax.f32 %v2691, 0.0
        %v2756 = vmax.f32 %v2692, 0.0
        %v2757 = vmax.f32 %v2693, 0.0
        %v2758 = vpack.c.bf16 %v2696, %v2694
        %v2759 = vpack.c.bf16 %v2697, %v2695
        %v2760 = vpack.c.bf16 %v2700, %v2698
        %v2761 = vpack.c.bf16 %v2701, %v2699
        %v2762 = vpack.c.bf16 %v2704, %v2702
        %v2763 = vpack.c.bf16 %v2705, %v2703
        %v2764 = vpack.c.bf16 %v2708, %v2706
        %v2765 = vpack.c.bf16 %v2709, %v2707
        %v2766 = vpack.c.bf16 %v2712, %v2710
        %v2767 = vpack.c.bf16 %v2713, %v2711
        %v2768 = vpack.c.bf16 %v2716, %v2714
        %v2769 = vpack.c.bf16 %v2717, %v2715
        %v2770 = vpack.c.bf16 %v2720, %v2718
        %v2771 = vpack.c.bf16 %v2721, %v2719
        %v2772 = vpack.c.bf16 %v2724, %v2722
        %v2773 = vpack.c.bf16 %v2725, %v2723
        %v2774 = vpack.c.bf16 %v2728, %v2726
        %v2775 = vpack.c.bf16 %v2729, %v2727
        %v2776 = vpack.c.bf16 %v2732, %v2730
        %v2777 = vpack.c.bf16 %v2733, %v2731
        %v2778 = vpack.c.bf16 %v2736, %v2734
        %v2779 = vpack.c.bf16 %v2737, %v2735
        %v2780 = vpack.c.bf16 %v2740, %v2738
        %v2781 = vpack.c.bf16 %v2741, %v2739
        %v2782 = vpack.c.bf16 %v2744, %v2742
        %v2783 = vpack.c.bf16 %v2745, %v2743
        %v2784 = vpack.c.bf16 %v2748, %v2746
        %v2785 = vpack.c.bf16 %v2749, %v2747
        %v2786 = vpack.c.bf16 %v2752, %v2750
        %v2787 = vpack.c.bf16 %v2753, %v2751
        %v2788 = vpack.c.bf16 %v2756, %v2754
        %v2789 = vpack.c.bf16 %v2757, %v2755
        %s2790 = scalar_lea.vmem [#allocation2], 512
        %v2791 = vld [vmem:[%s2790] sm:$0xff]
        %v2792 = vld [vmem:[%s2790 + $0x8] sm:$0xff]
        %v2793 = vld [vmem:[%s2790 + $0x10] sm:$0xff]
        %v2794 = vld [vmem:[%s2790 + $0x18] sm:$0xff]
        %v2795 = vld [vmem:[%s2790 + $0x20] sm:$0xff]
        %v2796 = vld [vmem:[%s2790 + $0x28] sm:$0xff]
        %v2797 = vld [vmem:[%s2790 + $0x30] sm:$0xff]
        %v2798 = vld [vmem:[%s2790 + $0x38] sm:$0xff]
        %v2799 = vld [vmem:[%s2790 + $0x40] sm:$0xff]
        %v2800 = vld [vmem:[%s2790 + $0x48] sm:$0xff]
        %v2801 = vld [vmem:[%s2790 + $0x50] sm:$0xff]
        %v2802 = vld [vmem:[%s2790 + $0x58] sm:$0xff]
        %v2803 = vld [vmem:[%s2790 + $0x60] sm:$0xff]
        %v2804 = vld [vmem:[%s2790 + $0x68] sm:$0xff]
        %v2805 = vld [vmem:[%s2790 + $0x70] sm:$0xff]
        %v2806 = vld [vmem:[%s2790 + $0x78] sm:$0xff]
        %v2807 = vld [vmem:[%s2790 + $0x80] sm:$0xff]
        %v2808 = vld [vmem:[%s2790 + $0x88] sm:$0xff]
        %v2809 = vld [vmem:[%s2790 + $0x90] sm:$0xff]
        %v2810 = vld [vmem:[%s2790 + $0x98] sm:$0xff]
        %v2811 = vld [vmem:[%s2790 + $0xa0] sm:$0xff]
        %v2812 = vld [vmem:[%s2790 + $0xa8] sm:$0xff]
        %v2813 = vld [vmem:[%s2790 + $0xb0] sm:$0xff]
        %v2814 = vld [vmem:[%s2790 + $0xb8] sm:$0xff]
        %v2815 = vld [vmem:[%s2790 + $0xc0] sm:$0xff]
        %v2816 = vld [vmem:[%s2790 + $0xc8] sm:$0xff]
        %v2817 = vld [vmem:[%s2790 + $0xd0] sm:$0xff]
        %v2818 = vld [vmem:[%s2790 + $0xd8] sm:$0xff]
        %v2819 = vld [vmem:[%s2790 + $0xe0] sm:$0xff]
        %v2820 = vld [vmem:[%s2790 + $0xe8] sm:$0xff]
        %v2821 = vld [vmem:[%s2790 + $0xf0] sm:$0xff]
        %v2822 = vld [vmem:[%s2790 + $0xf8] sm:$0xff]
        %v2855 = vunpack.c.l.b16 %v2791
        %v2856 = vunpack.c.h.b16 %v2791
        %v2857 = vunpack.c.l.b16 %v2792
        %v2858 = vunpack.c.h.b16 %v2792
        %v2859 = vunpack.c.l.b16 %v2793
        %v2860 = vunpack.c.h.b16 %v2793
        %v2861 = vunpack.c.l.b16 %v2794
        %v2862 = vunpack.c.h.b16 %v2794
        %v2863 = vunpack.c.l.b16 %v2795
        %v2864 = vunpack.c.h.b16 %v2795
        %v2865 = vunpack.c.l.b16 %v2796
        %v2866 = vunpack.c.h.b16 %v2796
        %v2867 = vunpack.c.l.b16 %v2797
        %v2868 = vunpack.c.h.b16 %v2797
        %v2869 = vunpack.c.l.b16 %v2798
        %v2870 = vunpack.c.h.b16 %v2798
        %v2871 = vunpack.c.l.b16 %v2799
        %v2872 = vunpack.c.h.b16 %v2799
        %v2873 = vunpack.c.l.b16 %v2800
        %v2874 = vunpack.c.h.b16 %v2800
        %v2875 = vunpack.c.l.b16 %v2801
        %v2876 = vunpack.c.h.b16 %v2801
        %v2877 = vunpack.c.l.b16 %v2802
        %v2878 = vunpack.c.h.b16 %v2802
        %v2879 = vunpack.c.l.b16 %v2803
        %v2880 = vunpack.c.h.b16 %v2803
        %v2881 = vunpack.c.l.b16 %v2804
        %v2882 = vunpack.c.h.b16 %v2804
        %v2883 = vunpack.c.l.b16 %v2805
        %v2884 = vunpack.c.h.b16 %v2805
        %v2885 = vunpack.c.l.b16 %v2806
        %v2886 = vunpack.c.h.b16 %v2806
        %v2887 = vunpack.c.l.b16 %v2807
        %v2888 = vunpack.c.h.b16 %v2807
        %v2889 = vunpack.c.l.b16 %v2808
        %v2890 = vunpack.c.h.b16 %v2808
        %v2891 = vunpack.c.l.b16 %v2809
        %v2892 = vunpack.c.h.b16 %v2809
        %v2893 = vunpack.c.l.b16 %v2810
        %v2894 = vunpack.c.h.b16 %v2810
        %v2895 = vunpack.c.l.b16 %v2811
        %v2896 = vunpack.c.h.b16 %v2811
        %v2897 = vunpack.c.l.b16 %v2812
        %v2898 = vunpack.c.h.b16 %v2812
        %v2899 = vunpack.c.l.b16 %v2813
        %v2900 = vunpack.c.h.b16 %v2813
        %v2901 = vunpack.c.l.b16 %v2814
        %v2902 = vunpack.c.h.b16 %v2814
        %v2903 = vunpack.c.l.b16 %v2815
        %v2904 = vunpack.c.h.b16 %v2815
        %v2905 = vunpack.c.l.b16 %v2816
        %v2906 = vunpack.c.h.b16 %v2816
        %v2907 = vunpack.c.l.b16 %v2817
        %v2908 = vunpack.c.h.b16 %v2817
        %v2909 = vunpack.c.l.b16 %v2818
        %v2910 = vunpack.c.h.b16 %v2818
        %v2911 = vunpack.c.l.b16 %v2819
        %v2912 = vunpack.c.h.b16 %v2819
        %v2913 = vunpack.c.l.b16 %v2820
        %v2914 = vunpack.c.h.b16 %v2820
        %v2915 = vunpack.c.l.b16 %v2821
        %v2916 = vunpack.c.h.b16 %v2821
        %v2917 = vunpack.c.l.b16 %v2822
        %v2918 = vunpack.c.h.b16 %v2822
        %v2919 = vpack.c.b16 %v2857, %v2855
        %v2920 = vpack.c.b16 %v2858, %v2856
        %v2921 = vpack.c.b16 %v2861, %v2859
        %v2922 = vpack.c.b16 %v2862, %v2860
        %v2923 = vpack.c.b16 %v2865, %v2863
        %v2924 = vpack.c.b16 %v2866, %v2864
        %v2925 = vpack.c.b16 %v2869, %v2867
        %v2926 = vpack.c.b16 %v2870, %v2868
        %v2927 = vpack.c.b16 %v2873, %v2871
        %v2928 = vpack.c.b16 %v2874, %v2872
        %v2929 = vpack.c.b16 %v2877, %v2875
        %v2930 = vpack.c.b16 %v2878, %v2876
        %v2931 = vpack.c.b16 %v2881, %v2879
        %v2932 = vpack.c.b16 %v2882, %v2880
        %v2933 = vpack.c.b16 %v2885, %v2883
        %v2934 = vpack.c.b16 %v2886, %v2884
        %v2935 = vpack.c.b16 %v2889, %v2887
        %v2936 = vpack.c.b16 %v2890, %v2888
        %v2937 = vpack.c.b16 %v2893, %v2891
        %v2938 = vpack.c.b16 %v2894, %v2892
        %v2939 = vpack.c.b16 %v2897, %v2895
        %v2940 = vpack.c.b16 %v2898, %v2896
        %v2941 = vpack.c.b16 %v2901, %v2899
        %v2942 = vpack.c.b16 %v2902, %v2900
        %v2943 = vpack.c.b16 %v2905, %v2903
        %v2944 = vpack.c.b16 %v2906, %v2904
        %v2945 = vpack.c.b16 %v2909, %v2907
        %v2946 = vpack.c.b16 %v2910, %v2908
        %v2947 = vpack.c.b16 %v2913, %v2911
        %v2948 = vpack.c.b16 %v2914, %v2912
        %v2949 = vpack.c.b16 %v2917, %v2915
        %v2950 = vpack.c.b16 %v2918, %v2916
        %2983 = vmatpush.bf16.msra.mxu0 %v2933
        %2984 = vmatpush.bf16.msra.mxu0 %v2931
        %2985 = vmatpush.bf16.msra.mxu0 %v2929
        %2986 = vmatpush.bf16.msra.mxu0 %v2927
        %2987 = vmatpush.bf16.msra.mxu0 %v2925
        %2988 = vmatpush.bf16.msra.mxu0 %v2923
        %2989 = vmatpush.bf16.msra.mxu0 %v2921
        %2990 = vmatpush.bf16.msra.mxu0 %v2919
        %2991 = vmatmul.bf16.gmra.mxu0 %v2758
        %v2992 = vpop.f32.mrf.mxu0
        %v2993 = vadd.f32 0.0, %v2992
        %v2994 = vpop.f32.mrf.mxu0
        %v2995 = vadd.f32 0.0, %v2994
        %2996 = vmatmul.bf16.gmra.mxu0 %v2760
        %v2997 = vpop.f32.mrf.mxu0
        %v2998 = vadd.f32 0.0, %v2997
        %v2999 = vpop.f32.mrf.mxu0
        %v3000 = vadd.f32 0.0, %v2999
        %3001 = vmatmul.bf16.gmra.mxu0 %v2762
        %v3002 = vpop.f32.mrf.mxu0
        %v3003 = vadd.f32 0.0, %v3002
        %v3004 = vpop.f32.mrf.mxu0
        %v3005 = vadd.f32 0.0, %v3004
        %3006 = vmatmul.bf16.gmra.mxu0 %v2764
        %v3007 = vpop.f32.mrf.mxu0
        %v3008 = vadd.f32 0.0, %v3007
        %v3009 = vpop.f32.mrf.mxu0
        %v3010 = vadd.f32 0.0, %v3009
        %3011 = vmatmul.bf16.gmra.mxu0 %v2766
        %v3012 = vpop.f32.mrf.mxu0
        %v3013 = vadd.f32 0.0, %v3012
        %v3014 = vpop.f32.mrf.mxu0
        %v3015 = vadd.f32 0.0, %v3014
        %3016 = vmatmul.bf16.gmra.mxu0 %v2768
        %v3017 = vpop.f32.mrf.mxu0
        %v3018 = vadd.f32 0.0, %v3017
        %v3019 = vpop.f32.mrf.mxu0
        %v3020 = vadd.f32 0.0, %v3019
        %3021 = vmatmul.bf16.gmra.mxu0 %v2770
        %v3022 = vpop.f32.mrf.mxu0
        %v3023 = vadd.f32 0.0, %v3022
        %v3024 = vpop.f32.mrf.mxu0
        %v3025 = vadd.f32 0.0, %v3024
        %3026 = vmatmul.bf16.gmra.mxu0 %v2772
        %v3027 = vpop.f32.mrf.mxu0
        %v3028 = vadd.f32 0.0, %v3027
        %v3029 = vpop.f32.mrf.mxu0
        %v3030 = vadd.f32 0.0, %v3029
        %3031 = vmatmul.bf16.gmra.mxu0 %v2774
        %v3032 = vpop.f32.mrf.mxu0
        %v3033 = vadd.f32 0.0, %v3032
        %v3034 = vpop.f32.mrf.mxu0
        %v3035 = vadd.f32 0.0, %v3034
        %3036 = vmatmul.bf16.gmra.mxu0 %v2776
        %v3037 = vpop.f32.mrf.mxu0
        %v3038 = vadd.f32 0.0, %v3037
        %v3039 = vpop.f32.mrf.mxu0
        %v3040 = vadd.f32 0.0, %v3039
        %3041 = vmatmul.bf16.gmra.mxu0 %v2778
        %v3042 = vpop.f32.mrf.mxu0
        %v3043 = vadd.f32 0.0, %v3042
        %v3044 = vpop.f32.mrf.mxu0
        %v3045 = vadd.f32 0.0, %v3044
        %3046 = vmatmul.bf16.gmra.mxu0 %v2780
        %v3047 = vpop.f32.mrf.mxu0
        %v3048 = vadd.f32 0.0, %v3047
        %v3049 = vpop.f32.mrf.mxu0
        %v3050 = vadd.f32 0.0, %v3049
        %3051 = vmatmul.bf16.gmra.mxu0 %v2782
        %v3052 = vpop.f32.mrf.mxu0
        %v3053 = vadd.f32 0.0, %v3052
        %v3054 = vpop.f32.mrf.mxu0
        %v3055 = vadd.f32 0.0, %v3054
        %3056 = vmatmul.bf16.gmra.mxu0 %v2784
        %v3057 = vpop.f32.mrf.mxu0
        %v3058 = vadd.f32 0.0, %v3057
        %v3059 = vpop.f32.mrf.mxu0
        %v3060 = vadd.f32 0.0, %v3059
        %3061 = vmatmul.bf16.gmra.mxu0 %v2786
        %v3062 = vpop.f32.mrf.mxu0
        %v3063 = vadd.f32 0.0, %v3062
        %v3064 = vpop.f32.mrf.mxu0
        %v3065 = vadd.f32 0.0, %v3064
        %3066 = vmatmul.bf16.gmra.mxu0 %v2788
        %v3067 = vpop.f32.mrf.mxu0
        %v3068 = vadd.f32 0.0, %v3067
        %v3069 = vpop.f32.mrf.mxu0
        %v3070 = vadd.f32 0.0, %v3069
        %3071 = vdwg.mxu0
        %3072 = vmatpush.bf16.msra.mxu0 %v2949
        %3073 = vmatpush.bf16.msra.mxu0 %v2947
        %3074 = vmatpush.bf16.msra.mxu0 %v2945
        %3075 = vmatpush.bf16.msra.mxu0 %v2943
        %3076 = vmatpush.bf16.msra.mxu0 %v2941
        %3077 = vmatpush.bf16.msra.mxu0 %v2939
        %3078 = vmatpush.bf16.msra.mxu0 %v2937
        %3079 = vmatpush.bf16.msra.mxu0 %v2935
        %3080 = vmatmul.bf16.gmra.mxu0 %v2759
        %v3081 = vpop.f32.mrf.mxu0
        %v3082 = vadd.f32 %v2993, %v3081
        %v3083 = vpop.f32.mrf.mxu0
        %v3084 = vadd.f32 %v2995, %v3083
        %3085 = vmatmul.bf16.gmra.mxu0 %v2761
        %v3086 = vpop.f32.mrf.mxu0
        %v3087 = vadd.f32 %v2998, %v3086
        %v3088 = vpop.f32.mrf.mxu0
        %v3089 = vadd.f32 %v3000, %v3088
        %3090 = vmatmul.bf16.gmra.mxu0 %v2763
        %v3091 = vpop.f32.mrf.mxu0
        %v3092 = vadd.f32 %v3003, %v3091
        %v3093 = vpop.f32.mrf.mxu0
        %v3094 = vadd.f32 %v3005, %v3093
        %3095 = vmatmul.bf16.gmra.mxu0 %v2765
        %v3096 = vpop.f32.mrf.mxu0
        %v3097 = vadd.f32 %v3008, %v3096
        %v3098 = vpop.f32.mrf.mxu0
        %v3099 = vadd.f32 %v3010, %v3098
        %3100 = vmatmul.bf16.gmra.mxu0 %v2767
        %v3101 = vpop.f32.mrf.mxu0
        %v3102 = vadd.f32 %v3013, %v3101
        %v3103 = vpop.f32.mrf.mxu0
        %v3104 = vadd.f32 %v3015, %v3103
        %3105 = vmatmul.bf16.gmra.mxu0 %v2769
        %v3106 = vpop.f32.mrf.mxu0
        %v3107 = vadd.f32 %v3018, %v3106
        %v3108 = vpop.f32.mrf.mxu0
        %v3109 = vadd.f32 %v3020, %v3108
        %3110 = vmatmul.bf16.gmra.mxu0 %v2771
        %v3111 = vpop.f32.mrf.mxu0
        %v3112 = vadd.f32 %v3023, %v3111
        %v3113 = vpop.f32.mrf.mxu0
        %v3114 = vadd.f32 %v3025, %v3113
        %3115 = vmatmul.bf16.gmra.mxu0 %v2773
        %v3116 = vpop.f32.mrf.mxu0
        %v3117 = vadd.f32 %v3028, %v3116
        %v3118 = vpop.f32.mrf.mxu0
        %v3119 = vadd.f32 %v3030, %v3118
        %3120 = vmatmul.bf16.gmra.mxu0 %v2775
        %v3121 = vpop.f32.mrf.mxu0
        %v3122 = vadd.f32 %v3033, %v3121
        %v3123 = vpop.f32.mrf.mxu0
        %v3124 = vadd.f32 %v3035, %v3123
        %3125 = vmatmul.bf16.gmra.mxu0 %v2777
        %v3126 = vpop.f32.mrf.mxu0
        %v3127 = vadd.f32 %v3038, %v3126
        %v3128 = vpop.f32.mrf.mxu0
        %v3129 = vadd.f32 %v3040, %v3128
        %3130 = vmatmul.bf16.gmra.mxu0 %v2779
        %v3131 = vpop.f32.mrf.mxu0
        %v3132 = vadd.f32 %v3043, %v3131
        %v3133 = vpop.f32.mrf.mxu0
        %v3134 = vadd.f32 %v3045, %v3133
        %3135 = vmatmul.bf16.gmra.mxu0 %v2781
        %v3136 = vpop.f32.mrf.mxu0
        %v3137 = vadd.f32 %v3048, %v3136
        %v3138 = vpop.f32.mrf.mxu0
        %v3139 = vadd.f32 %v3050, %v3138
        %3140 = vmatmul.bf16.gmra.mxu0 %v2783
        %v3141 = vpop.f32.mrf.mxu0
        %v3142 = vadd.f32 %v3053, %v3141
        %v3143 = vpop.f32.mrf.mxu0
        %v3144 = vadd.f32 %v3055, %v3143
        %3145 = vmatmul.bf16.gmra.mxu0 %v2785
        %v3146 = vpop.f32.mrf.mxu0
        %v3147 = vadd.f32 %v3058, %v3146
        %v3148 = vpop.f32.mrf.mxu0
        %v3149 = vadd.f32 %v3060, %v3148
        %3150 = vmatmul.bf16.gmra.mxu0 %v2787
        %v3151 = vpop.f32.mrf.mxu0
        %v3152 = vadd.f32 %v3063, %v3151
        %v3153 = vpop.f32.mrf.mxu0
        %v3154 = vadd.f32 %v3065, %v3153
        %3155 = vmatmul.bf16.gmra.mxu0 %v2789
        %v3156 = vpop.f32.mrf.mxu0
        %v3157 = vadd.f32 %v3068, %v3156
        %v3158 = vpop.f32.mrf.mxu0
        %v3159 = vadd.f32 %v3070, %v3158
        %3160 = vdwg.mxu0
        %3161 = vmatpush.bf16.msra.mxu0 %v2934
        %3162 = vmatpush.bf16.msra.mxu0 %v2932
        %3163 = vmatpush.bf16.msra.mxu0 %v2930
        %3164 = vmatpush.bf16.msra.mxu0 %v2928
        %3165 = vmatpush.bf16.msra.mxu0 %v2926
        %3166 = vmatpush.bf16.msra.mxu0 %v2924
        %3167 = vmatpush.bf16.msra.mxu0 %v2922
        %3168 = vmatpush.bf16.msra.mxu0 %v2920
        %3169 = vmatmul.bf16.gmra.mxu0 %v2758
        %v3170 = vpop.f32.mrf.mxu0
        %v3171 = vadd.f32 0.0, %v3170
        %v3172 = vpop.f32.mrf.mxu0
        %v3173 = vadd.f32 0.0, %v3172
        %3174 = vmatmul.bf16.gmra.mxu0 %v2760
        %v3175 = vpop.f32.mrf.mxu0
        %v3176 = vadd.f32 0.0, %v3175
        %v3177 = vpop.f32.mrf.mxu0
        %v3178 = vadd.f32 0.0, %v3177
        %3179 = vmatmul.bf16.gmra.mxu0 %v2762
        %v3180 = vpop.f32.mrf.mxu0
        %v3181 = vadd.f32 0.0, %v3180
        %v3182 = vpop.f32.mrf.mxu0
        %v3183 = vadd.f32 0.0, %v3182
        %3184 = vmatmul.bf16.gmra.mxu0 %v2764
        %v3185 = vpop.f32.mrf.mxu0
        %v3186 = vadd.f32 0.0, %v3185
        %v3187 = vpop.f32.mrf.mxu0
        %v3188 = vadd.f32 0.0, %v3187
        %3189 = vmatmul.bf16.gmra.mxu0 %v2766
        %v3190 = vpop.f32.mrf.mxu0
        %v3191 = vadd.f32 0.0, %v3190
        %v3192 = vpop.f32.mrf.mxu0
        %v3193 = vadd.f32 0.0, %v3192
        %3194 = vmatmul.bf16.gmra.mxu0 %v2768
        %v3195 = vpop.f32.mrf.mxu0
        %v3196 = vadd.f32 0.0, %v3195
        %v3197 = vpop.f32.mrf.mxu0
        %v3198 = vadd.f32 0.0, %v3197
        %3199 = vmatmul.bf16.gmra.mxu0 %v2770
        %v3200 = vpop.f32.mrf.mxu0
        %v3201 = vadd.f32 0.0, %v3200
        %v3202 = vpop.f32.mrf.mxu0
        %v3203 = vadd.f32 0.0, %v3202
        %3204 = vmatmul.bf16.gmra.mxu0 %v2772
        %v3205 = vpop.f32.mrf.mxu0
        %v3206 = vadd.f32 0.0, %v3205
        %v3207 = vpop.f32.mrf.mxu0
        %v3208 = vadd.f32 0.0, %v3207
        %3209 = vmatmul.bf16.gmra.mxu0 %v2774
        %v3210 = vpop.f32.mrf.mxu0
        %v3211 = vadd.f32 0.0, %v3210
        %v3212 = vpop.f32.mrf.mxu0
        %v3213 = vadd.f32 0.0, %v3212
        %3214 = vmatmul.bf16.gmra.mxu0 %v2776
        %v3215 = vpop.f32.mrf.mxu0
        %v3216 = vadd.f32 0.0, %v3215
        %v3217 = vpop.f32.mrf.mxu0
        %v3218 = vadd.f32 0.0, %v3217
        %3219 = vmatmul.bf16.gmra.mxu0 %v2778
        %v3220 = vpop.f32.mrf.mxu0
        %v3221 = vadd.f32 0.0, %v3220
        %v3222 = vpop.f32.mrf.mxu0
        %v3223 = vadd.f32 0.0, %v3222
        %3224 = vmatmul.bf16.gmra.mxu0 %v2780
        %v3225 = vpop.f32.mrf.mxu0
        %v3226 = vadd.f32 0.0, %v3225
        %v3227 = vpop.f32.mrf.mxu0
        %v3228 = vadd.f32 0.0, %v3227
        %3229 = vmatmul.bf16.gmra.mxu0 %v2782
        %v3230 = vpop.f32.mrf.mxu0
        %v3231 = vadd.f32 0.0, %v3230
        %v3232 = vpop.f32.mrf.mxu0
        %v3233 = vadd.f32 0.0, %v3232
        %3234 = vmatmul.bf16.gmra.mxu0 %v2784
        %v3235 = vpop.f32.mrf.mxu0
        %v3236 = vadd.f32 0.0, %v3235
        %v3237 = vpop.f32.mrf.mxu0
        %v3238 = vadd.f32 0.0, %v3237
        %3239 = vmatmul.bf16.gmra.mxu0 %v2786
        %v3240 = vpop.f32.mrf.mxu0
        %v3241 = vadd.f32 0.0, %v3240
        %v3242 = vpop.f32.mrf.mxu0
        %v3243 = vadd.f32 0.0, %v3242
        %3244 = vmatmul.bf16.gmra.mxu0 %v2788
        %v3245 = vpop.f32.mrf.mxu0
        %v3246 = vadd.f32 0.0, %v3245
        %v3247 = vpop.f32.mrf.mxu0
        %v3248 = vadd.f32 0.0, %v3247
        %3249 = vdwg.mxu0
        %3250 = vmatpush.bf16.msra.mxu0 %v2950
        %3251 = vmatpush.bf16.msra.mxu0 %v2948
        %3252 = vmatpush.bf16.msra.mxu0 %v2946
        %3253 = vmatpush.bf16.msra.mxu0 %v2944
        %3254 = vmatpush.bf16.msra.mxu0 %v2942
        %3255 = vmatpush.bf16.msra.mxu0 %v2940
        %3256 = vmatpush.bf16.msra.mxu0 %v2938
        %3257 = vmatpush.bf16.msra.mxu0 %v2936
        %3258 = vmatmul.bf16.gmra.mxu0 %v2759
        %v3259 = vpop.f32.mrf.mxu0
        %v3260 = vadd.f32 %v3171, %v3259
        %v3261 = vpop.f32.mrf.mxu0
        %v3262 = vadd.f32 %v3173, %v3261
        %3263 = vmatmul.bf16.gmra.mxu0 %v2761
        %v3264 = vpop.f32.mrf.mxu0
        %v3265 = vadd.f32 %v3176, %v3264
        %v3266 = vpop.f32.mrf.mxu0
        %v3267 = vadd.f32 %v3178, %v3266
        %3268 = vmatmul.bf16.gmra.mxu0 %v2763
        %v3269 = vpop.f32.mrf.mxu0
        %v3270 = vadd.f32 %v3181, %v3269
        %v3271 = vpop.f32.mrf.mxu0
        %v3272 = vadd.f32 %v3183, %v3271
        %3273 = vmatmul.bf16.gmra.mxu0 %v2765
        %v3274 = vpop.f32.mrf.mxu0
        %v3275 = vadd.f32 %v3186, %v3274
        %v3276 = vpop.f32.mrf.mxu0
        %v3277 = vadd.f32 %v3188, %v3276
        %3278 = vmatmul.bf16.gmra.mxu0 %v2767
        %v3279 = vpop.f32.mrf.mxu0
        %v3280 = vadd.f32 %v3191, %v3279
        %v3281 = vpop.f32.mrf.mxu0
        %v3282 = vadd.f32 %v3193, %v3281
        %3283 = vmatmul.bf16.gmra.mxu0 %v2769
        %v3284 = vpop.f32.mrf.mxu0
        %v3285 = vadd.f32 %v3196, %v3284
        %v3286 = vpop.f32.mrf.mxu0
        %v3287 = vadd.f32 %v3198, %v3286
        %3288 = vmatmul.bf16.gmra.mxu0 %v2771
        %v3289 = vpop.f32.mrf.mxu0
        %v3290 = vadd.f32 %v3201, %v3289
        %v3291 = vpop.f32.mrf.mxu0
        %v3292 = vadd.f32 %v3203, %v3291
        %3293 = vmatmul.bf16.gmra.mxu0 %v2773
        %v3294 = vpop.f32.mrf.mxu0
        %v3295 = vadd.f32 %v3206, %v3294
        %v3296 = vpop.f32.mrf.mxu0
        %v3297 = vadd.f32 %v3208, %v3296
        %3298 = vmatmul.bf16.gmra.mxu0 %v2775
        %v3299 = vpop.f32.mrf.mxu0
        %v3300 = vadd.f32 %v3211, %v3299
        %v3301 = vpop.f32.mrf.mxu0
        %v3302 = vadd.f32 %v3213, %v3301
        %3303 = vmatmul.bf16.gmra.mxu0 %v2777
        %v3304 = vpop.f32.mrf.mxu0
        %v3305 = vadd.f32 %v3216, %v3304
        %v3306 = vpop.f32.mrf.mxu0
        %v3307 = vadd.f32 %v3218, %v3306
        %3308 = vmatmul.bf16.gmra.mxu0 %v2779
        %v3309 = vpop.f32.mrf.mxu0
        %v3310 = vadd.f32 %v3221, %v3309
        %v3311 = vpop.f32.mrf.mxu0
        %v3312 = vadd.f32 %v3223, %v3311
        %3313 = vmatmul.bf16.gmra.mxu0 %v2781
        %v3314 = vpop.f32.mrf.mxu0
        %v3315 = vadd.f32 %v3226, %v3314
        %v3316 = vpop.f32.mrf.mxu0
        %v3317 = vadd.f32 %v3228, %v3316
        %3318 = vmatmul.bf16.gmra.mxu0 %v2783
        %v3319 = vpop.f32.mrf.mxu0
        %v3320 = vadd.f32 %v3231, %v3319
        %v3321 = vpop.f32.mrf.mxu0
        %v3322 = vadd.f32 %v3233, %v3321
        %3323 = vmatmul.bf16.gmra.mxu0 %v2785
        %v3324 = vpop.f32.mrf.mxu0
        %v3325 = vadd.f32 %v3236, %v3324
        %v3326 = vpop.f32.mrf.mxu0
        %v3327 = vadd.f32 %v3238, %v3326
        %3328 = vmatmul.bf16.gmra.mxu0 %v2787
        %v3329 = vpop.f32.mrf.mxu0
        %v3330 = vadd.f32 %v3241, %v3329
        %v3331 = vpop.f32.mrf.mxu0
        %v3332 = vadd.f32 %v3243, %v3331
        %3333 = vmatmul.bf16.gmra.mxu0 %v2789
        %v3334 = vpop.f32.mrf.mxu0
        %v3335 = vadd.f32 %v3246, %v3334
        %v3336 = vpop.f32.mrf.mxu0
        %v3337 = vadd.f32 %v3248, %v3336
        %3338 = vdwg.mxu0
        %v3339 = vpack.c.bf16 %v3260, %v3082
        %v3340 = vpack.c.bf16 %v3262, %v3084
        %v3341 = vpack.c.bf16 %v3265, %v3087
        %v3342 = vpack.c.bf16 %v3267, %v3089
        %v3343 = vpack.c.bf16 %v3270, %v3092
        %v3344 = vpack.c.bf16 %v3272, %v3094
        %v3345 = vpack.c.bf16 %v3275, %v3097
        %v3346 = vpack.c.bf16 %v3277, %v3099
        %v3347 = vpack.c.bf16 %v3280, %v3102
        %v3348 = vpack.c.bf16 %v3282, %v3104
        %v3349 = vpack.c.bf16 %v3285, %v3107
        %v3350 = vpack.c.bf16 %v3287, %v3109
        %v3351 = vpack.c.bf16 %v3290, %v3112
        %v3352 = vpack.c.bf16 %v3292, %v3114
        %v3353 = vpack.c.bf16 %v3295, %v3117
        %v3354 = vpack.c.bf16 %v3297, %v3119
        %v3355 = vpack.c.bf16 %v3300, %v3122
        %v3356 = vpack.c.bf16 %v3302, %v3124
        %v3357 = vpack.c.bf16 %v3305, %v3127
        %v3358 = vpack.c.bf16 %v3307, %v3129
        %v3359 = vpack.c.bf16 %v3310, %v3132
        %v3360 = vpack.c.bf16 %v3312, %v3134
        %v3361 = vpack.c.bf16 %v3315, %v3137
        %v3362 = vpack.c.bf16 %v3317, %v3139
        %v3363 = vpack.c.bf16 %v3320, %v3142
        %v3364 = vpack.c.bf16 %v3322, %v3144
        %v3365 = vpack.c.bf16 %v3325, %v3147
        %v3366 = vpack.c.bf16 %v3327, %v3149
        %v3367 = vpack.c.bf16 %v3330, %v3152
        %v3368 = vpack.c.bf16 %v3332, %v3154
        %v3369 = vpack.c.bf16 %v3335, %v3157
        %v3370 = vpack.c.bf16 %v3337, %v3159
        %s3371 = scalar_lea.vmem %s4, 4
        %v3372 = vld [vmem:[%s3371] sm:$0x3]
        %3374 = vst [vmem:[#allocation1] ss:$9 sm:$0xff] %v3372
        %v3375 = vld [vmem:[#allocation1] sm:$0xff]
        %v3376 = vld [vmem:[#allocation1 + $0x9] sm:$0xff]
        %v3377 = vpack.i.b16 %v3375, %v3375
        %v3379 = vperm.slane %v3377, 0
        %v3380 = vpack.i.b16 %v3376, %v3376
        %v3382 = vperm.slane %v3380, 0
        %v3383 = vunpack.c.l.bf16 %v3339
        %v3384 = vunpack.c.h.bf16 %v3339
        %v3385 = vunpack.c.l.bf16 %v3340
        %v3386 = vunpack.c.h.bf16 %v3340
        %v3387 = vunpack.c.l.bf16 %v3341
        %v3388 = vunpack.c.h.bf16 %v3341
        %v3389 = vunpack.c.l.bf16 %v3342
        %v3390 = vunpack.c.h.bf16 %v3342
        %v3391 = vunpack.c.l.bf16 %v3343
        %v3392 = vunpack.c.h.bf16 %v3343
        %v3393 = vunpack.c.l.bf16 %v3344
        %v3394 = vunpack.c.h.bf16 %v3344
        %v3395 = vunpack.c.l.bf16 %v3345
        %v3396 = vunpack.c.h.bf16 %v3345
        %v3397 = vunpack.c.l.bf16 %v3346
        %v3398 = vunpack.c.h.bf16 %v3346
        %v3399 = vunpack.c.l.bf16 %v3347
        %v3400 = vunpack.c.h.bf16 %v3347
        %v3401 = vunpack.c.l.bf16 %v3348
        %v3402 = vunpack.c.h.bf16 %v3348
        %v3403 = vunpack.c.l.bf16 %v3349
        %v3404 = vunpack.c.h.bf16 %v3349
        %v3405 = vunpack.c.l.bf16 %v3350
        %v3406 = vunpack.c.h.bf16 %v3350
        %v3407 = vunpack.c.l.bf16 %v3351
        %v3408 = vunpack.c.h.bf16 %v3351
        %v3409 = vunpack.c.l.bf16 %v3352
        %v3410 = vunpack.c.h.bf16 %v3352
        %v3411 = vunpack.c.l.bf16 %v3353
        %v3412 = vunpack.c.h.bf16 %v3353
        %v3413 = vunpack.c.l.bf16 %v3354
        %v3414 = vunpack.c.h.bf16 %v3354
        %v3415 = vunpack.c.l.bf16 %v3355
        %v3416 = vunpack.c.h.bf16 %v3355
        %v3417 = vunpack.c.l.bf16 %v3356
        %v3418 = vunpack.c.h.bf16 %v3356
        %v3419 = vunpack.c.l.bf16 %v3357
        %v3420 = vunpack.c.h.bf16 %v3357
        %v3421 = vunpack.c.l.bf16 %v3358
        %v3422 = vunpack.c.h.bf16 %v3358
        %v3423 = vunpack.c.l.bf16 %v3359
        %v3424 = vunpack.c.h.bf16 %v3359
        %v3425 = vunpack.c.l.bf16 %v3360
        %v3426 = vunpack.c.h.bf16 %v3360
        %v3427 = vunpack.c.l.bf16 %v3361
        %v3428 = vunpack.c.h.bf16 %v3361
        %v3429 = vunpack.c.l.bf16 %v3362
        %v3430 = vunpack.c.h.bf16 %v3362
        %v3431 = vunpack.c.l.bf16 %v3363
        %v3432 = vunpack.c.h.bf16 %v3363
        %v3433 = vunpack.c.l.bf16 %v3364
        %v3434 = vunpack.c.h.bf16 %v3364
        %v3435 = vunpack.c.l.bf16 %v3365
        %v3436 = vunpack.c.h.bf16 %v3365
        %v3437 = vunpack.c.l.bf16 %v3366
        %v3438 = vunpack.c.h.bf16 %v3366
        %v3439 = vunpack.c.l.bf16 %v3367
        %v3440 = vunpack.c.h.bf16 %v3367
        %v3441 = vunpack.c.l.bf16 %v3368
        %v3442 = vunpack.c.h.bf16 %v3368
        %v3443 = vunpack.c.l.bf16 %v3369
        %v3444 = vunpack.c.h.bf16 %v3369
        %v3445 = vunpack.c.l.bf16 %v3370
        %v3446 = vunpack.c.h.bf16 %v3370
        %v3447 = vunpack.c.l.bf16 %v3379
        %v3448 = vunpack.c.l.bf16 %v3382
        %v3449 = vadd.f32 %v3383, %v3447
        %v3450 = vadd.f32 %v3384, %v3448
        %v3451 = vadd.f32 %v3385, %v3447
        %v3452 = vadd.f32 %v3386, %v3448
        %v3453 = vadd.f32 %v3387, %v3447
        %v3454 = vadd.f32 %v3388, %v3448
        %v3455 = vadd.f32 %v3389, %v3447
        %v3456 = vadd.f32 %v3390, %v3448
        %v3457 = vadd.f32 %v3391, %v3447
        %v3458 = vadd.f32 %v3392, %v3448
        %v3459 = vadd.f32 %v3393, %v3447
        %v3460 = vadd.f32 %v3394, %v3448
        %v3461 = vadd.f32 %v3395, %v3447
        %v3462 = vadd.f32 %v3396, %v3448
        %v3463 = vadd.f32 %v3397, %v3447
        %v3464 = vadd.f32 %v3398, %v3448
        %v3465 = vadd.f32 %v3399, %v3447
        %v3466 = vadd.f32 %v3400, %v3448
        %v3467 = vadd.f32 %v3401, %v3447
        %v3468 = vadd.f32 %v3402, %v3448
        %v3469 = vadd.f32 %v3403, %v3447
        %v3470 = vadd.f32 %v3404, %v3448
        %v3471 = vadd.f32 %v3405, %v3447
        %v3472 = vadd.f32 %v3406, %v3448
        %v3473 = vadd.f32 %v3407, %v3447
        %v3474 = vadd.f32 %v3408, %v3448
        %v3475 = vadd.f32 %v3409, %v3447
        %v3476 = vadd.f32 %v3410, %v3448
        %v3477 = vadd.f32 %v3411, %v3447
        %v3478 = vadd.f32 %v3412, %v3448
        %v3479 = vadd.f32 %v3413, %v3447
        %v3480 = vadd.f32 %v3414, %v3448
        %v3481 = vadd.f32 %v3415, %v3447
        %v3482 = vadd.f32 %v3416, %v3448
        %v3483 = vadd.f32 %v3417, %v3447
        %v3484 = vadd.f32 %v3418, %v3448
        %v3485 = vadd.f32 %v3419, %v3447
        %v3486 = vadd.f32 %v3420, %v3448
        %v3487 = vadd.f32 %v3421, %v3447
        %v3488 = vadd.f32 %v3422, %v3448
        %v3489 = vadd.f32 %v3423, %v3447
        %v3490 = vadd.f32 %v3424, %v3448
        %v3491 = vadd.f32 %v3425, %v3447
        %v3492 = vadd.f32 %v3426, %v3448
        %v3493 = vadd.f32 %v3427, %v3447
        %v3494 = vadd.f32 %v3428, %v3448
        %v3495 = vadd.f32 %v3429, %v3447
        %v3496 = vadd.f32 %v3430, %v3448
        %v3497 = vadd.f32 %v3431, %v3447
        %v3498 = vadd.f32 %v3432, %v3448
        %v3499 = vadd.f32 %v3433, %v3447
        %v3500 = vadd.f32 %v3434, %v3448
        %v3501 = vadd.f32 %v3435, %v3447
        %v3502 = vadd.f32 %v3436, %v3448
        %v3503 = vadd.f32 %v3437, %v3447
        %v3504 = vadd.f32 %v3438, %v3448
        %v3505 = vadd.f32 %v3439, %v3447
        %v3506 = vadd.f32 %v3440, %v3448
        %v3507 = vadd.f32 %v3441, %v3447
        %v3508 = vadd.f32 %v3442, %v3448
        %v3509 = vadd.f32 %v3443, %v3447
        %v3510 = vadd.f32 %v3444, %v3448
        %v3511 = vadd.f32 %v3445, %v3447
        %v3512 = vadd.f32 %v3446, %v3448
        %v3513 = vpack.c.bf16 %v3450, %v3449
        %v3514 = vpack.c.bf16 %v3452, %v3451
        %v3515 = vpack.c.bf16 %v3454, %v3453
        %v3516 = vpack.c.bf16 %v3456, %v3455
        %v3517 = vpack.c.bf16 %v3458, %v3457
        %v3518 = vpack.c.bf16 %v3460, %v3459
        %v3519 = vpack.c.bf16 %v3462, %v3461
        %v3520 = vpack.c.bf16 %v3464, %v3463
        %v3521 = vpack.c.bf16 %v3466, %v3465
        %v3522 = vpack.c.bf16 %v3468, %v3467
        %v3523 = vpack.c.bf16 %v3470, %v3469
        %v3524 = vpack.c.bf16 %v3472, %v3471
        %v3525 = vpack.c.bf16 %v3474, %v3473
        %v3526 = vpack.c.bf16 %v3476, %v3475
        %v3527 = vpack.c.bf16 %v3478, %v3477
        %v3528 = vpack.c.bf16 %v3480, %v3479
        %v3529 = vpack.c.bf16 %v3482, %v3481
        %v3530 = vpack.c.bf16 %v3484, %v3483
        %v3531 = vpack.c.bf16 %v3486, %v3485
        %v3532 = vpack.c.bf16 %v3488, %v3487
        %v3533 = vpack.c.bf16 %v3490, %v3489
        %v3534 = vpack.c.bf16 %v3492, %v3491
        %v3535 = vpack.c.bf16 %v3494, %v3493
        %v3536 = vpack.c.bf16 %v3496, %v3495
        %v3537 = vpack.c.bf16 %v3498, %v3497
        %v3538 = vpack.c.bf16 %v3500, %v3499
        %v3539 = vpack.c.bf16 %v3502, %v3501
        %v3540 = vpack.c.bf16 %v3504, %v3503
        %v3541 = vpack.c.bf16 %v3506, %v3505
        %v3542 = vpack.c.bf16 %v3508, %v3507
        %v3543 = vpack.c.bf16 %v3510, %v3509
        %v3544 = vpack.c.bf16 %v3512, %v3511
        %v3545 = vunpack.c.l.bf16 %v3513
        %v3546 = vunpack.c.h.bf16 %v3513
        %v3547 = vunpack.c.l.bf16 %v3514
        %v3548 = vunpack.c.h.bf16 %v3514
        %v3549 = vunpack.c.l.bf16 %v3515
        %v3550 = vunpack.c.h.bf16 %v3515
        %v3551 = vunpack.c.l.bf16 %v3516
        %v3552 = vunpack.c.h.bf16 %v3516
        %v3553 = vunpack.c.l.bf16 %v3517
        %v3554 = vunpack.c.h.bf16 %v3517
        %v3555 = vunpack.c.l.bf16 %v3518
        %v3556 = vunpack.c.h.bf16 %v3518
        %v3557 = vunpack.c.l.bf16 %v3519
        %v3558 = vunpack.c.h.bf16 %v3519
        %v3559 = vunpack.c.l.bf16 %v3520
        %v3560 = vunpack.c.h.bf16 %v3520
        %v3561 = vunpack.c.l.bf16 %v3521
        %v3562 = vunpack.c.h.bf16 %v3521
        %v3563 = vunpack.c.l.bf16 %v3522
        %v3564 = vunpack.c.h.bf16 %v3522
        %v3565 = vunpack.c.l.bf16 %v3523
        %v3566 = vunpack.c.h.bf16 %v3523
        %v3567 = vunpack.c.l.bf16 %v3524
        %v3568 = vunpack.c.h.bf16 %v3524
        %v3569 = vunpack.c.l.bf16 %v3525
        %v3570 = vunpack.c.h.bf16 %v3525
        %v3571 = vunpack.c.l.bf16 %v3526
        %v3572 = vunpack.c.h.bf16 %v3526
        %v3573 = vunpack.c.l.bf16 %v3527
        %v3574 = vunpack.c.h.bf16 %v3527
        %v3575 = vunpack.c.l.bf16 %v3528
        %v3576 = vunpack.c.h.bf16 %v3528
        %v3577 = vunpack.c.l.bf16 %v3529
        %v3578 = vunpack.c.h.bf16 %v3529
        %v3579 = vunpack.c.l.bf16 %v3530
        %v3580 = vunpack.c.h.bf16 %v3530
        %v3581 = vunpack.c.l.bf16 %v3531
        %v3582 = vunpack.c.h.bf16 %v3531
        %v3583 = vunpack.c.l.bf16 %v3532
        %v3584 = vunpack.c.h.bf16 %v3532
        %v3585 = vunpack.c.l.bf16 %v3533
        %v3586 = vunpack.c.h.bf16 %v3533
        %v3587 = vunpack.c.l.bf16 %v3534
        %v3588 = vunpack.c.h.bf16 %v3534
        %v3589 = vunpack.c.l.bf16 %v3535
        %v3590 = vunpack.c.h.bf16 %v3535
        %v3591 = vunpack.c.l.bf16 %v3536
        %v3592 = vunpack.c.h.bf16 %v3536
        %v3593 = vunpack.c.l.bf16 %v3537
        %v3594 = vunpack.c.h.bf16 %v3537
        %v3595 = vunpack.c.l.bf16 %v3538
        %v3596 = vunpack.c.h.bf16 %v3538
        %v3597 = vunpack.c.l.bf16 %v3539
        %v3598 = vunpack.c.h.bf16 %v3539
        %v3599 = vunpack.c.l.bf16 %v3540
        %v3600 = vunpack.c.h.bf16 %v3540
        %v3601 = vunpack.c.l.bf16 %v3541
        %v3602 = vunpack.c.h.bf16 %v3541
        %v3603 = vunpack.c.l.bf16 %v3542
        %v3604 = vunpack.c.h.bf16 %v3542
        %v3605 = vunpack.c.l.bf16 %v3543
        %v3606 = vunpack.c.h.bf16 %v3543
        %v3607 = vunpack.c.l.bf16 %v3544
        %v3608 = vunpack.c.h.bf16 %v3544
        %v3609 = vmax.f32 %v3545, 0.0
        %v3610 = vmax.f32 %v3546, 0.0
        %v3611 = vmax.f32 %v3547, 0.0
        %v3612 = vmax.f32 %v3548, 0.0
        %v3613 = vmax.f32 %v3549, 0.0
        %v3614 = vmax.f32 %v3550, 0.0
        %v3615 = vmax.f32 %v3551, 0.0
        %v3616 = vmax.f32 %v3552, 0.0
        %v3617 = vmax.f32 %v3553, 0.0
        %v3618 = vmax.f32 %v3554, 0.0
        %v3619 = vmax.f32 %v3555, 0.0
        %v3620 = vmax.f32 %v3556, 0.0
        %v3621 = vmax.f32 %v3557, 0.0
        %v3622 = vmax.f32 %v3558, 0.0
        %v3623 = vmax.f32 %v3559, 0.0
        %v3624 = vmax.f32 %v3560, 0.0
        %v3625 = vmax.f32 %v3561, 0.0
        %v3626 = vmax.f32 %v3562, 0.0
        %v3627 = vmax.f32 %v3563, 0.0
        %v3628 = vmax.f32 %v3564, 0.0
        %v3629 = vmax.f32 %v3565, 0.0
        %v3630 = vmax.f32 %v3566, 0.0
        %v3631 = vmax.f32 %v3567, 0.0
        %v3632 = vmax.f32 %v3568, 0.0
        %v3633 = vmax.f32 %v3569, 0.0
        %v3634 = vmax.f32 %v3570, 0.0
        %v3635 = vmax.f32 %v3571, 0.0
        %v3636 = vmax.f32 %v3572, 0.0
        %v3637 = vmax.f32 %v3573, 0.0
        %v3638 = vmax.f32 %v3574, 0.0
        %v3639 = vmax.f32 %v3575, 0.0
        %v3640 = vmax.f32 %v3576, 0.0
        %v3641 = vmax.f32 %v3577, 0.0
        %v3642 = vmax.f32 %v3578, 0.0
        %v3643 = vmax.f32 %v3579, 0.0
        %v3644 = vmax.f32 %v3580, 0.0
        %v3645 = vmax.f32 %v3581, 0.0
        %v3646 = vmax.f32 %v3582, 0.0
        %v3647 = vmax.f32 %v3583, 0.0
        %v3648 = vmax.f32 %v3584, 0.0
        %v3649 = vmax.f32 %v3585, 0.0
        %v3650 = vmax.f32 %v3586, 0.0
        %v3651 = vmax.f32 %v3587, 0.0
        %v3652 = vmax.f32 %v3588, 0.0
        %v3653 = vmax.f32 %v3589, 0.0
        %v3654 = vmax.f32 %v3590, 0.0
        %v3655 = vmax.f32 %v3591, 0.0
        %v3656 = vmax.f32 %v3592, 0.0
        %v3657 = vmax.f32 %v3593, 0.0
        %v3658 = vmax.f32 %v3594, 0.0
        %v3659 = vmax.f32 %v3595, 0.0
        %v3660 = vmax.f32 %v3596, 0.0
        %v3661 = vmax.f32 %v3597, 0.0
        %v3662 = vmax.f32 %v3598, 0.0
        %v3663 = vmax.f32 %v3599, 0.0
        %v3664 = vmax.f32 %v3600, 0.0
        %v3665 = vmax.f32 %v3601, 0.0
        %v3666 = vmax.f32 %v3602, 0.0
        %v3667 = vmax.f32 %v3603, 0.0
        %v3668 = vmax.f32 %v3604, 0.0
        %v3669 = vmax.f32 %v3605, 0.0
        %v3670 = vmax.f32 %v3606, 0.0
        %v3671 = vmax.f32 %v3607, 0.0
        %v3672 = vmax.f32 %v3608, 0.0
        %v3673 = vpack.c.bf16 %v3611, %v3609
        %v3674 = vpack.c.bf16 %v3612, %v3610
        %v3675 = vpack.c.bf16 %v3615, %v3613
        %v3676 = vpack.c.bf16 %v3616, %v3614
        %v3677 = vpack.c.bf16 %v3619, %v3617
        %v3678 = vpack.c.bf16 %v3620, %v3618
        %v3679 = vpack.c.bf16 %v3623, %v3621
        %v3680 = vpack.c.bf16 %v3624, %v3622
        %v3681 = vpack.c.bf16 %v3627, %v3625
        %v3682 = vpack.c.bf16 %v3628, %v3626
        %v3683 = vpack.c.bf16 %v3631, %v3629
        %v3684 = vpack.c.bf16 %v3632, %v3630
        %v3685 = vpack.c.bf16 %v3635, %v3633
        %v3686 = vpack.c.bf16 %v3636, %v3634
        %v3687 = vpack.c.bf16 %v3639, %v3637
        %v3688 = vpack.c.bf16 %v3640, %v3638
        %v3689 = vpack.c.bf16 %v3643, %v3641
        %v3690 = vpack.c.bf16 %v3644, %v3642
        %v3691 = vpack.c.bf16 %v3647, %v3645
        %v3692 = vpack.c.bf16 %v3648, %v3646
        %v3693 = vpack.c.bf16 %v3651, %v3649
        %v3694 = vpack.c.bf16 %v3652, %v3650
        %v3695 = vpack.c.bf16 %v3655, %v3653
        %v3696 = vpack.c.bf16 %v3656, %v3654
        %v3697 = vpack.c.bf16 %v3659, %v3657
        %v3698 = vpack.c.bf16 %v3660, %v3658
        %v3699 = vpack.c.bf16 %v3663, %v3661
        %v3700 = vpack.c.bf16 %v3664, %v3662
        %v3701 = vpack.c.bf16 %v3667, %v3665
        %v3702 = vpack.c.bf16 %v3668, %v3666
        %v3703 = vpack.c.bf16 %v3671, %v3669
        %v3704 = vpack.c.bf16 %v3672, %v3670
        %s3705 = scalar_lea.vmem [#allocation2], 768
        %v3706 = vld [vmem:[%s3705] sm:$0xff]
        %v3707 = vld [vmem:[%s3705 + $0x8] sm:$0xff]
        %v3708 = vld [vmem:[%s3705 + $0x10] sm:$0xff]
        %v3709 = vld [vmem:[%s3705 + $0x18] sm:$0xff]
        %v3710 = vld [vmem:[%s3705 + $0x20] sm:$0xff]
        %v3711 = vld [vmem:[%s3705 + $0x28] sm:$0xff]
        %v3712 = vld [vmem:[%s3705 + $0x30] sm:$0xff]
        %v3713 = vld [vmem:[%s3705 + $0x38] sm:$0xff]
        %v3714 = vld [vmem:[%s3705 + $0x40] sm:$0xff]
        %v3715 = vld [vmem:[%s3705 + $0x48] sm:$0xff]
        %v3716 = vld [vmem:[%s3705 + $0x50] sm:$0xff]
        %v3717 = vld [vmem:[%s3705 + $0x58] sm:$0xff]
        %v3718 = vld [vmem:[%s3705 + $0x60] sm:$0xff]
        %v3719 = vld [vmem:[%s3705 + $0x68] sm:$0xff]
        %v3720 = vld [vmem:[%s3705 + $0x70] sm:$0xff]
        %v3721 = vld [vmem:[%s3705 + $0x78] sm:$0xff]
        %v3722 = vld [vmem:[%s3705 + $0x80] sm:$0xff]
        %v3723 = vld [vmem:[%s3705 + $0x88] sm:$0xff]
        %v3724 = vld [vmem:[%s3705 + $0x90] sm:$0xff]
        %v3725 = vld [vmem:[%s3705 + $0x98] sm:$0xff]
        %v3726 = vld [vmem:[%s3705 + $0xa0] sm:$0xff]
        %v3727 = vld [vmem:[%s3705 + $0xa8] sm:$0xff]
        %v3728 = vld [vmem:[%s3705 + $0xb0] sm:$0xff]
        %v3729 = vld [vmem:[%s3705 + $0xb8] sm:$0xff]
        %v3730 = vld [vmem:[%s3705 + $0xc0] sm:$0xff]
        %v3731 = vld [vmem:[%s3705 + $0xc8] sm:$0xff]
        %v3732 = vld [vmem:[%s3705 + $0xd0] sm:$0xff]
        %v3733 = vld [vmem:[%s3705 + $0xd8] sm:$0xff]
        %v3734 = vld [vmem:[%s3705 + $0xe0] sm:$0xff]
        %v3735 = vld [vmem:[%s3705 + $0xe8] sm:$0xff]
        %v3736 = vld [vmem:[%s3705 + $0xf0] sm:$0xff]
        %v3737 = vld [vmem:[%s3705 + $0xf8] sm:$0xff]
        %v3770 = vunpack.c.l.b16 %v3706
        %v3771 = vunpack.c.h.b16 %v3706
        %v3772 = vunpack.c.l.b16 %v3707
        %v3773 = vunpack.c.h.b16 %v3707
        %v3774 = vunpack.c.l.b16 %v3708
        %v3775 = vunpack.c.h.b16 %v3708
        %v3776 = vunpack.c.l.b16 %v3709
        %v3777 = vunpack.c.h.b16 %v3709
        %v3778 = vunpack.c.l.b16 %v3710
        %v3779 = vunpack.c.h.b16 %v3710
        %v3780 = vunpack.c.l.b16 %v3711
        %v3781 = vunpack.c.h.b16 %v3711
        %v3782 = vunpack.c.l.b16 %v3712
        %v3783 = vunpack.c.h.b16 %v3712
        %v3784 = vunpack.c.l.b16 %v3713
        %v3785 = vunpack.c.h.b16 %v3713
        %v3786 = vunpack.c.l.b16 %v3714
        %v3787 = vunpack.c.h.b16 %v3714
        %v3788 = vunpack.c.l.b16 %v3715
        %v3789 = vunpack.c.h.b16 %v3715
        %v3790 = vunpack.c.l.b16 %v3716
        %v3791 = vunpack.c.h.b16 %v3716
        %v3792 = vunpack.c.l.b16 %v3717
        %v3793 = vunpack.c.h.b16 %v3717
        %v3794 = vunpack.c.l.b16 %v3718
        %v3795 = vunpack.c.h.b16 %v3718
        %v3796 = vunpack.c.l.b16 %v3719
        %v3797 = vunpack.c.h.b16 %v3719
        %v3798 = vunpack.c.l.b16 %v3720
        %v3799 = vunpack.c.h.b16 %v3720
        %v3800 = vunpack.c.l.b16 %v3721
        %v3801 = vunpack.c.h.b16 %v3721
        %v3802 = vunpack.c.l.b16 %v3722
        %v3803 = vunpack.c.h.b16 %v3722
        %v3804 = vunpack.c.l.b16 %v3723
        %v3805 = vunpack.c.h.b16 %v3723
        %v3806 = vunpack.c.l.b16 %v3724
        %v3807 = vunpack.c.h.b16 %v3724
        %v3808 = vunpack.c.l.b16 %v3725
        %v3809 = vunpack.c.h.b16 %v3725
        %v3810 = vunpack.c.l.b16 %v3726
        %v3811 = vunpack.c.h.b16 %v3726
        %v3812 = vunpack.c.l.b16 %v3727
        %v3813 = vunpack.c.h.b16 %v3727
        %v3814 = vunpack.c.l.b16 %v3728
        %v3815 = vunpack.c.h.b16 %v3728
        %v3816 = vunpack.c.l.b16 %v3729
        %v3817 = vunpack.c.h.b16 %v3729
        %v3818 = vunpack.c.l.b16 %v3730
        %v3819 = vunpack.c.h.b16 %v3730
        %v3820 = vunpack.c.l.b16 %v3731
        %v3821 = vunpack.c.h.b16 %v3731
        %v3822 = vunpack.c.l.b16 %v3732
        %v3823 = vunpack.c.h.b16 %v3732
        %v3824 = vunpack.c.l.b16 %v3733
        %v3825 = vunpack.c.h.b16 %v3733
        %v3826 = vunpack.c.l.b16 %v3734
        %v3827 = vunpack.c.h.b16 %v3734
        %v3828 = vunpack.c.l.b16 %v3735
        %v3829 = vunpack.c.h.b16 %v3735
        %v3830 = vunpack.c.l.b16 %v3736
        %v3831 = vunpack.c.h.b16 %v3736
        %v3832 = vunpack.c.l.b16 %v3737
        %v3833 = vunpack.c.h.b16 %v3737
        %v3834 = vpack.c.b16 %v3772, %v3770
        %v3835 = vpack.c.b16 %v3773, %v3771
        %v3836 = vpack.c.b16 %v3776, %v3774
        %v3837 = vpack.c.b16 %v3777, %v3775
        %v3838 = vpack.c.b16 %v3780, %v3778
        %v3839 = vpack.c.b16 %v3781, %v3779
        %v3840 = vpack.c.b16 %v3784, %v3782
        %v3841 = vpack.c.b16 %v3785, %v3783
        %v3842 = vpack.c.b16 %v3788, %v3786
        %v3843 = vpack.c.b16 %v3789, %v3787
        %v3844 = vpack.c.b16 %v3792, %v3790
        %v3845 = vpack.c.b16 %v3793, %v3791
        %v3846 = vpack.c.b16 %v3796, %v3794
        %v3847 = vpack.c.b16 %v3797, %v3795
        %v3848 = vpack.c.b16 %v3800, %v3798
        %v3849 = vpack.c.b16 %v3801, %v3799
        %v3850 = vpack.c.b16 %v3804, %v3802
        %v3851 = vpack.c.b16 %v3805, %v3803
        %v3852 = vpack.c.b16 %v3808, %v3806
        %v3853 = vpack.c.b16 %v3809, %v3807
        %v3854 = vpack.c.b16 %v3812, %v3810
        %v3855 = vpack.c.b16 %v3813, %v3811
        %v3856 = vpack.c.b16 %v3816, %v3814
        %v3857 = vpack.c.b16 %v3817, %v3815
        %v3858 = vpack.c.b16 %v3820, %v3818
        %v3859 = vpack.c.b16 %v3821, %v3819
        %v3860 = vpack.c.b16 %v3824, %v3822
        %v3861 = vpack.c.b16 %v3825, %v3823
        %v3862 = vpack.c.b16 %v3828, %v3826
        %v3863 = vpack.c.b16 %v3829, %v3827
        %v3864 = vpack.c.b16 %v3832, %v3830
        %v3865 = vpack.c.b16 %v3833, %v3831
        %3898 = vmatpush.bf16.msra.mxu0 %v3848
        %3899 = vmatpush.bf16.msra.mxu0 %v3846
        %3900 = vmatpush.bf16.msra.mxu0 %v3844
        %3901 = vmatpush.bf16.msra.mxu0 %v3842
        %3902 = vmatpush.bf16.msra.mxu0 %v3840
        %3903 = vmatpush.bf16.msra.mxu0 %v3838
        %3904 = vmatpush.bf16.msra.mxu0 %v3836
        %3905 = vmatpush.bf16.msra.mxu0 %v3834
        %3906 = vmatmul.bf16.gmra.mxu0 %v3673
        %v3907 = vpop.f32.mrf.mxu0
        %v3908 = vadd.f32 0.0, %v3907
        %v3909 = vpop.f32.mrf.mxu0
        %v3910 = vadd.f32 0.0, %v3909
        %3911 = vmatmul.bf16.gmra.mxu0 %v3675
        %v3912 = vpop.f32.mrf.mxu0
        %v3913 = vadd.f32 0.0, %v3912
        %v3914 = vpop.f32.mrf.mxu0
        %v3915 = vadd.f32 0.0, %v3914
        %3916 = vmatmul.bf16.gmra.mxu0 %v3677
        %v3917 = vpop.f32.mrf.mxu0
        %v3918 = vadd.f32 0.0, %v3917
        %v3919 = vpop.f32.mrf.mxu0
        %v3920 = vadd.f32 0.0, %v3919
        %3921 = vmatmul.bf16.gmra.mxu0 %v3679
        %v3922 = vpop.f32.mrf.mxu0
        %v3923 = vadd.f32 0.0, %v3922
        %v3924 = vpop.f32.mrf.mxu0
        %v3925 = vadd.f32 0.0, %v3924
        %3926 = vmatmul.bf16.gmra.mxu0 %v3681
        %v3927 = vpop.f32.mrf.mxu0
        %v3928 = vadd.f32 0.0, %v3927
        %v3929 = vpop.f32.mrf.mxu0
        %v3930 = vadd.f32 0.0, %v3929
        %3931 = vmatmul.bf16.gmra.mxu0 %v3683
        %v3932 = vpop.f32.mrf.mxu0
        %v3933 = vadd.f32 0.0, %v3932
        %v3934 = vpop.f32.mrf.mxu0
        %v3935 = vadd.f32 0.0, %v3934
        %3936 = vmatmul.bf16.gmra.mxu0 %v3685
        %v3937 = vpop.f32.mrf.mxu0
        %v3938 = vadd.f32 0.0, %v3937
        %v3939 = vpop.f32.mrf.mxu0
        %v3940 = vadd.f32 0.0, %v3939
        %3941 = vmatmul.bf16.gmra.mxu0 %v3687
        %v3942 = vpop.f32.mrf.mxu0
        %v3943 = vadd.f32 0.0, %v3942
        %v3944 = vpop.f32.mrf.mxu0
        %v3945 = vadd.f32 0.0, %v3944
        %3946 = vmatmul.bf16.gmra.mxu0 %v3689
        %v3947 = vpop.f32.mrf.mxu0
        %v3948 = vadd.f32 0.0, %v3947
        %v3949 = vpop.f32.mrf.mxu0
        %v3950 = vadd.f32 0.0, %v3949
        %3951 = vmatmul.bf16.gmra.mxu0 %v3691
        %v3952 = vpop.f32.mrf.mxu0
        %v3953 = vadd.f32 0.0, %v3952
        %v3954 = vpop.f32.mrf.mxu0
        %v3955 = vadd.f32 0.0, %v3954
        %3956 = vmatmul.bf16.gmra.mxu0 %v3693
        %v3957 = vpop.f32.mrf.mxu0
        %v3958 = vadd.f32 0.0, %v3957
        %v3959 = vpop.f32.mrf.mxu0
        %v3960 = vadd.f32 0.0, %v3959
        %3961 = vmatmul.bf16.gmra.mxu0 %v3695
        %v3962 = vpop.f32.mrf.mxu0
        %v3963 = vadd.f32 0.0, %v3962
        %v3964 = vpop.f32.mrf.mxu0
        %v3965 = vadd.f32 0.0, %v3964
        %3966 = vmatmul.bf16.gmra.mxu0 %v3697
        %v3967 = vpop.f32.mrf.mxu0
        %v3968 = vadd.f32 0.0, %v3967
        %v3969 = vpop.f32.mrf.mxu0
        %v3970 = vadd.f32 0.0, %v3969
        %3971 = vmatmul.bf16.gmra.mxu0 %v3699
        %v3972 = vpop.f32.mrf.mxu0
        %v3973 = vadd.f32 0.0, %v3972
        %v3974 = vpop.f32.mrf.mxu0
        %v3975 = vadd.f32 0.0, %v3974
        %3976 = vmatmul.bf16.gmra.mxu0 %v3701
        %v3977 = vpop.f32.mrf.mxu0
        %v3978 = vadd.f32 0.0, %v3977
        %v3979 = vpop.f32.mrf.mxu0
        %v3980 = vadd.f32 0.0, %v3979
        %3981 = vmatmul.bf16.gmra.mxu0 %v3703
        %v3982 = vpop.f32.mrf.mxu0
        %v3983 = vadd.f32 0.0, %v3982
        %v3984 = vpop.f32.mrf.mxu0
        %v3985 = vadd.f32 0.0, %v3984
        %3986 = vdwg.mxu0
        %3987 = vmatpush.bf16.msra.mxu0 %v3864
        %3988 = vmatpush.bf16.msra.mxu0 %v3862
        %3989 = vmatpush.bf16.msra.mxu0 %v3860
        %3990 = vmatpush.bf16.msra.mxu0 %v3858
        %3991 = vmatpush.bf16.msra.mxu0 %v3856
        %3992 = vmatpush.bf16.msra.mxu0 %v3854
        %3993 = vmatpush.bf16.msra.mxu0 %v3852
        %3994 = vmatpush.bf16.msra.mxu0 %v3850
        %3995 = vmatmul.bf16.gmra.mxu0 %v3674
        %v3996 = vpop.f32.mrf.mxu0
        %v3997 = vadd.f32 %v3908, %v3996
        %v3998 = vpop.f32.mrf.mxu0
        %v3999 = vadd.f32 %v3910, %v3998
        %4000 = vmatmul.bf16.gmra.mxu0 %v3676
        %v4001 = vpop.f32.mrf.mxu0
        %v4002 = vadd.f32 %v3913, %v4001
        %v4003 = vpop.f32.mrf.mxu0
        %v4004 = vadd.f32 %v3915, %v4003
        %4005 = vmatmul.bf16.gmra.mxu0 %v3678
        %v4006 = vpop.f32.mrf.mxu0
        %v4007 = vadd.f32 %v3918, %v4006
        %v4008 = vpop.f32.mrf.mxu0
        %v4009 = vadd.f32 %v3920, %v4008
        %4010 = vmatmul.bf16.gmra.mxu0 %v3680
        %v4011 = vpop.f32.mrf.mxu0
        %v4012 = vadd.f32 %v3923, %v4011
        %v4013 = vpop.f32.mrf.mxu0
        %v4014 = vadd.f32 %v3925, %v4013
        %4015 = vmatmul.bf16.gmra.mxu0 %v3682
        %v4016 = vpop.f32.mrf.mxu0
        %v4017 = vadd.f32 %v3928, %v4016
        %v4018 = vpop.f32.mrf.mxu0
        %v4019 = vadd.f32 %v3930, %v4018
        %4020 = vmatmul.bf16.gmra.mxu0 %v3684
        %v4021 = vpop.f32.mrf.mxu0
        %v4022 = vadd.f32 %v3933, %v4021
        %v4023 = vpop.f32.mrf.mxu0
        %v4024 = vadd.f32 %v3935, %v4023
        %4025 = vmatmul.bf16.gmra.mxu0 %v3686
        %v4026 = vpop.f32.mrf.mxu0
        %v4027 = vadd.f32 %v3938, %v4026
        %v4028 = vpop.f32.mrf.mxu0
        %v4029 = vadd.f32 %v3940, %v4028
        %4030 = vmatmul.bf16.gmra.mxu0 %v3688
        %v4031 = vpop.f32.mrf.mxu0
        %v4032 = vadd.f32 %v3943, %v4031
        %v4033 = vpop.f32.mrf.mxu0
        %v4034 = vadd.f32 %v3945, %v4033
        %4035 = vmatmul.bf16.gmra.mxu0 %v3690
        %v4036 = vpop.f32.mrf.mxu0
        %v4037 = vadd.f32 %v3948, %v4036
        %v4038 = vpop.f32.mrf.mxu0
        %v4039 = vadd.f32 %v3950, %v4038
        %4040 = vmatmul.bf16.gmra.mxu0 %v3692
        %v4041 = vpop.f32.mrf.mxu0
        %v4042 = vadd.f32 %v3953, %v4041
        %v4043 = vpop.f32.mrf.mxu0
        %v4044 = vadd.f32 %v3955, %v4043
        %4045 = vmatmul.bf16.gmra.mxu0 %v3694
        %v4046 = vpop.f32.mrf.mxu0
        %v4047 = vadd.f32 %v3958, %v4046
        %v4048 = vpop.f32.mrf.mxu0
        %v4049 = vadd.f32 %v3960, %v4048
        %4050 = vmatmul.bf16.gmra.mxu0 %v3696
        %v4051 = vpop.f32.mrf.mxu0
        %v4052 = vadd.f32 %v3963, %v4051
        %v4053 = vpop.f32.mrf.mxu0
        %v4054 = vadd.f32 %v3965, %v4053
        %4055 = vmatmul.bf16.gmra.mxu0 %v3698
        %v4056 = vpop.f32.mrf.mxu0
        %v4057 = vadd.f32 %v3968, %v4056
        %v4058 = vpop.f32.mrf.mxu0
        %v4059 = vadd.f32 %v3970, %v4058
        %4060 = vmatmul.bf16.gmra.mxu0 %v3700
        %v4061 = vpop.f32.mrf.mxu0
        %v4062 = vadd.f32 %v3973, %v4061
        %v4063 = vpop.f32.mrf.mxu0
        %v4064 = vadd.f32 %v3975, %v4063
        %4065 = vmatmul.bf16.gmra.mxu0 %v3702
        %v4066 = vpop.f32.mrf.mxu0
        %v4067 = vadd.f32 %v3978, %v4066
        %v4068 = vpop.f32.mrf.mxu0
        %v4069 = vadd.f32 %v3980, %v4068
        %4070 = vmatmul.bf16.gmra.mxu0 %v3704
        %v4071 = vpop.f32.mrf.mxu0
        %v4072 = vadd.f32 %v3983, %v4071
        %v4073 = vpop.f32.mrf.mxu0
        %v4074 = vadd.f32 %v3985, %v4073
        %4075 = vdwg.mxu0
        %4076 = vmatpush.bf16.msra.mxu0 %v3849
        %4077 = vmatpush.bf16.msra.mxu0 %v3847
        %4078 = vmatpush.bf16.msra.mxu0 %v3845
        %4079 = vmatpush.bf16.msra.mxu0 %v3843
        %4080 = vmatpush.bf16.msra.mxu0 %v3841
        %4081 = vmatpush.bf16.msra.mxu0 %v3839
        %4082 = vmatpush.bf16.msra.mxu0 %v3837
        %4083 = vmatpush.bf16.msra.mxu0 %v3835
        %4084 = vmatmul.bf16.gmra.mxu0 %v3673
        %v4085 = vpop.f32.mrf.mxu0
        %v4086 = vadd.f32 0.0, %v4085
        %v4087 = vpop.f32.mrf.mxu0
        %v4088 = vadd.f32 0.0, %v4087
        %4089 = vmatmul.bf16.gmra.mxu0 %v3675
        %v4090 = vpop.f32.mrf.mxu0
        %v4091 = vadd.f32 0.0, %v4090
        %v4092 = vpop.f32.mrf.mxu0
        %v4093 = vadd.f32 0.0, %v4092
        %4094 = vmatmul.bf16.gmra.mxu0 %v3677
        %v4095 = vpop.f32.mrf.mxu0
        %v4096 = vadd.f32 0.0, %v4095
        %v4097 = vpop.f32.mrf.mxu0
        %v4098 = vadd.f32 0.0, %v4097
        %4099 = vmatmul.bf16.gmra.mxu0 %v3679
        %v4100 = vpop.f32.mrf.mxu0
        %v4101 = vadd.f32 0.0, %v4100
        %v4102 = vpop.f32.mrf.mxu0
        %v4103 = vadd.f32 0.0, %v4102
        %4104 = vmatmul.bf16.gmra.mxu0 %v3681
        %v4105 = vpop.f32.mrf.mxu0
        %v4106 = vadd.f32 0.0, %v4105
        %v4107 = vpop.f32.mrf.mxu0
        %v4108 = vadd.f32 0.0, %v4107
        %4109 = vmatmul.bf16.gmra.mxu0 %v3683
        %v4110 = vpop.f32.mrf.mxu0
        %v4111 = vadd.f32 0.0, %v4110
        %v4112 = vpop.f32.mrf.mxu0
        %v4113 = vadd.f32 0.0, %v4112
        %4114 = vmatmul.bf16.gmra.mxu0 %v3685
        %v4115 = vpop.f32.mrf.mxu0
        %v4116 = vadd.f32 0.0, %v4115
        %v4117 = vpop.f32.mrf.mxu0
        %v4118 = vadd.f32 0.0, %v4117
        %4119 = vmatmul.bf16.gmra.mxu0 %v3687
        %v4120 = vpop.f32.mrf.mxu0
        %v4121 = vadd.f32 0.0, %v4120
        %v4122 = vpop.f32.mrf.mxu0
        %v4123 = vadd.f32 0.0, %v4122
        %4124 = vmatmul.bf16.gmra.mxu0 %v3689
        %v4125 = vpop.f32.mrf.mxu0
        %v4126 = vadd.f32 0.0, %v4125
        %v4127 = vpop.f32.mrf.mxu0
        %v4128 = vadd.f32 0.0, %v4127
        %4129 = vmatmul.bf16.gmra.mxu0 %v3691
        %v4130 = vpop.f32.mrf.mxu0
        %v4131 = vadd.f32 0.0, %v4130
        %v4132 = vpop.f32.mrf.mxu0
        %v4133 = vadd.f32 0.0, %v4132
        %4134 = vmatmul.bf16.gmra.mxu0 %v3693
        %v4135 = vpop.f32.mrf.mxu0
        %v4136 = vadd.f32 0.0, %v4135
        %v4137 = vpop.f32.mrf.mxu0
        %v4138 = vadd.f32 0.0, %v4137
        %4139 = vmatmul.bf16.gmra.mxu0 %v3695
        %v4140 = vpop.f32.mrf.mxu0
        %v4141 = vadd.f32 0.0, %v4140
        %v4142 = vpop.f32.mrf.mxu0
        %v4143 = vadd.f32 0.0, %v4142
        %4144 = vmatmul.bf16.gmra.mxu0 %v3697
        %v4145 = vpop.f32.mrf.mxu0
        %v4146 = vadd.f32 0.0, %v4145
        %v4147 = vpop.f32.mrf.mxu0
        %v4148 = vadd.f32 0.0, %v4147
        %4149 = vmatmul.bf16.gmra.mxu0 %v3699
        %v4150 = vpop.f32.mrf.mxu0
        %v4151 = vadd.f32 0.0, %v4150
        %v4152 = vpop.f32.mrf.mxu0
        %v4153 = vadd.f32 0.0, %v4152
        %4154 = vmatmul.bf16.gmra.mxu0 %v3701
        %v4155 = vpop.f32.mrf.mxu0
        %v4156 = vadd.f32 0.0, %v4155
        %v4157 = vpop.f32.mrf.mxu0
        %v4158 = vadd.f32 0.0, %v4157
        %4159 = vmatmul.bf16.gmra.mxu0 %v3703
        %v4160 = vpop.f32.mrf.mxu0
        %v4161 = vadd.f32 0.0, %v4160
        %v4162 = vpop.f32.mrf.mxu0
        %v4163 = vadd.f32 0.0, %v4162
        %4164 = vdwg.mxu0
        %4165 = vmatpush.bf16.msra.mxu0 %v3865
        %4166 = vmatpush.bf16.msra.mxu0 %v3863
        %4167 = vmatpush.bf16.msra.mxu0 %v3861
        %4168 = vmatpush.bf16.msra.mxu0 %v3859
        %4169 = vmatpush.bf16.msra.mxu0 %v3857
        %4170 = vmatpush.bf16.msra.mxu0 %v3855
        %4171 = vmatpush.bf16.msra.mxu0 %v3853
        %4172 = vmatpush.bf16.msra.mxu0 %v3851
        %4173 = vmatmul.bf16.gmra.mxu0 %v3674
        %v4174 = vpop.f32.mrf.mxu0
        %v4175 = vadd.f32 %v4086, %v4174
        %v4176 = vpop.f32.mrf.mxu0
        %v4177 = vadd.f32 %v4088, %v4176
        %4178 = vmatmul.bf16.gmra.mxu0 %v3676
        %v4179 = vpop.f32.mrf.mxu0
        %v4180 = vadd.f32 %v4091, %v4179
        %v4181 = vpop.f32.mrf.mxu0
        %v4182 = vadd.f32 %v4093, %v4181
        %4183 = vmatmul.bf16.gmra.mxu0 %v3678
        %v4184 = vpop.f32.mrf.mxu0
        %v4185 = vadd.f32 %v4096, %v4184
        %v4186 = vpop.f32.mrf.mxu0
        %v4187 = vadd.f32 %v4098, %v4186
        %4188 = vmatmul.bf16.gmra.mxu0 %v3680
        %v4189 = vpop.f32.mrf.mxu0
        %v4190 = vadd.f32 %v4101, %v4189
        %v4191 = vpop.f32.mrf.mxu0
        %v4192 = vadd.f32 %v4103, %v4191
        %4193 = vmatmul.bf16.gmra.mxu0 %v3682
        %v4194 = vpop.f32.mrf.mxu0
        %v4195 = vadd.f32 %v4106, %v4194
        %v4196 = vpop.f32.mrf.mxu0
        %v4197 = vadd.f32 %v4108, %v4196
        %4198 = vmatmul.bf16.gmra.mxu0 %v3684
        %v4199 = vpop.f32.mrf.mxu0
        %v4200 = vadd.f32 %v4111, %v4199
        %v4201 = vpop.f32.mrf.mxu0
        %v4202 = vadd.f32 %v4113, %v4201
        %4203 = vmatmul.bf16.gmra.mxu0 %v3686
        %v4204 = vpop.f32.mrf.mxu0
        %v4205 = vadd.f32 %v4116, %v4204
        %v4206 = vpop.f32.mrf.mxu0
        %v4207 = vadd.f32 %v4118, %v4206
        %4208 = vmatmul.bf16.gmra.mxu0 %v3688
        %v4209 = vpop.f32.mrf.mxu0
        %v4210 = vadd.f32 %v4121, %v4209
        %v4211 = vpop.f32.mrf.mxu0
        %v4212 = vadd.f32 %v4123, %v4211
        %4213 = vmatmul.bf16.gmra.mxu0 %v3690
        %v4214 = vpop.f32.mrf.mxu0
        %v4215 = vadd.f32 %v4126, %v4214
        %v4216 = vpop.f32.mrf.mxu0
        %v4217 = vadd.f32 %v4128, %v4216
        %4218 = vmatmul.bf16.gmra.mxu0 %v3692
        %v4219 = vpop.f32.mrf.mxu0
        %v4220 = vadd.f32 %v4131, %v4219
        %v4221 = vpop.f32.mrf.mxu0
        %v4222 = vadd.f32 %v4133, %v4221
        %4223 = vmatmul.bf16.gmra.mxu0 %v3694
        %v4224 = vpop.f32.mrf.mxu0
        %v4225 = vadd.f32 %v4136, %v4224
        %v4226 = vpop.f32.mrf.mxu0
        %v4227 = vadd.f32 %v4138, %v4226
        %4228 = vmatmul.bf16.gmra.mxu0 %v3696
        %v4229 = vpop.f32.mrf.mxu0
        %v4230 = vadd.f32 %v4141, %v4229
        %v4231 = vpop.f32.mrf.mxu0
        %v4232 = vadd.f32 %v4143, %v4231
        %4233 = vmatmul.bf16.gmra.mxu0 %v3698
        %v4234 = vpop.f32.mrf.mxu0
        %v4235 = vadd.f32 %v4146, %v4234
        %v4236 = vpop.f32.mrf.mxu0
        %v4237 = vadd.f32 %v4148, %v4236
        %4238 = vmatmul.bf16.gmra.mxu0 %v3700
        %v4239 = vpop.f32.mrf.mxu0
        %v4240 = vadd.f32 %v4151, %v4239
        %v4241 = vpop.f32.mrf.mxu0
        %v4242 = vadd.f32 %v4153, %v4241
        %4243 = vmatmul.bf16.gmra.mxu0 %v3702
        %v4244 = vpop.f32.mrf.mxu0
        %v4245 = vadd.f32 %v4156, %v4244
        %v4246 = vpop.f32.mrf.mxu0
        %v4247 = vadd.f32 %v4158, %v4246
        %4248 = vmatmul.bf16.gmra.mxu0 %v3704
        %v4249 = vpop.f32.mrf.mxu0
        %v4250 = vadd.f32 %v4161, %v4249
        %v4251 = vpop.f32.mrf.mxu0
        %v4252 = vadd.f32 %v4163, %v4251
        %4253 = vdwg.mxu0
        %v4254 = vpack.c.bf16 %v4175, %v3997
        %v4255 = vpack.c.bf16 %v4177, %v3999
        %v4256 = vpack.c.bf16 %v4180, %v4002
        %v4257 = vpack.c.bf16 %v4182, %v4004
        %v4258 = vpack.c.bf16 %v4185, %v4007
        %v4259 = vpack.c.bf16 %v4187, %v4009
        %v4260 = vpack.c.bf16 %v4190, %v4012
        %v4261 = vpack.c.bf16 %v4192, %v4014
        %v4262 = vpack.c.bf16 %v4195, %v4017
        %v4263 = vpack.c.bf16 %v4197, %v4019
        %v4264 = vpack.c.bf16 %v4200, %v4022
        %v4265 = vpack.c.bf16 %v4202, %v4024
        %v4266 = vpack.c.bf16 %v4205, %v4027
        %v4267 = vpack.c.bf16 %v4207, %v4029
        %v4268 = vpack.c.bf16 %v4210, %v4032
        %v4269 = vpack.c.bf16 %v4212, %v4034
        %v4270 = vpack.c.bf16 %v4215, %v4037
        %v4271 = vpack.c.bf16 %v4217, %v4039
        %v4272 = vpack.c.bf16 %v4220, %v4042
        %v4273 = vpack.c.bf16 %v4222, %v4044
        %v4274 = vpack.c.bf16 %v4225, %v4047
        %v4275 = vpack.c.bf16 %v4227, %v4049
        %v4276 = vpack.c.bf16 %v4230, %v4052
        %v4277 = vpack.c.bf16 %v4232, %v4054
        %v4278 = vpack.c.bf16 %v4235, %v4057
        %v4279 = vpack.c.bf16 %v4237, %v4059
        %v4280 = vpack.c.bf16 %v4240, %v4062
        %v4281 = vpack.c.bf16 %v4242, %v4064
        %v4282 = vpack.c.bf16 %v4245, %v4067
        %v4283 = vpack.c.bf16 %v4247, %v4069
        %v4284 = vpack.c.bf16 %v4250, %v4072
        %v4285 = vpack.c.bf16 %v4252, %v4074
        %s4286 = scalar_lea.vmem %s4, 6
        %v4287 = vld [vmem:[%s4286] sm:$0x3]
        %4289 = vst [vmem:[#allocation1] ss:$9 sm:$0xff] %v4287
        %v4290 = vld [vmem:[#allocation1] sm:$0xff]
        %v4291 = vld [vmem:[#allocation1 + $0x9] sm:$0xff]
        %v4292 = vpack.i.b16 %v4290, %v4290
        %v4294 = vperm.slane %v4292, 0
        %v4295 = vpack.i.b16 %v4291, %v4291
        %v4297 = vperm.slane %v4295, 0
        %v4298 = vunpack.c.l.bf16 %v4254
        %v4299 = vunpack.c.h.bf16 %v4254
        %v4300 = vunpack.c.l.bf16 %v4255
        %v4301 = vunpack.c.h.bf16 %v4255
        %v4302 = vunpack.c.l.bf16 %v4256
        %v4303 = vunpack.c.h.bf16 %v4256
        %v4304 = vunpack.c.l.bf16 %v4257
        %v4305 = vunpack.c.h.bf16 %v4257
        %v4306 = vunpack.c.l.bf16 %v4258
        %v4307 = vunpack.c.h.bf16 %v4258
        %v4308 = vunpack.c.l.bf16 %v4259
        %v4309 = vunpack.c.h.bf16 %v4259
        %v4310 = vunpack.c.l.bf16 %v4260
        %v4311 = vunpack.c.h.bf16 %v4260
        %v4312 = vunpack.c.l.bf16 %v4261
        %v4313 = vunpack.c.h.bf16 %v4261
        %v4314 = vunpack.c.l.bf16 %v4262
        %v4315 = vunpack.c.h.bf16 %v4262
        %v4316 = vunpack.c.l.bf16 %v4263
        %v4317 = vunpack.c.h.bf16 %v4263
        %v4318 = vunpack.c.l.bf16 %v4264
        %v4319 = vunpack.c.h.bf16 %v4264
        %v4320 = vunpack.c.l.bf16 %v4265
        %v4321 = vunpack.c.h.bf16 %v4265
        %v4322 = vunpack.c.l.bf16 %v4266
        %v4323 = vunpack.c.h.bf16 %v4266
        %v4324 = vunpack.c.l.bf16 %v4267
        %v4325 = vunpack.c.h.bf16 %v4267
        %v4326 = vunpack.c.l.bf16 %v4268
        %v4327 = vunpack.c.h.bf16 %v4268
        %v4328 = vunpack.c.l.bf16 %v4269
        %v4329 = vunpack.c.h.bf16 %v4269
        %v4330 = vunpack.c.l.bf16 %v4270
        %v4331 = vunpack.c.h.bf16 %v4270
        %v4332 = vunpack.c.l.bf16 %v4271
        %v4333 = vunpack.c.h.bf16 %v4271
        %v4334 = vunpack.c.l.bf16 %v4272
        %v4335 = vunpack.c.h.bf16 %v4272
        %v4336 = vunpack.c.l.bf16 %v4273
        %v4337 = vunpack.c.h.bf16 %v4273
        %v4338 = vunpack.c.l.bf16 %v4274
        %v4339 = vunpack.c.h.bf16 %v4274
        %v4340 = vunpack.c.l.bf16 %v4275
        %v4341 = vunpack.c.h.bf16 %v4275
        %v4342 = vunpack.c.l.bf16 %v4276
        %v4343 = vunpack.c.h.bf16 %v4276
        %v4344 = vunpack.c.l.bf16 %v4277
        %v4345 = vunpack.c.h.bf16 %v4277
        %v4346 = vunpack.c.l.bf16 %v4278
        %v4347 = vunpack.c.h.bf16 %v4278
        %v4348 = vunpack.c.l.bf16 %v4279
        %v4349 = vunpack.c.h.bf16 %v4279
        %v4350 = vunpack.c.l.bf16 %v4280
        %v4351 = vunpack.c.h.bf16 %v4280
        %v4352 = vunpack.c.l.bf16 %v4281
        %v4353 = vunpack.c.h.bf16 %v4281
        %v4354 = vunpack.c.l.bf16 %v4282
        %v4355 = vunpack.c.h.bf16 %v4282
        %v4356 = vunpack.c.l.bf16 %v4283
        %v4357 = vunpack.c.h.bf16 %v4283
        %v4358 = vunpack.c.l.bf16 %v4284
        %v4359 = vunpack.c.h.bf16 %v4284
        %v4360 = vunpack.c.l.bf16 %v4285
        %v4361 = vunpack.c.h.bf16 %v4285
        %v4362 = vunpack.c.l.bf16 %v4294
        %v4363 = vunpack.c.l.bf16 %v4297
        %v4364 = vadd.f32 %v4298, %v4362
        %v4365 = vadd.f32 %v4299, %v4363
        %v4366 = vadd.f32 %v4300, %v4362
        %v4367 = vadd.f32 %v4301, %v4363
        %v4368 = vadd.f32 %v4302, %v4362
        %v4369 = vadd.f32 %v4303, %v4363
        %v4370 = vadd.f32 %v4304, %v4362
        %v4371 = vadd.f32 %v4305, %v4363
        %v4372 = vadd.f32 %v4306, %v4362
        %v4373 = vadd.f32 %v4307, %v4363
        %v4374 = vadd.f32 %v4308, %v4362
        %v4375 = vadd.f32 %v4309, %v4363
        %v4376 = vadd.f32 %v4310, %v4362
        %v4377 = vadd.f32 %v4311, %v4363
        %v4378 = vadd.f32 %v4312, %v4362
        %v4379 = vadd.f32 %v4313, %v4363
        %v4380 = vadd.f32 %v4314, %v4362
        %v4381 = vadd.f32 %v4315, %v4363
        %v4382 = vadd.f32 %v4316, %v4362
        %v4383 = vadd.f32 %v4317, %v4363
        %v4384 = vadd.f32 %v4318, %v4362
        %v4385 = vadd.f32 %v4319, %v4363
        %v4386 = vadd.f32 %v4320, %v4362
        %v4387 = vadd.f32 %v4321, %v4363
        %v4388 = vadd.f32 %v4322, %v4362
        %v4389 = vadd.f32 %v4323, %v4363
        %v4390 = vadd.f32 %v4324, %v4362
        %v4391 = vadd.f32 %v4325, %v4363
        %v4392 = vadd.f32 %v4326, %v4362
        %v4393 = vadd.f32 %v4327, %v4363
        %v4394 = vadd.f32 %v4328, %v4362
        %v4395 = vadd.f32 %v4329, %v4363
        %v4396 = vadd.f32 %v4330, %v4362
        %v4397 = vadd.f32 %v4331, %v4363
        %v4398 = vadd.f32 %v4332, %v4362
        %v4399 = vadd.f32 %v4333, %v4363
        %v4400 = vadd.f32 %v4334, %v4362
        %v4401 = vadd.f32 %v4335, %v4363
        %v4402 = vadd.f32 %v4336, %v4362
        %v4403 = vadd.f32 %v4337, %v4363
        %v4404 = vadd.f32 %v4338, %v4362
        %v4405 = vadd.f32 %v4339, %v4363
        %v4406 = vadd.f32 %v4340, %v4362
        %v4407 = vadd.f32 %v4341, %v4363
        %v4408 = vadd.f32 %v4342, %v4362
        %v4409 = vadd.f32 %v4343, %v4363
        %v4410 = vadd.f32 %v4344, %v4362
        %v4411 = vadd.f32 %v4345, %v4363
        %v4412 = vadd.f32 %v4346, %v4362
        %v4413 = vadd.f32 %v4347, %v4363
        %v4414 = vadd.f32 %v4348, %v4362
        %v4415 = vadd.f32 %v4349, %v4363
        %v4416 = vadd.f32 %v4350, %v4362
        %v4417 = vadd.f32 %v4351, %v4363
        %v4418 = vadd.f32 %v4352, %v4362
        %v4419 = vadd.f32 %v4353, %v4363
        %v4420 = vadd.f32 %v4354, %v4362
        %v4421 = vadd.f32 %v4355, %v4363
        %v4422 = vadd.f32 %v4356, %v4362
        %v4423 = vadd.f32 %v4357, %v4363
        %v4424 = vadd.f32 %v4358, %v4362
        %v4425 = vadd.f32 %v4359, %v4363
        %v4426 = vadd.f32 %v4360, %v4362
        %v4427 = vadd.f32 %v4361, %v4363
        %v4428 = vpack.c.bf16 %v4365, %v4364
        %v4429 = vpack.c.bf16 %v4367, %v4366
        %v4430 = vpack.c.bf16 %v4369, %v4368
        %v4431 = vpack.c.bf16 %v4371, %v4370
        %v4432 = vpack.c.bf16 %v4373, %v4372
        %v4433 = vpack.c.bf16 %v4375, %v4374
        %v4434 = vpack.c.bf16 %v4377, %v4376
        %v4435 = vpack.c.bf16 %v4379, %v4378
        %v4436 = vpack.c.bf16 %v4381, %v4380
        %v4437 = vpack.c.bf16 %v4383, %v4382
        %v4438 = vpack.c.bf16 %v4385, %v4384
        %v4439 = vpack.c.bf16 %v4387, %v4386
        %v4440 = vpack.c.bf16 %v4389, %v4388
        %v4441 = vpack.c.bf16 %v4391, %v4390
        %v4442 = vpack.c.bf16 %v4393, %v4392
        %v4443 = vpack.c.bf16 %v4395, %v4394
        %v4444 = vpack.c.bf16 %v4397, %v4396
        %v4445 = vpack.c.bf16 %v4399, %v4398
        %v4446 = vpack.c.bf16 %v4401, %v4400
        %v4447 = vpack.c.bf16 %v4403, %v4402
        %v4448 = vpack.c.bf16 %v4405, %v4404
        %v4449 = vpack.c.bf16 %v4407, %v4406
        %v4450 = vpack.c.bf16 %v4409, %v4408
        %v4451 = vpack.c.bf16 %v4411, %v4410
        %v4452 = vpack.c.bf16 %v4413, %v4412
        %v4453 = vpack.c.bf16 %v4415, %v4414
        %v4454 = vpack.c.bf16 %v4417, %v4416
        %v4455 = vpack.c.bf16 %v4419, %v4418
        %v4456 = vpack.c.bf16 %v4421, %v4420
        %v4457 = vpack.c.bf16 %v4423, %v4422
        %v4458 = vpack.c.bf16 %v4425, %v4424
        %v4459 = vpack.c.bf16 %v4427, %v4426
        %v4460 = vunpack.c.l.bf16 %v4428
        %v4461 = vunpack.c.h.bf16 %v4428
        %v4462 = vunpack.c.l.bf16 %v4429
        %v4463 = vunpack.c.h.bf16 %v4429
        %v4464 = vunpack.c.l.bf16 %v4430
        %v4465 = vunpack.c.h.bf16 %v4430
        %v4466 = vunpack.c.l.bf16 %v4431
        %v4467 = vunpack.c.h.bf16 %v4431
        %v4468 = vunpack.c.l.bf16 %v4432
        %v4469 = vunpack.c.h.bf16 %v4432
        %v4470 = vunpack.c.l.bf16 %v4433
        %v4471 = vunpack.c.h.bf16 %v4433
        %v4472 = vunpack.c.l.bf16 %v4434
        %v4473 = vunpack.c.h.bf16 %v4434
        %v4474 = vunpack.c.l.bf16 %v4435
        %v4475 = vunpack.c.h.bf16 %v4435
        %v4476 = vunpack.c.l.bf16 %v4436
        %v4477 = vunpack.c.h.bf16 %v4436
        %v4478 = vunpack.c.l.bf16 %v4437
        %v4479 = vunpack.c.h.bf16 %v4437
        %v4480 = vunpack.c.l.bf16 %v4438
        %v4481 = vunpack.c.h.bf16 %v4438
        %v4482 = vunpack.c.l.bf16 %v4439
        %v4483 = vunpack.c.h.bf16 %v4439
        %v4484 = vunpack.c.l.bf16 %v4440
        %v4485 = vunpack.c.h.bf16 %v4440
        %v4486 = vunpack.c.l.bf16 %v4441
        %v4487 = vunpack.c.h.bf16 %v4441
        %v4488 = vunpack.c.l.bf16 %v4442
        %v4489 = vunpack.c.h.bf16 %v4442
        %v4490 = vunpack.c.l.bf16 %v4443
        %v4491 = vunpack.c.h.bf16 %v4443
        %v4492 = vunpack.c.l.bf16 %v4444
        %v4493 = vunpack.c.h.bf16 %v4444
        %v4494 = vunpack.c.l.bf16 %v4445
        %v4495 = vunpack.c.h.bf16 %v4445
        %v4496 = vunpack.c.l.bf16 %v4446
        %v4497 = vunpack.c.h.bf16 %v4446
        %v4498 = vunpack.c.l.bf16 %v4447
        %v4499 = vunpack.c.h.bf16 %v4447
        %v4500 = vunpack.c.l.bf16 %v4448
        %v4501 = vunpack.c.h.bf16 %v4448
        %v4502 = vunpack.c.l.bf16 %v4449
        %v4503 = vunpack.c.h.bf16 %v4449
        %v4504 = vunpack.c.l.bf16 %v4450
        %v4505 = vunpack.c.h.bf16 %v4450
        %v4506 = vunpack.c.l.bf16 %v4451
        %v4507 = vunpack.c.h.bf16 %v4451
        %v4508 = vunpack.c.l.bf16 %v4452
        %v4509 = vunpack.c.h.bf16 %v4452
        %v4510 = vunpack.c.l.bf16 %v4453
        %v4511 = vunpack.c.h.bf16 %v4453
        %v4512 = vunpack.c.l.bf16 %v4454
        %v4513 = vunpack.c.h.bf16 %v4454
        %v4514 = vunpack.c.l.bf16 %v4455
        %v4515 = vunpack.c.h.bf16 %v4455
        %v4516 = vunpack.c.l.bf16 %v4456
        %v4517 = vunpack.c.h.bf16 %v4456
        %v4518 = vunpack.c.l.bf16 %v4457
        %v4519 = vunpack.c.h.bf16 %v4457
        %v4520 = vunpack.c.l.bf16 %v4458
        %v4521 = vunpack.c.h.bf16 %v4458
        %v4522 = vunpack.c.l.bf16 %v4459
        %v4523 = vunpack.c.h.bf16 %v4459
        %v4524 = vmax.f32 %v4460, 0.0
        %v4525 = vmax.f32 %v4461, 0.0
        %v4526 = vmax.f32 %v4462, 0.0
        %v4527 = vmax.f32 %v4463, 0.0
        %v4528 = vmax.f32 %v4464, 0.0
        %v4529 = vmax.f32 %v4465, 0.0
        %v4530 = vmax.f32 %v4466, 0.0
        %v4531 = vmax.f32 %v4467, 0.0
        %v4532 = vmax.f32 %v4468, 0.0
        %v4533 = vmax.f32 %v4469, 0.0
        %v4534 = vmax.f32 %v4470, 0.0
        %v4535 = vmax.f32 %v4471, 0.0
        %v4536 = vmax.f32 %v4472, 0.0
        %v4537 = vmax.f32 %v4473, 0.0
        %v4538 = vmax.f32 %v4474, 0.0
        %v4539 = vmax.f32 %v4475, 0.0
        %v4540 = vmax.f32 %v4476, 0.0
        %v4541 = vmax.f32 %v4477, 0.0
        %v4542 = vmax.f32 %v4478, 0.0
        %v4543 = vmax.f32 %v4479, 0.0
        %v4544 = vmax.f32 %v4480, 0.0
        %v4545 = vmax.f32 %v4481, 0.0
        %v4546 = vmax.f32 %v4482, 0.0
        %v4547 = vmax.f32 %v4483, 0.0
        %v4548 = vmax.f32 %v4484, 0.0
        %v4549 = vmax.f32 %v4485, 0.0
        %v4550 = vmax.f32 %v4486, 0.0
        %v4551 = vmax.f32 %v4487, 0.0
        %v4552 = vmax.f32 %v4488, 0.0
        %v4553 = vmax.f32 %v4489, 0.0
        %v4554 = vmax.f32 %v4490, 0.0
        %v4555 = vmax.f32 %v4491, 0.0
        %v4556 = vmax.f32 %v4492, 0.0
        %v4557 = vmax.f32 %v4493, 0.0
        %v4558 = vmax.f32 %v4494, 0.0
        %v4559 = vmax.f32 %v4495, 0.0
        %v4560 = vmax.f32 %v4496, 0.0
        %v4561 = vmax.f32 %v4497, 0.0
        %v4562 = vmax.f32 %v4498, 0.0
        %v4563 = vmax.f32 %v4499, 0.0
        %v4564 = vmax.f32 %v4500, 0.0
        %v4565 = vmax.f32 %v4501, 0.0
        %v4566 = vmax.f32 %v4502, 0.0
        %v4567 = vmax.f32 %v4503, 0.0
        %v4568 = vmax.f32 %v4504, 0.0
        %v4569 = vmax.f32 %v4505, 0.0
        %v4570 = vmax.f32 %v4506, 0.0
        %v4571 = vmax.f32 %v4507, 0.0
        %v4572 = vmax.f32 %v4508, 0.0
        %v4573 = vmax.f32 %v4509, 0.0
        %v4574 = vmax.f32 %v4510, 0.0
        %v4575 = vmax.f32 %v4511, 0.0
        %v4576 = vmax.f32 %v4512, 0.0
        %v4577 = vmax.f32 %v4513, 0.0
        %v4578 = vmax.f32 %v4514, 0.0
        %v4579 = vmax.f32 %v4515, 0.0
        %v4580 = vmax.f32 %v4516, 0.0
        %v4581 = vmax.f32 %v4517, 0.0
        %v4582 = vmax.f32 %v4518, 0.0
        %v4583 = vmax.f32 %v4519, 0.0
        %v4584 = vmax.f32 %v4520, 0.0
        %v4585 = vmax.f32 %v4521, 0.0
        %v4586 = vmax.f32 %v4522, 0.0
        %v4587 = vmax.f32 %v4523, 0.0
        %v4588 = vpack.c.bf16 %v4526, %v4524
        %v4589 = vpack.c.bf16 %v4527, %v4525
        %v4590 = vpack.c.bf16 %v4530, %v4528
        %v4591 = vpack.c.bf16 %v4531, %v4529
        %v4592 = vpack.c.bf16 %v4534, %v4532
        %v4593 = vpack.c.bf16 %v4535, %v4533
        %v4594 = vpack.c.bf16 %v4538, %v4536
        %v4595 = vpack.c.bf16 %v4539, %v4537
        %v4596 = vpack.c.bf16 %v4542, %v4540
        %v4597 = vpack.c.bf16 %v4543, %v4541
        %v4598 = vpack.c.bf16 %v4546, %v4544
        %v4599 = vpack.c.bf16 %v4547, %v4545
        %v4600 = vpack.c.bf16 %v4550, %v4548
        %v4601 = vpack.c.bf16 %v4551, %v4549
        %v4602 = vpack.c.bf16 %v4554, %v4552
        %v4603 = vpack.c.bf16 %v4555, %v4553
        %v4604 = vpack.c.bf16 %v4558, %v4556
        %v4605 = vpack.c.bf16 %v4559, %v4557
        %v4606 = vpack.c.bf16 %v4562, %v4560
        %v4607 = vpack.c.bf16 %v4563, %v4561
        %v4608 = vpack.c.bf16 %v4566, %v4564
        %v4609 = vpack.c.bf16 %v4567, %v4565
        %v4610 = vpack.c.bf16 %v4570, %v4568
        %v4611 = vpack.c.bf16 %v4571, %v4569
        %v4612 = vpack.c.bf16 %v4574, %v4572
        %v4613 = vpack.c.bf16 %v4575, %v4573
        %v4614 = vpack.c.bf16 %v4578, %v4576
        %v4615 = vpack.c.bf16 %v4579, %v4577
        %v4616 = vpack.c.bf16 %v4582, %v4580
        %v4617 = vpack.c.bf16 %v4583, %v4581
        %v4618 = vpack.c.bf16 %v4586, %v4584
        %v4619 = vpack.c.bf16 %v4587, %v4585
        %s4620 = scalar_lea.vmem [#allocation2], 1024
        %v4621 = vld [vmem:[%s4620] sm:$0xff]
        %v4622 = vld [vmem:[%s4620 + $0x8] sm:$0xff]
        %v4623 = vld [vmem:[%s4620 + $0x10] sm:$0xff]
        %v4624 = vld [vmem:[%s4620 + $0x18] sm:$0xff]
        %v4625 = vld [vmem:[%s4620 + $0x20] sm:$0xff]
        %v4626 = vld [vmem:[%s4620 + $0x28] sm:$0xff]
        %v4627 = vld [vmem:[%s4620 + $0x30] sm:$0xff]
        %v4628 = vld [vmem:[%s4620 + $0x38] sm:$0xff]
        %v4629 = vld [vmem:[%s4620 + $0x40] sm:$0xff]
        %v4630 = vld [vmem:[%s4620 + $0x48] sm:$0xff]
        %v4631 = vld [vmem:[%s4620 + $0x50] sm:$0xff]
        %v4632 = vld [vmem:[%s4620 + $0x58] sm:$0xff]
        %v4633 = vld [vmem:[%s4620 + $0x60] sm:$0xff]
        %v4634 = vld [vmem:[%s4620 + $0x68] sm:$0xff]
        %v4635 = vld [vmem:[%s4620 + $0x70] sm:$0xff]
        %v4636 = vld [vmem:[%s4620 + $0x78] sm:$0xff]
        %v4637 = vld [vmem:[%s4620 + $0x80] sm:$0xff]
        %v4638 = vld [vmem:[%s4620 + $0x88] sm:$0xff]
        %v4639 = vld [vmem:[%s4620 + $0x90] sm:$0xff]
        %v4640 = vld [vmem:[%s4620 + $0x98] sm:$0xff]
        %v4641 = vld [vmem:[%s4620 + $0xa0] sm:$0xff]
        %v4642 = vld [vmem:[%s4620 + $0xa8] sm:$0xff]
        %v4643 = vld [vmem:[%s4620 + $0xb0] sm:$0xff]
        %v4644 = vld [vmem:[%s4620 + $0xb8] sm:$0xff]
        %v4645 = vld [vmem:[%s4620 + $0xc0] sm:$0xff]
        %v4646 = vld [vmem:[%s4620 + $0xc8] sm:$0xff]
        %v4647 = vld [vmem:[%s4620 + $0xd0] sm:$0xff]
        %v4648 = vld [vmem:[%s4620 + $0xd8] sm:$0xff]
        %v4649 = vld [vmem:[%s4620 + $0xe0] sm:$0xff]
        %v4650 = vld [vmem:[%s4620 + $0xe8] sm:$0xff]
        %v4651 = vld [vmem:[%s4620 + $0xf0] sm:$0xff]
        %v4652 = vld [vmem:[%s4620 + $0xf8] sm:$0xff]
        %v4685 = vunpack.c.l.b16 %v4621
        %v4686 = vunpack.c.h.b16 %v4621
        %v4687 = vunpack.c.l.b16 %v4622
        %v4688 = vunpack.c.h.b16 %v4622
        %v4689 = vunpack.c.l.b16 %v4623
        %v4690 = vunpack.c.h.b16 %v4623
        %v4691 = vunpack.c.l.b16 %v4624
        %v4692 = vunpack.c.h.b16 %v4624
        %v4693 = vunpack.c.l.b16 %v4625
        %v4694 = vunpack.c.h.b16 %v4625
        %v4695 = vunpack.c.l.b16 %v4626
        %v4696 = vunpack.c.h.b16 %v4626
        %v4697 = vunpack.c.l.b16 %v4627
        %v4698 = vunpack.c.h.b16 %v4627
        %v4699 = vunpack.c.l.b16 %v4628
        %v4700 = vunpack.c.h.b16 %v4628
        %v4701 = vunpack.c.l.b16 %v4629
        %v4702 = vunpack.c.h.b16 %v4629
        %v4703 = vunpack.c.l.b16 %v4630
        %v4704 = vunpack.c.h.b16 %v4630
        %v4705 = vunpack.c.l.b16 %v4631
        %v4706 = vunpack.c.h.b16 %v4631
        %v4707 = vunpack.c.l.b16 %v4632
        %v4708 = vunpack.c.h.b16 %v4632
        %v4709 = vunpack.c.l.b16 %v4633
        %v4710 = vunpack.c.h.b16 %v4633
        %v4711 = vunpack.c.l.b16 %v4634
        %v4712 = vunpack.c.h.b16 %v4634
        %v4713 = vunpack.c.l.b16 %v4635
        %v4714 = vunpack.c.h.b16 %v4635
        %v4715 = vunpack.c.l.b16 %v4636
        %v4716 = vunpack.c.h.b16 %v4636
        %v4717 = vunpack.c.l.b16 %v4637
        %v4718 = vunpack.c.h.b16 %v4637
        %v4719 = vunpack.c.l.b16 %v4638
        %v4720 = vunpack.c.h.b16 %v4638
        %v4721 = vunpack.c.l.b16 %v4639
        %v4722 = vunpack.c.h.b16 %v4639
        %v4723 = vunpack.c.l.b16 %v4640
        %v4724 = vunpack.c.h.b16 %v4640
        %v4725 = vunpack.c.l.b16 %v4641
        %v4726 = vunpack.c.h.b16 %v4641
        %v4727 = vunpack.c.l.b16 %v4642
        %v4728 = vunpack.c.h.b16 %v4642
        %v4729 = vunpack.c.l.b16 %v4643
        %v4730 = vunpack.c.h.b16 %v4643
        %v4731 = vunpack.c.l.b16 %v4644
        %v4732 = vunpack.c.h.b16 %v4644
        %v4733 = vunpack.c.l.b16 %v4645
        %v4734 = vunpack.c.h.b16 %v4645
        %v4735 = vunpack.c.l.b16 %v4646
        %v4736 = vunpack.c.h.b16 %v4646
        %v4737 = vunpack.c.l.b16 %v4647
        %v4738 = vunpack.c.h.b16 %v4647
        %v4739 = vunpack.c.l.b16 %v4648
        %v4740 = vunpack.c.h.b16 %v4648
        %v4741 = vunpack.c.l.b16 %v4649
        %v4742 = vunpack.c.h.b16 %v4649
        %v4743 = vunpack.c.l.b16 %v4650
        %v4744 = vunpack.c.h.b16 %v4650
        %v4745 = vunpack.c.l.b16 %v4651
        %v4746 = vunpack.c.h.b16 %v4651
        %v4747 = vunpack.c.l.b16 %v4652
        %v4748 = vunpack.c.h.b16 %v4652
        %v4749 = vpack.c.b16 %v4687, %v4685
        %v4750 = vpack.c.b16 %v4688, %v4686
        %v4751 = vpack.c.b16 %v4691, %v4689
        %v4752 = vpack.c.b16 %v4692, %v4690
        %v4753 = vpack.c.b16 %v4695, %v4693
        %v4754 = vpack.c.b16 %v4696, %v4694
        %v4755 = vpack.c.b16 %v4699, %v4697
        %v4756 = vpack.c.b16 %v4700, %v4698
        %v4757 = vpack.c.b16 %v4703, %v4701
        %v4758 = vpack.c.b16 %v4704, %v4702
        %v4759 = vpack.c.b16 %v4707, %v4705
        %v4760 = vpack.c.b16 %v4708, %v4706
        %v4761 = vpack.c.b16 %v4711, %v4709
        %v4762 = vpack.c.b16 %v4712, %v4710
        %v4763 = vpack.c.b16 %v4715, %v4713
        %v4764 = vpack.c.b16 %v4716, %v4714
        %v4765 = vpack.c.b16 %v4719, %v4717
        %v4766 = vpack.c.b16 %v4720, %v4718
        %v4767 = vpack.c.b16 %v4723, %v4721
        %v4768 = vpack.c.b16 %v4724, %v4722
        %v4769 = vpack.c.b16 %v4727, %v4725
        %v4770 = vpack.c.b16 %v4728, %v4726
        %v4771 = vpack.c.b16 %v4731, %v4729
        %v4772 = vpack.c.b16 %v4732, %v4730
        %v4773 = vpack.c.b16 %v4735, %v4733
        %v4774 = vpack.c.b16 %v4736, %v4734
        %v4775 = vpack.c.b16 %v4739, %v4737
        %v4776 = vpack.c.b16 %v4740, %v4738
        %v4777 = vpack.c.b16 %v4743, %v4741
        %v4778 = vpack.c.b16 %v4744, %v4742
        %v4779 = vpack.c.b16 %v4747, %v4745
        %v4780 = vpack.c.b16 %v4748, %v4746
        %4813 = vmatpush.bf16.msra.mxu0 %v4763
        %4814 = vmatpush.bf16.msra.mxu0 %v4761
        %4815 = vmatpush.bf16.msra.mxu0 %v4759
        %4816 = vmatpush.bf16.msra.mxu0 %v4757
        %4817 = vmatpush.bf16.msra.mxu0 %v4755
        %4818 = vmatpush.bf16.msra.mxu0 %v4753
        %4819 = vmatpush.bf16.msra.mxu0 %v4751
        %4820 = vmatpush.bf16.msra.mxu0 %v4749
        %4821 = vmatmul.bf16.gmra.mxu0 %v4588
        %v4822 = vpop.f32.mrf.mxu0
        %v4823 = vadd.f32 0.0, %v4822
        %v4824 = vpop.f32.mrf.mxu0
        %v4825 = vadd.f32 0.0, %v4824
        %4826 = vmatmul.bf16.gmra.mxu0 %v4590
        %v4827 = vpop.f32.mrf.mxu0
        %v4828 = vadd.f32 0.0, %v4827
        %v4829 = vpop.f32.mrf.mxu0
        %v4830 = vadd.f32 0.0, %v4829
        %4831 = vmatmul.bf16.gmra.mxu0 %v4592
        %v4832 = vpop.f32.mrf.mxu0
        %v4833 = vadd.f32 0.0, %v4832
        %v4834 = vpop.f32.mrf.mxu0
        %v4835 = vadd.f32 0.0, %v4834
        %4836 = vmatmul.bf16.gmra.mxu0 %v4594
        %v4837 = vpop.f32.mrf.mxu0
        %v4838 = vadd.f32 0.0, %v4837
        %v4839 = vpop.f32.mrf.mxu0
        %v4840 = vadd.f32 0.0, %v4839
        %4841 = vmatmul.bf16.gmra.mxu0 %v4596
        %v4842 = vpop.f32.mrf.mxu0
        %v4843 = vadd.f32 0.0, %v4842
        %v4844 = vpop.f32.mrf.mxu0
        %v4845 = vadd.f32 0.0, %v4844
        %4846 = vmatmul.bf16.gmra.mxu0 %v4598
        %v4847 = vpop.f32.mrf.mxu0
        %v4848 = vadd.f32 0.0, %v4847
        %v4849 = vpop.f32.mrf.mxu0
        %v4850 = vadd.f32 0.0, %v4849
        %4851 = vmatmul.bf16.gmra.mxu0 %v4600
        %v4852 = vpop.f32.mrf.mxu0
        %v4853 = vadd.f32 0.0, %v4852
        %v4854 = vpop.f32.mrf.mxu0
        %v4855 = vadd.f32 0.0, %v4854
        %4856 = vmatmul.bf16.gmra.mxu0 %v4602
        %v4857 = vpop.f32.mrf.mxu0
        %v4858 = vadd.f32 0.0, %v4857
        %v4859 = vpop.f32.mrf.mxu0
        %v4860 = vadd.f32 0.0, %v4859
        %4861 = vmatmul.bf16.gmra.mxu0 %v4604
        %v4862 = vpop.f32.mrf.mxu0
        %v4863 = vadd.f32 0.0, %v4862
        %v4864 = vpop.f32.mrf.mxu0
        %v4865 = vadd.f32 0.0, %v4864
        %4866 = vmatmul.bf16.gmra.mxu0 %v4606
        %v4867 = vpop.f32.mrf.mxu0
        %v4868 = vadd.f32 0.0, %v4867
        %v4869 = vpop.f32.mrf.mxu0
        %v4870 = vadd.f32 0.0, %v4869
        %4871 = vmatmul.bf16.gmra.mxu0 %v4608
        %v4872 = vpop.f32.mrf.mxu0
        %v4873 = vadd.f32 0.0, %v4872
        %v4874 = vpop.f32.mrf.mxu0
        %v4875 = vadd.f32 0.0, %v4874
        %4876 = vmatmul.bf16.gmra.mxu0 %v4610
        %v4877 = vpop.f32.mrf.mxu0
        %v4878 = vadd.f32 0.0, %v4877
        %v4879 = vpop.f32.mrf.mxu0
        %v4880 = vadd.f32 0.0, %v4879
        %4881 = vmatmul.bf16.gmra.mxu0 %v4612
        %v4882 = vpop.f32.mrf.mxu0
        %v4883 = vadd.f32 0.0, %v4882
        %v4884 = vpop.f32.mrf.mxu0
        %v4885 = vadd.f32 0.0, %v4884
        %4886 = vmatmul.bf16.gmra.mxu0 %v4614
        %v4887 = vpop.f32.mrf.mxu0
        %v4888 = vadd.f32 0.0, %v4887
        %v4889 = vpop.f32.mrf.mxu0
        %v4890 = vadd.f32 0.0, %v4889
        %4891 = vmatmul.bf16.gmra.mxu0 %v4616
        %v4892 = vpop.f32.mrf.mxu0
        %v4893 = vadd.f32 0.0, %v4892
        %v4894 = vpop.f32.mrf.mxu0
        %v4895 = vadd.f32 0.0, %v4894
        %4896 = vmatmul.bf16.gmra.mxu0 %v4618
        %v4897 = vpop.f32.mrf.mxu0
        %v4898 = vadd.f32 0.0, %v4897
        %v4899 = vpop.f32.mrf.mxu0
        %v4900 = vadd.f32 0.0, %v4899
        %4901 = vdwg.mxu0
        %4902 = vmatpush.bf16.msra.mxu0 %v4779
        %4903 = vmatpush.bf16.msra.mxu0 %v4777
        %4904 = vmatpush.bf16.msra.mxu0 %v4775
        %4905 = vmatpush.bf16.msra.mxu0 %v4773
        %4906 = vmatpush.bf16.msra.mxu0 %v4771
        %4907 = vmatpush.bf16.msra.mxu0 %v4769
        %4908 = vmatpush.bf16.msra.mxu0 %v4767
        %4909 = vmatpush.bf16.msra.mxu0 %v4765
        %4910 = vmatmul.bf16.gmra.mxu0 %v4589
        %v4911 = vpop.f32.mrf.mxu0
        %v4912 = vadd.f32 %v4823, %v4911
        %v4913 = vpop.f32.mrf.mxu0
        %v4914 = vadd.f32 %v4825, %v4913
        %4915 = vmatmul.bf16.gmra.mxu0 %v4591
        %v4916 = vpop.f32.mrf.mxu0
        %v4917 = vadd.f32 %v4828, %v4916
        %v4918 = vpop.f32.mrf.mxu0
        %v4919 = vadd.f32 %v4830, %v4918
        %4920 = vmatmul.bf16.gmra.mxu0 %v4593
        %v4921 = vpop.f32.mrf.mxu0
        %v4922 = vadd.f32 %v4833, %v4921
        %v4923 = vpop.f32.mrf.mxu0
        %v4924 = vadd.f32 %v4835, %v4923
        %4925 = vmatmul.bf16.gmra.mxu0 %v4595
        %v4926 = vpop.f32.mrf.mxu0
        %v4927 = vadd.f32 %v4838, %v4926
        %v4928 = vpop.f32.mrf.mxu0
        %v4929 = vadd.f32 %v4840, %v4928
        %4930 = vmatmul.bf16.gmra.mxu0 %v4597
        %v4931 = vpop.f32.mrf.mxu0
        %v4932 = vadd.f32 %v4843, %v4931
        %v4933 = vpop.f32.mrf.mxu0
        %v4934 = vadd.f32 %v4845, %v4933
        %4935 = vmatmul.bf16.gmra.mxu0 %v4599
        %v4936 = vpop.f32.mrf.mxu0
        %v4937 = vadd.f32 %v4848, %v4936
        %v4938 = vpop.f32.mrf.mxu0
        %v4939 = vadd.f32 %v4850, %v4938
        %4940 = vmatmul.bf16.gmra.mxu0 %v4601
        %v4941 = vpop.f32.mrf.mxu0
        %v4942 = vadd.f32 %v4853, %v4941
        %v4943 = vpop.f32.mrf.mxu0
        %v4944 = vadd.f32 %v4855, %v4943
        %4945 = vmatmul.bf16.gmra.mxu0 %v4603
        %v4946 = vpop.f32.mrf.mxu0
        %v4947 = vadd.f32 %v4858, %v4946
        %v4948 = vpop.f32.mrf.mxu0
        %v4949 = vadd.f32 %v4860, %v4948
        %4950 = vmatmul.bf16.gmra.mxu0 %v4605
        %v4951 = vpop.f32.mrf.mxu0
        %v4952 = vadd.f32 %v4863, %v4951
        %v4953 = vpop.f32.mrf.mxu0
        %v4954 = vadd.f32 %v4865, %v4953
        %4955 = vmatmul.bf16.gmra.mxu0 %v4607
        %v4956 = vpop.f32.mrf.mxu0
        %v4957 = vadd.f32 %v4868, %v4956
        %v4958 = vpop.f32.mrf.mxu0
        %v4959 = vadd.f32 %v4870, %v4958
        %4960 = vmatmul.bf16.gmra.mxu0 %v4609
        %v4961 = vpop.f32.mrf.mxu0
        %v4962 = vadd.f32 %v4873, %v4961
        %v4963 = vpop.f32.mrf.mxu0
        %v4964 = vadd.f32 %v4875, %v4963
        %4965 = vmatmul.bf16.gmra.mxu0 %v4611
        %v4966 = vpop.f32.mrf.mxu0
        %v4967 = vadd.f32 %v4878, %v4966
        %v4968 = vpop.f32.mrf.mxu0
        %v4969 = vadd.f32 %v4880, %v4968
        %4970 = vmatmul.bf16.gmra.mxu0 %v4613
        %v4971 = vpop.f32.mrf.mxu0
        %v4972 = vadd.f32 %v4883, %v4971
        %v4973 = vpop.f32.mrf.mxu0
        %v4974 = vadd.f32 %v4885, %v4973
        %4975 = vmatmul.bf16.gmra.mxu0 %v4615
        %v4976 = vpop.f32.mrf.mxu0
        %v4977 = vadd.f32 %v4888, %v4976
        %v4978 = vpop.f32.mrf.mxu0
        %v4979 = vadd.f32 %v4890, %v4978
        %4980 = vmatmul.bf16.gmra.mxu0 %v4617
        %v4981 = vpop.f32.mrf.mxu0
        %v4982 = vadd.f32 %v4893, %v4981
        %v4983 = vpop.f32.mrf.mxu0
        %v4984 = vadd.f32 %v4895, %v4983
        %4985 = vmatmul.bf16.gmra.mxu0 %v4619
        %v4986 = vpop.f32.mrf.mxu0
        %v4987 = vadd.f32 %v4898, %v4986
        %v4988 = vpop.f32.mrf.mxu0
        %v4989 = vadd.f32 %v4900, %v4988
        %4990 = vdwg.mxu0
        %4991 = vmatpush.bf16.msra.mxu0 %v4764
        %4992 = vmatpush.bf16.msra.mxu0 %v4762
        %4993 = vmatpush.bf16.msra.mxu0 %v4760
        %4994 = vmatpush.bf16.msra.mxu0 %v4758
        %4995 = vmatpush.bf16.msra.mxu0 %v4756
        %4996 = vmatpush.bf16.msra.mxu0 %v4754
        %4997 = vmatpush.bf16.msra.mxu0 %v4752
        %4998 = vmatpush.bf16.msra.mxu0 %v4750
        %4999 = vmatmul.bf16.gmra.mxu0 %v4588
        %v5000 = vpop.f32.mrf.mxu0
        %v5001 = vadd.f32 0.0, %v5000
        %v5002 = vpop.f32.mrf.mxu0
        %v5003 = vadd.f32 0.0, %v5002
        %5004 = vmatmul.bf16.gmra.mxu0 %v4590
        %v5005 = vpop.f32.mrf.mxu0
        %v5006 = vadd.f32 0.0, %v5005
        %v5007 = vpop.f32.mrf.mxu0
        %v5008 = vadd.f32 0.0, %v5007
        %5009 = vmatmul.bf16.gmra.mxu0 %v4592
        %v5010 = vpop.f32.mrf.mxu0
        %v5011 = vadd.f32 0.0, %v5010
        %v5012 = vpop.f32.mrf.mxu0
        %v5013 = vadd.f32 0.0, %v5012
        %5014 = vmatmul.bf16.gmra.mxu0 %v4594
        %v5015 = vpop.f32.mrf.mxu0
        %v5016 = vadd.f32 0.0, %v5015
        %v5017 = vpop.f32.mrf.mxu0
        %v5018 = vadd.f32 0.0, %v5017
        %5019 = vmatmul.bf16.gmra.mxu0 %v4596
        %v5020 = vpop.f32.mrf.mxu0
        %v5021 = vadd.f32 0.0, %v5020
        %v5022 = vpop.f32.mrf.mxu0
        %v5023 = vadd.f32 0.0, %v5022
        %5024 = vmatmul.bf16.gmra.mxu0 %v4598
        %v5025 = vpop.f32.mrf.mxu0
        %v5026 = vadd.f32 0.0, %v5025
        %v5027 = vpop.f32.mrf.mxu0
        %v5028 = vadd.f32 0.0, %v5027
        %5029 = vmatmul.bf16.gmra.mxu0 %v4600
        %v5030 = vpop.f32.mrf.mxu0
        %v5031 = vadd.f32 0.0, %v5030
        %v5032 = vpop.f32.mrf.mxu0
        %v5033 = vadd.f32 0.0, %v5032
        %5034 = vmatmul.bf16.gmra.mxu0 %v4602
        %v5035 = vpop.f32.mrf.mxu0
        %v5036 = vadd.f32 0.0, %v5035
        %v5037 = vpop.f32.mrf.mxu0
        %v5038 = vadd.f32 0.0, %v5037
        %5039 = vmatmul.bf16.gmra.mxu0 %v4604
        %v5040 = vpop.f32.mrf.mxu0
        %v5041 = vadd.f32 0.0, %v5040
        %v5042 = vpop.f32.mrf.mxu0
        %v5043 = vadd.f32 0.0, %v5042
        %5044 = vmatmul.bf16.gmra.mxu0 %v4606
        %v5045 = vpop.f32.mrf.mxu0
        %v5046 = vadd.f32 0.0, %v5045
        %v5047 = vpop.f32.mrf.mxu0
        %v5048 = vadd.f32 0.0, %v5047
        %5049 = vmatmul.bf16.gmra.mxu0 %v4608
        %v5050 = vpop.f32.mrf.mxu0
        %v5051 = vadd.f32 0.0, %v5050
        %v5052 = vpop.f32.mrf.mxu0
        %v5053 = vadd.f32 0.0, %v5052
        %5054 = vmatmul.bf16.gmra.mxu0 %v4610
        %v5055 = vpop.f32.mrf.mxu0
        %v5056 = vadd.f32 0.0, %v5055
        %v5057 = vpop.f32.mrf.mxu0
        %v5058 = vadd.f32 0.0, %v5057
        %5059 = vmatmul.bf16.gmra.mxu0 %v4612
        %v5060 = vpop.f32.mrf.mxu0
        %v5061 = vadd.f32 0.0, %v5060
        %v5062 = vpop.f32.mrf.mxu0
        %v5063 = vadd.f32 0.0, %v5062
        %5064 = vmatmul.bf16.gmra.mxu0 %v4614
        %v5065 = vpop.f32.mrf.mxu0
        %v5066 = vadd.f32 0.0, %v5065
        %v5067 = vpop.f32.mrf.mxu0
        %v5068 = vadd.f32 0.0, %v5067
        %5069 = vmatmul.bf16.gmra.mxu0 %v4616
        %v5070 = vpop.f32.mrf.mxu0
        %v5071 = vadd.f32 0.0, %v5070
        %v5072 = vpop.f32.mrf.mxu0
        %v5073 = vadd.f32 0.0, %v5072
        %5074 = vmatmul.bf16.gmra.mxu0 %v4618
        %v5075 = vpop.f32.mrf.mxu0
        %v5076 = vadd.f32 0.0, %v5075
        %v5077 = vpop.f32.mrf.mxu0
        %v5078 = vadd.f32 0.0, %v5077
        %5079 = vdwg.mxu0
        %5080 = vmatpush.bf16.msra.mxu0 %v4780
        %5081 = vmatpush.bf16.msra.mxu0 %v4778
        %5082 = vmatpush.bf16.msra.mxu0 %v4776
        %5083 = vmatpush.bf16.msra.mxu0 %v4774
        %5084 = vmatpush.bf16.msra.mxu0 %v4772
        %5085 = vmatpush.bf16.msra.mxu0 %v4770
        %5086 = vmatpush.bf16.msra.mxu0 %v4768
        %5087 = vmatpush.bf16.msra.mxu0 %v4766
        %5088 = vmatmul.bf16.gmra.mxu0 %v4589
        %v5089 = vpop.f32.mrf.mxu0
        %v5090 = vadd.f32 %v5001, %v5089
        %v5091 = vpop.f32.mrf.mxu0
        %v5092 = vadd.f32 %v5003, %v5091
        %5093 = vmatmul.bf16.gmra.mxu0 %v4591
        %v5094 = vpop.f32.mrf.mxu0
        %v5095 = vadd.f32 %v5006, %v5094
        %v5096 = vpop.f32.mrf.mxu0
        %v5097 = vadd.f32 %v5008, %v5096
        %5098 = vmatmul.bf16.gmra.mxu0 %v4593
        %v5099 = vpop.f32.mrf.mxu0
        %v5100 = vadd.f32 %v5011, %v5099
        %v5101 = vpop.f32.mrf.mxu0
        %v5102 = vadd.f32 %v5013, %v5101
        %5103 = vmatmul.bf16.gmra.mxu0 %v4595
        %v5104 = vpop.f32.mrf.mxu0
        %v5105 = vadd.f32 %v5016, %v5104
        %v5106 = vpop.f32.mrf.mxu0
        %v5107 = vadd.f32 %v5018, %v5106
        %5108 = vmatmul.bf16.gmra.mxu0 %v4597
        %v5109 = vpop.f32.mrf.mxu0
        %v5110 = vadd.f32 %v5021, %v5109
        %v5111 = vpop.f32.mrf.mxu0
        %v5112 = vadd.f32 %v5023, %v5111
        %5113 = vmatmul.bf16.gmra.mxu0 %v4599
        %v5114 = vpop.f32.mrf.mxu0
        %v5115 = vadd.f32 %v5026, %v5114
        %v5116 = vpop.f32.mrf.mxu0
        %v5117 = vadd.f32 %v5028, %v5116
        %5118 = vmatmul.bf16.gmra.mxu0 %v4601
        %v5119 = vpop.f32.mrf.mxu0
        %v5120 = vadd.f32 %v5031, %v5119
        %v5121 = vpop.f32.mrf.mxu0
        %v5122 = vadd.f32 %v5033, %v5121
        %5123 = vmatmul.bf16.gmra.mxu0 %v4603
        %v5124 = vpop.f32.mrf.mxu0
        %v5125 = vadd.f32 %v5036, %v5124
        %v5126 = vpop.f32.mrf.mxu0
        %v5127 = vadd.f32 %v5038, %v5126
        %5128 = vmatmul.bf16.gmra.mxu0 %v4605
        %v5129 = vpop.f32.mrf.mxu0
        %v5130 = vadd.f32 %v5041, %v5129
        %v5131 = vpop.f32.mrf.mxu0
        %v5132 = vadd.f32 %v5043, %v5131
        %5133 = vmatmul.bf16.gmra.mxu0 %v4607
        %v5134 = vpop.f32.mrf.mxu0
        %v5135 = vadd.f32 %v5046, %v5134
        %v5136 = vpop.f32.mrf.mxu0
        %v5137 = vadd.f32 %v5048, %v5136
        %5138 = vmatmul.bf16.gmra.mxu0 %v4609
        %v5139 = vpop.f32.mrf.mxu0
        %v5140 = vadd.f32 %v5051, %v5139
        %v5141 = vpop.f32.mrf.mxu0
        %v5142 = vadd.f32 %v5053, %v5141
        %5143 = vmatmul.bf16.gmra.mxu0 %v4611
        %v5144 = vpop.f32.mrf.mxu0
        %v5145 = vadd.f32 %v5056, %v5144
        %v5146 = vpop.f32.mrf.mxu0
        %v5147 = vadd.f32 %v5058, %v5146
        %5148 = vmatmul.bf16.gmra.mxu0 %v4613
        %v5149 = vpop.f32.mrf.mxu0
        %v5150 = vadd.f32 %v5061, %v5149
        %v5151 = vpop.f32.mrf.mxu0
        %v5152 = vadd.f32 %v5063, %v5151
        %5153 = vmatmul.bf16.gmra.mxu0 %v4615
        %v5154 = vpop.f32.mrf.mxu0
        %v5155 = vadd.f32 %v5066, %v5154
        %v5156 = vpop.f32.mrf.mxu0
        %v5157 = vadd.f32 %v5068, %v5156
        %5158 = vmatmul.bf16.gmra.mxu0 %v4617
        %v5159 = vpop.f32.mrf.mxu0
        %v5160 = vadd.f32 %v5071, %v5159
        %v5161 = vpop.f32.mrf.mxu0
        %v5162 = vadd.f32 %v5073, %v5161
        %5163 = vmatmul.bf16.gmra.mxu0 %v4619
        %v5164 = vpop.f32.mrf.mxu0
        %v5165 = vadd.f32 %v5076, %v5164
        %v5166 = vpop.f32.mrf.mxu0
        %v5167 = vadd.f32 %v5078, %v5166
        %5168 = vdwg.mxu0
        %v5169 = vpack.c.bf16 %v5090, %v4912
        %v5170 = vpack.c.bf16 %v5092, %v4914
        %v5171 = vpack.c.bf16 %v5095, %v4917
        %v5172 = vpack.c.bf16 %v5097, %v4919
        %v5173 = vpack.c.bf16 %v5100, %v4922
        %v5174 = vpack.c.bf16 %v5102, %v4924
        %v5175 = vpack.c.bf16 %v5105, %v4927
        %v5176 = vpack.c.bf16 %v5107, %v4929
        %v5177 = vpack.c.bf16 %v5110, %v4932
        %v5178 = vpack.c.bf16 %v5112, %v4934
        %v5179 = vpack.c.bf16 %v5115, %v4937
        %v5180 = vpack.c.bf16 %v5117, %v4939
        %v5181 = vpack.c.bf16 %v5120, %v4942
        %v5182 = vpack.c.bf16 %v5122, %v4944
        %v5183 = vpack.c.bf16 %v5125, %v4947
        %v5184 = vpack.c.bf16 %v5127, %v4949
        %v5185 = vpack.c.bf16 %v5130, %v4952
        %v5186 = vpack.c.bf16 %v5132, %v4954
        %v5187 = vpack.c.bf16 %v5135, %v4957
        %v5188 = vpack.c.bf16 %v5137, %v4959
        %v5189 = vpack.c.bf16 %v5140, %v4962
        %v5190 = vpack.c.bf16 %v5142, %v4964
        %v5191 = vpack.c.bf16 %v5145, %v4967
        %v5192 = vpack.c.bf16 %v5147, %v4969
        %v5193 = vpack.c.bf16 %v5150, %v4972
        %v5194 = vpack.c.bf16 %v5152, %v4974
        %v5195 = vpack.c.bf16 %v5155, %v4977
        %v5196 = vpack.c.bf16 %v5157, %v4979
        %v5197 = vpack.c.bf16 %v5160, %v4982
        %v5198 = vpack.c.bf16 %v5162, %v4984
        %v5199 = vpack.c.bf16 %v5165, %v4987
        %v5200 = vpack.c.bf16 %v5167, %v4989
        %s5201 = scalar_lea.vmem %s4, 8
        %v5202 = vld [vmem:[%s5201] sm:$0x3]
        %5204 = vst [vmem:[#allocation1] ss:$9 sm:$0xff] %v5202
        %v5205 = vld [vmem:[#allocation1] sm:$0xff]
        %v5206 = vld [vmem:[#allocation1 + $0x9] sm:$0xff]
        %v5207 = vpack.i.b16 %v5205, %v5205
        %v5209 = vperm.slane %v5207, 0
        %v5210 = vpack.i.b16 %v5206, %v5206
        %v5212 = vperm.slane %v5210, 0
        %v5213 = vunpack.c.l.bf16 %v5169
        %v5214 = vunpack.c.h.bf16 %v5169
        %v5215 = vunpack.c.l.bf16 %v5170
        %v5216 = vunpack.c.h.bf16 %v5170
        %v5217 = vunpack.c.l.bf16 %v5171
        %v5218 = vunpack.c.h.bf16 %v5171
        %v5219 = vunpack.c.l.bf16 %v5172
        %v5220 = vunpack.c.h.bf16 %v5172
        %v5221 = vunpack.c.l.bf16 %v5173
        %v5222 = vunpack.c.h.bf16 %v5173
        %v5223 = vunpack.c.l.bf16 %v5174
        %v5224 = vunpack.c.h.bf16 %v5174
        %v5225 = vunpack.c.l.bf16 %v5175
        %v5226 = vunpack.c.h.bf16 %v5175
        %v5227 = vunpack.c.l.bf16 %v5176
        %v5228 = vunpack.c.h.bf16 %v5176
        %v5229 = vunpack.c.l.bf16 %v5177
        %v5230 = vunpack.c.h.bf16 %v5177
        %v5231 = vunpack.c.l.bf16 %v5178
        %v5232 = vunpack.c.h.bf16 %v5178
        %v5233 = vunpack.c.l.bf16 %v5179
        %v5234 = vunpack.c.h.bf16 %v5179
        %v5235 = vunpack.c.l.bf16 %v5180
        %v5236 = vunpack.c.h.bf16 %v5180
        %v5237 = vunpack.c.l.bf16 %v5181
        %v5238 = vunpack.c.h.bf16 %v5181
        %v5239 = vunpack.c.l.bf16 %v5182
        %v5240 = vunpack.c.h.bf16 %v5182
        %v5241 = vunpack.c.l.bf16 %v5183
        %v5242 = vunpack.c.h.bf16 %v5183
        %v5243 = vunpack.c.l.bf16 %v5184
        %v5244 = vunpack.c.h.bf16 %v5184
        %v5245 = vunpack.c.l.bf16 %v5185
        %v5246 = vunpack.c.h.bf16 %v5185
        %v5247 = vunpack.c.l.bf16 %v5186
        %v5248 = vunpack.c.h.bf16 %v5186
        %v5249 = vunpack.c.l.bf16 %v5187
        %v5250 = vunpack.c.h.bf16 %v5187
        %v5251 = vunpack.c.l.bf16 %v5188
        %v5252 = vunpack.c.h.bf16 %v5188
        %v5253 = vunpack.c.l.bf16 %v5189
        %v5254 = vunpack.c.h.bf16 %v5189
        %v5255 = vunpack.c.l.bf16 %v5190
        %v5256 = vunpack.c.h.bf16 %v5190
        %v5257 = vunpack.c.l.bf16 %v5191
        %v5258 = vunpack.c.h.bf16 %v5191
        %v5259 = vunpack.c.l.bf16 %v5192
        %v5260 = vunpack.c.h.bf16 %v5192
        %v5261 = vunpack.c.l.bf16 %v5193
        %v5262 = vunpack.c.h.bf16 %v5193
        %v5263 = vunpack.c.l.bf16 %v5194
        %v5264 = vunpack.c.h.bf16 %v5194
        %v5265 = vunpack.c.l.bf16 %v5195
        %v5266 = vunpack.c.h.bf16 %v5195
        %v5267 = vunpack.c.l.bf16 %v5196
        %v5268 = vunpack.c.h.bf16 %v5196
        %v5269 = vunpack.c.l.bf16 %v5197
        %v5270 = vunpack.c.h.bf16 %v5197
        %v5271 = vunpack.c.l.bf16 %v5198
        %v5272 = vunpack.c.h.bf16 %v5198
        %v5273 = vunpack.c.l.bf16 %v5199
        %v5274 = vunpack.c.h.bf16 %v5199
        %v5275 = vunpack.c.l.bf16 %v5200
        %v5276 = vunpack.c.h.bf16 %v5200
        %v5277 = vunpack.c.l.bf16 %v5209
        %v5278 = vunpack.c.l.bf16 %v5212
        %v5279 = vadd.f32 %v5213, %v5277
        %v5280 = vadd.f32 %v5214, %v5278
        %v5281 = vadd.f32 %v5215, %v5277
        %v5282 = vadd.f32 %v5216, %v5278
        %v5283 = vadd.f32 %v5217, %v5277
        %v5284 = vadd.f32 %v5218, %v5278
        %v5285 = vadd.f32 %v5219, %v5277
        %v5286 = vadd.f32 %v5220, %v5278
        %v5287 = vadd.f32 %v5221, %v5277
        %v5288 = vadd.f32 %v5222, %v5278
        %v5289 = vadd.f32 %v5223, %v5277
        %v5290 = vadd.f32 %v5224, %v5278
        %v5291 = vadd.f32 %v5225, %v5277
        %v5292 = vadd.f32 %v5226, %v5278
        %v5293 = vadd.f32 %v5227, %v5277
        %v5294 = vadd.f32 %v5228, %v5278
        %v5295 = vadd.f32 %v5229, %v5277
        %v5296 = vadd.f32 %v5230, %v5278
        %v5297 = vadd.f32 %v5231, %v5277
        %v5298 = vadd.f32 %v5232, %v5278
        %v5299 = vadd.f32 %v5233, %v5277
        %v5300 = vadd.f32 %v5234, %v5278
        %v5301 = vadd.f32 %v5235, %v5277
        %v5302 = vadd.f32 %v5236, %v5278
        %v5303 = vadd.f32 %v5237, %v5277
        %v5304 = vadd.f32 %v5238, %v5278
        %v5305 = vadd.f32 %v5239, %v5277
        %v5306 = vadd.f32 %v5240, %v5278
        %v5307 = vadd.f32 %v5241, %v5277
        %v5308 = vadd.f32 %v5242, %v5278
        %v5309 = vadd.f32 %v5243, %v5277
        %v5310 = vadd.f32 %v5244, %v5278
        %v5311 = vadd.f32 %v5245, %v5277
        %v5312 = vadd.f32 %v5246, %v5278
        %v5313 = vadd.f32 %v5247, %v5277
        %v5314 = vadd.f32 %v5248, %v5278
        %v5315 = vadd.f32 %v5249, %v5277
        %v5316 = vadd.f32 %v5250, %v5278
        %v5317 = vadd.f32 %v5251, %v5277
        %v5318 = vadd.f32 %v5252, %v5278
        %v5319 = vadd.f32 %v5253, %v5277
        %v5320 = vadd.f32 %v5254, %v5278
        %v5321 = vadd.f32 %v5255, %v5277
        %v5322 = vadd.f32 %v5256, %v5278
        %v5323 = vadd.f32 %v5257, %v5277
        %v5324 = vadd.f32 %v5258, %v5278
        %v5325 = vadd.f32 %v5259, %v5277
        %v5326 = vadd.f32 %v5260, %v5278
        %v5327 = vadd.f32 %v5261, %v5277
        %v5328 = vadd.f32 %v5262, %v5278
        %v5329 = vadd.f32 %v5263, %v5277
        %v5330 = vadd.f32 %v5264, %v5278
        %v5331 = vadd.f32 %v5265, %v5277
        %v5332 = vadd.f32 %v5266, %v5278
        %v5333 = vadd.f32 %v5267, %v5277
        %v5334 = vadd.f32 %v5268, %v5278
        %v5335 = vadd.f32 %v5269, %v5277
        %v5336 = vadd.f32 %v5270, %v5278
        %v5337 = vadd.f32 %v5271, %v5277
        %v5338 = vadd.f32 %v5272, %v5278
        %v5339 = vadd.f32 %v5273, %v5277
        %v5340 = vadd.f32 %v5274, %v5278
        %v5341 = vadd.f32 %v5275, %v5277
        %v5342 = vadd.f32 %v5276, %v5278
        %v5343 = vpack.c.bf16 %v5280, %v5279
        %v5344 = vpack.c.bf16 %v5282, %v5281
        %v5345 = vpack.c.bf16 %v5284, %v5283
        %v5346 = vpack.c.bf16 %v5286, %v5285
        %v5347 = vpack.c.bf16 %v5288, %v5287
        %v5348 = vpack.c.bf16 %v5290, %v5289
        %v5349 = vpack.c.bf16 %v5292, %v5291
        %v5350 = vpack.c.bf16 %v5294, %v5293
        %v5351 = vpack.c.bf16 %v5296, %v5295
        %v5352 = vpack.c.bf16 %v5298, %v5297
        %v5353 = vpack.c.bf16 %v5300, %v5299
        %v5354 = vpack.c.bf16 %v5302, %v5301
        %v5355 = vpack.c.bf16 %v5304, %v5303
        %v5356 = vpack.c.bf16 %v5306, %v5305
        %v5357 = vpack.c.bf16 %v5308, %v5307
        %v5358 = vpack.c.bf16 %v5310, %v5309
        %v5359 = vpack.c.bf16 %v5312, %v5311
        %v5360 = vpack.c.bf16 %v5314, %v5313
        %v5361 = vpack.c.bf16 %v5316, %v5315
        %v5362 = vpack.c.bf16 %v5318, %v5317
        %v5363 = vpack.c.bf16 %v5320, %v5319
        %v5364 = vpack.c.bf16 %v5322, %v5321
        %v5365 = vpack.c.bf16 %v5324, %v5323
        %v5366 = vpack.c.bf16 %v5326, %v5325
        %v5367 = vpack.c.bf16 %v5328, %v5327
        %v5368 = vpack.c.bf16 %v5330, %v5329
        %v5369 = vpack.c.bf16 %v5332, %v5331
        %v5370 = vpack.c.bf16 %v5334, %v5333
        %v5371 = vpack.c.bf16 %v5336, %v5335
        %v5372 = vpack.c.bf16 %v5338, %v5337
        %v5373 = vpack.c.bf16 %v5340, %v5339
        %v5374 = vpack.c.bf16 %v5342, %v5341
        %v5375 = vunpack.c.l.bf16 %v5343
        %v5376 = vunpack.c.h.bf16 %v5343
        %v5377 = vunpack.c.l.bf16 %v5344
        %v5378 = vunpack.c.h.bf16 %v5344
        %v5379 = vunpack.c.l.bf16 %v5345
        %v5380 = vunpack.c.h.bf16 %v5345
        %v5381 = vunpack.c.l.bf16 %v5346
        %v5382 = vunpack.c.h.bf16 %v5346
        %v5383 = vunpack.c.l.bf16 %v5347
        %v5384 = vunpack.c.h.bf16 %v5347
        %v5385 = vunpack.c.l.bf16 %v5348
        %v5386 = vunpack.c.h.bf16 %v5348
        %v5387 = vunpack.c.l.bf16 %v5349
        %v5388 = vunpack.c.h.bf16 %v5349
        %v5389 = vunpack.c.l.bf16 %v5350
        %v5390 = vunpack.c.h.bf16 %v5350
        %v5391 = vunpack.c.l.bf16 %v5351
        %v5392 = vunpack.c.h.bf16 %v5351
        %v5393 = vunpack.c.l.bf16 %v5352
        %v5394 = vunpack.c.h.bf16 %v5352
        %v5395 = vunpack.c.l.bf16 %v5353
        %v5396 = vunpack.c.h.bf16 %v5353
        %v5397 = vunpack.c.l.bf16 %v5354
        %v5398 = vunpack.c.h.bf16 %v5354
        %v5399 = vunpack.c.l.bf16 %v5355
        %v5400 = vunpack.c.h.bf16 %v5355
        %v5401 = vunpack.c.l.bf16 %v5356
        %v5402 = vunpack.c.h.bf16 %v5356
        %v5403 = vunpack.c.l.bf16 %v5357
        %v5404 = vunpack.c.h.bf16 %v5357
        %v5405 = vunpack.c.l.bf16 %v5358
        %v5406 = vunpack.c.h.bf16 %v5358
        %v5407 = vunpack.c.l.bf16 %v5359
        %v5408 = vunpack.c.h.bf16 %v5359
        %v5409 = vunpack.c.l.bf16 %v5360
        %v5410 = vunpack.c.h.bf16 %v5360
        %v5411 = vunpack.c.l.bf16 %v5361
        %v5412 = vunpack.c.h.bf16 %v5361
        %v5413 = vunpack.c.l.bf16 %v5362
        %v5414 = vunpack.c.h.bf16 %v5362
        %v5415 = vunpack.c.l.bf16 %v5363
        %v5416 = vunpack.c.h.bf16 %v5363
        %v5417 = vunpack.c.l.bf16 %v5364
        %v5418 = vunpack.c.h.bf16 %v5364
        %v5419 = vunpack.c.l.bf16 %v5365
        %v5420 = vunpack.c.h.bf16 %v5365
        %v5421 = vunpack.c.l.bf16 %v5366
        %v5422 = vunpack.c.h.bf16 %v5366
        %v5423 = vunpack.c.l.bf16 %v5367
        %v5424 = vunpack.c.h.bf16 %v5367
        %v5425 = vunpack.c.l.bf16 %v5368
        %v5426 = vunpack.c.h.bf16 %v5368
        %v5427 = vunpack.c.l.bf16 %v5369
        %v5428 = vunpack.c.h.bf16 %v5369
        %v5429 = vunpack.c.l.bf16 %v5370
        %v5430 = vunpack.c.h.bf16 %v5370
        %v5431 = vunpack.c.l.bf16 %v5371
        %v5432 = vunpack.c.h.bf16 %v5371
        %v5433 = vunpack.c.l.bf16 %v5372
        %v5434 = vunpack.c.h.bf16 %v5372
        %v5435 = vunpack.c.l.bf16 %v5373
        %v5436 = vunpack.c.h.bf16 %v5373
        %v5437 = vunpack.c.l.bf16 %v5374
        %v5438 = vunpack.c.h.bf16 %v5374
        %v5439 = vmax.f32 %v5375, 0.0
        %v5440 = vmax.f32 %v5376, 0.0
        %v5441 = vmax.f32 %v5377, 0.0
        %v5442 = vmax.f32 %v5378, 0.0
        %v5443 = vmax.f32 %v5379, 0.0
        %v5444 = vmax.f32 %v5380, 0.0
        %v5445 = vmax.f32 %v5381, 0.0
        %v5446 = vmax.f32 %v5382, 0.0
        %v5447 = vmax.f32 %v5383, 0.0
        %v5448 = vmax.f32 %v5384, 0.0
        %v5449 = vmax.f32 %v5385, 0.0
        %v5450 = vmax.f32 %v5386, 0.0
        %v5451 = vmax.f32 %v5387, 0.0
        %v5452 = vmax.f32 %v5388, 0.0
        %v5453 = vmax.f32 %v5389, 0.0
        %v5454 = vmax.f32 %v5390, 0.0
        %v5455 = vmax.f32 %v5391, 0.0
        %v5456 = vmax.f32 %v5392, 0.0
        %v5457 = vmax.f32 %v5393, 0.0
        %v5458 = vmax.f32 %v5394, 0.0
        %v5459 = vmax.f32 %v5395, 0.0
        %v5460 = vmax.f32 %v5396, 0.0
        %v5461 = vmax.f32 %v5397, 0.0
        %v5462 = vmax.f32 %v5398, 0.0
        %v5463 = vmax.f32 %v5399, 0.0
        %v5464 = vmax.f32 %v5400, 0.0
        %v5465 = vmax.f32 %v5401, 0.0
        %v5466 = vmax.f32 %v5402, 0.0
        %v5467 = vmax.f32 %v5403, 0.0
        %v5468 = vmax.f32 %v5404, 0.0
        %v5469 = vmax.f32 %v5405, 0.0
        %v5470 = vmax.f32 %v5406, 0.0
        %v5471 = vmax.f32 %v5407, 0.0
        %v5472 = vmax.f32 %v5408, 0.0
        %v5473 = vmax.f32 %v5409, 0.0
        %v5474 = vmax.f32 %v5410, 0.0
        %v5475 = vmax.f32 %v5411, 0.0
        %v5476 = vmax.f32 %v5412, 0.0
        %v5477 = vmax.f32 %v5413, 0.0
        %v5478 = vmax.f32 %v5414, 0.0
        %v5479 = vmax.f32 %v5415, 0.0
        %v5480 = vmax.f32 %v5416, 0.0
        %v5481 = vmax.f32 %v5417, 0.0
        %v5482 = vmax.f32 %v5418, 0.0
        %v5483 = vmax.f32 %v5419, 0.0
        %v5484 = vmax.f32 %v5420, 0.0
        %v5485 = vmax.f32 %v5421, 0.0
        %v5486 = vmax.f32 %v5422, 0.0
        %v5487 = vmax.f32 %v5423, 0.0
        %v5488 = vmax.f32 %v5424, 0.0
        %v5489 = vmax.f32 %v5425, 0.0
        %v5490 = vmax.f32 %v5426, 0.0
        %v5491 = vmax.f32 %v5427, 0.0
        %v5492 = vmax.f32 %v5428, 0.0
        %v5493 = vmax.f32 %v5429, 0.0
        %v5494 = vmax.f32 %v5430, 0.0
        %v5495 = vmax.f32 %v5431, 0.0
        %v5496 = vmax.f32 %v5432, 0.0
        %v5497 = vmax.f32 %v5433, 0.0
        %v5498 = vmax.f32 %v5434, 0.0
        %v5499 = vmax.f32 %v5435, 0.0
        %v5500 = vmax.f32 %v5436, 0.0
        %v5501 = vmax.f32 %v5437, 0.0
        %v5502 = vmax.f32 %v5438, 0.0
        %v5503 = vpack.c.bf16 %v5441, %v5439
        %v5504 = vpack.c.bf16 %v5442, %v5440
        %v5505 = vpack.c.bf16 %v5445, %v5443
        %v5506 = vpack.c.bf16 %v5446, %v5444
        %v5507 = vpack.c.bf16 %v5449, %v5447
        %v5508 = vpack.c.bf16 %v5450, %v5448
        %v5509 = vpack.c.bf16 %v5453, %v5451
        %v5510 = vpack.c.bf16 %v5454, %v5452
        %v5511 = vpack.c.bf16 %v5457, %v5455
        %v5512 = vpack.c.bf16 %v5458, %v5456
        %v5513 = vpack.c.bf16 %v5461, %v5459
        %v5514 = vpack.c.bf16 %v5462, %v5460
        %v5515 = vpack.c.bf16 %v5465, %v5463
        %v5516 = vpack.c.bf16 %v5466, %v5464
        %v5517 = vpack.c.bf16 %v5469, %v5467
        %v5518 = vpack.c.bf16 %v5470, %v5468
        %v5519 = vpack.c.bf16 %v5473, %v5471
        %v5520 = vpack.c.bf16 %v5474, %v5472
        %v5521 = vpack.c.bf16 %v5477, %v5475
        %v5522 = vpack.c.bf16 %v5478, %v5476
        %v5523 = vpack.c.bf16 %v5481, %v5479
        %v5524 = vpack.c.bf16 %v5482, %v5480
        %v5525 = vpack.c.bf16 %v5485, %v5483
        %v5526 = vpack.c.bf16 %v5486, %v5484
        %v5527 = vpack.c.bf16 %v5489, %v5487
        %v5528 = vpack.c.bf16 %v5490, %v5488
        %v5529 = vpack.c.bf16 %v5493, %v5491
        %v5530 = vpack.c.bf16 %v5494, %v5492
        %v5531 = vpack.c.bf16 %v5497, %v5495
        %v5532 = vpack.c.bf16 %v5498, %v5496
        %v5533 = vpack.c.bf16 %v5501, %v5499
        %v5534 = vpack.c.bf16 %v5502, %v5500
        %s5535 = scalar_lea.vmem [#allocation2], 1280
        %v5536 = vld [vmem:[%s5535] sm:$0xff]
        %v5537 = vld [vmem:[%s5535 + $0x8] sm:$0xff]
        %v5538 = vld [vmem:[%s5535 + $0x10] sm:$0xff]
        %v5539 = vld [vmem:[%s5535 + $0x18] sm:$0xff]
        %v5540 = vld [vmem:[%s5535 + $0x20] sm:$0xff]
        %v5541 = vld [vmem:[%s5535 + $0x28] sm:$0xff]
        %v5542 = vld [vmem:[%s5535 + $0x30] sm:$0xff]
        %v5543 = vld [vmem:[%s5535 + $0x38] sm:$0xff]
        %v5544 = vld [vmem:[%s5535 + $0x40] sm:$0xff]
        %v5545 = vld [vmem:[%s5535 + $0x48] sm:$0xff]
        %v5546 = vld [vmem:[%s5535 + $0x50] sm:$0xff]
        %v5547 = vld [vmem:[%s5535 + $0x58] sm:$0xff]
        %v5548 = vld [vmem:[%s5535 + $0x60] sm:$0xff]
        %v5549 = vld [vmem:[%s5535 + $0x68] sm:$0xff]
        %v5550 = vld [vmem:[%s5535 + $0x70] sm:$0xff]
        %v5551 = vld [vmem:[%s5535 + $0x78] sm:$0xff]
        %v5552 = vld [vmem:[%s5535 + $0x80] sm:$0xff]
        %v5553 = vld [vmem:[%s5535 + $0x88] sm:$0xff]
        %v5554 = vld [vmem:[%s5535 + $0x90] sm:$0xff]
        %v5555 = vld [vmem:[%s5535 + $0x98] sm:$0xff]
        %v5556 = vld [vmem:[%s5535 + $0xa0] sm:$0xff]
        %v5557 = vld [vmem:[%s5535 + $0xa8] sm:$0xff]
        %v5558 = vld [vmem:[%s5535 + $0xb0] sm:$0xff]
        %v5559 = vld [vmem:[%s5535 + $0xb8] sm:$0xff]
        %v5560 = vld [vmem:[%s5535 + $0xc0] sm:$0xff]
        %v5561 = vld [vmem:[%s5535 + $0xc8] sm:$0xff]
        %v5562 = vld [vmem:[%s5535 + $0xd0] sm:$0xff]
        %v5563 = vld [vmem:[%s5535 + $0xd8] sm:$0xff]
        %v5564 = vld [vmem:[%s5535 + $0xe0] sm:$0xff]
        %v5565 = vld [vmem:[%s5535 + $0xe8] sm:$0xff]
        %v5566 = vld [vmem:[%s5535 + $0xf0] sm:$0xff]
        %v5567 = vld [vmem:[%s5535 + $0xf8] sm:$0xff]
        %v5600 = vunpack.c.l.b16 %v5536
        %v5601 = vunpack.c.h.b16 %v5536
        %v5602 = vunpack.c.l.b16 %v5537
        %v5603 = vunpack.c.h.b16 %v5537
        %v5604 = vunpack.c.l.b16 %v5538
        %v5605 = vunpack.c.h.b16 %v5538
        %v5606 = vunpack.c.l.b16 %v5539
        %v5607 = vunpack.c.h.b16 %v5539
        %v5608 = vunpack.c.l.b16 %v5540
        %v5609 = vunpack.c.h.b16 %v5540
        %v5610 = vunpack.c.l.b16 %v5541
        %v5611 = vunpack.c.h.b16 %v5541
        %v5612 = vunpack.c.l.b16 %v5542
        %v5613 = vunpack.c.h.b16 %v5542
        %v5614 = vunpack.c.l.b16 %v5543
        %v5615 = vunpack.c.h.b16 %v5543
        %v5616 = vunpack.c.l.b16 %v5544
        %v5617 = vunpack.c.h.b16 %v5544
        %v5618 = vunpack.c.l.b16 %v5545
        %v5619 = vunpack.c.h.b16 %v5545
        %v5620 = vunpack.c.l.b16 %v5546
        %v5621 = vunpack.c.h.b16 %v5546
        %v5622 = vunpack.c.l.b16 %v5547
        %v5623 = vunpack.c.h.b16 %v5547
        %v5624 = vunpack.c.l.b16 %v5548
        %v5625 = vunpack.c.h.b16 %v5548
        %v5626 = vunpack.c.l.b16 %v5549
        %v5627 = vunpack.c.h.b16 %v5549
        %v5628 = vunpack.c.l.b16 %v5550
        %v5629 = vunpack.c.h.b16 %v5550
        %v5630 = vunpack.c.l.b16 %v5551
        %v5631 = vunpack.c.h.b16 %v5551
        %v5632 = vunpack.c.l.b16 %v5552
        %v5633 = vunpack.c.h.b16 %v5552
        %v5634 = vunpack.c.l.b16 %v5553
        %v5635 = vunpack.c.h.b16 %v5553
        %v5636 = vunpack.c.l.b16 %v5554
        %v5637 = vunpack.c.h.b16 %v5554
        %v5638 = vunpack.c.l.b16 %v5555
        %v5639 = vunpack.c.h.b16 %v5555
        %v5640 = vunpack.c.l.b16 %v5556
        %v5641 = vunpack.c.h.b16 %v5556
        %v5642 = vunpack.c.l.b16 %v5557
        %v5643 = vunpack.c.h.b16 %v5557
        %v5644 = vunpack.c.l.b16 %v5558
        %v5645 = vunpack.c.h.b16 %v5558
        %v5646 = vunpack.c.l.b16 %v5559
        %v5647 = vunpack.c.h.b16 %v5559
        %v5648 = vunpack.c.l.b16 %v5560
        %v5649 = vunpack.c.h.b16 %v5560
        %v5650 = vunpack.c.l.b16 %v5561
        %v5651 = vunpack.c.h.b16 %v5561
        %v5652 = vunpack.c.l.b16 %v5562
        %v5653 = vunpack.c.h.b16 %v5562
        %v5654 = vunpack.c.l.b16 %v5563
        %v5655 = vunpack.c.h.b16 %v5563
        %v5656 = vunpack.c.l.b16 %v5564
        %v5657 = vunpack.c.h.b16 %v5564
        %v5658 = vunpack.c.l.b16 %v5565
        %v5659 = vunpack.c.h.b16 %v5565
        %v5660 = vunpack.c.l.b16 %v5566
        %v5661 = vunpack.c.h.b16 %v5566
        %v5662 = vunpack.c.l.b16 %v5567
        %v5663 = vunpack.c.h.b16 %v5567
        %v5664 = vpack.c.b16 %v5602, %v5600
        %v5665 = vpack.c.b16 %v5603, %v5601
        %v5666 = vpack.c.b16 %v5606, %v5604
        %v5667 = vpack.c.b16 %v5607, %v5605
        %v5668 = vpack.c.b16 %v5610, %v5608
        %v5669 = vpack.c.b16 %v5611, %v5609
        %v5670 = vpack.c.b16 %v5614, %v5612
        %v5671 = vpack.c.b16 %v5615, %v5613
        %v5672 = vpack.c.b16 %v5618, %v5616
        %v5673 = vpack.c.b16 %v5619, %v5617
        %v5674 = vpack.c.b16 %v5622, %v5620
        %v5675 = vpack.c.b16 %v5623, %v5621
        %v5676 = vpack.c.b16 %v5626, %v5624
        %v5677 = vpack.c.b16 %v5627, %v5625
        %v5678 = vpack.c.b16 %v5630, %v5628
        %v5679 = vpack.c.b16 %v5631, %v5629
        %v5680 = vpack.c.b16 %v5634, %v5632
        %v5681 = vpack.c.b16 %v5635, %v5633
        %v5682 = vpack.c.b16 %v5638, %v5636
        %v5683 = vpack.c.b16 %v5639, %v5637
        %v5684 = vpack.c.b16 %v5642, %v5640
        %v5685 = vpack.c.b16 %v5643, %v5641
        %v5686 = vpack.c.b16 %v5646, %v5644
        %v5687 = vpack.c.b16 %v5647, %v5645
        %v5688 = vpack.c.b16 %v5650, %v5648
        %v5689 = vpack.c.b16 %v5651, %v5649
        %v5690 = vpack.c.b16 %v5654, %v5652
        %v5691 = vpack.c.b16 %v5655, %v5653
        %v5692 = vpack.c.b16 %v5658, %v5656
        %v5693 = vpack.c.b16 %v5659, %v5657
        %v5694 = vpack.c.b16 %v5662, %v5660
        %v5695 = vpack.c.b16 %v5663, %v5661
        %5728 = vmatpush.bf16.msra.mxu0 %v5678
        %5729 = vmatpush.bf16.msra.mxu0 %v5676
        %5730 = vmatpush.bf16.msra.mxu0 %v5674
        %5731 = vmatpush.bf16.msra.mxu0 %v5672
        %5732 = vmatpush.bf16.msra.mxu0 %v5670
        %5733 = vmatpush.bf16.msra.mxu0 %v5668
        %5734 = vmatpush.bf16.msra.mxu0 %v5666
        %5735 = vmatpush.bf16.msra.mxu0 %v5664
        %5736 = vmatmul.bf16.gmra.mxu0 %v5503
        %v5737 = vpop.f32.mrf.mxu0
        %v5738 = vadd.f32 0.0, %v5737
        %v5739 = vpop.f32.mrf.mxu0
        %v5740 = vadd.f32 0.0, %v5739
        %5741 = vmatmul.bf16.gmra.mxu0 %v5505
        %v5742 = vpop.f32.mrf.mxu0
        %v5743 = vadd.f32 0.0, %v5742
        %v5744 = vpop.f32.mrf.mxu0
        %v5745 = vadd.f32 0.0, %v5744
        %5746 = vmatmul.bf16.gmra.mxu0 %v5507
        %v5747 = vpop.f32.mrf.mxu0
        %v5748 = vadd.f32 0.0, %v5747
        %v5749 = vpop.f32.mrf.mxu0
        %v5750 = vadd.f32 0.0, %v5749
        %5751 = vmatmul.bf16.gmra.mxu0 %v5509
        %v5752 = vpop.f32.mrf.mxu0
        %v5753 = vadd.f32 0.0, %v5752
        %v5754 = vpop.f32.mrf.mxu0
        %v5755 = vadd.f32 0.0, %v5754
        %5756 = vmatmul.bf16.gmra.mxu0 %v5511
        %v5757 = vpop.f32.mrf.mxu0
        %v5758 = vadd.f32 0.0, %v5757
        %v5759 = vpop.f32.mrf.mxu0
        %v5760 = vadd.f32 0.0, %v5759
        %5761 = vmatmul.bf16.gmra.mxu0 %v5513
        %v5762 = vpop.f32.mrf.mxu0
        %v5763 = vadd.f32 0.0, %v5762
        %v5764 = vpop.f32.mrf.mxu0
        %v5765 = vadd.f32 0.0, %v5764
        %5766 = vmatmul.bf16.gmra.mxu0 %v5515
        %v5767 = vpop.f32.mrf.mxu0
        %v5768 = vadd.f32 0.0, %v5767
        %v5769 = vpop.f32.mrf.mxu0
        %v5770 = vadd.f32 0.0, %v5769
        %5771 = vmatmul.bf16.gmra.mxu0 %v5517
        %v5772 = vpop.f32.mrf.mxu0
        %v5773 = vadd.f32 0.0, %v5772
        %v5774 = vpop.f32.mrf.mxu0
        %v5775 = vadd.f32 0.0, %v5774
        %5776 = vmatmul.bf16.gmra.mxu0 %v5519
        %v5777 = vpop.f32.mrf.mxu0
        %v5778 = vadd.f32 0.0, %v5777
        %v5779 = vpop.f32.mrf.mxu0
        %v5780 = vadd.f32 0.0, %v5779
        %5781 = vmatmul.bf16.gmra.mxu0 %v5521
        %v5782 = vpop.f32.mrf.mxu0
        %v5783 = vadd.f32 0.0, %v5782
        %v5784 = vpop.f32.mrf.mxu0
        %v5785 = vadd.f32 0.0, %v5784
        %5786 = vmatmul.bf16.gmra.mxu0 %v5523
        %v5787 = vpop.f32.mrf.mxu0
        %v5788 = vadd.f32 0.0, %v5787
        %v5789 = vpop.f32.mrf.mxu0
        %v5790 = vadd.f32 0.0, %v5789
        %5791 = vmatmul.bf16.gmra.mxu0 %v5525
        %v5792 = vpop.f32.mrf.mxu0
        %v5793 = vadd.f32 0.0, %v5792
        %v5794 = vpop.f32.mrf.mxu0
        %v5795 = vadd.f32 0.0, %v5794
        %5796 = vmatmul.bf16.gmra.mxu0 %v5527
        %v5797 = vpop.f32.mrf.mxu0
        %v5798 = vadd.f32 0.0, %v5797
        %v5799 = vpop.f32.mrf.mxu0
        %v5800 = vadd.f32 0.0, %v5799
        %5801 = vmatmul.bf16.gmra.mxu0 %v5529
        %v5802 = vpop.f32.mrf.mxu0
        %v5803 = vadd.f32 0.0, %v5802
        %v5804 = vpop.f32.mrf.mxu0
        %v5805 = vadd.f32 0.0, %v5804
        %5806 = vmatmul.bf16.gmra.mxu0 %v5531
        %v5807 = vpop.f32.mrf.mxu0
        %v5808 = vadd.f32 0.0, %v5807
        %v5809 = vpop.f32.mrf.mxu0
        %v5810 = vadd.f32 0.0, %v5809
        %5811 = vmatmul.bf16.gmra.mxu0 %v5533
        %v5812 = vpop.f32.mrf.mxu0
        %v5813 = vadd.f32 0.0, %v5812
        %v5814 = vpop.f32.mrf.mxu0
        %v5815 = vadd.f32 0.0, %v5814
        %5816 = vdwg.mxu0
        %5817 = vmatpush.bf16.msra.mxu0 %v5694
        %5818 = vmatpush.bf16.msra.mxu0 %v5692
        %5819 = vmatpush.bf16.msra.mxu0 %v5690
        %5820 = vmatpush.bf16.msra.mxu0 %v5688
        %5821 = vmatpush.bf16.msra.mxu0 %v5686
        %5822 = vmatpush.bf16.msra.mxu0 %v5684
        %5823 = vmatpush.bf16.msra.mxu0 %v5682
        %5824 = vmatpush.bf16.msra.mxu0 %v5680
        %5825 = vmatmul.bf16.gmra.mxu0 %v5504
        %v5826 = vpop.f32.mrf.mxu0
        %v5827 = vadd.f32 %v5738, %v5826
        %v5828 = vpop.f32.mrf.mxu0
        %v5829 = vadd.f32 %v5740, %v5828
        %5830 = vmatmul.bf16.gmra.mxu0 %v5506
        %v5831 = vpop.f32.mrf.mxu0
        %v5832 = vadd.f32 %v5743, %v5831
        %v5833 = vpop.f32.mrf.mxu0
        %v5834 = vadd.f32 %v5745, %v5833
        %5835 = vmatmul.bf16.gmra.mxu0 %v5508
        %v5836 = vpop.f32.mrf.mxu0
        %v5837 = vadd.f32 %v5748, %v5836
        %v5838 = vpop.f32.mrf.mxu0
        %v5839 = vadd.f32 %v5750, %v5838
        %5840 = vmatmul.bf16.gmra.mxu0 %v5510
        %v5841 = vpop.f32.mrf.mxu0
        %v5842 = vadd.f32 %v5753, %v5841
        %v5843 = vpop.f32.mrf.mxu0
        %v5844 = vadd.f32 %v5755, %v5843
        %5845 = vmatmul.bf16.gmra.mxu0 %v5512
        %v5846 = vpop.f32.mrf.mxu0
        %v5847 = vadd.f32 %v5758, %v5846
        %v5848 = vpop.f32.mrf.mxu0
        %v5849 = vadd.f32 %v5760, %v5848
        %5850 = vmatmul.bf16.gmra.mxu0 %v5514
        %v5851 = vpop.f32.mrf.mxu0
        %v5852 = vadd.f32 %v5763, %v5851
        %v5853 = vpop.f32.mrf.mxu0
        %v5854 = vadd.f32 %v5765, %v5853
        %5855 = vmatmul.bf16.gmra.mxu0 %v5516
        %v5856 = vpop.f32.mrf.mxu0
        %v5857 = vadd.f32 %v5768, %v5856
        %v5858 = vpop.f32.mrf.mxu0
        %v5859 = vadd.f32 %v5770, %v5858
        %5860 = vmatmul.bf16.gmra.mxu0 %v5518
        %v5861 = vpop.f32.mrf.mxu0
        %v5862 = vadd.f32 %v5773, %v5861
        %v5863 = vpop.f32.mrf.mxu0
        %v5864 = vadd.f32 %v5775, %v5863
        %5865 = vmatmul.bf16.gmra.mxu0 %v5520
        %v5866 = vpop.f32.mrf.mxu0
        %v5867 = vadd.f32 %v5778, %v5866
        %v5868 = vpop.f32.mrf.mxu0
        %v5869 = vadd.f32 %v5780, %v5868
        %5870 = vmatmul.bf16.gmra.mxu0 %v5522
        %v5871 = vpop.f32.mrf.mxu0
        %v5872 = vadd.f32 %v5783, %v5871
        %v5873 = vpop.f32.mrf.mxu0
        %v5874 = vadd.f32 %v5785, %v5873
        %5875 = vmatmul.bf16.gmra.mxu0 %v5524
        %v5876 = vpop.f32.mrf.mxu0
        %v5877 = vadd.f32 %v5788, %v5876
        %v5878 = vpop.f32.mrf.mxu0
        %v5879 = vadd.f32 %v5790, %v5878
        %5880 = vmatmul.bf16.gmra.mxu0 %v5526
        %v5881 = vpop.f32.mrf.mxu0
        %v5882 = vadd.f32 %v5793, %v5881
        %v5883 = vpop.f32.mrf.mxu0
        %v5884 = vadd.f32 %v5795, %v5883
        %5885 = vmatmul.bf16.gmra.mxu0 %v5528
        %v5886 = vpop.f32.mrf.mxu0
        %v5887 = vadd.f32 %v5798, %v5886
        %v5888 = vpop.f32.mrf.mxu0
        %v5889 = vadd.f32 %v5800, %v5888
        %5890 = vmatmul.bf16.gmra.mxu0 %v5530
        %v5891 = vpop.f32.mrf.mxu0
        %v5892 = vadd.f32 %v5803, %v5891
        %v5893 = vpop.f32.mrf.mxu0
        %v5894 = vadd.f32 %v5805, %v5893
        %5895 = vmatmul.bf16.gmra.mxu0 %v5532
        %v5896 = vpop.f32.mrf.mxu0
        %v5897 = vadd.f32 %v5808, %v5896
        %v5898 = vpop.f32.mrf.mxu0
        %v5899 = vadd.f32 %v5810, %v5898
        %5900 = vmatmul.bf16.gmra.mxu0 %v5534
        %v5901 = vpop.f32.mrf.mxu0
        %v5902 = vadd.f32 %v5813, %v5901
        %v5903 = vpop.f32.mrf.mxu0
        %v5904 = vadd.f32 %v5815, %v5903
        %5905 = vdwg.mxu0
        %5906 = vmatpush.bf16.msra.mxu0 %v5679
        %5907 = vmatpush.bf16.msra.mxu0 %v5677
        %5908 = vmatpush.bf16.msra.mxu0 %v5675
        %5909 = vmatpush.bf16.msra.mxu0 %v5673
        %5910 = vmatpush.bf16.msra.mxu0 %v5671
        %5911 = vmatpush.bf16.msra.mxu0 %v5669
        %5912 = vmatpush.bf16.msra.mxu0 %v5667
        %5913 = vmatpush.bf16.msra.mxu0 %v5665
        %5914 = vmatmul.bf16.gmra.mxu0 %v5503
        %v5915 = vpop.f32.mrf.mxu0
        %v5916 = vadd.f32 0.0, %v5915
        %v5917 = vpop.f32.mrf.mxu0
        %v5918 = vadd.f32 0.0, %v5917
        %5919 = vmatmul.bf16.gmra.mxu0 %v5505
        %v5920 = vpop.f32.mrf.mxu0
        %v5921 = vadd.f32 0.0, %v5920
        %v5922 = vpop.f32.mrf.mxu0
        %v5923 = vadd.f32 0.0, %v5922
        %5924 = vmatmul.bf16.gmra.mxu0 %v5507
        %v5925 = vpop.f32.mrf.mxu0
        %v5926 = vadd.f32 0.0, %v5925
        %v5927 = vpop.f32.mrf.mxu0
        %v5928 = vadd.f32 0.0, %v5927
        %5929 = vmatmul.bf16.gmra.mxu0 %v5509
        %v5930 = vpop.f32.mrf.mxu0
        %v5931 = vadd.f32 0.0, %v5930
        %v5932 = vpop.f32.mrf.mxu0
        %v5933 = vadd.f32 0.0, %v5932
        %5934 = vmatmul.bf16.gmra.mxu0 %v5511
        %v5935 = vpop.f32.mrf.mxu0
        %v5936 = vadd.f32 0.0, %v5935
        %v5937 = vpop.f32.mrf.mxu0
        %v5938 = vadd.f32 0.0, %v5937
        %5939 = vmatmul.bf16.gmra.mxu0 %v5513
        %v5940 = vpop.f32.mrf.mxu0
        %v5941 = vadd.f32 0.0, %v5940
        %v5942 = vpop.f32.mrf.mxu0
        %v5943 = vadd.f32 0.0, %v5942
        %5944 = vmatmul.bf16.gmra.mxu0 %v5515
        %v5945 = vpop.f32.mrf.mxu0
        %v5946 = vadd.f32 0.0, %v5945
        %v5947 = vpop.f32.mrf.mxu0
        %v5948 = vadd.f32 0.0, %v5947
        %5949 = vmatmul.bf16.gmra.mxu0 %v5517
        %v5950 = vpop.f32.mrf.mxu0
        %v5951 = vadd.f32 0.0, %v5950
        %v5952 = vpop.f32.mrf.mxu0
        %v5953 = vadd.f32 0.0, %v5952
        %5954 = vmatmul.bf16.gmra.mxu0 %v5519
        %v5955 = vpop.f32.mrf.mxu0
        %v5956 = vadd.f32 0.0, %v5955
        %v5957 = vpop.f32.mrf.mxu0
        %v5958 = vadd.f32 0.0, %v5957
        %5959 = vmatmul.bf16.gmra.mxu0 %v5521
        %v5960 = vpop.f32.mrf.mxu0
        %v5961 = vadd.f32 0.0, %v5960
        %v5962 = vpop.f32.mrf.mxu0
        %v5963 = vadd.f32 0.0, %v5962
        %5964 = vmatmul.bf16.gmra.mxu0 %v5523
        %v5965 = vpop.f32.mrf.mxu0
        %v5966 = vadd.f32 0.0, %v5965
        %v5967 = vpop.f32.mrf.mxu0
        %v5968 = vadd.f32 0.0, %v5967
        %5969 = vmatmul.bf16.gmra.mxu0 %v5525
        %v5970 = vpop.f32.mrf.mxu0
        %v5971 = vadd.f32 0.0, %v5970
        %v5972 = vpop.f32.mrf.mxu0
        %v5973 = vadd.f32 0.0, %v5972
        %5974 = vmatmul.bf16.gmra.mxu0 %v5527
        %v5975 = vpop.f32.mrf.mxu0
        %v5976 = vadd.f32 0.0, %v5975
        %v5977 = vpop.f32.mrf.mxu0
        %v5978 = vadd.f32 0.0, %v5977
        %5979 = vmatmul.bf16.gmra.mxu0 %v5529
        %v5980 = vpop.f32.mrf.mxu0
        %v5981 = vadd.f32 0.0, %v5980
        %v5982 = vpop.f32.mrf.mxu0
        %v5983 = vadd.f32 0.0, %v5982
        %5984 = vmatmul.bf16.gmra.mxu0 %v5531
        %v5985 = vpop.f32.mrf.mxu0
        %v5986 = vadd.f32 0.0, %v5985
        %v5987 = vpop.f32.mrf.mxu0
        %v5988 = vadd.f32 0.0, %v5987
        %5989 = vmatmul.bf16.gmra.mxu0 %v5533
        %v5990 = vpop.f32.mrf.mxu0
        %v5991 = vadd.f32 0.0, %v5990
        %v5992 = vpop.f32.mrf.mxu0
        %v5993 = vadd.f32 0.0, %v5992
        %5994 = vdwg.mxu0
        %5995 = vmatpush.bf16.msra.mxu0 %v5695
        %5996 = vmatpush.bf16.msra.mxu0 %v5693
        %5997 = vmatpush.bf16.msra.mxu0 %v5691
        %5998 = vmatpush.bf16.msra.mxu0 %v5689
        %5999 = vmatpush.bf16.msra.mxu0 %v5687
        %6000 = vmatpush.bf16.msra.mxu0 %v5685
        %6001 = vmatpush.bf16.msra.mxu0 %v5683
        %6002 = vmatpush.bf16.msra.mxu0 %v5681
        %6003 = vmatmul.bf16.gmra.mxu0 %v5504
        %v6004 = vpop.f32.mrf.mxu0
        %v6005 = vadd.f32 %v5916, %v6004
        %v6006 = vpop.f32.mrf.mxu0
        %v6007 = vadd.f32 %v5918, %v6006
        %6008 = vmatmul.bf16.gmra.mxu0 %v5506
        %v6009 = vpop.f32.mrf.mxu0
        %v6010 = vadd.f32 %v5921, %v6009
        %v6011 = vpop.f32.mrf.mxu0
        %v6012 = vadd.f32 %v5923, %v6011
        %6013 = vmatmul.bf16.gmra.mxu0 %v5508
        %v6014 = vpop.f32.mrf.mxu0
        %v6015 = vadd.f32 %v5926, %v6014
        %v6016 = vpop.f32.mrf.mxu0
        %v6017 = vadd.f32 %v5928, %v6016
        %6018 = vmatmul.bf16.gmra.mxu0 %v5510
        %v6019 = vpop.f32.mrf.mxu0
        %v6020 = vadd.f32 %v5931, %v6019
        %v6021 = vpop.f32.mrf.mxu0
        %v6022 = vadd.f32 %v5933, %v6021
        %6023 = vmatmul.bf16.gmra.mxu0 %v5512
        %v6024 = vpop.f32.mrf.mxu0
        %v6025 = vadd.f32 %v5936, %v6024
        %v6026 = vpop.f32.mrf.mxu0
        %v6027 = vadd.f32 %v5938, %v6026
        %6028 = vmatmul.bf16.gmra.mxu0 %v5514
        %v6029 = vpop.f32.mrf.mxu0
        %v6030 = vadd.f32 %v5941, %v6029
        %v6031 = vpop.f32.mrf.mxu0
        %v6032 = vadd.f32 %v5943, %v6031
        %6033 = vmatmul.bf16.gmra.mxu0 %v5516
        %v6034 = vpop.f32.mrf.mxu0
        %v6035 = vadd.f32 %v5946, %v6034
        %v6036 = vpop.f32.mrf.mxu0
        %v6037 = vadd.f32 %v5948, %v6036
        %6038 = vmatmul.bf16.gmra.mxu0 %v5518
        %v6039 = vpop.f32.mrf.mxu0
        %v6040 = vadd.f32 %v5951, %v6039
        %v6041 = vpop.f32.mrf.mxu0
        %v6042 = vadd.f32 %v5953, %v6041
        %6043 = vmatmul.bf16.gmra.mxu0 %v5520
        %v6044 = vpop.f32.mrf.mxu0
        %v6045 = vadd.f32 %v5956, %v6044
        %v6046 = vpop.f32.mrf.mxu0
        %v6047 = vadd.f32 %v5958, %v6046
        %6048 = vmatmul.bf16.gmra.mxu0 %v5522
        %v6049 = vpop.f32.mrf.mxu0
        %v6050 = vadd.f32 %v5961, %v6049
        %v6051 = vpop.f32.mrf.mxu0
        %v6052 = vadd.f32 %v5963, %v6051
        %6053 = vmatmul.bf16.gmra.mxu0 %v5524
        %v6054 = vpop.f32.mrf.mxu0
        %v6055 = vadd.f32 %v5966, %v6054
        %v6056 = vpop.f32.mrf.mxu0
        %v6057 = vadd.f32 %v5968, %v6056
        %6058 = vmatmul.bf16.gmra.mxu0 %v5526
        %v6059 = vpop.f32.mrf.mxu0
        %v6060 = vadd.f32 %v5971, %v6059
        %v6061 = vpop.f32.mrf.mxu0
        %v6062 = vadd.f32 %v5973, %v6061
        %6063 = vmatmul.bf16.gmra.mxu0 %v5528
        %v6064 = vpop.f32.mrf.mxu0
        %v6065 = vadd.f32 %v5976, %v6064
        %v6066 = vpop.f32.mrf.mxu0
        %v6067 = vadd.f32 %v5978, %v6066
        %6068 = vmatmul.bf16.gmra.mxu0 %v5530
        %v6069 = vpop.f32.mrf.mxu0
        %v6070 = vadd.f32 %v5981, %v6069
        %v6071 = vpop.f32.mrf.mxu0
        %v6072 = vadd.f32 %v5983, %v6071
        %6073 = vmatmul.bf16.gmra.mxu0 %v5532
        %v6074 = vpop.f32.mrf.mxu0
        %v6075 = vadd.f32 %v5986, %v6074
        %v6076 = vpop.f32.mrf.mxu0
        %v6077 = vadd.f32 %v5988, %v6076
        %6078 = vmatmul.bf16.gmra.mxu0 %v5534
        %v6079 = vpop.f32.mrf.mxu0
        %v6080 = vadd.f32 %v5991, %v6079
        %v6081 = vpop.f32.mrf.mxu0
        %v6082 = vadd.f32 %v5993, %v6081
        %6083 = vdwg.mxu0
        %v6084 = vpack.c.bf16 %v6005, %v5827
        %v6085 = vpack.c.bf16 %v6007, %v5829
        %v6086 = vpack.c.bf16 %v6010, %v5832
        %v6087 = vpack.c.bf16 %v6012, %v5834
        %v6088 = vpack.c.bf16 %v6015, %v5837
        %v6089 = vpack.c.bf16 %v6017, %v5839
        %v6090 = vpack.c.bf16 %v6020, %v5842
        %v6091 = vpack.c.bf16 %v6022, %v5844
        %v6092 = vpack.c.bf16 %v6025, %v5847
        %v6093 = vpack.c.bf16 %v6027, %v5849
        %v6094 = vpack.c.bf16 %v6030, %v5852
        %v6095 = vpack.c.bf16 %v6032, %v5854
        %v6096 = vpack.c.bf16 %v6035, %v5857
        %v6097 = vpack.c.bf16 %v6037, %v5859
        %v6098 = vpack.c.bf16 %v6040, %v5862
        %v6099 = vpack.c.bf16 %v6042, %v5864
        %v6100 = vpack.c.bf16 %v6045, %v5867
        %v6101 = vpack.c.bf16 %v6047, %v5869
        %v6102 = vpack.c.bf16 %v6050, %v5872
        %v6103 = vpack.c.bf16 %v6052, %v5874
        %v6104 = vpack.c.bf16 %v6055, %v5877
        %v6105 = vpack.c.bf16 %v6057, %v5879
        %v6106 = vpack.c.bf16 %v6060, %v5882
        %v6107 = vpack.c.bf16 %v6062, %v5884
        %v6108 = vpack.c.bf16 %v6065, %v5887
        %v6109 = vpack.c.bf16 %v6067, %v5889
        %v6110 = vpack.c.bf16 %v6070, %v5892
        %v6111 = vpack.c.bf16 %v6072, %v5894
        %v6112 = vpack.c.bf16 %v6075, %v5897
        %v6113 = vpack.c.bf16 %v6077, %v5899
        %v6114 = vpack.c.bf16 %v6080, %v5902
        %v6115 = vpack.c.bf16 %v6082, %v5904
        %s6116 = scalar_lea.vmem %s4, 10
        %v6117 = vld [vmem:[%s6116] sm:$0x3]
        %6119 = vst [vmem:[#allocation1] ss:$9 sm:$0xff] %v6117
        %v6120 = vld [vmem:[#allocation1] sm:$0xff]
        %v6121 = vld [vmem:[#allocation1 + $0x9] sm:$0xff]
        %v6122 = vpack.i.b16 %v6120, %v6120
        %v6124 = vperm.slane %v6122, 0
        %v6125 = vpack.i.b16 %v6121, %v6121
        %v6127 = vperm.slane %v6125, 0
        %v6128 = vunpack.c.l.bf16 %v6084
        %v6129 = vunpack.c.h.bf16 %v6084
        %v6130 = vunpack.c.l.bf16 %v6085
        %v6131 = vunpack.c.h.bf16 %v6085
        %v6132 = vunpack.c.l.bf16 %v6086
        %v6133 = vunpack.c.h.bf16 %v6086
        %v6134 = vunpack.c.l.bf16 %v6087
        %v6135 = vunpack.c.h.bf16 %v6087
        %v6136 = vunpack.c.l.bf16 %v6088
        %v6137 = vunpack.c.h.bf16 %v6088
        %v6138 = vunpack.c.l.bf16 %v6089
        %v6139 = vunpack.c.h.bf16 %v6089
        %v6140 = vunpack.c.l.bf16 %v6090
        %v6141 = vunpack.c.h.bf16 %v6090
        %v6142 = vunpack.c.l.bf16 %v6091
        %v6143 = vunpack.c.h.bf16 %v6091
        %v6144 = vunpack.c.l.bf16 %v6092
        %v6145 = vunpack.c.h.bf16 %v6092
        %v6146 = vunpack.c.l.bf16 %v6093
        %v6147 = vunpack.c.h.bf16 %v6093
        %v6148 = vunpack.c.l.bf16 %v6094
        %v6149 = vunpack.c.h.bf16 %v6094
        %v6150 = vunpack.c.l.bf16 %v6095
        %v6151 = vunpack.c.h.bf16 %v6095
        %v6152 = vunpack.c.l.bf16 %v6096
        %v6153 = vunpack.c.h.bf16 %v6096
        %v6154 = vunpack.c.l.bf16 %v6097
        %v6155 = vunpack.c.h.bf16 %v6097
        %v6156 = vunpack.c.l.bf16 %v6098
        %v6157 = vunpack.c.h.bf16 %v6098
        %v6158 = vunpack.c.l.bf16 %v6099
        %v6159 = vunpack.c.h.bf16 %v6099
        %v6160 = vunpack.c.l.bf16 %v6100
        %v6161 = vunpack.c.h.bf16 %v6100
        %v6162 = vunpack.c.l.bf16 %v6101
        %v6163 = vunpack.c.h.bf16 %v6101
        %v6164 = vunpack.c.l.bf16 %v6102
        %v6165 = vunpack.c.h.bf16 %v6102
        %v6166 = vunpack.c.l.bf16 %v6103
        %v6167 = vunpack.c.h.bf16 %v6103
        %v6168 = vunpack.c.l.bf16 %v6104
        %v6169 = vunpack.c.h.bf16 %v6104
        %v6170 = vunpack.c.l.bf16 %v6105
        %v6171 = vunpack.c.h.bf16 %v6105
        %v6172 = vunpack.c.l.bf16 %v6106
        %v6173 = vunpack.c.h.bf16 %v6106
        %v6174 = vunpack.c.l.bf16 %v6107
        %v6175 = vunpack.c.h.bf16 %v6107
        %v6176 = vunpack.c.l.bf16 %v6108
        %v6177 = vunpack.c.h.bf16 %v6108
        %v6178 = vunpack.c.l.bf16 %v6109
        %v6179 = vunpack.c.h.bf16 %v6109
        %v6180 = vunpack.c.l.bf16 %v6110
        %v6181 = vunpack.c.h.bf16 %v6110
        %v6182 = vunpack.c.l.bf16 %v6111
        %v6183 = vunpack.c.h.bf16 %v6111
        %v6184 = vunpack.c.l.bf16 %v6112
        %v6185 = vunpack.c.h.bf16 %v6112
        %v6186 = vunpack.c.l.bf16 %v6113
        %v6187 = vunpack.c.h.bf16 %v6113
        %v6188 = vunpack.c.l.bf16 %v6114
        %v6189 = vunpack.c.h.bf16 %v6114
        %v6190 = vunpack.c.l.bf16 %v6115
        %v6191 = vunpack.c.h.bf16 %v6115
        %v6192 = vunpack.c.l.bf16 %v6124
        %v6193 = vunpack.c.l.bf16 %v6127
        %v6194 = vadd.f32 %v6128, %v6192
        %v6195 = vadd.f32 %v6129, %v6193
        %v6196 = vadd.f32 %v6130, %v6192
        %v6197 = vadd.f32 %v6131, %v6193
        %v6198 = vadd.f32 %v6132, %v6192
        %v6199 = vadd.f32 %v6133, %v6193
        %v6200 = vadd.f32 %v6134, %v6192
        %v6201 = vadd.f32 %v6135, %v6193
        %v6202 = vadd.f32 %v6136, %v6192
        %v6203 = vadd.f32 %v6137, %v6193
        %v6204 = vadd.f32 %v6138, %v6192
        %v6205 = vadd.f32 %v6139, %v6193
        %v6206 = vadd.f32 %v6140, %v6192
        %v6207 = vadd.f32 %v6141, %v6193
        %v6208 = vadd.f32 %v6142, %v6192
        %v6209 = vadd.f32 %v6143, %v6193
        %v6210 = vadd.f32 %v6144, %v6192
        %v6211 = vadd.f32 %v6145, %v6193
        %v6212 = vadd.f32 %v6146, %v6192
        %v6213 = vadd.f32 %v6147, %v6193
        %v6214 = vadd.f32 %v6148, %v6192
        %v6215 = vadd.f32 %v6149, %v6193
        %v6216 = vadd.f32 %v6150, %v6192
        %v6217 = vadd.f32 %v6151, %v6193
        %v6218 = vadd.f32 %v6152, %v6192
        %v6219 = vadd.f32 %v6153, %v6193
        %v6220 = vadd.f32 %v6154, %v6192
        %v6221 = vadd.f32 %v6155, %v6193
        %v6222 = vadd.f32 %v6156, %v6192
        %v6223 = vadd.f32 %v6157, %v6193
        %v6224 = vadd.f32 %v6158, %v6192
        %v6225 = vadd.f32 %v6159, %v6193
        %v6226 = vadd.f32 %v6160, %v6192
        %v6227 = vadd.f32 %v6161, %v6193
        %v6228 = vadd.f32 %v6162, %v6192
        %v6229 = vadd.f32 %v6163, %v6193
        %v6230 = vadd.f32 %v6164, %v6192
        %v6231 = vadd.f32 %v6165, %v6193
        %v6232 = vadd.f32 %v6166, %v6192
        %v6233 = vadd.f32 %v6167, %v6193
        %v6234 = vadd.f32 %v6168, %v6192
        %v6235 = vadd.f32 %v6169, %v6193
        %v6236 = vadd.f32 %v6170, %v6192
        %v6237 = vadd.f32 %v6171, %v6193
        %v6238 = vadd.f32 %v6172, %v6192
        %v6239 = vadd.f32 %v6173, %v6193
        %v6240 = vadd.f32 %v6174, %v6192
        %v6241 = vadd.f32 %v6175, %v6193
        %v6242 = vadd.f32 %v6176, %v6192
        %v6243 = vadd.f32 %v6177, %v6193
        %v6244 = vadd.f32 %v6178, %v6192
        %v6245 = vadd.f32 %v6179, %v6193
        %v6246 = vadd.f32 %v6180, %v6192
        %v6247 = vadd.f32 %v6181, %v6193
        %v6248 = vadd.f32 %v6182, %v6192
        %v6249 = vadd.f32 %v6183, %v6193
        %v6250 = vadd.f32 %v6184, %v6192
        %v6251 = vadd.f32 %v6185, %v6193
        %v6252 = vadd.f32 %v6186, %v6192
        %v6253 = vadd.f32 %v6187, %v6193
        %v6254 = vadd.f32 %v6188, %v6192
        %v6255 = vadd.f32 %v6189, %v6193
        %v6256 = vadd.f32 %v6190, %v6192
        %v6257 = vadd.f32 %v6191, %v6193
        %v6258 = vpack.c.bf16 %v6195, %v6194
        %v6259 = vpack.c.bf16 %v6197, %v6196
        %v6260 = vpack.c.bf16 %v6199, %v6198
        %v6261 = vpack.c.bf16 %v6201, %v6200
        %v6262 = vpack.c.bf16 %v6203, %v6202
        %v6263 = vpack.c.bf16 %v6205, %v6204
        %v6264 = vpack.c.bf16 %v6207, %v6206
        %v6265 = vpack.c.bf16 %v6209, %v6208
        %v6266 = vpack.c.bf16 %v6211, %v6210
        %v6267 = vpack.c.bf16 %v6213, %v6212
        %v6268 = vpack.c.bf16 %v6215, %v6214
        %v6269 = vpack.c.bf16 %v6217, %v6216
        %v6270 = vpack.c.bf16 %v6219, %v6218
        %v6271 = vpack.c.bf16 %v6221, %v6220
        %v6272 = vpack.c.bf16 %v6223, %v6222
        %v6273 = vpack.c.bf16 %v6225, %v6224
        %v6274 = vpack.c.bf16 %v6227, %v6226
        %v6275 = vpack.c.bf16 %v6229, %v6228
        %v6276 = vpack.c.bf16 %v6231, %v6230
        %v6277 = vpack.c.bf16 %v6233, %v6232
        %v6278 = vpack.c.bf16 %v6235, %v6234
        %v6279 = vpack.c.bf16 %v6237, %v6236
        %v6280 = vpack.c.bf16 %v6239, %v6238
        %v6281 = vpack.c.bf16 %v6241, %v6240
        %v6282 = vpack.c.bf16 %v6243, %v6242
        %v6283 = vpack.c.bf16 %v6245, %v6244
        %v6284 = vpack.c.bf16 %v6247, %v6246
        %v6285 = vpack.c.bf16 %v6249, %v6248
        %v6286 = vpack.c.bf16 %v6251, %v6250
        %v6287 = vpack.c.bf16 %v6253, %v6252
        %v6288 = vpack.c.bf16 %v6255, %v6254
        %v6289 = vpack.c.bf16 %v6257, %v6256
        %v6290 = vunpack.c.l.bf16 %v6258
        %v6291 = vunpack.c.h.bf16 %v6258
        %v6292 = vunpack.c.l.bf16 %v6259
        %v6293 = vunpack.c.h.bf16 %v6259
        %v6294 = vunpack.c.l.bf16 %v6260
        %v6295 = vunpack.c.h.bf16 %v6260
        %v6296 = vunpack.c.l.bf16 %v6261
        %v6297 = vunpack.c.h.bf16 %v6261
        %v6298 = vunpack.c.l.bf16 %v6262
        %v6299 = vunpack.c.h.bf16 %v6262
        %v6300 = vunpack.c.l.bf16 %v6263
        %v6301 = vunpack.c.h.bf16 %v6263
        %v6302 = vunpack.c.l.bf16 %v6264
        %v6303 = vunpack.c.h.bf16 %v6264
        %v6304 = vunpack.c.l.bf16 %v6265
        %v6305 = vunpack.c.h.bf16 %v6265
        %v6306 = vunpack.c.l.bf16 %v6266
        %v6307 = vunpack.c.h.bf16 %v6266
        %v6308 = vunpack.c.l.bf16 %v6267
        %v6309 = vunpack.c.h.bf16 %v6267
        %v6310 = vunpack.c.l.bf16 %v6268
        %v6311 = vunpack.c.h.bf16 %v6268
        %v6312 = vunpack.c.l.bf16 %v6269
        %v6313 = vunpack.c.h.bf16 %v6269
        %v6314 = vunpack.c.l.bf16 %v6270
        %v6315 = vunpack.c.h.bf16 %v6270
        %v6316 = vunpack.c.l.bf16 %v6271
        %v6317 = vunpack.c.h.bf16 %v6271
        %v6318 = vunpack.c.l.bf16 %v6272
        %v6319 = vunpack.c.h.bf16 %v6272
        %v6320 = vunpack.c.l.bf16 %v6273
        %v6321 = vunpack.c.h.bf16 %v6273
        %v6322 = vunpack.c.l.bf16 %v6274
        %v6323 = vunpack.c.h.bf16 %v6274
        %v6324 = vunpack.c.l.bf16 %v6275
        %v6325 = vunpack.c.h.bf16 %v6275
        %v6326 = vunpack.c.l.bf16 %v6276
        %v6327 = vunpack.c.h.bf16 %v6276
        %v6328 = vunpack.c.l.bf16 %v6277
        %v6329 = vunpack.c.h.bf16 %v6277
        %v6330 = vunpack.c.l.bf16 %v6278
        %v6331 = vunpack.c.h.bf16 %v6278
        %v6332 = vunpack.c.l.bf16 %v6279
        %v6333 = vunpack.c.h.bf16 %v6279
        %v6334 = vunpack.c.l.bf16 %v6280
        %v6335 = vunpack.c.h.bf16 %v6280
        %v6336 = vunpack.c.l.bf16 %v6281
        %v6337 = vunpack.c.h.bf16 %v6281
        %v6338 = vunpack.c.l.bf16 %v6282
        %v6339 = vunpack.c.h.bf16 %v6282
        %v6340 = vunpack.c.l.bf16 %v6283
        %v6341 = vunpack.c.h.bf16 %v6283
        %v6342 = vunpack.c.l.bf16 %v6284
        %v6343 = vunpack.c.h.bf16 %v6284
        %v6344 = vunpack.c.l.bf16 %v6285
        %v6345 = vunpack.c.h.bf16 %v6285
        %v6346 = vunpack.c.l.bf16 %v6286
        %v6347 = vunpack.c.h.bf16 %v6286
        %v6348 = vunpack.c.l.bf16 %v6287
        %v6349 = vunpack.c.h.bf16 %v6287
        %v6350 = vunpack.c.l.bf16 %v6288
        %v6351 = vunpack.c.h.bf16 %v6288
        %v6352 = vunpack.c.l.bf16 %v6289
        %v6353 = vunpack.c.h.bf16 %v6289
        %v6354 = vmax.f32 %v6290, 0.0
        %v6355 = vmax.f32 %v6291, 0.0
        %v6356 = vmax.f32 %v6292, 0.0
        %v6357 = vmax.f32 %v6293, 0.0
        %v6358 = vmax.f32 %v6294, 0.0
        %v6359 = vmax.f32 %v6295, 0.0
        %v6360 = vmax.f32 %v6296, 0.0
        %v6361 = vmax.f32 %v6297, 0.0
        %v6362 = vmax.f32 %v6298, 0.0
        %v6363 = vmax.f32 %v6299, 0.0
        %v6364 = vmax.f32 %v6300, 0.0
        %v6365 = vmax.f32 %v6301, 0.0
        %v6366 = vmax.f32 %v6302, 0.0
        %v6367 = vmax.f32 %v6303, 0.0
        %v6368 = vmax.f32 %v6304, 0.0
        %v6369 = vmax.f32 %v6305, 0.0
        %v6370 = vmax.f32 %v6306, 0.0
        %v6371 = vmax.f32 %v6307, 0.0
        %v6372 = vmax.f32 %v6308, 0.0
        %v6373 = vmax.f32 %v6309, 0.0
        %v6374 = vmax.f32 %v6310, 0.0
        %v6375 = vmax.f32 %v6311, 0.0
        %v6376 = vmax.f32 %v6312, 0.0
        %v6377 = vmax.f32 %v6313, 0.0
        %v6378 = vmax.f32 %v6314, 0.0
        %v6379 = vmax.f32 %v6315, 0.0
        %v6380 = vmax.f32 %v6316, 0.0
        %v6381 = vmax.f32 %v6317, 0.0
        %v6382 = vmax.f32 %v6318, 0.0
        %v6383 = vmax.f32 %v6319, 0.0
        %v6384 = vmax.f32 %v6320, 0.0
        %v6385 = vmax.f32 %v6321, 0.0
        %v6386 = vmax.f32 %v6322, 0.0
        %v6387 = vmax.f32 %v6323, 0.0
        %v6388 = vmax.f32 %v6324, 0.0
        %v6389 = vmax.f32 %v6325, 0.0
        %v6390 = vmax.f32 %v6326, 0.0
        %v6391 = vmax.f32 %v6327, 0.0
        %v6392 = vmax.f32 %v6328, 0.0
        %v6393 = vmax.f32 %v6329, 0.0
        %v6394 = vmax.f32 %v6330, 0.0
        %v6395 = vmax.f32 %v6331, 0.0
        %v6396 = vmax.f32 %v6332, 0.0
        %v6397 = vmax.f32 %v6333, 0.0
        %v6398 = vmax.f32 %v6334, 0.0
        %v6399 = vmax.f32 %v6335, 0.0
        %v6400 = vmax.f32 %v6336, 0.0
        %v6401 = vmax.f32 %v6337, 0.0
        %v6402 = vmax.f32 %v6338, 0.0
        %v6403 = vmax.f32 %v6339, 0.0
        %v6404 = vmax.f32 %v6340, 0.0
        %v6405 = vmax.f32 %v6341, 0.0
        %v6406 = vmax.f32 %v6342, 0.0
        %v6407 = vmax.f32 %v6343, 0.0
        %v6408 = vmax.f32 %v6344, 0.0
        %v6409 = vmax.f32 %v6345, 0.0
        %v6410 = vmax.f32 %v6346, 0.0
        %v6411 = vmax.f32 %v6347, 0.0
        %v6412 = vmax.f32 %v6348, 0.0
        %v6413 = vmax.f32 %v6349, 0.0
        %v6414 = vmax.f32 %v6350, 0.0
        %v6415 = vmax.f32 %v6351, 0.0
        %v6416 = vmax.f32 %v6352, 0.0
        %v6417 = vmax.f32 %v6353, 0.0
        %v6418 = vpack.c.bf16 %v6356, %v6354
        %v6419 = vpack.c.bf16 %v6357, %v6355
        %v6420 = vpack.c.bf16 %v6360, %v6358
        %v6421 = vpack.c.bf16 %v6361, %v6359
        %v6422 = vpack.c.bf16 %v6364, %v6362
        %v6423 = vpack.c.bf16 %v6365, %v6363
        %v6424 = vpack.c.bf16 %v6368, %v6366
        %v6425 = vpack.c.bf16 %v6369, %v6367
        %v6426 = vpack.c.bf16 %v6372, %v6370
        %v6427 = vpack.c.bf16 %v6373, %v6371
        %v6428 = vpack.c.bf16 %v6376, %v6374
        %v6429 = vpack.c.bf16 %v6377, %v6375
        %v6430 = vpack.c.bf16 %v6380, %v6378
        %v6431 = vpack.c.bf16 %v6381, %v6379
        %v6432 = vpack.c.bf16 %v6384, %v6382
        %v6433 = vpack.c.bf16 %v6385, %v6383
        %v6434 = vpack.c.bf16 %v6388, %v6386
        %v6435 = vpack.c.bf16 %v6389, %v6387
        %v6436 = vpack.c.bf16 %v6392, %v6390
        %v6437 = vpack.c.bf16 %v6393, %v6391
        %v6438 = vpack.c.bf16 %v6396, %v6394
        %v6439 = vpack.c.bf16 %v6397, %v6395
        %v6440 = vpack.c.bf16 %v6400, %v6398
        %v6441 = vpack.c.bf16 %v6401, %v6399
        %v6442 = vpack.c.bf16 %v6404, %v6402
        %v6443 = vpack.c.bf16 %v6405, %v6403
        %v6444 = vpack.c.bf16 %v6408, %v6406
        %v6445 = vpack.c.bf16 %v6409, %v6407
        %v6446 = vpack.c.bf16 %v6412, %v6410
        %v6447 = vpack.c.bf16 %v6413, %v6411
        %v6448 = vpack.c.bf16 %v6416, %v6414
        %v6449 = vpack.c.bf16 %v6417, %v6415
        %s6450 = scalar_lea.vmem [#allocation2], 1536
        %v6451 = vld [vmem:[%s6450] sm:$0xff]
        %v6452 = vld [vmem:[%s6450 + $0x8] sm:$0xff]
        %v6453 = vld [vmem:[%s6450 + $0x10] sm:$0xff]
        %v6454 = vld [vmem:[%s6450 + $0x18] sm:$0xff]
        %v6455 = vld [vmem:[%s6450 + $0x20] sm:$0xff]
        %v6456 = vld [vmem:[%s6450 + $0x28] sm:$0xff]
        %v6457 = vld [vmem:[%s6450 + $0x30] sm:$0xff]
        %v6458 = vld [vmem:[%s6450 + $0x38] sm:$0xff]
        %v6459 = vld [vmem:[%s6450 + $0x40] sm:$0xff]
        %v6460 = vld [vmem:[%s6450 + $0x48] sm:$0xff]
        %v6461 = vld [vmem:[%s6450 + $0x50] sm:$0xff]
        %v6462 = vld [vmem:[%s6450 + $0x58] sm:$0xff]
        %v6463 = vld [vmem:[%s6450 + $0x60] sm:$0xff]
        %v6464 = vld [vmem:[%s6450 + $0x68] sm:$0xff]
        %v6465 = vld [vmem:[%s6450 + $0x70] sm:$0xff]
        %v6466 = vld [vmem:[%s6450 + $0x78] sm:$0xff]
        %v6467 = vld [vmem:[%s6450 + $0x80] sm:$0xff]
        %v6468 = vld [vmem:[%s6450 + $0x88] sm:$0xff]
        %v6469 = vld [vmem:[%s6450 + $0x90] sm:$0xff]
        %v6470 = vld [vmem:[%s6450 + $0x98] sm:$0xff]
        %v6471 = vld [vmem:[%s6450 + $0xa0] sm:$0xff]
        %v6472 = vld [vmem:[%s6450 + $0xa8] sm:$0xff]
        %v6473 = vld [vmem:[%s6450 + $0xb0] sm:$0xff]
        %v6474 = vld [vmem:[%s6450 + $0xb8] sm:$0xff]
        %v6475 = vld [vmem:[%s6450 + $0xc0] sm:$0xff]
        %v6476 = vld [vmem:[%s6450 + $0xc8] sm:$0xff]
        %v6477 = vld [vmem:[%s6450 + $0xd0] sm:$0xff]
        %v6478 = vld [vmem:[%s6450 + $0xd8] sm:$0xff]
        %v6479 = vld [vmem:[%s6450 + $0xe0] sm:$0xff]
        %v6480 = vld [vmem:[%s6450 + $0xe8] sm:$0xff]
        %v6481 = vld [vmem:[%s6450 + $0xf0] sm:$0xff]
        %v6482 = vld [vmem:[%s6450 + $0xf8] sm:$0xff]
        %v6515 = vunpack.c.l.b16 %v6451
        %v6516 = vunpack.c.h.b16 %v6451
        %v6517 = vunpack.c.l.b16 %v6452
        %v6518 = vunpack.c.h.b16 %v6452
        %v6519 = vunpack.c.l.b16 %v6453
        %v6520 = vunpack.c.h.b16 %v6453
        %v6521 = vunpack.c.l.b16 %v6454
        %v6522 = vunpack.c.h.b16 %v6454
        %v6523 = vunpack.c.l.b16 %v6455
        %v6524 = vunpack.c.h.b16 %v6455
        %v6525 = vunpack.c.l.b16 %v6456
        %v6526 = vunpack.c.h.b16 %v6456
        %v6527 = vunpack.c.l.b16 %v6457
        %v6528 = vunpack.c.h.b16 %v6457
        %v6529 = vunpack.c.l.b16 %v6458
        %v6530 = vunpack.c.h.b16 %v6458
        %v6531 = vunpack.c.l.b16 %v6459
        %v6532 = vunpack.c.h.b16 %v6459
        %v6533 = vunpack.c.l.b16 %v6460
        %v6534 = vunpack.c.h.b16 %v6460
        %v6535 = vunpack.c.l.b16 %v6461
        %v6536 = vunpack.c.h.b16 %v6461
        %v6537 = vunpack.c.l.b16 %v6462
        %v6538 = vunpack.c.h.b16 %v6462
        %v6539 = vunpack.c.l.b16 %v6463
        %v6540 = vunpack.c.h.b16 %v6463
        %v6541 = vunpack.c.l.b16 %v6464
        %v6542 = vunpack.c.h.b16 %v6464
        %v6543 = vunpack.c.l.b16 %v6465
        %v6544 = vunpack.c.h.b16 %v6465
        %v6545 = vunpack.c.l.b16 %v6466
        %v6546 = vunpack.c.h.b16 %v6466
        %v6547 = vunpack.c.l.b16 %v6467
        %v6548 = vunpack.c.h.b16 %v6467
        %v6549 = vunpack.c.l.b16 %v6468
        %v6550 = vunpack.c.h.b16 %v6468
        %v6551 = vunpack.c.l.b16 %v6469
        %v6552 = vunpack.c.h.b16 %v6469
        %v6553 = vunpack.c.l.b16 %v6470
        %v6554 = vunpack.c.h.b16 %v6470
        %v6555 = vunpack.c.l.b16 %v6471
        %v6556 = vunpack.c.h.b16 %v6471
        %v6557 = vunpack.c.l.b16 %v6472
        %v6558 = vunpack.c.h.b16 %v6472
        %v6559 = vunpack.c.l.b16 %v6473
        %v6560 = vunpack.c.h.b16 %v6473
        %v6561 = vunpack.c.l.b16 %v6474
        %v6562 = vunpack.c.h.b16 %v6474
        %v6563 = vunpack.c.l.b16 %v6475
        %v6564 = vunpack.c.h.b16 %v6475
        %v6565 = vunpack.c.l.b16 %v6476
        %v6566 = vunpack.c.h.b16 %v6476
        %v6567 = vunpack.c.l.b16 %v6477
        %v6568 = vunpack.c.h.b16 %v6477
        %v6569 = vunpack.c.l.b16 %v6478
        %v6570 = vunpack.c.h.b16 %v6478
        %v6571 = vunpack.c.l.b16 %v6479
        %v6572 = vunpack.c.h.b16 %v6479
        %v6573 = vunpack.c.l.b16 %v6480
        %v6574 = vunpack.c.h.b16 %v6480
        %v6575 = vunpack.c.l.b16 %v6481
        %v6576 = vunpack.c.h.b16 %v6481
        %v6577 = vunpack.c.l.b16 %v6482
        %v6578 = vunpack.c.h.b16 %v6482
        %v6579 = vpack.c.b16 %v6517, %v6515
        %v6580 = vpack.c.b16 %v6518, %v6516
        %v6581 = vpack.c.b16 %v6521, %v6519
        %v6582 = vpack.c.b16 %v6522, %v6520
        %v6583 = vpack.c.b16 %v6525, %v6523
        %v6584 = vpack.c.b16 %v6526, %v6524
        %v6585 = vpack.c.b16 %v6529, %v6527
        %v6586 = vpack.c.b16 %v6530, %v6528
        %v6587 = vpack.c.b16 %v6533, %v6531
        %v6588 = vpack.c.b16 %v6534, %v6532
        %v6589 = vpack.c.b16 %v6537, %v6535
        %v6590 = vpack.c.b16 %v6538, %v6536
        %v6591 = vpack.c.b16 %v6541, %v6539
        %v6592 = vpack.c.b16 %v6542, %v6540
        %v6593 = vpack.c.b16 %v6545, %v6543
        %v6594 = vpack.c.b16 %v6546, %v6544
        %v6595 = vpack.c.b16 %v6549, %v6547
        %v6596 = vpack.c.b16 %v6550, %v6548
        %v6597 = vpack.c.b16 %v6553, %v6551
        %v6598 = vpack.c.b16 %v6554, %v6552
        %v6599 = vpack.c.b16 %v6557, %v6555
        %v6600 = vpack.c.b16 %v6558, %v6556
        %v6601 = vpack.c.b16 %v6561, %v6559
        %v6602 = vpack.c.b16 %v6562, %v6560
        %v6603 = vpack.c.b16 %v6565, %v6563
        %v6604 = vpack.c.b16 %v6566, %v6564
        %v6605 = vpack.c.b16 %v6569, %v6567
        %v6606 = vpack.c.b16 %v6570, %v6568
        %v6607 = vpack.c.b16 %v6573, %v6571
        %v6608 = vpack.c.b16 %v6574, %v6572
        %v6609 = vpack.c.b16 %v6577, %v6575
        %v6610 = vpack.c.b16 %v6578, %v6576
        %6643 = vmatpush.bf16.msra.mxu0 %v6593
        %6644 = vmatpush.bf16.msra.mxu0 %v6591
        %6645 = vmatpush.bf16.msra.mxu0 %v6589
        %6646 = vmatpush.bf16.msra.mxu0 %v6587
        %6647 = vmatpush.bf16.msra.mxu0 %v6585
        %6648 = vmatpush.bf16.msra.mxu0 %v6583
        %6649 = vmatpush.bf16.msra.mxu0 %v6581
        %6650 = vmatpush.bf16.msra.mxu0 %v6579
        %6651 = vmatmul.bf16.gmra.mxu0 %v6418
        %v6652 = vpop.f32.mrf.mxu0
        %v6653 = vadd.f32 0.0, %v6652
        %v6654 = vpop.f32.mrf.mxu0
        %v6655 = vadd.f32 0.0, %v6654
        %6656 = vmatmul.bf16.gmra.mxu0 %v6420
        %v6657 = vpop.f32.mrf.mxu0
        %v6658 = vadd.f32 0.0, %v6657
        %v6659 = vpop.f32.mrf.mxu0
        %v6660 = vadd.f32 0.0, %v6659
        %6661 = vmatmul.bf16.gmra.mxu0 %v6422
        %v6662 = vpop.f32.mrf.mxu0
        %v6663 = vadd.f32 0.0, %v6662
        %v6664 = vpop.f32.mrf.mxu0
        %v6665 = vadd.f32 0.0, %v6664
        %6666 = vmatmul.bf16.gmra.mxu0 %v6424
        %v6667 = vpop.f32.mrf.mxu0
        %v6668 = vadd.f32 0.0, %v6667
        %v6669 = vpop.f32.mrf.mxu0
        %v6670 = vadd.f32 0.0, %v6669
        %6671 = vmatmul.bf16.gmra.mxu0 %v6426
        %v6672 = vpop.f32.mrf.mxu0
        %v6673 = vadd.f32 0.0, %v6672
        %v6674 = vpop.f32.mrf.mxu0
        %v6675 = vadd.f32 0.0, %v6674
        %6676 = vmatmul.bf16.gmra.mxu0 %v6428
        %v6677 = vpop.f32.mrf.mxu0
        %v6678 = vadd.f32 0.0, %v6677
        %v6679 = vpop.f32.mrf.mxu0
        %v6680 = vadd.f32 0.0, %v6679
        %6681 = vmatmul.bf16.gmra.mxu0 %v6430
        %v6682 = vpop.f32.mrf.mxu0
        %v6683 = vadd.f32 0.0, %v6682
        %v6684 = vpop.f32.mrf.mxu0
        %v6685 = vadd.f32 0.0, %v6684
        %6686 = vmatmul.bf16.gmra.mxu0 %v6432
        %v6687 = vpop.f32.mrf.mxu0
        %v6688 = vadd.f32 0.0, %v6687
        %v6689 = vpop.f32.mrf.mxu0
        %v6690 = vadd.f32 0.0, %v6689
        %6691 = vmatmul.bf16.gmra.mxu0 %v6434
        %v6692 = vpop.f32.mrf.mxu0
        %v6693 = vadd.f32 0.0, %v6692
        %v6694 = vpop.f32.mrf.mxu0
        %v6695 = vadd.f32 0.0, %v6694
        %6696 = vmatmul.bf16.gmra.mxu0 %v6436
        %v6697 = vpop.f32.mrf.mxu0
        %v6698 = vadd.f32 0.0, %v6697
        %v6699 = vpop.f32.mrf.mxu0
        %v6700 = vadd.f32 0.0, %v6699
        %6701 = vmatmul.bf16.gmra.mxu0 %v6438
        %v6702 = vpop.f32.mrf.mxu0
        %v6703 = vadd.f32 0.0, %v6702
        %v6704 = vpop.f32.mrf.mxu0
        %v6705 = vadd.f32 0.0, %v6704
        %6706 = vmatmul.bf16.gmra.mxu0 %v6440
        %v6707 = vpop.f32.mrf.mxu0
        %v6708 = vadd.f32 0.0, %v6707
        %v6709 = vpop.f32.mrf.mxu0
        %v6710 = vadd.f32 0.0, %v6709
        %6711 = vmatmul.bf16.gmra.mxu0 %v6442
        %v6712 = vpop.f32.mrf.mxu0
        %v6713 = vadd.f32 0.0, %v6712
        %v6714 = vpop.f32.mrf.mxu0
        %v6715 = vadd.f32 0.0, %v6714
        %6716 = vmatmul.bf16.gmra.mxu0 %v6444
        %v6717 = vpop.f32.mrf.mxu0
        %v6718 = vadd.f32 0.0, %v6717
        %v6719 = vpop.f32.mrf.mxu0
        %v6720 = vadd.f32 0.0, %v6719
        %6721 = vmatmul.bf16.gmra.mxu0 %v6446
        %v6722 = vpop.f32.mrf.mxu0
        %v6723 = vadd.f32 0.0, %v6722
        %v6724 = vpop.f32.mrf.mxu0
        %v6725 = vadd.f32 0.0, %v6724
        %6726 = vmatmul.bf16.gmra.mxu0 %v6448
        %v6727 = vpop.f32.mrf.mxu0
        %v6728 = vadd.f32 0.0, %v6727
        %v6729 = vpop.f32.mrf.mxu0
        %v6730 = vadd.f32 0.0, %v6729
        %6731 = vdwg.mxu0
        %6732 = vmatpush.bf16.msra.mxu0 %v6609
        %6733 = vmatpush.bf16.msra.mxu0 %v6607
        %6734 = vmatpush.bf16.msra.mxu0 %v6605
        %6735 = vmatpush.bf16.msra.mxu0 %v6603
        %6736 = vmatpush.bf16.msra.mxu0 %v6601
        %6737 = vmatpush.bf16.msra.mxu0 %v6599
        %6738 = vmatpush.bf16.msra.mxu0 %v6597
        %6739 = vmatpush.bf16.msra.mxu0 %v6595
        %6740 = vmatmul.bf16.gmra.mxu0 %v6419
        %v6741 = vpop.f32.mrf.mxu0
        %v6742 = vadd.f32 %v6653, %v6741
        %v6743 = vpop.f32.mrf.mxu0
        %v6744 = vadd.f32 %v6655, %v6743
        %6745 = vmatmul.bf16.gmra.mxu0 %v6421
        %v6746 = vpop.f32.mrf.mxu0
        %v6747 = vadd.f32 %v6658, %v6746
        %v6748 = vpop.f32.mrf.mxu0
        %v6749 = vadd.f32 %v6660, %v6748
        %6750 = vmatmul.bf16.gmra.mxu0 %v6423
        %v6751 = vpop.f32.mrf.mxu0
        %v6752 = vadd.f32 %v6663, %v6751
        %v6753 = vpop.f32.mrf.mxu0
        %v6754 = vadd.f32 %v6665, %v6753
        %6755 = vmatmul.bf16.gmra.mxu0 %v6425
        %v6756 = vpop.f32.mrf.mxu0
        %v6757 = vadd.f32 %v6668, %v6756
        %v6758 = vpop.f32.mrf.mxu0
        %v6759 = vadd.f32 %v6670, %v6758
        %6760 = vmatmul.bf16.gmra.mxu0 %v6427
        %v6761 = vpop.f32.mrf.mxu0
        %v6762 = vadd.f32 %v6673, %v6761
        %v6763 = vpop.f32.mrf.mxu0
        %v6764 = vadd.f32 %v6675, %v6763
        %6765 = vmatmul.bf16.gmra.mxu0 %v6429
        %v6766 = vpop.f32.mrf.mxu0
        %v6767 = vadd.f32 %v6678, %v6766
        %v6768 = vpop.f32.mrf.mxu0
        %v6769 = vadd.f32 %v6680, %v6768
        %6770 = vmatmul.bf16.gmra.mxu0 %v6431
        %v6771 = vpop.f32.mrf.mxu0
        %v6772 = vadd.f32 %v6683, %v6771
        %v6773 = vpop.f32.mrf.mxu0
        %v6774 = vadd.f32 %v6685, %v6773
        %6775 = vmatmul.bf16.gmra.mxu0 %v6433
        %v6776 = vpop.f32.mrf.mxu0
        %v6777 = vadd.f32 %v6688, %v6776
        %v6778 = vpop.f32.mrf.mxu0
        %v6779 = vadd.f32 %v6690, %v6778
        %6780 = vmatmul.bf16.gmra.mxu0 %v6435
        %v6781 = vpop.f32.mrf.mxu0
        %v6782 = vadd.f32 %v6693, %v6781
        %v6783 = vpop.f32.mrf.mxu0
        %v6784 = vadd.f32 %v6695, %v6783
        %6785 = vmatmul.bf16.gmra.mxu0 %v6437
        %v6786 = vpop.f32.mrf.mxu0
        %v6787 = vadd.f32 %v6698, %v6786
        %v6788 = vpop.f32.mrf.mxu0
        %v6789 = vadd.f32 %v6700, %v6788
        %6790 = vmatmul.bf16.gmra.mxu0 %v6439
        %v6791 = vpop.f32.mrf.mxu0
        %v6792 = vadd.f32 %v6703, %v6791
        %v6793 = vpop.f32.mrf.mxu0
        %v6794 = vadd.f32 %v6705, %v6793
        %6795 = vmatmul.bf16.gmra.mxu0 %v6441
        %v6796 = vpop.f32.mrf.mxu0
        %v6797 = vadd.f32 %v6708, %v6796
        %v6798 = vpop.f32.mrf.mxu0
        %v6799 = vadd.f32 %v6710, %v6798
        %6800 = vmatmul.bf16.gmra.mxu0 %v6443
        %v6801 = vpop.f32.mrf.mxu0
        %v6802 = vadd.f32 %v6713, %v6801
        %v6803 = vpop.f32.mrf.mxu0
        %v6804 = vadd.f32 %v6715, %v6803
        %6805 = vmatmul.bf16.gmra.mxu0 %v6445
        %v6806 = vpop.f32.mrf.mxu0
        %v6807 = vadd.f32 %v6718, %v6806
        %v6808 = vpop.f32.mrf.mxu0
        %v6809 = vadd.f32 %v6720, %v6808
        %6810 = vmatmul.bf16.gmra.mxu0 %v6447
        %v6811 = vpop.f32.mrf.mxu0
        %v6812 = vadd.f32 %v6723, %v6811
        %v6813 = vpop.f32.mrf.mxu0
        %v6814 = vadd.f32 %v6725, %v6813
        %6815 = vmatmul.bf16.gmra.mxu0 %v6449
        %v6816 = vpop.f32.mrf.mxu0
        %v6817 = vadd.f32 %v6728, %v6816
        %v6818 = vpop.f32.mrf.mxu0
        %v6819 = vadd.f32 %v6730, %v6818
        %6820 = vdwg.mxu0
        %6821 = vmatpush.bf16.msra.mxu0 %v6594
        %6822 = vmatpush.bf16.msra.mxu0 %v6592
        %6823 = vmatpush.bf16.msra.mxu0 %v6590
        %6824 = vmatpush.bf16.msra.mxu0 %v6588
        %6825 = vmatpush.bf16.msra.mxu0 %v6586
        %6826 = vmatpush.bf16.msra.mxu0 %v6584
        %6827 = vmatpush.bf16.msra.mxu0 %v6582
        %6828 = vmatpush.bf16.msra.mxu0 %v6580
        %6829 = vmatmul.bf16.gmra.mxu0 %v6418
        %v6830 = vpop.f32.mrf.mxu0
        %v6831 = vadd.f32 0.0, %v6830
        %v6832 = vpop.f32.mrf.mxu0
        %v6833 = vadd.f32 0.0, %v6832
        %6834 = vmatmul.bf16.gmra.mxu0 %v6420
        %v6835 = vpop.f32.mrf.mxu0
        %v6836 = vadd.f32 0.0, %v6835
        %v6837 = vpop.f32.mrf.mxu0
        %v6838 = vadd.f32 0.0, %v6837
        %6839 = vmatmul.bf16.gmra.mxu0 %v6422
        %v6840 = vpop.f32.mrf.mxu0
        %v6841 = vadd.f32 0.0, %v6840
        %v6842 = vpop.f32.mrf.mxu0
        %v6843 = vadd.f32 0.0, %v6842
        %6844 = vmatmul.bf16.gmra.mxu0 %v6424
        %v6845 = vpop.f32.mrf.mxu0
        %v6846 = vadd.f32 0.0, %v6845
        %v6847 = vpop.f32.mrf.mxu0
        %v6848 = vadd.f32 0.0, %v6847
        %6849 = vmatmul.bf16.gmra.mxu0 %v6426
        %v6850 = vpop.f32.mrf.mxu0
        %v6851 = vadd.f32 0.0, %v6850
        %v6852 = vpop.f32.mrf.mxu0
        %v6853 = vadd.f32 0.0, %v6852
        %6854 = vmatmul.bf16.gmra.mxu0 %v6428
        %v6855 = vpop.f32.mrf.mxu0
        %v6856 = vadd.f32 0.0, %v6855
        %v6857 = vpop.f32.mrf.mxu0
        %v6858 = vadd.f32 0.0, %v6857
        %6859 = vmatmul.bf16.gmra.mxu0 %v6430
        %v6860 = vpop.f32.mrf.mxu0
        %v6861 = vadd.f32 0.0, %v6860
        %v6862 = vpop.f32.mrf.mxu0
        %v6863 = vadd.f32 0.0, %v6862
        %6864 = vmatmul.bf16.gmra.mxu0 %v6432
        %v6865 = vpop.f32.mrf.mxu0
        %v6866 = vadd.f32 0.0, %v6865
        %v6867 = vpop.f32.mrf.mxu0
        %v6868 = vadd.f32 0.0, %v6867
        %6869 = vmatmul.bf16.gmra.mxu0 %v6434
        %v6870 = vpop.f32.mrf.mxu0
        %v6871 = vadd.f32 0.0, %v6870
        %v6872 = vpop.f32.mrf.mxu0
        %v6873 = vadd.f32 0.0, %v6872
        %6874 = vmatmul.bf16.gmra.mxu0 %v6436
        %v6875 = vpop.f32.mrf.mxu0
        %v6876 = vadd.f32 0.0, %v6875
        %v6877 = vpop.f32.mrf.mxu0
        %v6878 = vadd.f32 0.0, %v6877
        %6879 = vmatmul.bf16.gmra.mxu0 %v6438
        %v6880 = vpop.f32.mrf.mxu0
        %v6881 = vadd.f32 0.0, %v6880
        %v6882 = vpop.f32.mrf.mxu0
        %v6883 = vadd.f32 0.0, %v6882
        %6884 = vmatmul.bf16.gmra.mxu0 %v6440
        %v6885 = vpop.f32.mrf.mxu0
        %v6886 = vadd.f32 0.0, %v6885
        %v6887 = vpop.f32.mrf.mxu0
        %v6888 = vadd.f32 0.0, %v6887
        %6889 = vmatmul.bf16.gmra.mxu0 %v6442
        %v6890 = vpop.f32.mrf.mxu0
        %v6891 = vadd.f32 0.0, %v6890
        %v6892 = vpop.f32.mrf.mxu0
        %v6893 = vadd.f32 0.0, %v6892
        %6894 = vmatmul.bf16.gmra.mxu0 %v6444
        %v6895 = vpop.f32.mrf.mxu0
        %v6896 = vadd.f32 0.0, %v6895
        %v6897 = vpop.f32.mrf.mxu0
        %v6898 = vadd.f32 0.0, %v6897
        %6899 = vmatmul.bf16.gmra.mxu0 %v6446
        %v6900 = vpop.f32.mrf.mxu0
        %v6901 = vadd.f32 0.0, %v6900
        %v6902 = vpop.f32.mrf.mxu0
        %v6903 = vadd.f32 0.0, %v6902
        %6904 = vmatmul.bf16.gmra.mxu0 %v6448
        %v6905 = vpop.f32.mrf.mxu0
        %v6906 = vadd.f32 0.0, %v6905
        %v6907 = vpop.f32.mrf.mxu0
        %v6908 = vadd.f32 0.0, %v6907
        %6909 = vdwg.mxu0
        %6910 = vmatpush.bf16.msra.mxu0 %v6610
        %6911 = vmatpush.bf16.msra.mxu0 %v6608
        %6912 = vmatpush.bf16.msra.mxu0 %v6606
        %6913 = vmatpush.bf16.msra.mxu0 %v6604
        %6914 = vmatpush.bf16.msra.mxu0 %v6602
        %6915 = vmatpush.bf16.msra.mxu0 %v6600
        %6916 = vmatpush.bf16.msra.mxu0 %v6598
        %6917 = vmatpush.bf16.msra.mxu0 %v6596
        %6918 = vmatmul.bf16.gmra.mxu0 %v6419
        %v6919 = vpop.f32.mrf.mxu0
        %v6920 = vadd.f32 %v6831, %v6919
        %v6921 = vpop.f32.mrf.mxu0
        %v6922 = vadd.f32 %v6833, %v6921
        %6923 = vmatmul.bf16.gmra.mxu0 %v6421
        %v6924 = vpop.f32.mrf.mxu0
        %v6925 = vadd.f32 %v6836, %v6924
        %v6926 = vpop.f32.mrf.mxu0
        %v6927 = vadd.f32 %v6838, %v6926
        %6928 = vmatmul.bf16.gmra.mxu0 %v6423
        %v6929 = vpop.f32.mrf.mxu0
        %v6930 = vadd.f32 %v6841, %v6929
        %v6931 = vpop.f32.mrf.mxu0
        %v6932 = vadd.f32 %v6843, %v6931
        %6933 = vmatmul.bf16.gmra.mxu0 %v6425
        %v6934 = vpop.f32.mrf.mxu0
        %v6935 = vadd.f32 %v6846, %v6934
        %v6936 = vpop.f32.mrf.mxu0
        %v6937 = vadd.f32 %v6848, %v6936
        %6938 = vmatmul.bf16.gmra.mxu0 %v6427
        %v6939 = vpop.f32.mrf.mxu0
        %v6940 = vadd.f32 %v6851, %v6939
        %v6941 = vpop.f32.mrf.mxu0
        %v6942 = vadd.f32 %v6853, %v6941
        %6943 = vmatmul.bf16.gmra.mxu0 %v6429
        %v6944 = vpop.f32.mrf.mxu0
        %v6945 = vadd.f32 %v6856, %v6944
        %v6946 = vpop.f32.mrf.mxu0
        %v6947 = vadd.f32 %v6858, %v6946
        %6948 = vmatmul.bf16.gmra.mxu0 %v6431
        %v6949 = vpop.f32.mrf.mxu0
        %v6950 = vadd.f32 %v6861, %v6949
        %v6951 = vpop.f32.mrf.mxu0
        %v6952 = vadd.f32 %v6863, %v6951
        %6953 = vmatmul.bf16.gmra.mxu0 %v6433
        %v6954 = vpop.f32.mrf.mxu0
        %v6955 = vadd.f32 %v6866, %v6954
        %v6956 = vpop.f32.mrf.mxu0
        %v6957 = vadd.f32 %v6868, %v6956
        %6958 = vmatmul.bf16.gmra.mxu0 %v6435
        %v6959 = vpop.f32.mrf.mxu0
        %v6960 = vadd.f32 %v6871, %v6959
        %v6961 = vpop.f32.mrf.mxu0
        %v6962 = vadd.f32 %v6873, %v6961
        %6963 = vmatmul.bf16.gmra.mxu0 %v6437
        %v6964 = vpop.f32.mrf.mxu0
        %v6965 = vadd.f32 %v6876, %v6964
        %v6966 = vpop.f32.mrf.mxu0
        %v6967 = vadd.f32 %v6878, %v6966
        %6968 = vmatmul.bf16.gmra.mxu0 %v6439
        %v6969 = vpop.f32.mrf.mxu0
        %v6970 = vadd.f32 %v6881, %v6969
        %v6971 = vpop.f32.mrf.mxu0
        %v6972 = vadd.f32 %v6883, %v6971
        %6973 = vmatmul.bf16.gmra.mxu0 %v6441
        %v6974 = vpop.f32.mrf.mxu0
        %v6975 = vadd.f32 %v6886, %v6974
        %v6976 = vpop.f32.mrf.mxu0
        %v6977 = vadd.f32 %v6888, %v6976
        %6978 = vmatmul.bf16.gmra.mxu0 %v6443
        %v6979 = vpop.f32.mrf.mxu0
        %v6980 = vadd.f32 %v6891, %v6979
        %v6981 = vpop.f32.mrf.mxu0
        %v6982 = vadd.f32 %v6893, %v6981
        %6983 = vmatmul.bf16.gmra.mxu0 %v6445
        %v6984 = vpop.f32.mrf.mxu0
        %v6985 = vadd.f32 %v6896, %v6984
        %v6986 = vpop.f32.mrf.mxu0
        %v6987 = vadd.f32 %v6898, %v6986
        %6988 = vmatmul.bf16.gmra.mxu0 %v6447
        %v6989 = vpop.f32.mrf.mxu0
        %v6990 = vadd.f32 %v6901, %v6989
        %v6991 = vpop.f32.mrf.mxu0
        %v6992 = vadd.f32 %v6903, %v6991
        %6993 = vmatmul.bf16.gmra.mxu0 %v6449
        %v6994 = vpop.f32.mrf.mxu0
        %v6995 = vadd.f32 %v6906, %v6994
        %v6996 = vpop.f32.mrf.mxu0
        %v6997 = vadd.f32 %v6908, %v6996
        %6998 = vdwg.mxu0
        %v6999 = vpack.c.bf16 %v6920, %v6742
        %v7000 = vpack.c.bf16 %v6922, %v6744
        %v7001 = vpack.c.bf16 %v6925, %v6747
        %v7002 = vpack.c.bf16 %v6927, %v6749
        %v7003 = vpack.c.bf16 %v6930, %v6752
        %v7004 = vpack.c.bf16 %v6932, %v6754
        %v7005 = vpack.c.bf16 %v6935, %v6757
        %v7006 = vpack.c.bf16 %v6937, %v6759
        %v7007 = vpack.c.bf16 %v6940, %v6762
        %v7008 = vpack.c.bf16 %v6942, %v6764
        %v7009 = vpack.c.bf16 %v6945, %v6767
        %v7010 = vpack.c.bf16 %v6947, %v6769
        %v7011 = vpack.c.bf16 %v6950, %v6772
        %v7012 = vpack.c.bf16 %v6952, %v6774
        %v7013 = vpack.c.bf16 %v6955, %v6777
        %v7014 = vpack.c.bf16 %v6957, %v6779
        %v7015 = vpack.c.bf16 %v6960, %v6782
        %v7016 = vpack.c.bf16 %v6962, %v6784
        %v7017 = vpack.c.bf16 %v6965, %v6787
        %v7018 = vpack.c.bf16 %v6967, %v6789
        %v7019 = vpack.c.bf16 %v6970, %v6792
        %v7020 = vpack.c.bf16 %v6972, %v6794
        %v7021 = vpack.c.bf16 %v6975, %v6797
        %v7022 = vpack.c.bf16 %v6977, %v6799
        %v7023 = vpack.c.bf16 %v6980, %v6802
        %v7024 = vpack.c.bf16 %v6982, %v6804
        %v7025 = vpack.c.bf16 %v6985, %v6807
        %v7026 = vpack.c.bf16 %v6987, %v6809
        %v7027 = vpack.c.bf16 %v6990, %v6812
        %v7028 = vpack.c.bf16 %v6992, %v6814
        %v7029 = vpack.c.bf16 %v6995, %v6817
        %v7030 = vpack.c.bf16 %v6997, %v6819
        %s7031 = scalar_lea.vmem %s4, 12
        %v7032 = vld [vmem:[%s7031] sm:$0x3]
        %7034 = vst [vmem:[#allocation1] ss:$9 sm:$0xff] %v7032
        %v7035 = vld [vmem:[#allocation1] sm:$0xff]
        %v7036 = vld [vmem:[#allocation1 + $0x9] sm:$0xff]
        %v7037 = vpack.i.b16 %v7035, %v7035
        %v7039 = vperm.slane %v7037, 0
        %v7040 = vpack.i.b16 %v7036, %v7036
        %v7042 = vperm.slane %v7040, 0
        %v7043 = vunpack.c.l.bf16 %v6999
        %v7044 = vunpack.c.h.bf16 %v6999
        %v7045 = vunpack.c.l.bf16 %v7000
        %v7046 = vunpack.c.h.bf16 %v7000
        %v7047 = vunpack.c.l.bf16 %v7001
        %v7048 = vunpack.c.h.bf16 %v7001
        %v7049 = vunpack.c.l.bf16 %v7002
        %v7050 = vunpack.c.h.bf16 %v7002
        %v7051 = vunpack.c.l.bf16 %v7003
        %v7052 = vunpack.c.h.bf16 %v7003
        %v7053 = vunpack.c.l.bf16 %v7004
        %v7054 = vunpack.c.h.bf16 %v7004
        %v7055 = vunpack.c.l.bf16 %v7005
        %v7056 = vunpack.c.h.bf16 %v7005
        %v7057 = vunpack.c.l.bf16 %v7006
        %v7058 = vunpack.c.h.bf16 %v7006
        %v7059 = vunpack.c.l.bf16 %v7007
        %v7060 = vunpack.c.h.bf16 %v7007
        %v7061 = vunpack.c.l.bf16 %v7008
        %v7062 = vunpack.c.h.bf16 %v7008
        %v7063 = vunpack.c.l.bf16 %v7009
        %v7064 = vunpack.c.h.bf16 %v7009
        %v7065 = vunpack.c.l.bf16 %v7010
        %v7066 = vunpack.c.h.bf16 %v7010
        %v7067 = vunpack.c.l.bf16 %v7011
        %v7068 = vunpack.c.h.bf16 %v7011
        %v7069 = vunpack.c.l.bf16 %v7012
        %v7070 = vunpack.c.h.bf16 %v7012
        %v7071 = vunpack.c.l.bf16 %v7013
        %v7072 = vunpack.c.h.bf16 %v7013
        %v7073 = vunpack.c.l.bf16 %v7014
        %v7074 = vunpack.c.h.bf16 %v7014
        %v7075 = vunpack.c.l.bf16 %v7015
        %v7076 = vunpack.c.h.bf16 %v7015
        %v7077 = vunpack.c.l.bf16 %v7016
        %v7078 = vunpack.c.h.bf16 %v7016
        %v7079 = vunpack.c.l.bf16 %v7017
        %v7080 = vunpack.c.h.bf16 %v7017
        %v7081 = vunpack.c.l.bf16 %v7018
        %v7082 = vunpack.c.h.bf16 %v7018
        %v7083 = vunpack.c.l.bf16 %v7019
        %v7084 = vunpack.c.h.bf16 %v7019
        %v7085 = vunpack.c.l.bf16 %v7020
        %v7086 = vunpack.c.h.bf16 %v7020
        %v7087 = vunpack.c.l.bf16 %v7021
        %v7088 = vunpack.c.h.bf16 %v7021
        %v7089 = vunpack.c.l.bf16 %v7022
        %v7090 = vunpack.c.h.bf16 %v7022
        %v7091 = vunpack.c.l.bf16 %v7023
        %v7092 = vunpack.c.h.bf16 %v7023
        %v7093 = vunpack.c.l.bf16 %v7024
        %v7094 = vunpack.c.h.bf16 %v7024
        %v7095 = vunpack.c.l.bf16 %v7025
        %v7096 = vunpack.c.h.bf16 %v7025
        %v7097 = vunpack.c.l.bf16 %v7026
        %v7098 = vunpack.c.h.bf16 %v7026
        %v7099 = vunpack.c.l.bf16 %v7027
        %v7100 = vunpack.c.h.bf16 %v7027
        %v7101 = vunpack.c.l.bf16 %v7028
        %v7102 = vunpack.c.h.bf16 %v7028
        %v7103 = vunpack.c.l.bf16 %v7029
        %v7104 = vunpack.c.h.bf16 %v7029
        %v7105 = vunpack.c.l.bf16 %v7030
        %v7106 = vunpack.c.h.bf16 %v7030
        %v7107 = vunpack.c.l.bf16 %v7039
        %v7108 = vunpack.c.l.bf16 %v7042
        %v7109 = vadd.f32 %v7043, %v7107
        %v7110 = vadd.f32 %v7044, %v7108
        %v7111 = vadd.f32 %v7045, %v7107
        %v7112 = vadd.f32 %v7046, %v7108
        %v7113 = vadd.f32 %v7047, %v7107
        %v7114 = vadd.f32 %v7048, %v7108
        %v7115 = vadd.f32 %v7049, %v7107
        %v7116 = vadd.f32 %v7050, %v7108
        %v7117 = vadd.f32 %v7051, %v7107
        %v7118 = vadd.f32 %v7052, %v7108
        %v7119 = vadd.f32 %v7053, %v7107
        %v7120 = vadd.f32 %v7054, %v7108
        %v7121 = vadd.f32 %v7055, %v7107
        %v7122 = vadd.f32 %v7056, %v7108
        %v7123 = vadd.f32 %v7057, %v7107
        %v7124 = vadd.f32 %v7058, %v7108
        %v7125 = vadd.f32 %v7059, %v7107
        %v7126 = vadd.f32 %v7060, %v7108
        %v7127 = vadd.f32 %v7061, %v7107
        %v7128 = vadd.f32 %v7062, %v7108
        %v7129 = vadd.f32 %v7063, %v7107
        %v7130 = vadd.f32 %v7064, %v7108
        %v7131 = vadd.f32 %v7065, %v7107
        %v7132 = vadd.f32 %v7066, %v7108
        %v7133 = vadd.f32 %v7067, %v7107
        %v7134 = vadd.f32 %v7068, %v7108
        %v7135 = vadd.f32 %v7069, %v7107
        %v7136 = vadd.f32 %v7070, %v7108
        %v7137 = vadd.f32 %v7071, %v7107
        %v7138 = vadd.f32 %v7072, %v7108
        %v7139 = vadd.f32 %v7073, %v7107
        %v7140 = vadd.f32 %v7074, %v7108
        %v7141 = vadd.f32 %v7075, %v7107
        %v7142 = vadd.f32 %v7076, %v7108
        %v7143 = vadd.f32 %v7077, %v7107
        %v7144 = vadd.f32 %v7078, %v7108
        %v7145 = vadd.f32 %v7079, %v7107
        %v7146 = vadd.f32 %v7080, %v7108
        %v7147 = vadd.f32 %v7081, %v7107
        %v7148 = vadd.f32 %v7082, %v7108
        %v7149 = vadd.f32 %v7083, %v7107
        %v7150 = vadd.f32 %v7084, %v7108
        %v7151 = vadd.f32 %v7085, %v7107
        %v7152 = vadd.f32 %v7086, %v7108
        %v7153 = vadd.f32 %v7087, %v7107
        %v7154 = vadd.f32 %v7088, %v7108
        %v7155 = vadd.f32 %v7089, %v7107
        %v7156 = vadd.f32 %v7090, %v7108
        %v7157 = vadd.f32 %v7091, %v7107
        %v7158 = vadd.f32 %v7092, %v7108
        %v7159 = vadd.f32 %v7093, %v7107
        %v7160 = vadd.f32 %v7094, %v7108
        %v7161 = vadd.f32 %v7095, %v7107
        %v7162 = vadd.f32 %v7096, %v7108
        %v7163 = vadd.f32 %v7097, %v7107
        %v7164 = vadd.f32 %v7098, %v7108
        %v7165 = vadd.f32 %v7099, %v7107
        %v7166 = vadd.f32 %v7100, %v7108
        %v7167 = vadd.f32 %v7101, %v7107
        %v7168 = vadd.f32 %v7102, %v7108
        %v7169 = vadd.f32 %v7103, %v7107
        %v7170 = vadd.f32 %v7104, %v7108
        %v7171 = vadd.f32 %v7105, %v7107
        %v7172 = vadd.f32 %v7106, %v7108
        %v7173 = vpack.c.bf16 %v7110, %v7109
        %v7174 = vpack.c.bf16 %v7112, %v7111
        %v7175 = vpack.c.bf16 %v7114, %v7113
        %v7176 = vpack.c.bf16 %v7116, %v7115
        %v7177 = vpack.c.bf16 %v7118, %v7117
        %v7178 = vpack.c.bf16 %v7120, %v7119
        %v7179 = vpack.c.bf16 %v7122, %v7121
        %v7180 = vpack.c.bf16 %v7124, %v7123
        %v7181 = vpack.c.bf16 %v7126, %v7125
        %v7182 = vpack.c.bf16 %v7128, %v7127
        %v7183 = vpack.c.bf16 %v7130, %v7129
        %v7184 = vpack.c.bf16 %v7132, %v7131
        %v7185 = vpack.c.bf16 %v7134, %v7133
        %v7186 = vpack.c.bf16 %v7136, %v7135
        %v7187 = vpack.c.bf16 %v7138, %v7137
        %v7188 = vpack.c.bf16 %v7140, %v7139
        %v7189 = vpack.c.bf16 %v7142, %v7141
        %v7190 = vpack.c.bf16 %v7144, %v7143
        %v7191 = vpack.c.bf16 %v7146, %v7145
        %v7192 = vpack.c.bf16 %v7148, %v7147
        %v7193 = vpack.c.bf16 %v7150, %v7149
        %v7194 = vpack.c.bf16 %v7152, %v7151
        %v7195 = vpack.c.bf16 %v7154, %v7153
        %v7196 = vpack.c.bf16 %v7156, %v7155
        %v7197 = vpack.c.bf16 %v7158, %v7157
        %v7198 = vpack.c.bf16 %v7160, %v7159
        %v7199 = vpack.c.bf16 %v7162, %v7161
        %v7200 = vpack.c.bf16 %v7164, %v7163
        %v7201 = vpack.c.bf16 %v7166, %v7165
        %v7202 = vpack.c.bf16 %v7168, %v7167
        %v7203 = vpack.c.bf16 %v7170, %v7169
        %v7204 = vpack.c.bf16 %v7172, %v7171
        %v7205 = vunpack.c.l.bf16 %v7173
        %v7206 = vunpack.c.h.bf16 %v7173
        %v7207 = vunpack.c.l.bf16 %v7174
        %v7208 = vunpack.c.h.bf16 %v7174
        %v7209 = vunpack.c.l.bf16 %v7175
        %v7210 = vunpack.c.h.bf16 %v7175
        %v7211 = vunpack.c.l.bf16 %v7176
        %v7212 = vunpack.c.h.bf16 %v7176
        %v7213 = vunpack.c.l.bf16 %v7177
        %v7214 = vunpack.c.h.bf16 %v7177
        %v7215 = vunpack.c.l.bf16 %v7178
        %v7216 = vunpack.c.h.bf16 %v7178
        %v7217 = vunpack.c.l.bf16 %v7179
        %v7218 = vunpack.c.h.bf16 %v7179
        %v7219 = vunpack.c.l.bf16 %v7180
        %v7220 = vunpack.c.h.bf16 %v7180
        %v7221 = vunpack.c.l.bf16 %v7181
        %v7222 = vunpack.c.h.bf16 %v7181
        %v7223 = vunpack.c.l.bf16 %v7182
        %v7224 = vunpack.c.h.bf16 %v7182
        %v7225 = vunpack.c.l.bf16 %v7183
        %v7226 = vunpack.c.h.bf16 %v7183
        %v7227 = vunpack.c.l.bf16 %v7184
        %v7228 = vunpack.c.h.bf16 %v7184
        %v7229 = vunpack.c.l.bf16 %v7185
        %v7230 = vunpack.c.h.bf16 %v7185
        %v7231 = vunpack.c.l.bf16 %v7186
        %v7232 = vunpack.c.h.bf16 %v7186
        %v7233 = vunpack.c.l.bf16 %v7187
        %v7234 = vunpack.c.h.bf16 %v7187
        %v7235 = vunpack.c.l.bf16 %v7188
        %v7236 = vunpack.c.h.bf16 %v7188
        %v7237 = vunpack.c.l.bf16 %v7189
        %v7238 = vunpack.c.h.bf16 %v7189
        %v7239 = vunpack.c.l.bf16 %v7190
        %v7240 = vunpack.c.h.bf16 %v7190
        %v7241 = vunpack.c.l.bf16 %v7191
        %v7242 = vunpack.c.h.bf16 %v7191
        %v7243 = vunpack.c.l.bf16 %v7192
        %v7244 = vunpack.c.h.bf16 %v7192
        %v7245 = vunpack.c.l.bf16 %v7193
        %v7246 = vunpack.c.h.bf16 %v7193
        %v7247 = vunpack.c.l.bf16 %v7194
        %v7248 = vunpack.c.h.bf16 %v7194
        %v7249 = vunpack.c.l.bf16 %v7195
        %v7250 = vunpack.c.h.bf16 %v7195
        %v7251 = vunpack.c.l.bf16 %v7196
        %v7252 = vunpack.c.h.bf16 %v7196
        %v7253 = vunpack.c.l.bf16 %v7197
        %v7254 = vunpack.c.h.bf16 %v7197
        %v7255 = vunpack.c.l.bf16 %v7198
        %v7256 = vunpack.c.h.bf16 %v7198
        %v7257 = vunpack.c.l.bf16 %v7199
        %v7258 = vunpack.c.h.bf16 %v7199
        %v7259 = vunpack.c.l.bf16 %v7200
        %v7260 = vunpack.c.h.bf16 %v7200
        %v7261 = vunpack.c.l.bf16 %v7201
        %v7262 = vunpack.c.h.bf16 %v7201
        %v7263 = vunpack.c.l.bf16 %v7202
        %v7264 = vunpack.c.h.bf16 %v7202
        %v7265 = vunpack.c.l.bf16 %v7203
        %v7266 = vunpack.c.h.bf16 %v7203
        %v7267 = vunpack.c.l.bf16 %v7204
        %v7268 = vunpack.c.h.bf16 %v7204
        %v7269 = vmax.f32 %v7205, 0.0
        %v7270 = vmax.f32 %v7206, 0.0
        %v7271 = vmax.f32 %v7207, 0.0
        %v7272 = vmax.f32 %v7208, 0.0
        %v7273 = vmax.f32 %v7209, 0.0
        %v7274 = vmax.f32 %v7210, 0.0
        %v7275 = vmax.f32 %v7211, 0.0
        %v7276 = vmax.f32 %v7212, 0.0
        %v7277 = vmax.f32 %v7213, 0.0
        %v7278 = vmax.f32 %v7214, 0.0
        %v7279 = vmax.f32 %v7215, 0.0
        %v7280 = vmax.f32 %v7216, 0.0
        %v7281 = vmax.f32 %v7217, 0.0
        %v7282 = vmax.f32 %v7218, 0.0
        %v7283 = vmax.f32 %v7219, 0.0
        %v7284 = vmax.f32 %v7220, 0.0
        %v7285 = vmax.f32 %v7221, 0.0
        %v7286 = vmax.f32 %v7222, 0.0
        %v7287 = vmax.f32 %v7223, 0.0
        %v7288 = vmax.f32 %v7224, 0.0
        %v7289 = vmax.f32 %v7225, 0.0
        %v7290 = vmax.f32 %v7226, 0.0
        %v7291 = vmax.f32 %v7227, 0.0
        %v7292 = vmax.f32 %v7228, 0.0
        %v7293 = vmax.f32 %v7229, 0.0
        %v7294 = vmax.f32 %v7230, 0.0
        %v7295 = vmax.f32 %v7231, 0.0
        %v7296 = vmax.f32 %v7232, 0.0
        %v7297 = vmax.f32 %v7233, 0.0
        %v7298 = vmax.f32 %v7234, 0.0
        %v7299 = vmax.f32 %v7235, 0.0
        %v7300 = vmax.f32 %v7236, 0.0
        %v7301 = vmax.f32 %v7237, 0.0
        %v7302 = vmax.f32 %v7238, 0.0
        %v7303 = vmax.f32 %v7239, 0.0
        %v7304 = vmax.f32 %v7240, 0.0
        %v7305 = vmax.f32 %v7241, 0.0
        %v7306 = vmax.f32 %v7242, 0.0
        %v7307 = vmax.f32 %v7243, 0.0
        %v7308 = vmax.f32 %v7244, 0.0
        %v7309 = vmax.f32 %v7245, 0.0
        %v7310 = vmax.f32 %v7246, 0.0
        %v7311 = vmax.f32 %v7247, 0.0
        %v7312 = vmax.f32 %v7248, 0.0
        %v7313 = vmax.f32 %v7249, 0.0
        %v7314 = vmax.f32 %v7250, 0.0
        %v7315 = vmax.f32 %v7251, 0.0
        %v7316 = vmax.f32 %v7252, 0.0
        %v7317 = vmax.f32 %v7253, 0.0
        %v7318 = vmax.f32 %v7254, 0.0
        %v7319 = vmax.f32 %v7255, 0.0
        %v7320 = vmax.f32 %v7256, 0.0
        %v7321 = vmax.f32 %v7257, 0.0
        %v7322 = vmax.f32 %v7258, 0.0
        %v7323 = vmax.f32 %v7259, 0.0
        %v7324 = vmax.f32 %v7260, 0.0
        %v7325 = vmax.f32 %v7261, 0.0
        %v7326 = vmax.f32 %v7262, 0.0
        %v7327 = vmax.f32 %v7263, 0.0
        %v7328 = vmax.f32 %v7264, 0.0
        %v7329 = vmax.f32 %v7265, 0.0
        %v7330 = vmax.f32 %v7266, 0.0
        %v7331 = vmax.f32 %v7267, 0.0
        %v7332 = vmax.f32 %v7268, 0.0
        %v7333 = vpack.c.bf16 %v7271, %v7269
        %v7334 = vpack.c.bf16 %v7272, %v7270
        %v7335 = vpack.c.bf16 %v7275, %v7273
        %v7336 = vpack.c.bf16 %v7276, %v7274
        %v7337 = vpack.c.bf16 %v7279, %v7277
        %v7338 = vpack.c.bf16 %v7280, %v7278
        %v7339 = vpack.c.bf16 %v7283, %v7281
        %v7340 = vpack.c.bf16 %v7284, %v7282
        %v7341 = vpack.c.bf16 %v7287, %v7285
        %v7342 = vpack.c.bf16 %v7288, %v7286
        %v7343 = vpack.c.bf16 %v7291, %v7289
        %v7344 = vpack.c.bf16 %v7292, %v7290
        %v7345 = vpack.c.bf16 %v7295, %v7293
        %v7346 = vpack.c.bf16 %v7296, %v7294
        %v7347 = vpack.c.bf16 %v7299, %v7297
        %v7348 = vpack.c.bf16 %v7300, %v7298
        %v7349 = vpack.c.bf16 %v7303, %v7301
        %v7350 = vpack.c.bf16 %v7304, %v7302
        %v7351 = vpack.c.bf16 %v7307, %v7305
        %v7352 = vpack.c.bf16 %v7308, %v7306
        %v7353 = vpack.c.bf16 %v7311, %v7309
        %v7354 = vpack.c.bf16 %v7312, %v7310
        %v7355 = vpack.c.bf16 %v7315, %v7313
        %v7356 = vpack.c.bf16 %v7316, %v7314
        %v7357 = vpack.c.bf16 %v7319, %v7317
        %v7358 = vpack.c.bf16 %v7320, %v7318
        %v7359 = vpack.c.bf16 %v7323, %v7321
        %v7360 = vpack.c.bf16 %v7324, %v7322
        %v7361 = vpack.c.bf16 %v7327, %v7325
        %v7362 = vpack.c.bf16 %v7328, %v7326
        %v7363 = vpack.c.bf16 %v7331, %v7329
        %v7364 = vpack.c.bf16 %v7332, %v7330
        %v7365 = vld [vmem:[%s5] sm:$0xf]
        %v7366 = vld [vmem:[%s5 + $0x4] sm:$0xf]
        %v7367 = vld [vmem:[%s5 + $0x8] sm:$0xf]
        %v7368 = vld [vmem:[%s5 + $0xc] sm:$0xf]
        %v7369 = vld [vmem:[%s5 + $0x10] sm:$0xf]
        %v7370 = vld [vmem:[%s5 + $0x14] sm:$0xf]
        %v7371 = vld [vmem:[%s5 + $0x18] sm:$0xf]
        %v7372 = vld [vmem:[%s5 + $0x1c] sm:$0xf]
        %v7373 = vld [vmem:[%s5 + $0x20] sm:$0xf]
        %v7374 = vld [vmem:[%s5 + $0x24] sm:$0xf]
        %v7375 = vld [vmem:[%s5 + $0x28] sm:$0xf]
        %v7376 = vld [vmem:[%s5 + $0x2c] sm:$0xf]
        %v7377 = vld [vmem:[%s5 + $0x30] sm:$0xf]
        %v7378 = vld [vmem:[%s5 + $0x34] sm:$0xf]
        %v7379 = vld [vmem:[%s5 + $0x38] sm:$0xf]
        %v7380 = vld [vmem:[%s5 + $0x3c] sm:$0xf]
        %v7381 = vld [vmem:[%s5 + $0x40] sm:$0xf]
        %v7382 = vld [vmem:[%s5 + $0x44] sm:$0xf]
        %v7383 = vld [vmem:[%s5 + $0x48] sm:$0xf]
        %v7384 = vld [vmem:[%s5 + $0x4c] sm:$0xf]
        %v7385 = vld [vmem:[%s5 + $0x50] sm:$0xf]
        %v7386 = vld [vmem:[%s5 + $0x54] sm:$0xf]
        %v7387 = vld [vmem:[%s5 + $0x58] sm:$0xf]
        %v7388 = vld [vmem:[%s5 + $0x5c] sm:$0xf]
        %v7389 = vld [vmem:[%s5 + $0x60] sm:$0xf]
        %v7390 = vld [vmem:[%s5 + $0x64] sm:$0xf]
        %v7391 = vld [vmem:[%s5 + $0x68] sm:$0xf]
        %v7392 = vld [vmem:[%s5 + $0x6c] sm:$0xf]
        %v7393 = vld [vmem:[%s5 + $0x70] sm:$0xf]
        %v7394 = vld [vmem:[%s5 + $0x74] sm:$0xf]
        %v7395 = vld [vmem:[%s5 + $0x78] sm:$0xf]
        %v7396 = vld [vmem:[%s5 + $0x7c] sm:$0xf]
        %v7397 = vld [vmem:[%s6] sm:$0x1]
        %v7399 = vperm.slane %v7397, 0
        %v7433 = vunpack.c.l.b16 %v7365
        %v7434 = vunpack.c.l.b16 %v7366
        %v7435 = vunpack.c.l.b16 %v7367
        %v7436 = vunpack.c.l.b16 %v7368
        %v7437 = vunpack.c.l.b16 %v7369
        %v7438 = vunpack.c.l.b16 %v7370
        %v7439 = vunpack.c.l.b16 %v7371
        %v7440 = vunpack.c.l.b16 %v7372
        %v7441 = vunpack.c.l.b16 %v7373
        %v7442 = vunpack.c.l.b16 %v7374
        %v7443 = vunpack.c.l.b16 %v7375
        %v7444 = vunpack.c.l.b16 %v7376
        %v7445 = vunpack.c.l.b16 %v7377
        %v7446 = vunpack.c.l.b16 %v7378
        %v7447 = vunpack.c.l.b16 %v7379
        %v7448 = vunpack.c.l.b16 %v7380
        %v7449 = vunpack.c.l.b16 %v7381
        %v7450 = vunpack.c.l.b16 %v7382
        %v7451 = vunpack.c.l.b16 %v7383
        %v7452 = vunpack.c.l.b16 %v7384
        %v7453 = vunpack.c.l.b16 %v7385
        %v7454 = vunpack.c.l.b16 %v7386
        %v7455 = vunpack.c.l.b16 %v7387
        %v7456 = vunpack.c.l.b16 %v7388
        %v7457 = vunpack.c.l.b16 %v7389
        %v7458 = vunpack.c.l.b16 %v7390
        %v7459 = vunpack.c.l.b16 %v7391
        %v7460 = vunpack.c.l.b16 %v7392
        %v7461 = vunpack.c.l.b16 %v7393
        %v7462 = vunpack.c.l.b16 %v7394
        %v7463 = vunpack.c.l.b16 %v7395
        %v7464 = vunpack.c.l.b16 %v7396
        %v7465 = vpack.c.b16 %v7434, %v7433
        %v7466 = vpack.c.b16 %v7436, %v7435
        %v7467 = vpack.c.b16 %v7438, %v7437
        %v7468 = vpack.c.b16 %v7440, %v7439
        %v7469 = vpack.c.b16 %v7442, %v7441
        %v7470 = vpack.c.b16 %v7444, %v7443
        %v7471 = vpack.c.b16 %v7446, %v7445
        %v7472 = vpack.c.b16 %v7448, %v7447
        %v7473 = vpack.c.b16 %v7450, %v7449
        %v7474 = vpack.c.b16 %v7452, %v7451
        %v7475 = vpack.c.b16 %v7454, %v7453
        %v7476 = vpack.c.b16 %v7456, %v7455
        %v7477 = vpack.c.b16 %v7458, %v7457
        %v7478 = vpack.c.b16 %v7460, %v7459
        %v7479 = vpack.c.b16 %v7462, %v7461
        %v7480 = vpack.c.b16 %v7464, %v7463
        %7497 = vmatpush.bf16.msra.mxu0 %v7472
        %7498 = vmatpush.bf16.msra.mxu0 %v7471
        %7499 = vmatpush.bf16.msra.mxu0 %v7470
        %7500 = vmatpush.bf16.msra.mxu0 %v7469
        %7501 = vmatpush.bf16.msra.mxu0 %v7468
        %7502 = vmatpush.bf16.msra.mxu0 %v7467
        %7503 = vmatpush.bf16.msra.mxu0 %v7466
        %7504 = vmatpush.bf16.msra.mxu0 %v7465
        %7505 = vmatmul.bf16.gmra.mxu0 %v7333
        %v7506 = vpop.f32.mrf.mxu0
        %v7507 = vadd.f32 %v7399, %v7506
        %v7508 = vpop.f32.mrf.mxu0
        %v7509 = vadd.f32 %v7399, %v7508
        %7510 = vmatmul.bf16.gmra.mxu0 %v7335
        %v7511 = vpop.f32.mrf.mxu0
        %v7512 = vadd.f32 %v7399, %v7511
        %v7513 = vpop.f32.mrf.mxu0
        %v7514 = vadd.f32 %v7399, %v7513
        %7515 = vmatmul.bf16.gmra.mxu0 %v7337
        %v7516 = vpop.f32.mrf.mxu0
        %v7517 = vadd.f32 %v7399, %v7516
        %v7518 = vpop.f32.mrf.mxu0
        %v7519 = vadd.f32 %v7399, %v7518
        %7520 = vmatmul.bf16.gmra.mxu0 %v7339
        %v7521 = vpop.f32.mrf.mxu0
        %v7522 = vadd.f32 %v7399, %v7521
        %v7523 = vpop.f32.mrf.mxu0
        %v7524 = vadd.f32 %v7399, %v7523
        %7525 = vmatmul.bf16.gmra.mxu0 %v7341
        %v7526 = vpop.f32.mrf.mxu0
        %v7527 = vadd.f32 %v7399, %v7526
        %v7528 = vpop.f32.mrf.mxu0
        %v7529 = vadd.f32 %v7399, %v7528
        %7530 = vmatmul.bf16.gmra.mxu0 %v7343
        %v7531 = vpop.f32.mrf.mxu0
        %v7532 = vadd.f32 %v7399, %v7531
        %v7533 = vpop.f32.mrf.mxu0
        %v7534 = vadd.f32 %v7399, %v7533
        %7535 = vmatmul.bf16.gmra.mxu0 %v7345
        %v7536 = vpop.f32.mrf.mxu0
        %v7537 = vadd.f32 %v7399, %v7536
        %v7538 = vpop.f32.mrf.mxu0
        %v7539 = vadd.f32 %v7399, %v7538
        %7540 = vmatmul.bf16.gmra.mxu0 %v7347
        %v7541 = vpop.f32.mrf.mxu0
        %v7542 = vadd.f32 %v7399, %v7541
        %v7543 = vpop.f32.mrf.mxu0
        %v7544 = vadd.f32 %v7399, %v7543
        %7545 = vmatmul.bf16.gmra.mxu0 %v7349
        %v7546 = vpop.f32.mrf.mxu0
        %v7547 = vadd.f32 %v7399, %v7546
        %v7548 = vpop.f32.mrf.mxu0
        %v7549 = vadd.f32 %v7399, %v7548
        %7550 = vmatmul.bf16.gmra.mxu0 %v7351
        %v7551 = vpop.f32.mrf.mxu0
        %v7552 = vadd.f32 %v7399, %v7551
        %v7553 = vpop.f32.mrf.mxu0
        %v7554 = vadd.f32 %v7399, %v7553
        %7555 = vmatmul.bf16.gmra.mxu0 %v7353
        %v7556 = vpop.f32.mrf.mxu0
        %v7557 = vadd.f32 %v7399, %v7556
        %v7558 = vpop.f32.mrf.mxu0
        %v7559 = vadd.f32 %v7399, %v7558
        %7560 = vmatmul.bf16.gmra.mxu0 %v7355
        %v7561 = vpop.f32.mrf.mxu0
        %v7562 = vadd.f32 %v7399, %v7561
        %v7563 = vpop.f32.mrf.mxu0
        %v7564 = vadd.f32 %v7399, %v7563
        %7565 = vmatmul.bf16.gmra.mxu0 %v7357
        %v7566 = vpop.f32.mrf.mxu0
        %v7567 = vadd.f32 %v7399, %v7566
        %v7568 = vpop.f32.mrf.mxu0
        %v7569 = vadd.f32 %v7399, %v7568
        %7570 = vmatmul.bf16.gmra.mxu0 %v7359
        %v7571 = vpop.f32.mrf.mxu0
        %v7572 = vadd.f32 %v7399, %v7571
        %v7573 = vpop.f32.mrf.mxu0
        %v7574 = vadd.f32 %v7399, %v7573
        %7575 = vmatmul.bf16.gmra.mxu0 %v7361
        %v7576 = vpop.f32.mrf.mxu0
        %v7577 = vadd.f32 %v7399, %v7576
        %v7578 = vpop.f32.mrf.mxu0
        %v7579 = vadd.f32 %v7399, %v7578
        %7580 = vmatmul.bf16.gmra.mxu0 %v7363
        %v7581 = vpop.f32.mrf.mxu0
        %v7582 = vadd.f32 %v7399, %v7581
        %v7583 = vpop.f32.mrf.mxu0
        %v7584 = vadd.f32 %v7399, %v7583
        %7585 = vdwg.mxu0
        %7586 = vmatpush.bf16.msra.mxu0 %v7480
        %7587 = vmatpush.bf16.msra.mxu0 %v7479
        %7588 = vmatpush.bf16.msra.mxu0 %v7478
        %7589 = vmatpush.bf16.msra.mxu0 %v7477
        %7590 = vmatpush.bf16.msra.mxu0 %v7476
        %7591 = vmatpush.bf16.msra.mxu0 %v7475
        %7592 = vmatpush.bf16.msra.mxu0 %v7474
        %7593 = vmatpush.bf16.msra.mxu0 %v7473
        %7594 = vmatmul.bf16.gmra.mxu0 %v7334
        %v7595 = vpop.f32.mrf.mxu0
        %v7596 = vadd.f32 %v7507, %v7595
        %v7597 = vpop.f32.mrf.mxu0
        %v7598 = vadd.f32 %v7509, %v7597
        %7599 = vmatmul.bf16.gmra.mxu0 %v7336
        %v7600 = vpop.f32.mrf.mxu0
        %v7601 = vadd.f32 %v7512, %v7600
        %v7602 = vpop.f32.mrf.mxu0
        %v7603 = vadd.f32 %v7514, %v7602
        %7604 = vmatmul.bf16.gmra.mxu0 %v7338
        %v7605 = vpop.f32.mrf.mxu0
        %v7606 = vadd.f32 %v7517, %v7605
        %v7607 = vpop.f32.mrf.mxu0
        %v7608 = vadd.f32 %v7519, %v7607
        %7609 = vmatmul.bf16.gmra.mxu0 %v7340
        %v7610 = vpop.f32.mrf.mxu0
        %v7611 = vadd.f32 %v7522, %v7610
        %v7612 = vpop.f32.mrf.mxu0
        %v7613 = vadd.f32 %v7524, %v7612
        %7614 = vmatmul.bf16.gmra.mxu0 %v7342
        %v7615 = vpop.f32.mrf.mxu0
        %v7616 = vadd.f32 %v7527, %v7615
        %v7617 = vpop.f32.mrf.mxu0
        %v7618 = vadd.f32 %v7529, %v7617
        %7619 = vmatmul.bf16.gmra.mxu0 %v7344
        %v7620 = vpop.f32.mrf.mxu0
        %v7621 = vadd.f32 %v7532, %v7620
        %v7622 = vpop.f32.mrf.mxu0
        %v7623 = vadd.f32 %v7534, %v7622
        %7624 = vmatmul.bf16.gmra.mxu0 %v7346
        %v7625 = vpop.f32.mrf.mxu0
        %v7626 = vadd.f32 %v7537, %v7625
        %v7627 = vpop.f32.mrf.mxu0
        %v7628 = vadd.f32 %v7539, %v7627
        %7629 = vmatmul.bf16.gmra.mxu0 %v7348
        %v7630 = vpop.f32.mrf.mxu0
        %v7631 = vadd.f32 %v7542, %v7630
        %v7632 = vpop.f32.mrf.mxu0
        %v7633 = vadd.f32 %v7544, %v7632
        %7634 = vmatmul.bf16.gmra.mxu0 %v7350
        %v7635 = vpop.f32.mrf.mxu0
        %v7636 = vadd.f32 %v7547, %v7635
        %v7637 = vpop.f32.mrf.mxu0
        %v7638 = vadd.f32 %v7549, %v7637
        %7639 = vmatmul.bf16.gmra.mxu0 %v7352
        %v7640 = vpop.f32.mrf.mxu0
        %v7641 = vadd.f32 %v7552, %v7640
        %v7642 = vpop.f32.mrf.mxu0
        %v7643 = vadd.f32 %v7554, %v7642
        %7644 = vmatmul.bf16.gmra.mxu0 %v7354
        %v7645 = vpop.f32.mrf.mxu0
        %v7646 = vadd.f32 %v7557, %v7645
        %v7647 = vpop.f32.mrf.mxu0
        %v7648 = vadd.f32 %v7559, %v7647
        %7649 = vmatmul.bf16.gmra.mxu0 %v7356
        %v7650 = vpop.f32.mrf.mxu0
        %v7651 = vadd.f32 %v7562, %v7650
        %v7652 = vpop.f32.mrf.mxu0
        %v7653 = vadd.f32 %v7564, %v7652
        %7654 = vmatmul.bf16.gmra.mxu0 %v7358
        %v7655 = vpop.f32.mrf.mxu0
        %v7656 = vadd.f32 %v7567, %v7655
        %v7657 = vpop.f32.mrf.mxu0
        %v7658 = vadd.f32 %v7569, %v7657
        %7659 = vmatmul.bf16.gmra.mxu0 %v7360
        %v7660 = vpop.f32.mrf.mxu0
        %v7661 = vadd.f32 %v7572, %v7660
        %v7662 = vpop.f32.mrf.mxu0
        %v7663 = vadd.f32 %v7574, %v7662
        %7664 = vmatmul.bf16.gmra.mxu0 %v7362
        %v7665 = vpop.f32.mrf.mxu0
        %v7666 = vadd.f32 %v7577, %v7665
        %v7667 = vpop.f32.mrf.mxu0
        %v7668 = vadd.f32 %v7579, %v7667
        %7669 = vmatmul.bf16.gmra.mxu0 %v7364
        %v7670 = vpop.f32.mrf.mxu0
        %v7671 = vadd.f32 %v7582, %v7670
        %v7672 = vpop.f32.mrf.mxu0
        %v7673 = vadd.f32 %v7584, %v7672
        %7674 = vdwg.mxu0
        %vm7675 = vcmask 64512
        %7676 = vst.msk [vmem:[%s297] sm:$0xff] %vm7675, %v7596
        %7677 = vst.msk [vmem:[%s297 + $0x8] sm:$0xff] %vm7675, %v7598
        %7678 = vst.msk [vmem:[%s297 + $0x10] sm:$0xff] %vm7675, %v7601
        %7679 = vst.msk [vmem:[%s297 + $0x18] sm:$0xff] %vm7675, %v7603
        %7680 = vst.msk [vmem:[%s297 + $0x20] sm:$0xff] %vm7675, %v7606
        %7681 = vst.msk [vmem:[%s297 + $0x28] sm:$0xff] %vm7675, %v7608
        %7682 = vst.msk [vmem:[%s297 + $0x30] sm:$0xff] %vm7675, %v7611
        %7683 = vst.msk [vmem:[%s297 + $0x38] sm:$0xff] %vm7675, %v7613
        %7684 = vst.msk [vmem:[%s297 + $0x40] sm:$0xff] %vm7675, %v7616
        %7685 = vst.msk [vmem:[%s297 + $0x48] sm:$0xff] %vm7675, %v7618
        %7686 = vst.msk [vmem:[%s297 + $0x50] sm:$0xff] %vm7675, %v7621
        %7687 = vst.msk [vmem:[%s297 + $0x58] sm:$0xff] %vm7675, %v7623
        %7688 = vst.msk [vmem:[%s297 + $0x60] sm:$0xff] %vm7675, %v7626
        %7689 = vst.msk [vmem:[%s297 + $0x68] sm:$0xff] %vm7675, %v7628
        %7690 = vst.msk [vmem:[%s297 + $0x70] sm:$0xff] %vm7675, %v7631
        %7691 = vst.msk [vmem:[%s297 + $0x78] sm:$0xff] %vm7675, %v7633
        %7692 = vst.msk [vmem:[%s297 + $0x80] sm:$0xff] %vm7675, %v7636
        %7693 = vst.msk [vmem:[%s297 + $0x88] sm:$0xff] %vm7675, %v7638
        %7694 = vst.msk [vmem:[%s297 + $0x90] sm:$0xff] %vm7675, %v7641
        %7695 = vst.msk [vmem:[%s297 + $0x98] sm:$0xff] %vm7675, %v7643
        %7696 = vst.msk [vmem:[%s297 + $0xa0] sm:$0xff] %vm7675, %v7646
        %7697 = vst.msk [vmem:[%s297 + $0xa8] sm:$0xff] %vm7675, %v7648
        %7698 = vst.msk [vmem:[%s297 + $0xb0] sm:$0xff] %vm7675, %v7651
        %7699 = vst.msk [vmem:[%s297 + $0xb8] sm:$0xff] %vm7675, %v7653
        %7700 = vst.msk [vmem:[%s297 + $0xc0] sm:$0xff] %vm7675, %v7656
        %7701 = vst.msk [vmem:[%s297 + $0xc8] sm:$0xff] %vm7675, %v7658
        %7702 = vst.msk [vmem:[%s297 + $0xd0] sm:$0xff] %vm7675, %v7661
        %7703 = vst.msk [vmem:[%s297 + $0xd8] sm:$0xff] %vm7675, %v7663
        %7704 = vst.msk [vmem:[%s297 + $0xe0] sm:$0xff] %vm7675, %v7666
        %7705 = vst.msk [vmem:[%s297 + $0xe8] sm:$0xff] %vm7675, %v7668
        %7706 = vst.msk [vmem:[%s297 + $0xf0] sm:$0xff] %vm7675, %v7671
        %7707 = vst.msk [vmem:[%s297 + $0xf8] sm:$0xff] %vm7675, %v7673
        %s7708 = smul.u32 32, %s19
        %p7709 = scmp.lt.s32.totalorder %s7708, 63
        %s7710 = scalar_select %p7709, %s7708, 63
        %s7711 = smul.addr %s7710, 8
        %s7712 = scalar_lea.vmem %s7, %s7711
        // Predicated region
        $region53: #{fcn_forward.1} parent=47 // pred_check
          %p7713 = pneg %p189
        $region54: #{fcn_forward.1} parent=47 // pred_check_branch
          %7715 = sbr.rel (%p7713) target = $region56
        $region55: #{fcn_forward.1} parent=47 // pred_region
          %s7716 = smul.u32 32, %s19
        $region56: #{fcn_forward.1} parent=47 // pred_fallthru
          _
      $region48: #{fcn_forward.1} parent=5 // pred_fallthru
        _
      %p7717 = scmp.le.s32.totalorder 2, %s14
      // Predicated region
      $region57: #{fcn_forward.1} parent=5 // pred_check
        %p7718 = pneg %p7717
      $region58: #{fcn_forward.1} parent=5 // pred_check_branch
        %7720 = sbr.rel (%p7718) target = $region60
      $region59: #{fcn_forward.1} parent=5 // pred_region
        %s7721 = ssub.s32 %s14, 2
        // Predicated region
        $region61: #{fcn_forward.1} parent=59 // pred_check
          %p7722 = pneg %p195
        $region62: #{fcn_forward.1} parent=59 // pred_check_branch
          %7724 = sbr.rel (%p7722) target = $region64
        $region63: #{fcn_forward.1} parent=59 // pred_region
          %s7725 = smul.u32 32, %s20
          %p7726 = scmp.lt.s32.totalorder %s7725, 63
          %s7727 = scalar_select %p7726, %s7725, 63
          %s7728 = smul.addr %s7727, 8
          %s7729 = scalar_lea.vmem %s7, %s7728
        $region64: #{fcn_forward.1} parent=59 // pred_fallthru
          _
      $region60: #{fcn_forward.1} parent=5 // pred_fallthru
        _
    $region6: #{fcn_forward.1} parent=1 // loop_footer
      %s18 = sadd.s32 1, %s14
    $region7: #{fcn_forward.1} parent=1 // loop_footer_branch
      %13 = sbr.rel target = $region3
    $region8: #{fcn_forward.1} parent=1 // loop_exit
      _
    %7730 = vsyncpa [#allocation3], 1
    %s7731 = scalar_lea.sflag [#allocation3], 1
    %7732 = vsyncpa %s7731, 1

</llo_original>
